<compile_context>
chip_gen: v6e
topology: v6e:2x2x1
jax: 0.10.0
libtpu: 0.0.40
codegen_flags: <defaults>
</compile_context>

<pallas_src>
import jax
import jax.numpy as jnp
from jax.experimental import pallas as pl
from jax.experimental.pallas import tpu as pltpu

LEAKY1 = 0.02200345          # slope for x2..x4
LEAKY2 = -1.19420467959      # slope for x6..x8

# ---- conv_t1: ConvTranspose2d(64, 32, 3, stride=2, padding=1) ----
C1_IN, C1_OUT, K1 = 64, 32, 3
N1, HI1, WI1 = 7, 3, 9        # batch (= depth of the 5-D tensor), H, W
HO1, WO1 = 5, 17              # output H, W
WS1 = 24                      # padded output-W rows per batch (17 valid + guard)
WZP1 = WS1 + K1 - 1           # 26: zero-inserted + padded input width

# ---- conv_t2: ConvTranspose3d(32, 8, 5, stride=(1,1,2), padding=(4,0,2),
#                               output_padding=(2,0,1), groups=2) ----
C2_IN, C2_OUT, K2, GROUPS = 32, 8, 5, 2
D2, HI2, WI2 = N1, HO1, WO1   # conv_t2 input D, H, W  (7, 5, 17)
DO2, HO2, WO2 = 5, 9, 34      # conv_t2 output D, H, W
DP2 = D2 + 2                  # 9: depth rows of the padded VMEM intermediate
WP2 = 32                      # padded W of the VMEM intermediate (1 + 17 + guard)
WE2 = 24                      # per-parity output-W columns computed (17 valid + guard)

M1 = N1 * WS1                 # 168 rows of the conv_t1 matmul
KF1 = K1 * HI1 * C1_IN        # 576 contraction lanes (kw, hi, ci)
NF1 = HO1 * C1_OUT            # 160 lanes (ho, co) == conv_t2 (hi, ci) contraction
M2 = DO2 * WE2                # 120 rows of each conv_t2 tap matmul
NF2 = HO2 * C2_OUT            # 72 output lanes (ho, co)


# --------------------------------------------------------------------------
# Fused kernel: one grid step per output-W parity of conv_t2.
# --------------------------------------------------------------------------
def _fused_kernel(a1_ref, w1_ref, b1_ref, w2_ref, b2_ref, o_ref, y1_scr):
    # ---- stage 1: ConvTranspose2d(64->32) as ONE MXU matmul + bias + leaky ----
    y1 = jnp.dot(a1_ref[...], w1_ref[...], preferred_element_type=jnp.float32)
    y1 = y1 + b1_ref[...]
    y1 = jnp.where(y1 > 0, y1, y1 * LEAKY1)
    # rows are (n, ws); only ws in [1, 1+WO1) are real output columns, the rest
    # must be exact zeros (they are the W zero padding seen by conv_t2).
    ws = jax.lax.broadcasted_iota(jnp.int32, (M1, 1), 0) % WS1
    y1 = jnp.where((ws >= 1) & (ws < 1 + WO1), y1, 0.0)

    # ---- VMEM-resident, padded conv_t2 input (no HBM round trip) ----
    y1_scr[...] = jnp.zeros_like(y1_scr)                       # (DP2, WP2, NF1)
    y1_scr[0:D2, 0:WS1, :] = y1.reshape(N1, WS1, NF1)

    # ---- stage 2: grouped ConvTranspose3d, one W-parity per grid step ----
    # Direct form: di = do + 4 - kd (scratch depth rows 7..8 are the zero pad),
    # the H transposed conv is folded into the (hi,ci)->(ho,co) tap weights, and
    # the stride-2 W axis is handled per parity by 3 sliding-window taps whose
    # weights (including a zero dummy for the odd parity) come from this grid
    # step's w2_ref block (leading-dim tap indexing, lane-dense N = 72).
    acc = jnp.zeros((M2, NF2), jnp.float32)
    for kd in range(K2):
        for t in range(3):
            slab = y1_scr[4 - kd:(4 - kd) + DO2, 2 - t:(2 - t) + WE2, :]
            acc = acc + jnp.dot(slab.reshape(M2, NF1), w2_ref[0, kd * 3 + t],
                                preferred_element_type=jnp.float32)
    acc = acc + b2_ref[...]
    acc = jnp.where(acc > 0, acc, acc * LEAKY2)
    o_ref[0] = acc.astype(o_ref.dtype)


def _fused_forward_call(a1, w1k, b1k, w2p, b2k):
    return pl.pallas_call(
        _fused_kernel,
        out_shape=jax.ShapeDtypeStruct((2, M2, NF2), jnp.float32),
        grid=(2,),                                  # output-W parity (even, odd)
        in_specs=[
            pl.BlockSpec((M1, KF1), lambda p: (0, 0)),                # a1
            pl.BlockSpec((KF1, NF1), lambda p: (0, 0)),               # w1k
            pl.BlockSpec((1, NF1), lambda p: (0, 0)),                 # b1k
            pl.BlockSpec((1, K2 * 3, NF1, NF2), lambda p: (p, 0, 0, 0)),  # w2p
            pl.BlockSpec((1, NF2), lambda p: (0, 0)),                 # b2k
        ],
        out_specs=pl.BlockSpec((1, M2, NF2), lambda p: (p, 0, 0)),
        scratch_shapes=[pltpu.VMEM((DP2, WP2, NF1), jnp.float32)],
        compiler_params=pltpu.CompilerParams(
            dimension_semantics=("parallel",),
            vmem_limit_bytes=32 * 1024 * 1024),
    )(a1, w1k, b1k, w2p, b2k)


# --------------------------------------------------------------------------
# Hoisted weight preparation (depends only on the parameters, done once).
# --------------------------------------------------------------------------
def prepare_params(w1, b1, w2, b2):
    # ---- conv_t1: fold the H transposed conv (stride 2, pad 1) into a dense
    # (kw, hi, ci) -> (ho, co) matrix; the W axis stays a 3-tap sliding window
    # over the zero-inserted input (window tap kw uses the W-flipped kernel).
    w1k = jnp.zeros((KF1, NF1), w1.dtype)
    for kw in range(K1):
        for hi in range(HI1):
            for ho in range(HO1):
                kh = ho + 1 - 2 * hi                        # stride 2, padding 1
                if 0 <= kh < K1:
                    r0 = (kw * HI1 + hi) * C1_IN
                    w1k = w1k.at[r0:r0 + C1_IN,
                                 ho * C1_OUT:(ho + 1) * C1_OUT].set(
                        w1[:, :, kh, K1 - 1 - kw])
    b1k = jnp.tile(b1, HO1).reshape(1, NF1)

    # ---- conv_t2: groups -> block-diagonal dense, fold the H transposed conv
    # (stride 1, pad 0) into a dense (hi,ci) -> (ho,co) matrix per (kd, kw) tap,
    # then repack taps per output-W parity on a LEADING dim:
    #   parity 0 (even wo): taps t=0,1,2 use kw=0,2,4
    #   parity 1 (odd  wo): taps t=0,1   use kw=1,3   (t=2 is a zero dummy)
    cgi, cgo = C2_IN // GROUPS, C2_OUT // GROUPS
    w2d = jnp.zeros((C2_IN, C2_OUT, K2, K2, K2), w2.dtype)
    for g in range(GROUPS):
        w2d = w2d.at[g * cgi:(g + 1) * cgi, g * cgo:(g + 1) * cgo].set(
            w2[g * cgi:(g + 1) * cgi])
    wh2 = jnp.zeros((K2, K2, NF1, NF2), w2.dtype)           # (kd, kw, hi*ci, ho*co)
    for hi in range(HI2):
        for ho in range(HO2):
            kh = ho - hi                                    # stride 1, padding 0
            if 0 <= kh < K2:
                blk = jnp.transpose(w2d[:, :, :, kh, :], (2, 3, 0, 1))  # (kd,kw,ci,co)
                wh2 = wh2.at[:, :, hi * C2_IN:(hi + 1) * C2_IN,
                             ho * C2_OUT:(ho + 1) * C2_OUT].set(blk)
    w2p = jnp.zeros((2, K2 * 3, NF1, NF2), w2.dtype)
    for kd in range(K2):
        for t in range(3):
            w2p = w2p.at[0, kd * 3 + t].set(wh2[kd, 2 * t])
        for t in range(2):
            w2p = w2p.at[1, kd * 3 + t].set(wh2[kd, 2 * t + 1])
    b2k = jnp.tile(b2, HO2).reshape(1, NF2)
    return w1k, b1k, w2p, b2k


# --------------------------------------------------------------------------
# Full forward: tiny input-side prep in XLA, one fused pallas_call, tiny
# output-side reordering in XLA.
# --------------------------------------------------------------------------
@jax.jit
def model_forward(x, prepped):
    w1k, b1k, w2p, b2k = prepped
    # x: (7, 64, 3, 9) -- depth of the original (1, 32, 7, 3, 9) acts as batch.
    xt = jnp.transpose(x, (0, 2, 3, 1))                     # (n, hi, wi, ci)
    # stride-2 zero insert along W with the transposed-conv padding built in.
    xzp = jnp.zeros((N1, HI1, WZP1, C1_IN), x.dtype)
    xzp = xzp.at[:, :, 2:2 + 2 * WI1:2, :].set(xt)
    # ~0.5 MB kw-only im2col of the network INPUT; every intermediate after the
    # first matmul stays VMEM-resident inside the single fused kernel.
    a1 = jnp.stack([xzp[:, :, kw:kw + WS1, :] for kw in range(K1)], axis=2)
    a1 = jnp.transpose(a1, (0, 3, 2, 1, 4)).reshape(M1, KF1)  # rows (n, ws), lanes (kw, hi, ci)

    out = _fused_forward_call(a1, w1k, b1k, w2p, b2k)       # (2, 120, 72)

    # (parity, do*we_pad, ho*co) -> drop guard columns -> interleave parity -> NCDHW
    out = out.reshape(2, DO2, WE2, HO2, C2_OUT)[:, :, :WO2 // 2]
    out = jnp.transpose(out, (1, 3, 2, 0, 4))               # (do, ho, we, parity, co)
    out = out.reshape(DO2, HO2, WO2, C2_OUT)
    return jnp.transpose(out, (3, 0, 1, 2))[None]           # (1, 8, 5, 9, 34)


if __name__ == "__main__":
    key = jax.random.PRNGKey(0)
    k1, k2, k3, k4, kx = jax.random.split(key, 5)
    # ConvTranspose2d(64, 32, 3): weight (64, 32, 3, 3), bias (32,)
    w1 = jax.random.normal(k1, (C1_IN, C1_OUT, K1, K1), jnp.float32) * 0.05
    b1 = jax.random.normal(k2, (C1_OUT,), jnp.float32) * 0.05
    # ConvTranspose3d(32, 8, 5, groups=2): weight (32, 4, 5, 5, 5), bias (8,)
    w2 = jax.random.normal(k3, (C2_IN, C2_OUT // GROUPS, K2, K2, K2),
                           jnp.float32) * 0.05
    b2 = jax.random.normal(k4, (C2_OUT,), jnp.float32) * 0.05

    # hoisted, per-model (not per-call) weight repacking
    prepped = prepare_params(w1, b1, w2, b2)

    # depth (=7) of the original (1, 32, 7, 3, 9) input acts as the conv_t1 batch
    x = jax.random.normal(kx, (N1, C1_IN, HI1, WI1), jnp.float32)

    out = jax.block_until_ready(model_forward(x, prepped))
    assert out.shape == (1, C2_OUT, DO2, HO2, WO2), out.shape
    assert out.dtype == jnp.float32
    print("KERNEL_OK")
</pallas_src>

<mosaic_0001>
module attributes {stable_mosaic.version = 11 : i64} {
  func.func @_fused_kernel(%arg0: i32, %arg1: memref<168x576xf32, #tpu.memory_space<vmem>>, %arg2: memref<576x160xf32, #tpu.memory_space<vmem>>, %arg3: memref<1x160xf32, #tpu.memory_space<vmem>>, %arg4: memref<1x15x160x72xf32, #tpu.memory_space<vmem>>, %arg5: memref<1x72xf32, #tpu.memory_space<vmem>>, %arg6: memref<1x120x72xf32, #tpu.memory_space<vmem>>, %arg7: memref<9x32x160xf32, #tpu.memory_space<vmem>>) attributes {dimension_semantics = [#tpu.dimension_semantics<parallel>], iteration_bounds = array<i64: 2>, scalar_prefetch = 0 : i64, scratch_operands = 1 : i64, tpu.core_type = #tpu.core_type<tc>, window_params = [{pipeline_mode = #tpu.pipeline_mode<synchronous>, transform_indices = @transform_0, window_bounds = array<i64: 168, 576>}, {pipeline_mode = #tpu.pipeline_mode<synchronous>, transform_indices = @transform_1, window_bounds = array<i64: 576, 160>}, {pipeline_mode = #tpu.pipeline_mode<synchronous>, transform_indices = @transform_2, window_bounds = array<i64: 1, 160>}, {transform_indices = @transform_3, window_bounds = array<i64: 1, 15, 160, 72>}, {pipeline_mode = #tpu.pipeline_mode<synchronous>, transform_indices = @transform_4, window_bounds = array<i64: 1, 72>}, {transform_indices = @transform_5, window_bounds = array<i64: 1, 120, 72>}]} {
    %c0 = arith.constant 0 : index
    %c0_0 = arith.constant 0 : index
    %0 = vector.load %arg1[%c0, %c0_0] : memref<168x576xf32, #tpu.memory_space<vmem>>, vector<168x576xf32>
    %c0_1 = arith.constant 0 : index
    %c0_2 = arith.constant 0 : index
    %1 = vector.load %arg2[%c0_1, %c0_2] : memref<576x160xf32, #tpu.memory_space<vmem>>, vector<576x160xf32>
    %cst = arith.constant dense<0.000000e+00> : vector<168x160xf32>
    %2 = tpu.matmul %0, %1, %cst {dimension_numbers = #tpu.dot_dimension_numbers<[1], [0], [0], [1], [0, 0, 1, 1], [], []>} : vector<168x576xf32>, vector<576x160xf32>, vector<168x160xf32> -> vector<168x160xf32>
    %c0_3 = arith.constant 0 : index
    %c0_4 = arith.constant 0 : index
    %3 = vector.load %arg3[%c0_3, %c0_4] : memref<1x160xf32, #tpu.memory_space<vmem>>, vector<1x160xf32>
    %4 = vector.broadcast %3 : vector<1x160xf32> to vector<168x160xf32>
    %5 = arith.addf %2, %4 : vector<168x160xf32>
    %cst_5 = arith.constant 0.000000e+00 : f32
    %6 = vector.broadcast %cst_5 : f32 to vector<168x160xf32>
    %7 = arith.cmpf ogt, %5, %6 : vector<168x160xf32>
    %cst_6 = arith.constant 0.0220034495 : f32
    %8 = vector.broadcast %cst_6 : f32 to vector<168x160xf32>
    %9 = arith.mulf %5, %8 : vector<168x160xf32>
    %10 = arith.select %7, %5, %9 : vector<168x160xi1>, vector<168x160xf32>
    %11 = tpu.iota {dimensions = array<i32: 0>} : vector<168x1xi32>
    %c24_i32 = arith.constant 24 : i32
    %c0_i32 = arith.constant 0 : i32
    %12 = arith.cmpi eq, %c24_i32, %c0_i32 : i32
    %c1_i32 = arith.constant 1 : i32
    %13 = arith.select %12, %c1_i32, %c24_i32 : i32
    %14 = vector.broadcast %13 : i32 to vector<168x1xi32>
    %15 = arith.remsi %11, %14 : vector<168x1xi32>
    %c0_i32_7 = arith.constant 0 : i32
    %16 = vector.broadcast %c0_i32_7 : i32 to vector<168x1xi32>
    %17 = arith.cmpi ne, %15, %16 : vector<168x1xi32>
    %c0_i32_8 = arith.constant 0 : i32
    %18 = vector.broadcast %c0_i32_8 : i32 to vector<168x1xi32>
    %19 = arith.cmpi slt, %15, %18 : vector<168x1xi32>
    %c0_i32_9 = arith.constant 0 : i32
    %20 = arith.cmpi slt, %13, %c0_i32_9 : i32
    %21 = vector.broadcast %20 : i1 to vector<168x1xi1>
    %22 = vector.broadcast %21 : vector<168x1xi1> to vector<168x1xi1>
    %23 = arith.xori %19, %22 : vector<168x1xi1>
    %24 = arith.andi %23, %17 : vector<168x1xi1>
    %25 = vector.broadcast %13 : i32 to vector<168x1xi32>
    %26 = arith.addi %15, %25 : vector<168x1xi32>
    %27 = arith.select %24, %26, %15 : vector<168x1xi1>, vector<168x1xi32>
    %c1_i32_10 = arith.constant 1 : i32
    %28 = vector.broadcast %c1_i32_10 : i32 to vector<168x1xi32>
    %29 = arith.cmpi sge, %27, %28 : vector<168x1xi32>
    %c18_i32 = arith.constant 18 : i32
    %30 = vector.broadcast %c18_i32 : i32 to vector<168x1xi32>
    %31 = arith.cmpi slt, %27, %30 : vector<168x1xi32>
    %32 = arith.andi %29, %31 : vector<168x1xi1>
    %cst_11 = arith.constant 0.000000e+00 : f32
    %33 = vector.shape_cast %32 : vector<168x1xi1> to vector<168x1xi1>
    %34 = vector.broadcast %33 : vector<168x1xi1> to vector<168x160xi1>
    %35 = vector.broadcast %cst_11 : f32 to vector<168x160xf32>
    %36 = arith.select %34, %10, %35 : vector<168x160xi1>, vector<168x160xf32>
    %cst_12 = arith.constant 0.000000e+00 : f32
    %37 = vector.broadcast %cst_12 : f32 to vector<9x32x160xf32>
    %c0_13 = arith.constant 0 : index
    %c0_14 = arith.constant 0 : index
    %c0_15 = arith.constant 0 : index
    %38 = vector.load %arg7[%c0_13, %c0_14, %c0_15] : memref<9x32x160xf32, #tpu.memory_space<vmem>>, vector<9x32x160xf32>
    tpu.vector_store %arg7[%c0_13, %c0_14, %c0_15], %37 {strides = array<i32>} : memref<9x32x160xf32, #tpu.memory_space<vmem>>, vector<9x32x160xf32>,
    %39 = vector.shape_cast %36 : vector<168x160xf32> to vector<7x24x160xf32>
    %c0_16 = arith.constant 0 : index
    %c0_17 = arith.constant 0 : index
    %c0_18 = arith.constant 0 : index
    %40 = vector.load %arg7[%c0_16, %c0_17, %c0_18] : memref<9x32x160xf32, #tpu.memory_space<vmem>>, vector<7x24x160xf32>
    tpu.vector_store %arg7[%c0_16, %c0_17, %c0_18], %39 {strides = array<i32>} : memref<9x32x160xf32, #tpu.memory_space<vmem>>, vector<7x24x160xf32>,
    %cst_19 = arith.constant 0.000000e+00 : f32
    %41 = vector.broadcast %cst_19 : f32 to vector<120x72xf32>
    %c4 = arith.constant 4 : index
    %c2 = arith.constant 2 : index
    %c0_20 = arith.constant 0 : index
    %42 = vector.load %arg7[%c4, %c2, %c0_20] : memref<9x32x160xf32, #tpu.memory_space<vmem>>, vector<5x24x160xf32>
    %43 = vector.shape_cast %42 : vector<5x24x160xf32> to vector<120x160xf32>
    %c0_21 = arith.constant 0 : index
    %c0_22 = arith.constant 0 : index
    %c0_23 = arith.constant 0 : index
    %c0_24 = arith.constant 0 : index
    %44 = vector.load %arg4[%c0_21, %c0_22, %c0_23, %c0_24] : memref<1x15x160x72xf32, #tpu.memory_space<vmem>>, vector<1x1x160x72xf32>
    %45 = vector.shape_cast %44 : vector<1x1x160x72xf32> to vector<160x72xf32>
    %cst_25 = arith.constant dense<0.000000e+00> : vector<120x72xf32>
    %46 = tpu.matmul %43, %45, %cst_25 {dimension_numbers = #tpu.dot_dimension_numbers<[1], [0], [0], [1], [0, 0, 1, 1], [], []>} : vector<120x160xf32>, vector<160x72xf32>, vector<120x72xf32> -> vector<120x72xf32>
    %47 = arith.addf %41, %46 : vector<120x72xf32>
    %c4_26 = arith.constant 4 : index
    %c1 = arith.constant 1 : index
    %c0_27 = arith.constant 0 : index
    %48 = vector.load %arg7[%c4_26, %c1, %c0_27] : memref<9x32x160xf32, #tpu.memory_space<vmem>>, vector<5x24x160xf32>
    %49 = vector.shape_cast %48 : vector<5x24x160xf32> to vector<120x160xf32>
    %c0_28 = arith.constant 0 : index
    %c1_29 = arith.constant 1 : index
    %c0_30 = arith.constant 0 : index
    %c0_31 = arith.constant 0 : index
    %50 = vector.load %arg4[%c0_28, %c1_29, %c0_30, %c0_31] : memref<1x15x160x72xf32, #tpu.memory_space<vmem>>, vector<1x1x160x72xf32>
    %51 = vector.shape_cast %50 : vector<1x1x160x72xf32> to vector<160x72xf32>
    %cst_32 = arith.constant dense<0.000000e+00> : vector<120x72xf32>
    %52 = tpu.matmul %49, %51, %cst_32 {dimension_numbers = #tpu.dot_dimension_numbers<[1], [0], [0], [1], [0, 0, 1, 1], [], []>} : vector<120x160xf32>, vector<160x72xf32>, vector<120x72xf32> -> vector<120x72xf32>
    %53 = arith.addf %47, %52 : vector<120x72xf32>
    %c4_33 = arith.constant 4 : index
    %c0_34 = arith.constant 0 : index
    %c0_35 = arith.constant 0 : index
    %54 = vector.load %arg7[%c4_33, %c0_34, %c0_35] : memref<9x32x160xf32, #tpu.memory_space<vmem>>, vector<5x24x160xf32>
    %55 = vector.shape_cast %54 : vector<5x24x160xf32> to vector<120x160xf32>
    %c0_36 = arith.constant 0 : index
    %c2_37 = arith.constant 2 : index
    %c0_38 = arith.constant 0 : index
    %c0_39 = arith.constant 0 : index
    %56 = vector.load %arg4[%c0_36, %c2_37, %c0_38, %c0_39] : memref<1x15x160x72xf32, #tpu.memory_space<vmem>>, vector<1x1x160x72xf32>
    %57 = vector.shape_cast %56 : vector<1x1x160x72xf32> to vector<160x72xf32>
    %cst_40 = arith.constant dense<0.000000e+00> : vector<120x72xf32>
    %58 = tpu.matmul %55, %57, %cst_40 {dimension_numbers = #tpu.dot_dimension_numbers<[1], [0], [0], [1], [0, 0, 1, 1], [], []>} : vector<120x160xf32>, vector<160x72xf32>, vector<120x72xf32> -> vector<120x72xf32>
    %59 = arith.addf %53, %58 : vector<120x72xf32>
    %c3 = arith.constant 3 : index
    %c2_41 = arith.constant 2 : index
    %c0_42 = arith.constant 0 : index
    %60 = vector.load %arg7[%c3, %c2_41, %c0_42] : memref<9x32x160xf32, #tpu.memory_space<vmem>>, vector<5x24x160xf32>
    %61 = vector.shape_cast %60 : vector<5x24x160xf32> to vector<120x160xf32>
    %c0_43 = arith.constant 0 : index
    %c3_44 = arith.constant 3 : index
    %c0_45 = arith.constant 0 : index
    %c0_46 = arith.constant 0 : index
    %62 = vector.load %arg4[%c0_43, %c3_44, %c0_45, %c0_46] : memref<1x15x160x72xf32, #tpu.memory_space<vmem>>, vector<1x1x160x72xf32>
    %63 = vector.shape_cast %62 : vector<1x1x160x72xf32> to vector<160x72xf32>
    %cst_47 = arith.constant dense<0.000000e+00> : vector<120x72xf32>
    %64 = tpu.matmul %61, %63, %cst_47 {dimension_numbers = #tpu.dot_dimension_numbers<[1], [0], [0], [1], [0, 0, 1, 1], [], []>} : vector<120x160xf32>, vector<160x72xf32>, vector<120x72xf32> -> vector<120x72xf32>
    %65 = arith.addf %59, %64 : vector<120x72xf32>
    %c3_48 = arith.constant 3 : index
    %c1_49 = arith.constant 1 : index
    %c0_50 = arith.constant 0 : index
    %66 = vector.load %arg7[%c3_48, %c1_49, %c0_50] : memref<9x32x160xf32, #tpu.memory_space<vmem>>, vector<5x24x160xf32>
    %67 = vector.shape_cast %66 : vector<5x24x160xf32> to vector<120x160xf32>
    %c0_51 = arith.constant 0 : index
    %c4_52 = arith.constant 4 : index
    %c0_53 = arith.constant 0 : index
    %c0_54 = arith.constant 0 : index
    %68 = vector.load %arg4[%c0_51, %c4_52, %c0_53, %c0_54] : memref<1x15x160x72xf32, #tpu.memory_space<vmem>>, vector<1x1x160x72xf32>
    %69 = vector.shape_cast %68 : vector<1x1x160x72xf32> to vector<160x72xf32>
    %cst_55 = arith.constant dense<0.000000e+00> : vector<120x72xf32>
    %70 = tpu.matmul %67, %69, %cst_55 {dimension_numbers = #tpu.dot_dimension_numbers<[1], [0], [0], [1], [0, 0, 1, 1], [], []>} : vector<120x160xf32>, vector<160x72xf32>, vector<120x72xf32> -> vector<120x72xf32>
    %71 = arith.addf %65, %70 : vector<120x72xf32>
    %c3_56 = arith.constant 3 : index
    %c0_57 = arith.constant 0 : index
    %c0_58 = arith.constant 0 : index
    %72 = vector.load %arg7[%c3_56, %c0_57, %c0_58] : memref<9x32x160xf32, #tpu.memory_space<vmem>>, vector<5x24x160xf32>
    %73 = vector.shape_cast %72 : vector<5x24x160xf32> to vector<120x160xf32>
    %c0_59 = arith.constant 0 : index
    %c5 = arith.constant 5 : index
    %c0_60 = arith.constant 0 : index
    %c0_61 = arith.constant 0 : index
    %74 = vector.load %arg4[%c0_59, %c5, %c0_60, %c0_61] : memref<1x15x160x72xf32, #tpu.memory_space<vmem>>, vector<1x1x160x72xf32>
    %75 = vector.shape_cast %74 : vector<1x1x160x72xf32> to vector<160x72xf32>
    %cst_62 = arith.constant dense<0.000000e+00> : vector<120x72xf32>
    %76 = tpu.matmul %73, %75, %cst_62 {dimension_numbers = #tpu.dot_dimension_numbers<[1], [0], [0], [1], [0, 0, 1, 1], [], []>} : vector<120x160xf32>, vector<160x72xf32>, vector<120x72xf32> -> vector<120x72xf32>
    %77 = arith.addf %71, %76 : vector<120x72xf32>
    %c2_63 = arith.constant 2 : index
    %c2_64 = arith.constant 2 : index
    %c0_65 = arith.constant 0 : index
    %78 = vector.load %arg7[%c2_63, %c2_64, %c0_65] : memref<9x32x160xf32, #tpu.memory_space<vmem>>, vector<5x24x160xf32>
    %79 = vector.shape_cast %78 : vector<5x24x160xf32> to vector<120x160xf32>
    %c0_66 = arith.constant 0 : index
    %c6 = arith.constant 6 : index
    %c0_67 = arith.constant 0 : index
    %c0_68 = arith.constant 0 : index
    %80 = vector.load %arg4[%c0_66, %c6, %c0_67, %c0_68] : memref<1x15x160x72xf32, #tpu.memory_space<vmem>>, vector<1x1x160x72xf32>
    %81 = vector.shape_cast %80 : vector<1x1x160x72xf32> to vector<160x72xf32>
    %cst_69 = arith.constant dense<0.000000e+00> : vector<120x72xf32>
    %82 = tpu.matmul %79, %81, %cst_69 {dimension_numbers = #tpu.dot_dimension_numbers<[1], [0], [0], [1], [0, 0, 1, 1], [], []>} : vector<120x160xf32>, vector<160x72xf32>, vector<120x72xf32> -> vector<120x72xf32>
    %83 = arith.addf %77, %82 : vector<120x72xf32>
    %c2_70 = arith.constant 2 : index
    %c1_71 = arith.constant 1 : index
    %c0_72 = arith.constant 0 : index
    %84 = vector.load %arg7[%c2_70, %c1_71, %c0_72] : memref<9x32x160xf32, #tpu.memory_space<vmem>>, vector<5x24x160xf32>
    %85 = vector.shape_cast %84 : vector<5x24x160xf32> to vector<120x160xf32>
    %c0_73 = arith.constant 0 : index
    %c7 = arith.constant 7 : index
    %c0_74 = arith.constant 0 : index
    %c0_75 = arith.constant 0 : index
    %86 = vector.load %arg4[%c0_73, %c7, %c0_74, %c0_75] : memref<1x15x160x72xf32, #tpu.memory_space<vmem>>, vector<1x1x160x72xf32>
    %87 = vector.shape_cast %86 : vector<1x1x160x72xf32> to vector<160x72xf32>
    %cst_76 = arith.constant dense<0.000000e+00> : vector<120x72xf32>
    %88 = tpu.matmul %85, %87, %cst_76 {dimension_numbers = #tpu.dot_dimension_numbers<[1], [0], [0], [1], [0, 0, 1, 1], [], []>} : vector<120x160xf32>, vector<160x72xf32>, vector<120x72xf32> -> vector<120x72xf32>
    %89 = arith.addf %83, %88 : vector<120x72xf32>
    %c2_77 = arith.constant 2 : index
    %c0_78 = arith.constant 0 : index
    %c0_79 = arith.constant 0 : index
    %90 = vector.load %arg7[%c2_77, %c0_78, %c0_79] : memref<9x32x160xf32, #tpu.memory_space<vmem>>, vector<5x24x160xf32>
    %91 = vector.shape_cast %90 : vector<5x24x160xf32> to vector<120x160xf32>
    %c0_80 = arith.constant 0 : index
    %c8 = arith.constant 8 : index
    %c0_81 = arith.constant 0 : index
    %c0_82 = arith.constant 0 : index
    %92 = vector.load %arg4[%c0_80, %c8, %c0_81, %c0_82] : memref<1x15x160x72xf32, #tpu.memory_space<vmem>>, vector<1x1x160x72xf32>
    %93 = vector.shape_cast %92 : vector<1x1x160x72xf32> to vector<160x72xf32>
    %cst_83 = arith.constant dense<0.000000e+00> : vector<120x72xf32>
    %94 = tpu.matmul %91, %93, %cst_83 {dimension_numbers = #tpu.dot_dimension_numbers<[1], [0], [0], [1], [0, 0, 1, 1], [], []>} : vector<120x160xf32>, vector<160x72xf32>, vector<120x72xf32> -> vector<120x72xf32>
    %95 = arith.addf %89, %94 : vector<120x72xf32>
    %c1_84 = arith.constant 1 : index
    %c2_85 = arith.constant 2 : index
    %c0_86 = arith.constant 0 : index
    %96 = vector.load %arg7[%c1_84, %c2_85, %c0_86] : memref<9x32x160xf32, #tpu.memory_space<vmem>>, vector<5x24x160xf32>
    %97 = vector.shape_cast %96 : vector<5x24x160xf32> to vector<120x160xf32>
    %c0_87 = arith.constant 0 : index
    %c9 = arith.constant 9 : index
    %c0_88 = arith.constant 0 : index
    %c0_89 = arith.constant 0 : index
    %98 = vector.load %arg4[%c0_87, %c9, %c0_88, %c0_89] : memref<1x15x160x72xf32, #tpu.memory_space<vmem>>, vector<1x1x160x72xf32>
    %99 = vector.shape_cast %98 : vector<1x1x160x72xf32> to vector<160x72xf32>
    %cst_90 = arith.constant dense<0.000000e+00> : vector<120x72xf32>
    %100 = tpu.matmul %97, %99, %cst_90 {dimension_numbers = #tpu.dot_dimension_numbers<[1], [0], [0], [1], [0, 0, 1, 1], [], []>} : vector<120x160xf32>, vector<160x72xf32>, vector<120x72xf32> -> vector<120x72xf32>
    %101 = arith.addf %95, %100 : vector<120x72xf32>
    %c1_91 = arith.constant 1 : index
    %c1_92 = arith.constant 1 : index
    %c0_93 = arith.constant 0 : index
    %102 = vector.load %arg7[%c1_91, %c1_92, %c0_93] : memref<9x32x160xf32, #tpu.memory_space<vmem>>, vector<5x24x160xf32>
    %103 = vector.shape_cast %102 : vector<5x24x160xf32> to vector<120x160xf32>
    %c0_94 = arith.constant 0 : index
    %c10 = arith.constant 10 : index
    %c0_95 = arith.constant 0 : index
    %c0_96 = arith.constant 0 : index
    %104 = vector.load %arg4[%c0_94, %c10, %c0_95, %c0_96] : memref<1x15x160x72xf32, #tpu.memory_space<vmem>>, vector<1x1x160x72xf32>
    %105 = vector.shape_cast %104 : vector<1x1x160x72xf32> to vector<160x72xf32>
    %cst_97 = arith.constant dense<0.000000e+00> : vector<120x72xf32>
    %106 = tpu.matmul %103, %105, %cst_97 {dimension_numbers = #tpu.dot_dimension_numbers<[1], [0], [0], [1], [0, 0, 1, 1], [], []>} : vector<120x160xf32>, vector<160x72xf32>, vector<120x72xf32> -> vector<120x72xf32>
    %107 = arith.addf %101, %106 : vector<120x72xf32>
    %c1_98 = arith.constant 1 : index
    %c0_99 = arith.constant 0 : index
    %c0_100 = arith.constant 0 : index
    %108 = vector.load %arg7[%c1_98, %c0_99, %c0_100] : memref<9x32x160xf32, #tpu.memory_space<vmem>>, vector<5x24x160xf32>
    %109 = vector.shape_cast %108 : vector<5x24x160xf32> to vector<120x160xf32>
    %c0_101 = arith.constant 0 : index
    %c11 = arith.constant 11 : index
    %c0_102 = arith.constant 0 : index
    %c0_103 = arith.constant 0 : index
    %110 = vector.load %arg4[%c0_101, %c11, %c0_102, %c0_103] : memref<1x15x160x72xf32, #tpu.memory_space<vmem>>, vector<1x1x160x72xf32>
    %111 = vector.shape_cast %110 : vector<1x1x160x72xf32> to vector<160x72xf32>
    %cst_104 = arith.constant dense<0.000000e+00> : vector<120x72xf32>
    %112 = tpu.matmul %109, %111, %cst_104 {dimension_numbers = #tpu.dot_dimension_numbers<[1], [0], [0], [1], [0, 0, 1, 1], [], []>} : vector<120x160xf32>, vector<160x72xf32>, vector<120x72xf32> -> vector<120x72xf32>
    %113 = arith.addf %107, %112 : vector<120x72xf32>
    %c0_105 = arith.constant 0 : index
    %c2_106 = arith.constant 2 : index
    %c0_107 = arith.constant 0 : index
    %114 = vector.load %arg7[%c0_105, %c2_106, %c0_107] : memref<9x32x160xf32, #tpu.memory_space<vmem>>, vector<5x24x160xf32>
    %115 = vector.shape_cast %114 : vector<5x24x160xf32> to vector<120x160xf32>
    %c0_108 = arith.constant 0 : index
    %c12 = arith.constant 12 : index
    %c0_109 = arith.constant 0 : index
    %c0_110 = arith.constant 0 : index
    %116 = vector.load %arg4[%c0_108, %c12, %c0_109, %c0_110] : memref<1x15x160x72xf32, #tpu.memory_space<vmem>>, vector<1x1x160x72xf32>
    %117 = vector.shape_cast %116 : vector<1x1x160x72xf32> to vector<160x72xf32>
    %cst_111 = arith.constant dense<0.000000e+00> : vector<120x72xf32>
    %118 = tpu.matmul %115, %117, %cst_111 {dimension_numbers = #tpu.dot_dimension_numbers<[1], [0], [0], [1], [0, 0, 1, 1], [], []>} : vector<120x160xf32>, vector<160x72xf32>, vector<120x72xf32> -> vector<120x72xf32>
    %119 = arith.addf %113, %118 : vector<120x72xf32>
    %c0_112 = arith.constant 0 : index
    %c1_113 = arith.constant 1 : index
    %c0_114 = arith.constant 0 : index
    %120 = vector.load %arg7[%c0_112, %c1_113, %c0_114] : memref<9x32x160xf32, #tpu.memory_space<vmem>>, vector<5x24x160xf32>
    %121 = vector.shape_cast %120 : vector<5x24x160xf32> to vector<120x160xf32>
    %c0_115 = arith.constant 0 : index
    %c13 = arith.constant 13 : index
    %c0_116 = arith.constant 0 : index
    %c0_117 = arith.constant 0 : index
    %122 = vector.load %arg4[%c0_115, %c13, %c0_116, %c0_117] : memref<1x15x160x72xf32, #tpu.memory_space<vmem>>, vector<1x1x160x72xf32>
    %123 = vector.shape_cast %122 : vector<1x1x160x72xf32> to vector<160x72xf32>
    %cst_118 = arith.constant dense<0.000000e+00> : vector<120x72xf32>
    %124 = tpu.matmul %121, %123, %cst_118 {dimension_numbers = #tpu.dot_dimension_numbers<[1], [0], [0], [1], [0, 0, 1, 1], [], []>} : vector<120x160xf32>, vector<160x72xf32>, vector<120x72xf32> -> vector<120x72xf32>
    %125 = arith.addf %119, %124 : vector<120x72xf32>
    %c0_119 = arith.constant 0 : index
    %c0_120 = arith.constant 0 : index
    %c0_121 = arith.constant 0 : index
    %126 = vector.load %arg7[%c0_119, %c0_120, %c0_121] : memref<9x32x160xf32, #tpu.memory_space<vmem>>, vector<5x24x160xf32>
    %127 = vector.shape_cast %126 : vector<5x24x160xf32> to vector<120x160xf32>
    %c0_122 = arith.constant 0 : index
    %c14 = arith.constant 14 : index
    %c0_123 = arith.constant 0 : index
    %c0_124 = arith.constant 0 : index
    %128 = vector.load %arg4[%c0_122, %c14, %c0_123, %c0_124] : memref<1x15x160x72xf32, #tpu.memory_space<vmem>>, vector<1x1x160x72xf32>
    %129 = vector.shape_cast %128 : vector<1x1x160x72xf32> to vector<160x72xf32>
    %cst_125 = arith.constant dense<0.000000e+00> : vector<120x72xf32>
    %130 = tpu.matmul %127, %129, %cst_125 {dimension_numbers = #tpu.dot_dimension_numbers<[1], [0], [0], [1], [0, 0, 1, 1], [], []>} : vector<120x160xf32>, vector<160x72xf32>, vector<120x72xf32> -> vector<120x72xf32>
    %131 = arith.addf %125, %130 : vector<120x72xf32>
    %c0_126 = arith.constant 0 : index
    %c0_127 = arith.constant 0 : index
    %132 = vector.load %arg5[%c0_126, %c0_127] : memref<1x72xf32, #tpu.memory_space<vmem>>, vector<1x72xf32>
    %133 = vector.broadcast %132 : vector<1x72xf32> to vector<120x72xf32>
    %134 = arith.addf %131, %133 : vector<120x72xf32>
    %cst_128 = arith.constant 0.000000e+00 : f32
    %135 = vector.broadcast %cst_128 : f32 to vector<120x72xf32>
    %136 = arith.cmpf ogt, %134, %135 : vector<120x72xf32>
    %cst_129 = arith.constant -1.19420469 : f32
    %137 = vector.broadcast %cst_129 : f32 to vector<120x72xf32>
    %138 = arith.mulf %134, %137 : vector<120x72xf32>
    %139 = arith.select %136, %134, %138 : vector<120x72xi1>, vector<120x72xf32>
    %c0_130 = arith.constant 0 : index
    %c0_131 = arith.constant 0 : index
    %c0_132 = arith.constant 0 : index
    %140 = vector.load %arg6[%c0_130, %c0_131, %c0_132] : memref<1x120x72xf32, #tpu.memory_space<vmem>>, vector<1x120x72xf32>
    %141 = vector.shape_cast %140 : vector<1x120x72xf32> to vector<120x72xf32>
    %142 = vector.shape_cast %139 : vector<120x72xf32> to vector<1x120x72xf32>
    tpu.vector_store %arg6[%c0_130, %c0_131, %c0_132], %142 {strides = array<i32>} : memref<1x120x72xf32, #tpu.memory_space<vmem>>, vector<1x120x72xf32>,
    return
  }
  func.func @transform_0(%arg0: i32) -> (i32, i32) {
    %c0_i32 = arith.constant 0 : i32
    %c0_i32_0 = arith.constant 0 : i32
    %c0_i32_1 = arith.constant 0 : i32
    return %c0_i32, %c0_i32_0 : i32, i32
  }
  func.func @transform_1(%arg0: i32) -> (i32, i32) {
    %c0_i32 = arith.constant 0 : i32
    %c0_i32_0 = arith.constant 0 : i32
    %c0_i32_1 = arith.constant 0 : i32
    return %c0_i32, %c0_i32_0 : i32, i32
  }
  func.func @transform_2(%arg0: i32) -> (i32, i32) {
    %c0_i32 = arith.constant 0 : i32
    %c0_i32_0 = arith.constant 0 : i32
    %c0_i32_1 = arith.constant 0 : i32
    return %c0_i32, %c0_i32_0 : i32, i32
  }
  func.func @transform_3(%arg0: i32) -> (i32, i32, i32, i32) {
    %c0_i32 = arith.constant 0 : i32
    %c0_i32_0 = arith.constant 0 : i32
    %c0_i32_1 = arith.constant 0 : i32
    %c0_i32_2 = arith.constant 0 : i32
    return %arg0, %c0_i32, %c0_i32_0, %c0_i32_1 : i32, i32, i32, i32
  }
  func.func @transform_4(%arg0: i32) -> (i32, i32) {
    %c0_i32 = arith.constant 0 : i32
    %c0_i32_0 = arith.constant 0 : i32
    %c0_i32_1 = arith.constant 0 : i32
    return %c0_i32, %c0_i32_0 : i32, i32
  }
  func.func @transform_5(%arg0: i32) -> (i32, i32, i32) {
    %c0_i32 = arith.constant 0 : i32
    %c0_i32_0 = arith.constant 0 : i32
    %c0_i32_1 = arith.constant 0 : i32
    return %arg0, %c0_i32, %c0_i32_0 : i32, i32, i32
  }
}

</mosaic_0001>

<llo_original>
// kernel: model_forward.1
$region0: #{model_forward.1}
  #allocation0 [shape = 'u32[]', space=smem, size = 0x4, offset = 0x4, fixed_abs, tag = 'smem constant byte address 0x4 - core index']
  #allocation1 [shape = 'u32[144,128]{1,0:T(1,128)}', space=vmem, size = 0x12000, scoped, tag = 'internal scratch']
  #allocation2 [shape = 'f32[9,32,160]{2,1,0:T(8,128)}', space=vmem, size = 0x48000, scoped, tag = 'scratch operand']
  %s0 = inlined_call_operand.vmem [shape: f32[168,576], index: 0, kind: input, shape index: {}]
  %s1 = inlined_call_operand.vmem [shape: f32[576,160], index: 1, kind: input, shape index: {}]
  %s2 = inlined_call_operand.vmem [shape: f32[1,160], index: 2, kind: input, shape index: {}]
  %s3 = inlined_call_operand.vmem [shape: f32[2,15,160,72], index: 3, kind: input, shape index: {}]
  %s4 = inlined_call_operand.vmem [shape: f32[1,72], index: 4, kind: input, shape index: {}]
  %s5 = inlined_call_operand.vmem [shape: f32[2,120,72], index: 5, kind: output, shape index: {}]
  %s6 = sld [smem:[#allocation0]]
  $region53: #{model_forward.1} parent=0
    _
  %s8 = ssub.s32 1, %s6
  %s9 = scalar_select 0, %s8, %s6
  loop: start=0, step=1, limit=4
  $region2: #{model_forward.1} parent=0 // loop_pre_header
    _
  $region3: #{model_forward.1} parent=0 // loop_header
    %s11 = sphi 0, %s15
    %p12 = scmp.ge.s32.totalorder %s11, 4
    %s19 = sphi 0, %s19
    %s21 = sphi 0, %s19
    %s22 = sphi 0, %s21
    %s36 = sphi 0, %s22
    %s40 = sphi 0, %s40
    %s42 = sphi 0, %s40
    %s43 = sphi 0, %s42
    %s57 = sphi 0, %s43
    %s61 = sphi 0, %s61
    %s63 = sphi 0, %s61
    %s64 = sphi 0, %s63
    %s78 = sphi 0, %s64
    %s84 = sphi 0, %s86
    %s87 = sphi 0, %s84
    %s88 = sphi 0, %s87
    %s104 = sphi 0, %s88
    %s108 = sphi 0, %s108
    %s110 = sphi 0, %s108
    %s111 = sphi 0, %s110
    %s125 = sphi 0, %s111
    %s131 = sphi 0, %s133
    %s134 = sphi 0, %s131
    %s135 = sphi 0, %s134
    %s151 = sphi 0, %s135
  $region4: #{model_forward.1} parent=0 // loop_header_branch
    %14 = sbr.rel (%p12) target = $region8
  $region5: #{model_forward.1} parent=0 // loop_body
    %s16 = ssub.s32 %s11, 1
    %s17 = ssub.s32 %s11, 2
    %s18 = sadd.s32 %s11, 1
    %s20 = sadd.s32 %s19, 1
    %p23 = scmp.eq.s32.totalorder %s11, 1
    %p24 = scmp.ne.s32.totalorder %s19, %s21
    %p25 = scmp.eq.s32.totalorder %s11, 0
    %p26 = por %p24, %p25
    %p27 = scmp.ne.s32.totalorder %s19, %s21
    %p28 = scmp.eq.s32.totalorder %s16, 1
    %p29 = por %p27, %p28
    %p30 = scmp.ne.s32.totalorder %s21, %s22
    %p31 = scmp.eq.s32.totalorder %s16, 0
    %p32 = por %p30, %p31
    %p33 = scmp.ne.s32.totalorder %s21, %s22
    %p34 = scmp.eq.s32.totalorder %s17, 1
    %p35 = por %p33, %p34
    %p37 = scmp.ne.s32.totalorder %s22, %s36
    %p38 = scmp.eq.s32.totalorder %s17, 0
    %p39 = por %p37, %p38
    %s41 = sadd.s32 %s40, 1
    %p44 = scmp.eq.s32.totalorder %s11, 1
    %p45 = scmp.ne.s32.totalorder %s40, %s42
    %p46 = scmp.eq.s32.totalorder %s11, 0
    %p47 = por %p45, %p46
    %p48 = scmp.ne.s32.totalorder %s40, %s42
    %p49 = scmp.eq.s32.totalorder %s16, 1
    %p50 = por %p48, %p49
    %p51 = scmp.ne.s32.totalorder %s42, %s43
    %p52 = scmp.eq.s32.totalorder %s16, 0
    %p53 = por %p51, %p52
    %p54 = scmp.ne.s32.totalorder %s42, %s43
    %p55 = scmp.eq.s32.totalorder %s17, 1
    %p56 = por %p54, %p55
    %p58 = scmp.ne.s32.totalorder %s43, %s57
    %p59 = scmp.eq.s32.totalorder %s17, 0
    %p60 = por %p58, %p59
    %s62 = sadd.s32 %s61, 1
    %p65 = scmp.eq.s32.totalorder %s11, 1
    %p66 = scmp.ne.s32.totalorder %s61, %s63
    %p67 = scmp.eq.s32.totalorder %s11, 0
    %p68 = por %p66, %p67
    %p69 = scmp.ne.s32.totalorder %s61, %s63
    %p70 = scmp.eq.s32.totalorder %s16, 1
    %p71 = por %p69, %p70
    %p72 = scmp.ne.s32.totalorder %s63, %s64
    %p73 = scmp.eq.s32.totalorder %s16, 0
    %p74 = por %p72, %p73
    %p75 = scmp.ne.s32.totalorder %s63, %s64
    %p76 = scmp.eq.s32.totalorder %s17, 1
    %p77 = por %p75, %p76
    %p79 = scmp.ne.s32.totalorder %s64, %s78
    %p80 = scmp.eq.s32.totalorder %s17, 0
    %p81 = por %p79, %p80
    %s82 = ssub.s32 %s11, %s18
    %p83 = scmp.eq.s32.totalorder %s82, 0
    %s85 = sadd.s32 %s84, 1
    %s86 = scalar_select %p83, %s84, %s85
    %p89 = pneg %p83
    %p90 = scmp.eq.s32.totalorder %s11, 1
    %p91 = por %p89, %p90
    %p92 = scmp.ne.s32.totalorder %s84, %s87
    %p93 = scmp.eq.s32.totalorder %s11, 0
    %p94 = por %p92, %p93
    %p95 = scmp.ne.s32.totalorder %s84, %s87
    %p96 = scmp.eq.s32.totalorder %s16, 1
    %p97 = por %p95, %p96
    %p98 = scmp.ne.s32.totalorder %s87, %s88
    %p99 = scmp.eq.s32.totalorder %s16, 0
    %p100 = por %p98, %p99
    %p101 = scmp.ne.s32.totalorder %s87, %s88
    %p102 = scmp.eq.s32.totalorder %s17, 1
    %p103 = por %p101, %p102
    %p105 = scmp.ne.s32.totalorder %s88, %s104
    %p106 = scmp.eq.s32.totalorder %s17, 0
    %p107 = por %p105, %p106
    %s109 = sadd.s32 %s108, 1
    %p112 = scmp.eq.s32.totalorder %s11, 1
    %p113 = scmp.ne.s32.totalorder %s108, %s110
    %p114 = scmp.eq.s32.totalorder %s11, 0
    %p115 = por %p113, %p114
    %p116 = scmp.ne.s32.totalorder %s108, %s110
    %p117 = scmp.eq.s32.totalorder %s16, 1
    %p118 = por %p116, %p117
    %p119 = scmp.ne.s32.totalorder %s110, %s111
    %p120 = scmp.eq.s32.totalorder %s16, 0
    %p121 = por %p119, %p120
    %p122 = scmp.ne.s32.totalorder %s110, %s111
    %p123 = scmp.eq.s32.totalorder %s17, 1
    %p124 = por %p122, %p123
    %p126 = scmp.ne.s32.totalorder %s111, %s125
    %p127 = scmp.eq.s32.totalorder %s17, 0
    %p128 = por %p126, %p127
    %s129 = ssub.s32 %s11, %s18
    %p130 = scmp.eq.s32.totalorder %s129, 0
    %s132 = sadd.s32 %s131, 1
    %s133 = scalar_select %p130, %s131, %s132
    %p136 = pneg %p130
    %p137 = scmp.eq.s32.totalorder %s11, 1
    %p138 = por %p136, %p137
    %p139 = scmp.ne.s32.totalorder %s131, %s134
    %p140 = scmp.eq.s32.totalorder %s11, 0
    %p141 = por %p139, %p140
    %p142 = scmp.ne.s32.totalorder %s131, %s134
    %p143 = scmp.eq.s32.totalorder %s16, 1
    %p144 = por %p142, %p143
    %p145 = scmp.ne.s32.totalorder %s134, %s135
    %p146 = scmp.eq.s32.totalorder %s16, 0
    %p147 = por %p145, %p146
    %p148 = scmp.ne.s32.totalorder %s134, %s135
    %p149 = scmp.eq.s32.totalorder %s17, 1
    %p150 = por %p148, %p149
    %p152 = scmp.ne.s32.totalorder %s135, %s151
    %p153 = scmp.eq.s32.totalorder %s17, 0
    %p154 = por %p152, %p153
    %p155 = scmp.le.s32.totalorder 1, %s11
    %p156 = scmp.lt.s32.totalorder %s11, 3
    %p157 = pnand %p155, %p156
    %p158 = pneg %p157
    // Predicated region
    $region9: #{model_forward.1} parent=5 // pred_check
      _
    $region10: #{model_forward.1} parent=5 // pred_check_branch
      %160 = sbr.rel (%p157) target = $region12
    $region11: #{model_forward.1} parent=5 // pred_region
      %s161 = ssub.s32 %s11, 1
      // Predicated region
      $region13: #{model_forward.1} parent=11 // pred_check
        %p162 = pneg %p32
      $region14: #{model_forward.1} parent=11 // pred_check_branch
        %164 = sbr.rel (%p162) target = $region16
      $region15: #{model_forward.1} parent=11 // pred_region
        _
      $region16: #{model_forward.1} parent=11 // pred_fallthru
        _
      // Predicated region
      $region17: #{model_forward.1} parent=11 // pred_check
        %p165 = pneg %p53
      $region18: #{model_forward.1} parent=11 // pred_check_branch
        %167 = sbr.rel (%p165) target = $region20
      $region19: #{model_forward.1} parent=11 // pred_region
        _
      $region20: #{model_forward.1} parent=11 // pred_fallthru
        _
      // Predicated region
      $region21: #{model_forward.1} parent=11 // pred_check
        %p168 = pneg %p74
      $region22: #{model_forward.1} parent=11 // pred_check_branch
        %170 = sbr.rel (%p168) target = $region24
      $region23: #{model_forward.1} parent=11 // pred_region
        _
      $region24: #{model_forward.1} parent=11 // pred_fallthru
        _
      // Predicated region
      $region25: #{model_forward.1} parent=11 // pred_check
        %p171 = pneg %p121
      $region26: #{model_forward.1} parent=11 // pred_check_branch
        %173 = sbr.rel (%p171) target = $region28
      $region27: #{model_forward.1} parent=11 // pred_region
        _
      $region28: #{model_forward.1} parent=11 // pred_fallthru
        _
    $region12: #{model_forward.1} parent=5 // pred_fallthru
      _
    %p174 = scmp.lt.s32.totalorder %s11, 2
    // Predicated region
    $region29: #{model_forward.1} parent=5 // pred_check
      %p175 = pneg %p174
    $region30: #{model_forward.1} parent=5 // pred_check_branch
      %177 = sbr.rel (%p175) target = $region32
    $region31: #{model_forward.1} parent=5 // pred_region
      // Predicated region
      $region33: #{model_forward.1} parent=31 // pred_check
        %p178 = pneg %p94
      $region34: #{model_forward.1} parent=31 // pred_check_branch
        %180 = sbr.rel (%p178) target = $region36
      $region35: #{model_forward.1} parent=31 // pred_region
        %p181 = scmp.lt.s32.totalorder %s11, 1
        %s182 = scalar_select %p181, %s11, 1
        %s183 = smul.addr %s182, 300
        %s184 = smul.addr %s183, 8
        %s185 = scalar_lea.vmem %s3, %s184
      $region36: #{model_forward.1} parent=31 // pred_fallthru
        _
    $region32: #{model_forward.1} parent=5 // pred_fallthru
      _
    %p186 = scmp.le.s32.totalorder 1, %s11
    %p187 = scmp.lt.s32.totalorder %s11, 3
    %p188 = pnand %p186, %p187
    %p189 = pneg %p188
    // Predicated region
    $region37: #{model_forward.1} parent=5 // pred_check
      _
    $region38: #{model_forward.1} parent=5 // pred_check_branch
      %191 = sbr.rel (%p188) target = $region40
    $region39: #{model_forward.1} parent=5 // pred_region
      %s192 = ssub.s32 %s11, 1
      %p193 = pneg %p32
      %p194 = pneg %p29
      %p195 = pneg %p53
      %p196 = pneg %p50
      %p197 = pneg %p74
      %p198 = pneg %p71
      %p199 = scmp.lt.s32.totalorder %s16, 1
      %s200 = scalar_select %p199, %s16, 1
      %s201 = smul.addr %s200, 300
      %s202 = smul.addr %s201, 8
      %s203 = scalar_lea.vmem %s3, %s202
      %p204 = pneg %p100
      %p205 = pneg %p97
      %p206 = pneg %p121
      %p207 = pneg %p118
      %p208 = pneg %p147
      %p209 = pneg %p144
      %p210 = scmp.lt.s32.totalorder %s16, 1
      %s211 = scalar_select %p210, %s16, 1
      %s212 = smul.addr %s211, 15
      %s213 = smul.addr %s212, 8
      %s214 = scalar_lea.vmem %s5, %s213
      %p215 = scmp.lt.s32.totalorder %s16, 1
      %s216 = scalar_select %p215, %s16, 1
      %s217 = smul.addr %s216, 300
      %s218 = smul.addr %s217, 8
      %s219 = scalar_lea.vmem %s3, %s218
      %p220 = scmp.lt.s32.totalorder %s16, 1
      %s221 = scalar_select %p220, %s16, 1
      %s222 = smul.addr %s221, 15
      %s223 = smul.addr %s222, 8
      %s224 = scalar_lea.vmem %s5, %s223
      %v225 = vld [vmem:[%s0] sm:$0xff]
      %v226 = vld [vmem:[%s0 + $0x8] sm:$0xff]
      %v227 = vld [vmem:[%s0 + $0x10] sm:$0xff]
      %v228 = vld [vmem:[%s0 + $0x18] sm:$0xff]
      %v229 = vld [vmem:[%s0 + $0x20] sm:$0xff]
      %v230 = vld [vmem:[%s0 + $0x28] sm:$0xff]
      %v231 = vld [vmem:[%s0 + $0x30] sm:$0xff]
      %v232 = vld [vmem:[%s0 + $0x38] sm:$0xff]
      %v233 = vld [vmem:[%s0 + $0x40] sm:$0xff]
      %v234 = vld [vmem:[%s0 + $0x48] sm:$0xff]
      %v235 = vld [vmem:[%s0 + $0x50] sm:$0xff]
      %v236 = vld [vmem:[%s0 + $0x58] sm:$0xff]
      %v237 = vld [vmem:[%s0 + $0x60] sm:$0xff]
      %v238 = vld [vmem:[%s0 + $0x68] sm:$0xff]
      %v239 = vld [vmem:[%s0 + $0x70] sm:$0xff]
      %v240 = vld [vmem:[%s0 + $0x78] sm:$0xff]
      %v241 = vld [vmem:[%s0 + $0x80] sm:$0xff]
      %v242 = vld [vmem:[%s0 + $0x88] sm:$0xff]
      %v243 = vld [vmem:[%s0 + $0x90] sm:$0xff]
      %v244 = vld [vmem:[%s0 + $0x98] sm:$0xff]
      %v245 = vld [vmem:[%s0 + $0xa0] sm:$0xff]
      %v246 = vld [vmem:[%s0 + $0xa8] sm:$0xff]
      %v247 = vld [vmem:[%s0 + $0xb0] sm:$0xff]
      %v248 = vld [vmem:[%s0 + $0xb8] sm:$0xff]
      %v249 = vld [vmem:[%s0 + $0xc0] sm:$0xff]
      %v250 = vld [vmem:[%s0 + $0xc8] sm:$0xff]
      %v251 = vld [vmem:[%s0 + $0xd0] sm:$0xff]
      %v252 = vld [vmem:[%s0 + $0xd8] sm:$0xff]
      %v253 = vld [vmem:[%s0 + $0xe0] sm:$0xff]
      %v254 = vld [vmem:[%s0 + $0xe8] sm:$0xff]
      %v255 = vld [vmem:[%s0 + $0xf0] sm:$0xff]
      %v256 = vld [vmem:[%s0 + $0xf8] sm:$0xff]
      %v257 = vld [vmem:[%s0 + $0x100] sm:$0xff]
      %v258 = vld [vmem:[%s0 + $0x108] sm:$0xff]
      %v259 = vld [vmem:[%s0 + $0x110] sm:$0xff]
      %v260 = vld [vmem:[%s0 + $0x118] sm:$0xff]
      %v261 = vld [vmem:[%s0 + $0x120] sm:$0xff]
      %v262 = vld [vmem:[%s0 + $0x128] sm:$0xff]
      %v263 = vld [vmem:[%s0 + $0x130] sm:$0xff]
      %v264 = vld [vmem:[%s0 + $0x138] sm:$0xff]
      %v265 = vld [vmem:[%s0 + $0x140] sm:$0xff]
      %v266 = vld [vmem:[%s0 + $0x148] sm:$0xff]
      %v267 = vld [vmem:[%s0 + $0x150] sm:$0xff]
      %v268 = vld [vmem:[%s0 + $0x158] sm:$0xff]
      %v269 = vld [vmem:[%s0 + $0x160] sm:$0xff]
      %v270 = vld [vmem:[%s0 + $0x168] sm:$0xff]
      %v271 = vld [vmem:[%s0 + $0x170] sm:$0xff]
      %v272 = vld [vmem:[%s0 + $0x178] sm:$0xff]
      %v273 = vld [vmem:[%s0 + $0x180] sm:$0xff]
      %v274 = vld [vmem:[%s0 + $0x188] sm:$0xff]
      %v275 = vld [vmem:[%s0 + $0x190] sm:$0xff]
      %v276 = vld [vmem:[%s0 + $0x198] sm:$0xff]
      %v277 = vld [vmem:[%s0 + $0x1a0] sm:$0xff]
      %v278 = vld [vmem:[%s0 + $0x1a8] sm:$0xff]
      %v279 = vld [vmem:[%s0 + $0x1b0] sm:$0xff]
      %v280 = vld [vmem:[%s0 + $0x1b8] sm:$0xff]
      %v281 = vld [vmem:[%s0 + $0x1c0] sm:$0xff]
      %v282 = vld [vmem:[%s0 + $0x1c8] sm:$0xff]
      %v283 = vld [vmem:[%s0 + $0x1d0] sm:$0xff]
      %v284 = vld [vmem:[%s0 + $0x1d8] sm:$0xff]
      %v285 = vld [vmem:[%s0 + $0x1e0] sm:$0xff]
      %v286 = vld [vmem:[%s0 + $0x1e8] sm:$0xff]
      %v287 = vld [vmem:[%s0 + $0x1f0] sm:$0xff]
      %v288 = vld [vmem:[%s0 + $0x1f8] sm:$0xff]
      %v289 = vld [vmem:[%s0 + $0x200] sm:$0xff]
      %v290 = vld [vmem:[%s0 + $0x208] sm:$0xff]
      %v291 = vld [vmem:[%s0 + $0x210] sm:$0xff]
      %v292 = vld [vmem:[%s0 + $0x218] sm:$0xff]
      %v293 = vld [vmem:[%s0 + $0x220] sm:$0xff]
      %v294 = vld [vmem:[%s0 + $0x228] sm:$0xff]
      %v295 = vld [vmem:[%s0 + $0x230] sm:$0xff]
      %v296 = vld [vmem:[%s0 + $0x238] sm:$0xff]
      %v297 = vld [vmem:[%s0 + $0x240] sm:$0xff]
      %v298 = vld [vmem:[%s0 + $0x248] sm:$0xff]
      %v299 = vld [vmem:[%s0 + $0x250] sm:$0xff]
      %v300 = vld [vmem:[%s0 + $0x258] sm:$0xff]
      %v301 = vld [vmem:[%s0 + $0x260] sm:$0xff]
      %v302 = vld [vmem:[%s0 + $0x268] sm:$0xff]
      %v303 = vld [vmem:[%s0 + $0x270] sm:$0xff]
      %v304 = vld [vmem:[%s0 + $0x278] sm:$0xff]
      %v305 = vld [vmem:[%s0 + $0x280] sm:$0xff]
      %v306 = vld [vmem:[%s0 + $0x288] sm:$0xff]
      %v307 = vld [vmem:[%s0 + $0x290] sm:$0xff]
      %v308 = vld [vmem:[%s0 + $0x298] sm:$0xff]
      %v309 = vld [vmem:[%s0 + $0x2a0] sm:$0xff]
      %v310 = vld [vmem:[%s0 + $0x2a8] sm:$0xff]
      %v311 = vld [vmem:[%s0 + $0x2b0] sm:$0xff]
      %v312 = vld [vmem:[%s0 + $0x2b8] sm:$0xff]
      %v313 = vld [vmem:[%s0 + $0x2c0] sm:$0xff]
      %v314 = vld [vmem:[%s0 + $0x2c8] sm:$0xff]
      %v315 = vld [vmem:[%s0 + $0x2d0] sm:$0xff]
      %v316 = vld [vmem:[%s0 + $0x2d8] sm:$0xff]
      %v317 = vld [vmem:[%s0 + $0x2e0] sm:$0xff]
      %v318 = vld [vmem:[%s0 + $0x2e8] sm:$0xff]
      %v319 = vld [vmem:[%s0 + $0x2f0] sm:$0xff]
      %v320 = vld [vmem:[%s0 + $0x2f8] sm:$0xff]
      %v321 = vld [vmem:[%s0 + $0x300] sm:$0xff]
      %v322 = vld [vmem:[%s0 + $0x308] sm:$0xff]
      %v323 = vld [vmem:[%s0 + $0x310] sm:$0xff]
      %v324 = vld [vmem:[%s0 + $0x318] sm:$0xff]
      %v325 = vld [vmem:[%s0 + $0x320] sm:$0xff]
      %v326 = vld [vmem:[%s0 + $0x328] sm:$0xff]
      %v327 = vld [vmem:[%s0 + $0x330] sm:$0xff]
      %v328 = vld [vmem:[%s0 + $0x338] sm:$0xff]
      %v329 = vld [vmem:[%s0 + $0x340] sm:$0xff]
      %v330 = vld [vmem:[%s1] sm:$0xff]
      %v331 = vld [vmem:[%s1 + $0x8] sm:$0xff]
      %v332 = vld [vmem:[%s1 + $0x10] sm:$0xff]
      %v333 = vld [vmem:[%s1 + $0x18] sm:$0xff]
      %v334 = vld [vmem:[%s1 + $0x20] sm:$0xff]
      %v335 = vld [vmem:[%s1 + $0x28] sm:$0xff]
      %v336 = vld [vmem:[%s1 + $0x30] sm:$0xff]
      %v337 = vld [vmem:[%s1 + $0x38] sm:$0xff]
      %v338 = vld [vmem:[%s1 + $0x40] sm:$0xff]
      %v339 = vld [vmem:[%s1 + $0x48] sm:$0xff]
      %v340 = vld [vmem:[%s1 + $0x50] sm:$0xff]
      %v341 = vld [vmem:[%s1 + $0x58] sm:$0xff]
      %v342 = vld [vmem:[%s1 + $0x60] sm:$0xff]
      %v343 = vld [vmem:[%s1 + $0x68] sm:$0xff]
      %v344 = vld [vmem:[%s1 + $0x70] sm:$0xff]
      %v345 = vld [vmem:[%s1 + $0x78] sm:$0xff]
      %v346 = vld [vmem:[%s1 + $0x80] sm:$0xff]
      %v347 = vld [vmem:[%s1 + $0x88] sm:$0xff]
      %v348 = vld [vmem:[%s1 + $0x90] sm:$0xff]
      %v349 = vld [vmem:[%s1 + $0x98] sm:$0xff]
      %v350 = vld [vmem:[%s1 + $0xa0] sm:$0xff]
      %v351 = vld [vmem:[%s1 + $0xa8] sm:$0xff]
      %v352 = vld [vmem:[%s1 + $0xb0] sm:$0xff]
      %v353 = vld [vmem:[%s1 + $0xb8] sm:$0xff]
      %v354 = vld [vmem:[%s1 + $0xc0] sm:$0xff]
      %v355 = vld [vmem:[%s1 + $0xc8] sm:$0xff]
      %v356 = vld [vmem:[%s1 + $0xd0] sm:$0xff]
      %v357 = vld [vmem:[%s1 + $0xd8] sm:$0xff]
      %v358 = vld [vmem:[%s1 + $0xe0] sm:$0xff]
      %v359 = vld [vmem:[%s1 + $0xe8] sm:$0xff]
      %v360 = vld [vmem:[%s1 + $0xf0] sm:$0xff]
      %v361 = vld [vmem:[%s1 + $0xf8] sm:$0xff]
      %v362 = vld [vmem:[%s1 + $0x100] sm:$0xff]
      %v363 = vld [vmem:[%s1 + $0x108] sm:$0xff]
      %v364 = vld [vmem:[%s1 + $0x110] sm:$0xff]
      %v365 = vld [vmem:[%s1 + $0x118] sm:$0xff]
      %v366 = vld [vmem:[%s1 + $0x120] sm:$0xff]
      %v367 = vld [vmem:[%s1 + $0x128] sm:$0xff]
      %v368 = vld [vmem:[%s1 + $0x130] sm:$0xff]
      %v369 = vld [vmem:[%s1 + $0x138] sm:$0xff]
      %v370 = vld [vmem:[%s1 + $0x140] sm:$0xff]
      %v371 = vld [vmem:[%s1 + $0x148] sm:$0xff]
      %v372 = vld [vmem:[%s1 + $0x150] sm:$0xff]
      %v373 = vld [vmem:[%s1 + $0x158] sm:$0xff]
      %v374 = vld [vmem:[%s1 + $0x160] sm:$0xff]
      %v375 = vld [vmem:[%s1 + $0x168] sm:$0xff]
      %v376 = vld [vmem:[%s1 + $0x170] sm:$0xff]
      %v377 = vld [vmem:[%s1 + $0x178] sm:$0xff]
      %v378 = vld [vmem:[%s1 + $0x180] sm:$0xff]
      %v379 = vld [vmem:[%s1 + $0x188] sm:$0xff]
      %v380 = vld [vmem:[%s1 + $0x190] sm:$0xff]
      %v381 = vld [vmem:[%s1 + $0x198] sm:$0xff]
      %v382 = vld [vmem:[%s1 + $0x1a0] sm:$0xff]
      %v383 = vld [vmem:[%s1 + $0x1a8] sm:$0xff]
      %v384 = vld [vmem:[%s1 + $0x1b0] sm:$0xff]
      %v385 = vld [vmem:[%s1 + $0x1b8] sm:$0xff]
      %v386 = vld [vmem:[%s1 + $0x1c0] sm:$0xff]
      %v387 = vld [vmem:[%s1 + $0x1c8] sm:$0xff]
      %v388 = vld [vmem:[%s1 + $0x1d0] sm:$0xff]
      %v389 = vld [vmem:[%s1 + $0x1d8] sm:$0xff]
      %v390 = vld [vmem:[%s1 + $0x1e0] sm:$0xff]
      %v391 = vld [vmem:[%s1 + $0x1e8] sm:$0xff]
      %v392 = vld [vmem:[%s1 + $0x1f0] sm:$0xff]
      %v393 = vld [vmem:[%s1 + $0x1f8] sm:$0xff]
      %v394 = vld [vmem:[%s1 + $0x200] sm:$0xff]
      %v395 = vld [vmem:[%s1 + $0x208] sm:$0xff]
      %v396 = vld [vmem:[%s1 + $0x210] sm:$0xff]
      %v397 = vld [vmem:[%s1 + $0x218] sm:$0xff]
      %v398 = vld [vmem:[%s1 + $0x220] sm:$0xff]
      %v399 = vld [vmem:[%s1 + $0x228] sm:$0xff]
      %v400 = vld [vmem:[%s1 + $0x230] sm:$0xff]
      %v401 = vld [vmem:[%s1 + $0x238] sm:$0xff]
      %v402 = vld [vmem:[%s1 + $0x240] sm:$0xff]
      %v403 = vld [vmem:[%s1 + $0x248] sm:$0xff]
      %v404 = vld [vmem:[%s1 + $0x250] sm:$0xff]
      %v405 = vld [vmem:[%s1 + $0x258] sm:$0xff]
      %v406 = vld [vmem:[%s1 + $0x260] sm:$0xff]
      %v407 = vld [vmem:[%s1 + $0x268] sm:$0xff]
      %v408 = vld [vmem:[%s1 + $0x270] sm:$0xff]
      %v409 = vld [vmem:[%s1 + $0x278] sm:$0xff]
      %v410 = vld [vmem:[%s1 + $0x280] sm:$0xff]
      %v411 = vld [vmem:[%s1 + $0x288] sm:$0xff]
      %v412 = vld [vmem:[%s1 + $0x290] sm:$0xff]
      %v413 = vld [vmem:[%s1 + $0x298] sm:$0xff]
      %v414 = vld [vmem:[%s1 + $0x2a0] sm:$0xff]
      %v415 = vld [vmem:[%s1 + $0x2a8] sm:$0xff]
      %v416 = vld [vmem:[%s1 + $0x2b0] sm:$0xff]
      %v417 = vld [vmem:[%s1 + $0x2b8] sm:$0xff]
      %v418 = vld [vmem:[%s1 + $0x2c0] sm:$0xff]
      %v419 = vld [vmem:[%s1 + $0x2c8] sm:$0xff]
      %v420 = vld [vmem:[%s1 + $0x2d0] sm:$0xff]
      %v421 = vld [vmem:[%s1 + $0x2d8] sm:$0xff]
      %v422 = vld [vmem:[%s1 + $0x2e0] sm:$0xff]
      %v423 = vld [vmem:[%s1 + $0x2e8] sm:$0xff]
      %v424 = vld [vmem:[%s1 + $0x2f0] sm:$0xff]
      %v425 = vld [vmem:[%s1 + $0x2f8] sm:$0xff]
      %v426 = vld [vmem:[%s1 + $0x300] sm:$0xff]
      %v427 = vld [vmem:[%s1 + $0x308] sm:$0xff]
      %v428 = vld [vmem:[%s1 + $0x310] sm:$0xff]
      %v429 = vld [vmem:[%s1 + $0x318] sm:$0xff]
      %v430 = vld [vmem:[%s1 + $0x320] sm:$0xff]
      %v431 = vld [vmem:[%s1 + $0x328] sm:$0xff]
      %v432 = vld [vmem:[%s1 + $0x330] sm:$0xff]
      %v433 = vld [vmem:[%s1 + $0x338] sm:$0xff]
      %v434 = vld [vmem:[%s1 + $0x340] sm:$0xff]
      %v435 = vld [vmem:[%s1 + $0x348] sm:$0xff]
      %v436 = vld [vmem:[%s1 + $0x350] sm:$0xff]
      %v437 = vld [vmem:[%s1 + $0x358] sm:$0xff]
      %v438 = vld [vmem:[%s1 + $0x360] sm:$0xff]
      %v439 = vld [vmem:[%s1 + $0x368] sm:$0xff]
      %v440 = vld [vmem:[%s1 + $0x370] sm:$0xff]
      %v441 = vld [vmem:[%s1 + $0x378] sm:$0xff]
      %v442 = vld [vmem:[%s1 + $0x380] sm:$0xff]
      %v443 = vld [vmem:[%s1 + $0x388] sm:$0xff]
      %v444 = vld [vmem:[%s1 + $0x390] sm:$0xff]
      %v445 = vld [vmem:[%s1 + $0x398] sm:$0xff]
      %v446 = vld [vmem:[%s1 + $0x3a0] sm:$0xff]
      %v447 = vld [vmem:[%s1 + $0x3a8] sm:$0xff]
      %v448 = vld [vmem:[%s1 + $0x3b0] sm:$0xff]
      %v449 = vld [vmem:[%s1 + $0x3b8] sm:$0xff]
      %v450 = vld [vmem:[%s1 + $0x3c0] sm:$0xff]
      %v451 = vld [vmem:[%s1 + $0x3c8] sm:$0xff]
      %v452 = vld [vmem:[%s1 + $0x3d0] sm:$0xff]
      %v453 = vld [vmem:[%s1 + $0x3d8] sm:$0xff]
      %v454 = vld [vmem:[%s1 + $0x3e0] sm:$0xff]
      %v455 = vld [vmem:[%s1 + $0x3e8] sm:$0xff]
      %v456 = vld [vmem:[%s1 + $0x3f0] sm:$0xff]
      %v457 = vld [vmem:[%s1 + $0x3f8] sm:$0xff]
      %v458 = vld [vmem:[%s1 + $0x400] sm:$0xff]
      %v459 = vld [vmem:[%s1 + $0x408] sm:$0xff]
      %v460 = vld [vmem:[%s1 + $0x410] sm:$0xff]
      %v461 = vld [vmem:[%s1 + $0x418] sm:$0xff]
      %v462 = vld [vmem:[%s1 + $0x420] sm:$0xff]
      %v463 = vld [vmem:[%s1 + $0x428] sm:$0xff]
      %v464 = vld [vmem:[%s1 + $0x430] sm:$0xff]
      %v465 = vld [vmem:[%s1 + $0x438] sm:$0xff]
      %v466 = vld [vmem:[%s1 + $0x440] sm:$0xff]
      %v467 = vld [vmem:[%s1 + $0x448] sm:$0xff]
      %v468 = vld [vmem:[%s1 + $0x450] sm:$0xff]
      %v469 = vld [vmem:[%s1 + $0x458] sm:$0xff]
      %v470 = vld [vmem:[%s1 + $0x460] sm:$0xff]
      %v471 = vld [vmem:[%s1 + $0x468] sm:$0xff]
      %v472 = vld [vmem:[%s1 + $0x470] sm:$0xff]
      %v473 = vld [vmem:[%s1 + $0x478] sm:$0xff]
      %v474 = vld [vmem:[%s2] sm:$0x3]
      %v476 = vlaneseq
      %v477 = vshrl.u32 %v476, 7
      %v478 = vsub.s32 0, %v477
      %v479 = vrot.slane %v474, %v478
      %v480 = vlaneseq
      %v481 = vshrl.u32 %v480, 7
      %v482 = vsub.s32 1, %v481
      %v483 = vrot.slane %v474, %v482
      %vm486 = vcmask 523264
      %v488 = vsel %vm486, %v229, 0
      %v491 = vsel %vm486, %v234, 0
      %v494 = vsel %vm486, %v239, 0
      %v497 = vsel %vm486, %v244, 0
      %v500 = vsel %vm486, %v249, 0
      %v503 = vsel %vm486, %v254, 0
      %v506 = vsel %vm486, %v259, 0
      %v509 = vsel %vm486, %v264, 0
      %v512 = vsel %vm486, %v269, 0
      %v515 = vsel %vm486, %v274, 0
      %v518 = vsel %vm486, %v279, 0
      %v521 = vsel %vm486, %v284, 0
      %v524 = vsel %vm486, %v289, 0
      %v527 = vsel %vm486, %v294, 0
      %v530 = vsel %vm486, %v299, 0
      %v533 = vsel %vm486, %v304, 0
      %v536 = vsel %vm486, %v309, 0
      %v539 = vsel %vm486, %v314, 0
      %v542 = vsel %vm486, %v319, 0
      %v545 = vsel %vm486, %v324, 0
      %v548 = vsel %vm486, %v329, 0
      %550 = vmatprep.subr.mxu0 %v361
      %551 = vmatpush1.msra.mxu0 %v360
      %552 = vmatprep.subr.mxu0 %v359
      %553 = vmatpush1.msra.mxu0 %v358
      %554 = vmatprep.subr.mxu0 %v357
      %555 = vmatpush1.msra.mxu0 %v356
      %556 = vmatprep.subr.mxu0 %v355
      %557 = vmatpush1.msra.mxu0 %v354
      %558 = vmatprep.subr.mxu0 %v353
      %559 = vmatpush1.msra.mxu0 %v352
      %560 = vmatprep.subr.mxu0 %v351
      %561 = vmatpush1.msra.mxu0 %v350
      %562 = vmatprep.subr.mxu0 %v349
      %563 = vmatpush1.msra.mxu0 %v348
      %564 = vmatprep.subr.mxu0 %v347
      %565 = vmatpush1.msra.mxu0 %v346
      %566 = vmatprep.subr.mxu0 %v345
      %567 = vmatpush1.msra.mxu0 %v344
      %568 = vmatprep.subr.mxu0 %v343
      %569 = vmatpush1.msra.mxu0 %v342
      %570 = vmatprep.subr.mxu0 %v341
      %571 = vmatpush1.msra.mxu0 %v340
      %572 = vmatprep.subr.mxu0 %v339
      %573 = vmatpush1.msra.mxu0 %v338
      %574 = vmatprep.subr.mxu0 %v337
      %575 = vmatpush1.msra.mxu0 %v336
      %576 = vmatprep.subr.mxu0 %v335
      %577 = vmatpush1.msra.mxu0 %v334
      %578 = vmatprep.subr.mxu0 %v333
      %579 = vmatpush1.msra.mxu0 %v332
      %580 = vmatprep.subr.mxu0 %v331
      %581 = vmatpush1.msra.mxu0 %v330
      %582 = vmatprep.subr.mxu0 %v393
      %583 = vmatpush2.msra.mxu0 %v392
      %584 = vmatprep.subr.mxu0 %v391
      %585 = vmatpush2.msra.mxu0 %v390
      %586 = vmatprep.subr.mxu0 %v389
      %587 = vmatpush2.msra.mxu0 %v388
      %588 = vmatprep.subr.mxu0 %v387
      %589 = vmatpush2.msra.mxu0 %v386
      %590 = vmatprep.subr.mxu0 %v385
      %591 = vmatpush2.msra.mxu0 %v384
      %592 = vmatprep.subr.mxu0 %v383
      %593 = vmatpush2.msra.mxu0 %v382
      %594 = vmatprep.subr.mxu0 %v381
      %595 = vmatpush2.msra.mxu0 %v380
      %596 = vmatprep.subr.mxu0 %v379
      %597 = vmatpush2.msra.mxu0 %v378
      %598 = vmatprep.subr.mxu0 %v377
      %599 = vmatpush2.msra.mxu0 %v376
      %600 = vmatprep.subr.mxu0 %v375
      %601 = vmatpush2.msra.mxu0 %v374
      %602 = vmatprep.subr.mxu0 %v373
      %603 = vmatpush2.msra.mxu0 %v372
      %604 = vmatprep.subr.mxu0 %v371
      %605 = vmatpush2.msra.mxu0 %v370
      %606 = vmatprep.subr.mxu0 %v369
      %607 = vmatpush2.msra.mxu0 %v368
      %608 = vmatprep.subr.mxu0 %v367
      %609 = vmatpush2.msra.mxu0 %v366
      %610 = vmatprep.subr.mxu0 %v365
      %611 = vmatpush2.msra.mxu0 %v364
      %612 = vmatprep.subr.mxu0 %v363
      %613 = vmatpush2.msra.mxu0 %v362
      %614 = vmatprep.mubr.f32.mxu0 %v226
      %615 = vmatmul.mubr.f32.gmra.mxu0 %v225
      %v616 = vpop.f32.mrf.mxu0
      %v617 = vadd.f32 %v479, %v616
      %v618 = vpop.f32.mrf.mxu0
      %v619 = vadd.f32 %v483, %v618
      %620 = vmatprep.mubr.f32.mxu0 %v231
      %621 = vmatmul.mubr.f32.gmra.mxu0 %v230
      %v622 = vpop.f32.mrf.mxu0
      %v623 = vadd.f32 %v479, %v622
      %v624 = vpop.f32.mrf.mxu0
      %v625 = vadd.f32 %v483, %v624
      %626 = vmatprep.mubr.f32.mxu0 %v236
      %627 = vmatmul.mubr.f32.gmra.mxu0 %v235
      %v628 = vpop.f32.mrf.mxu0
      %v629 = vadd.f32 %v479, %v628
      %v630 = vpop.f32.mrf.mxu0
      %v631 = vadd.f32 %v483, %v630
      %632 = vmatprep.mubr.f32.mxu0 %v241
      %633 = vmatmul.mubr.f32.gmra.mxu0 %v240
      %v634 = vpop.f32.mrf.mxu0
      %v635 = vadd.f32 %v479, %v634
      %v636 = vpop.f32.mrf.mxu0
      %v637 = vadd.f32 %v483, %v636
      %638 = vmatprep.mubr.f32.mxu0 %v246
      %639 = vmatmul.mubr.f32.gmra.mxu0 %v245
      %v640 = vpop.f32.mrf.mxu0
      %v641 = vadd.f32 %v479, %v640
      %v642 = vpop.f32.mrf.mxu0
      %v643 = vadd.f32 %v483, %v642
      %644 = vmatprep.mubr.f32.mxu0 %v251
      %645 = vmatmul.mubr.f32.gmra.mxu0 %v250
      %v646 = vpop.f32.mrf.mxu0
      %v647 = vadd.f32 %v479, %v646
      %v648 = vpop.f32.mrf.mxu0
      %v649 = vadd.f32 %v483, %v648
      %650 = vmatprep.mubr.f32.mxu0 %v256
      %651 = vmatmul.mubr.f32.gmra.mxu0 %v255
      %v652 = vpop.f32.mrf.mxu0
      %v653 = vadd.f32 %v479, %v652
      %v654 = vpop.f32.mrf.mxu0
      %v655 = vadd.f32 %v483, %v654
      %656 = vmatprep.mubr.f32.mxu0 %v261
      %657 = vmatmul.mubr.f32.gmra.mxu0 %v260
      %v658 = vpop.f32.mrf.mxu0
      %v659 = vadd.f32 %v479, %v658
      %v660 = vpop.f32.mrf.mxu0
      %v661 = vadd.f32 %v483, %v660
      %662 = vmatprep.mubr.f32.mxu0 %v266
      %663 = vmatmul.mubr.f32.gmra.mxu0 %v265
      %v664 = vpop.f32.mrf.mxu0
      %v665 = vadd.f32 %v479, %v664
      %v666 = vpop.f32.mrf.mxu0
      %v667 = vadd.f32 %v483, %v666
      %668 = vmatprep.mubr.f32.mxu0 %v271
      %669 = vmatmul.mubr.f32.gmra.mxu0 %v270
      %v670 = vpop.f32.mrf.mxu0
      %v671 = vadd.f32 %v479, %v670
      %v672 = vpop.f32.mrf.mxu0
      %v673 = vadd.f32 %v483, %v672
      %674 = vmatprep.mubr.f32.mxu0 %v276
      %675 = vmatmul.mubr.f32.gmra.mxu0 %v275
      %v676 = vpop.f32.mrf.mxu0
      %v677 = vadd.f32 %v479, %v676
      %v678 = vpop.f32.mrf.mxu0
      %v679 = vadd.f32 %v483, %v678
      %680 = vmatprep.mubr.f32.mxu0 %v281
      %681 = vmatmul.mubr.f32.gmra.mxu0 %v280
      %v682 = vpop.f32.mrf.mxu0
      %v683 = vadd.f32 %v479, %v682
      %v684 = vpop.f32.mrf.mxu0
      %v685 = vadd.f32 %v483, %v684
      %686 = vmatprep.mubr.f32.mxu0 %v286
      %687 = vmatmul.mubr.f32.gmra.mxu0 %v285
      %v688 = vpop.f32.mrf.mxu0
      %v689 = vadd.f32 %v479, %v688
      %v690 = vpop.f32.mrf.mxu0
      %v691 = vadd.f32 %v483, %v690
      %692 = vmatprep.mubr.f32.mxu0 %v291
      %693 = vmatmul.mubr.f32.gmra.mxu0 %v290
      %v694 = vpop.f32.mrf.mxu0
      %v695 = vadd.f32 %v479, %v694
      %v696 = vpop.f32.mrf.mxu0
      %v697 = vadd.f32 %v483, %v696
      %698 = vmatprep.mubr.f32.mxu0 %v296
      %699 = vmatmul.mubr.f32.gmra.mxu0 %v295
      %v700 = vpop.f32.mrf.mxu0
      %v701 = vadd.f32 %v479, %v700
      %v702 = vpop.f32.mrf.mxu0
      %v703 = vadd.f32 %v483, %v702
      %704 = vmatprep.mubr.f32.mxu0 %v301
      %705 = vmatmul.mubr.f32.gmra.mxu0 %v300
      %v706 = vpop.f32.mrf.mxu0
      %v707 = vadd.f32 %v479, %v706
      %v708 = vpop.f32.mrf.mxu0
      %v709 = vadd.f32 %v483, %v708
      %710 = vmatprep.mubr.f32.mxu0 %v306
      %711 = vmatmul.mubr.f32.gmra.mxu0 %v305
      %v712 = vpop.f32.mrf.mxu0
      %v713 = vadd.f32 %v479, %v712
      %v714 = vpop.f32.mrf.mxu0
      %v715 = vadd.f32 %v483, %v714
      %716 = vmatprep.mubr.f32.mxu0 %v311
      %717 = vmatmul.mubr.f32.gmra.mxu0 %v310
      %v718 = vpop.f32.mrf.mxu0
      %v719 = vadd.f32 %v479, %v718
      %v720 = vpop.f32.mrf.mxu0
      %v721 = vadd.f32 %v483, %v720
      %722 = vmatprep.mubr.f32.mxu0 %v316
      %723 = vmatmul.mubr.f32.gmra.mxu0 %v315
      %v724 = vpop.f32.mrf.mxu0
      %v725 = vadd.f32 %v479, %v724
      %v726 = vpop.f32.mrf.mxu0
      %v727 = vadd.f32 %v483, %v726
      %728 = vmatprep.mubr.f32.mxu0 %v321
      %729 = vmatmul.mubr.f32.gmra.mxu0 %v320
      %v730 = vpop.f32.mrf.mxu0
      %v731 = vadd.f32 %v479, %v730
      %v732 = vpop.f32.mrf.mxu0
      %v733 = vadd.f32 %v483, %v732
      %734 = vmatprep.mubr.f32.mxu0 %v326
      %735 = vmatmul.mubr.f32.gmra.mxu0 %v325
      %v736 = vpop.f32.mrf.mxu0
      %v737 = vadd.f32 %v479, %v736
      %v738 = vpop.f32.mrf.mxu0
      %v739 = vadd.f32 %v483, %v738
      %740 = vdwg.mxu0
      %741 = vmatprep.subr.mxu0 %v425
      %742 = vmatpush1.msra.mxu0 %v424
      %743 = vmatprep.subr.mxu0 %v423
      %744 = vmatpush1.msra.mxu0 %v422
      %745 = vmatprep.subr.mxu0 %v421
      %746 = vmatpush1.msra.mxu0 %v420
      %747 = vmatprep.subr.mxu0 %v419
      %748 = vmatpush1.msra.mxu0 %v418
      %749 = vmatprep.subr.mxu0 %v417
      %750 = vmatpush1.msra.mxu0 %v416
      %751 = vmatprep.subr.mxu0 %v415
      %752 = vmatpush1.msra.mxu0 %v414
      %753 = vmatprep.subr.mxu0 %v413
      %754 = vmatpush1.msra.mxu0 %v412
      %755 = vmatprep.subr.mxu0 %v411
      %756 = vmatpush1.msra.mxu0 %v410
      %757 = vmatprep.subr.mxu0 %v409
      %758 = vmatpush1.msra.mxu0 %v408
      %759 = vmatprep.subr.mxu0 %v407
      %760 = vmatpush1.msra.mxu0 %v406
      %761 = vmatprep.subr.mxu0 %v405
      %762 = vmatpush1.msra.mxu0 %v404
      %763 = vmatprep.subr.mxu0 %v403
      %764 = vmatpush1.msra.mxu0 %v402
      %765 = vmatprep.subr.mxu0 %v401
      %766 = vmatpush1.msra.mxu0 %v400
      %767 = vmatprep.subr.mxu0 %v399
      %768 = vmatpush1.msra.mxu0 %v398
      %769 = vmatprep.subr.mxu0 %v397
      %770 = vmatpush1.msra.mxu0 %v396
      %771 = vmatprep.subr.mxu0 %v395
      %772 = vmatpush1.msra.mxu0 %v394
      %773 = vmatprep.subr.mxu0 %v457
      %774 = vmatpush2.msra.mxu0 %v456
      %775 = vmatprep.subr.mxu0 %v455
      %776 = vmatpush2.msra.mxu0 %v454
      %777 = vmatprep.subr.mxu0 %v453
      %778 = vmatpush2.msra.mxu0 %v452
      %779 = vmatprep.subr.mxu0 %v451
      %780 = vmatpush2.msra.mxu0 %v450
      %781 = vmatprep.subr.mxu0 %v449
      %782 = vmatpush2.msra.mxu0 %v448
      %783 = vmatprep.subr.mxu0 %v447
      %784 = vmatpush2.msra.mxu0 %v446
      %785 = vmatprep.subr.mxu0 %v445
      %786 = vmatpush2.msra.mxu0 %v444
      %787 = vmatprep.subr.mxu0 %v443
      %788 = vmatpush2.msra.mxu0 %v442
      %789 = vmatprep.subr.mxu0 %v441
      %790 = vmatpush2.msra.mxu0 %v440
      %791 = vmatprep.subr.mxu0 %v439
      %792 = vmatpush2.msra.mxu0 %v438
      %793 = vmatprep.subr.mxu0 %v437
      %794 = vmatpush2.msra.mxu0 %v436
      %795 = vmatprep.subr.mxu0 %v435
      %796 = vmatpush2.msra.mxu0 %v434
      %797 = vmatprep.subr.mxu0 %v433
      %798 = vmatpush2.msra.mxu0 %v432
      %799 = vmatprep.subr.mxu0 %v431
      %800 = vmatpush2.msra.mxu0 %v430
      %801 = vmatprep.subr.mxu0 %v429
      %802 = vmatpush2.msra.mxu0 %v428
      %803 = vmatprep.subr.mxu0 %v427
      %804 = vmatpush2.msra.mxu0 %v426
      %805 = vmatprep.mubr.f32.mxu0 %v228
      %806 = vmatmul.mubr.f32.gmra.mxu0 %v227
      %v807 = vpop.f32.mrf.mxu0
      %v808 = vadd.f32 %v617, %v807
      %v809 = vpop.f32.mrf.mxu0
      %v810 = vadd.f32 %v619, %v809
      %811 = vmatprep.mubr.f32.mxu0 %v233
      %812 = vmatmul.mubr.f32.gmra.mxu0 %v232
      %v813 = vpop.f32.mrf.mxu0
      %v814 = vadd.f32 %v623, %v813
      %v815 = vpop.f32.mrf.mxu0
      %v816 = vadd.f32 %v625, %v815
      %817 = vmatprep.mubr.f32.mxu0 %v238
      %818 = vmatmul.mubr.f32.gmra.mxu0 %v237
      %v819 = vpop.f32.mrf.mxu0
      %v820 = vadd.f32 %v629, %v819
      %v821 = vpop.f32.mrf.mxu0
      %v822 = vadd.f32 %v631, %v821
      %823 = vmatprep.mubr.f32.mxu0 %v243
      %824 = vmatmul.mubr.f32.gmra.mxu0 %v242
      %v825 = vpop.f32.mrf.mxu0
      %v826 = vadd.f32 %v635, %v825
      %v827 = vpop.f32.mrf.mxu0
      %v828 = vadd.f32 %v637, %v827
      %829 = vmatprep.mubr.f32.mxu0 %v248
      %830 = vmatmul.mubr.f32.gmra.mxu0 %v247
      %v831 = vpop.f32.mrf.mxu0
      %v832 = vadd.f32 %v641, %v831
      %v833 = vpop.f32.mrf.mxu0
      %v834 = vadd.f32 %v643, %v833
      %835 = vmatprep.mubr.f32.mxu0 %v253
      %836 = vmatmul.mubr.f32.gmra.mxu0 %v252
      %v837 = vpop.f32.mrf.mxu0
      %v838 = vadd.f32 %v647, %v837
      %v839 = vpop.f32.mrf.mxu0
      %v840 = vadd.f32 %v649, %v839
      %841 = vmatprep.mubr.f32.mxu0 %v258
      %842 = vmatmul.mubr.f32.gmra.mxu0 %v257
      %v843 = vpop.f32.mrf.mxu0
      %v844 = vadd.f32 %v653, %v843
      %v845 = vpop.f32.mrf.mxu0
      %v846 = vadd.f32 %v655, %v845
      %847 = vmatprep.mubr.f32.mxu0 %v263
      %848 = vmatmul.mubr.f32.gmra.mxu0 %v262
      %v849 = vpop.f32.mrf.mxu0
      %v850 = vadd.f32 %v659, %v849
      %v851 = vpop.f32.mrf.mxu0
      %v852 = vadd.f32 %v661, %v851
      %853 = vmatprep.mubr.f32.mxu0 %v268
      %854 = vmatmul.mubr.f32.gmra.mxu0 %v267
      %v855 = vpop.f32.mrf.mxu0
      %v856 = vadd.f32 %v665, %v855
      %v857 = vpop.f32.mrf.mxu0
      %v858 = vadd.f32 %v667, %v857
      %859 = vmatprep.mubr.f32.mxu0 %v273
      %860 = vmatmul.mubr.f32.gmra.mxu0 %v272
      %v861 = vpop.f32.mrf.mxu0
      %v862 = vadd.f32 %v671, %v861
      %v863 = vpop.f32.mrf.mxu0
      %v864 = vadd.f32 %v673, %v863
      %865 = vmatprep.mubr.f32.mxu0 %v278
      %866 = vmatmul.mubr.f32.gmra.mxu0 %v277
      %v867 = vpop.f32.mrf.mxu0
      %v868 = vadd.f32 %v677, %v867
      %v869 = vpop.f32.mrf.mxu0
      %v870 = vadd.f32 %v679, %v869
      %871 = vmatprep.mubr.f32.mxu0 %v283
      %872 = vmatmul.mubr.f32.gmra.mxu0 %v282
      %v873 = vpop.f32.mrf.mxu0
      %v874 = vadd.f32 %v683, %v873
      %v875 = vpop.f32.mrf.mxu0
      %v876 = vadd.f32 %v685, %v875
      %877 = vmatprep.mubr.f32.mxu0 %v288
      %878 = vmatmul.mubr.f32.gmra.mxu0 %v287
      %v879 = vpop.f32.mrf.mxu0
      %v880 = vadd.f32 %v689, %v879
      %v881 = vpop.f32.mrf.mxu0
      %v882 = vadd.f32 %v691, %v881
      %883 = vmatprep.mubr.f32.mxu0 %v293
      %884 = vmatmul.mubr.f32.gmra.mxu0 %v292
      %v885 = vpop.f32.mrf.mxu0
      %v886 = vadd.f32 %v695, %v885
      %v887 = vpop.f32.mrf.mxu0
      %v888 = vadd.f32 %v697, %v887
      %889 = vmatprep.mubr.f32.mxu0 %v298
      %890 = vmatmul.mubr.f32.gmra.mxu0 %v297
      %v891 = vpop.f32.mrf.mxu0
      %v892 = vadd.f32 %v701, %v891
      %v893 = vpop.f32.mrf.mxu0
      %v894 = vadd.f32 %v703, %v893
      %895 = vmatprep.mubr.f32.mxu0 %v303
      %896 = vmatmul.mubr.f32.gmra.mxu0 %v302
      %v897 = vpop.f32.mrf.mxu0
      %v898 = vadd.f32 %v707, %v897
      %v899 = vpop.f32.mrf.mxu0
      %v900 = vadd.f32 %v709, %v899
      %901 = vmatprep.mubr.f32.mxu0 %v308
      %902 = vmatmul.mubr.f32.gmra.mxu0 %v307
      %v903 = vpop.f32.mrf.mxu0
      %v904 = vadd.f32 %v713, %v903
      %v905 = vpop.f32.mrf.mxu0
      %v906 = vadd.f32 %v715, %v905
      %907 = vmatprep.mubr.f32.mxu0 %v313
      %908 = vmatmul.mubr.f32.gmra.mxu0 %v312
      %v909 = vpop.f32.mrf.mxu0
      %v910 = vadd.f32 %v719, %v909
      %v911 = vpop.f32.mrf.mxu0
      %v912 = vadd.f32 %v721, %v911
      %913 = vmatprep.mubr.f32.mxu0 %v318
      %914 = vmatmul.mubr.f32.gmra.mxu0 %v317
      %v915 = vpop.f32.mrf.mxu0
      %v916 = vadd.f32 %v725, %v915
      %v917 = vpop.f32.mrf.mxu0
      %v918 = vadd.f32 %v727, %v917
      %919 = vmatprep.mubr.f32.mxu0 %v323
      %920 = vmatmul.mubr.f32.gmra.mxu0 %v322
      %v921 = vpop.f32.mrf.mxu0
      %v922 = vadd.f32 %v731, %v921
      %v923 = vpop.f32.mrf.mxu0
      %v924 = vadd.f32 %v733, %v923
      %925 = vmatprep.mubr.f32.mxu0 %v328
      %926 = vmatmul.mubr.f32.gmra.mxu0 %v327
      %v927 = vpop.f32.mrf.mxu0
      %v928 = vadd.f32 %v737, %v927
      %v929 = vpop.f32.mrf.mxu0
      %v930 = vadd.f32 %v739, %v929
      %931 = vdwg.mxu0
      %932 = vmatprep.subr.mxu0 0.0
      %933 = vmatpush1.msra.mxu0 0.0
      %934 = vmatprep.subr.mxu0 0.0
      %935 = vmatpush1.msra.mxu0 0.0
      %936 = vmatprep.subr.mxu0 0.0
      %937 = vmatpush1.msra.mxu0 0.0
      %938 = vmatprep.subr.mxu0 0.0
      %939 = vmatpush1.msra.mxu0 0.0
      %940 = vmatprep.subr.mxu0 0.0
      %941 = vmatpush1.msra.mxu0 0.0
      %942 = vmatprep.subr.mxu0 0.0
      %943 = vmatpush1.msra.mxu0 0.0
      %944 = vmatprep.subr.mxu0 0.0
      %945 = vmatpush1.msra.mxu0 0.0
      %946 = vmatprep.subr.mxu0 0.0
      %947 = vmatpush1.msra.mxu0 0.0
      %948 = vmatprep.subr.mxu0 %v473
      %949 = vmatpush1.msra.mxu0 %v472
      %950 = vmatprep.subr.mxu0 %v471
      %951 = vmatpush1.msra.mxu0 %v470
      %952 = vmatprep.subr.mxu0 %v469
      %953 = vmatpush1.msra.mxu0 %v468
      %954 = vmatprep.subr.mxu0 %v467
      %955 = vmatpush1.msra.mxu0 %v466
      %956 = vmatprep.subr.mxu0 %v465
      %957 = vmatpush1.msra.mxu0 %v464
      %958 = vmatprep.subr.mxu0 %v463
      %959 = vmatpush1.msra.mxu0 %v462
      %960 = vmatprep.subr.mxu0 %v461
      %961 = vmatpush1.msra.mxu0 %v460
      %962 = vmatprep.subr.mxu0 %v459
      %963 = vmatpush1.msra.mxu0 %v458
      %964 = vmatprep.subr.mxu0 0.0
      %965 = vmatpush2.msra.mxu0 0.0
      %966 = vmatprep.subr.mxu0 0.0
      %967 = vmatpush2.msra.mxu0 0.0
      %968 = vmatprep.subr.mxu0 0.0
      %969 = vmatpush2.msra.mxu0 0.0
      %970 = vmatprep.subr.mxu0 0.0
      %971 = vmatpush2.msra.mxu0 0.0
      %972 = vmatprep.subr.mxu0 0.0
      %973 = vmatpush2.msra.mxu0 0.0
      %974 = vmatprep.subr.mxu0 0.0
      %975 = vmatpush2.msra.mxu0 0.0
      %976 = vmatprep.subr.mxu0 0.0
      %977 = vmatpush2.msra.mxu0 0.0
      %978 = vmatprep.subr.mxu0 0.0
      %979 = vmatpush2.msra.mxu0 0.0
      %980 = vmatprep.subr.mxu0 0.0
      %981 = vmatpush2.msra.mxu0 0.0
      %982 = vmatprep.subr.mxu0 0.0
      %983 = vmatpush2.msra.mxu0 0.0
      %984 = vmatprep.subr.mxu0 0.0
      %985 = vmatpush2.msra.mxu0 0.0
      %986 = vmatprep.subr.mxu0 0.0
      %987 = vmatpush2.msra.mxu0 0.0
      %988 = vmatprep.subr.mxu0 0.0
      %989 = vmatpush2.msra.mxu0 0.0
      %990 = vmatprep.subr.mxu0 0.0
      %991 = vmatpush2.msra.mxu0 0.0
      %992 = vmatprep.subr.mxu0 0.0
      %993 = vmatpush2.msra.mxu0 0.0
      %994 = vmatprep.subr.mxu0 0.0
      %995 = vmatpush2.msra.mxu0 0.0
      %996 = vmatprep.mubr.f32.mxu0 0.0
      %997 = vmatmul.mubr.f32.gmra.mxu0 %v488
      %v998 = vpop.f32.mrf.mxu0
      %v999 = vadd.f32 %v808, %v998
      %v1000 = vpop.f32.mrf.mxu0
      %v1001 = vadd.f32 %v810, %v1000
      %1002 = vmatprep.mubr.f32.mxu0 0.0
      %1003 = vmatmul.mubr.f32.gmra.mxu0 %v491
      %v1004 = vpop.f32.mrf.mxu0
      %v1005 = vadd.f32 %v814, %v1004
      %v1006 = vpop.f32.mrf.mxu0
      %v1007 = vadd.f32 %v816, %v1006
      %1008 = vmatprep.mubr.f32.mxu0 0.0
      %1009 = vmatmul.mubr.f32.gmra.mxu0 %v494
      %v1010 = vpop.f32.mrf.mxu0
      %v1011 = vadd.f32 %v820, %v1010
      %v1012 = vpop.f32.mrf.mxu0
      %v1013 = vadd.f32 %v822, %v1012
      %1014 = vmatprep.mubr.f32.mxu0 0.0
      %1015 = vmatmul.mubr.f32.gmra.mxu0 %v497
      %v1016 = vpop.f32.mrf.mxu0
      %v1017 = vadd.f32 %v826, %v1016
      %v1018 = vpop.f32.mrf.mxu0
      %v1019 = vadd.f32 %v828, %v1018
      %1020 = vmatprep.mubr.f32.mxu0 0.0
      %1021 = vmatmul.mubr.f32.gmra.mxu0 %v500
      %v1022 = vpop.f32.mrf.mxu0
      %v1023 = vadd.f32 %v832, %v1022
      %v1024 = vpop.f32.mrf.mxu0
      %v1025 = vadd.f32 %v834, %v1024
      %1026 = vmatprep.mubr.f32.mxu0 0.0
      %1027 = vmatmul.mubr.f32.gmra.mxu0 %v503
      %v1028 = vpop.f32.mrf.mxu0
      %v1029 = vadd.f32 %v838, %v1028
      %v1030 = vpop.f32.mrf.mxu0
      %v1031 = vadd.f32 %v840, %v1030
      %1032 = vmatprep.mubr.f32.mxu0 0.0
      %1033 = vmatmul.mubr.f32.gmra.mxu0 %v506
      %v1034 = vpop.f32.mrf.mxu0
      %v1035 = vadd.f32 %v844, %v1034
      %v1036 = vpop.f32.mrf.mxu0
      %v1037 = vadd.f32 %v846, %v1036
      %1038 = vmatprep.mubr.f32.mxu0 0.0
      %1039 = vmatmul.mubr.f32.gmra.mxu0 %v509
      %v1040 = vpop.f32.mrf.mxu0
      %v1041 = vadd.f32 %v850, %v1040
      %v1042 = vpop.f32.mrf.mxu0
      %v1043 = vadd.f32 %v852, %v1042
      %1044 = vmatprep.mubr.f32.mxu0 0.0
      %1045 = vmatmul.mubr.f32.gmra.mxu0 %v512
      %v1046 = vpop.f32.mrf.mxu0
      %v1047 = vadd.f32 %v856, %v1046
      %v1048 = vpop.f32.mrf.mxu0
      %v1049 = vadd.f32 %v858, %v1048
      %1050 = vmatprep.mubr.f32.mxu0 0.0
      %1051 = vmatmul.mubr.f32.gmra.mxu0 %v515
      %v1052 = vpop.f32.mrf.mxu0
      %v1053 = vadd.f32 %v862, %v1052
      %v1054 = vpop.f32.mrf.mxu0
      %v1055 = vadd.f32 %v864, %v1054
      %1056 = vmatprep.mubr.f32.mxu0 0.0
      %1057 = vmatmul.mubr.f32.gmra.mxu0 %v518
      %v1058 = vpop.f32.mrf.mxu0
      %v1059 = vadd.f32 %v868, %v1058
      %v1060 = vpop.f32.mrf.mxu0
      %v1061 = vadd.f32 %v870, %v1060
      %1062 = vmatprep.mubr.f32.mxu0 0.0
      %1063 = vmatmul.mubr.f32.gmra.mxu0 %v521
      %v1064 = vpop.f32.mrf.mxu0
      %v1065 = vadd.f32 %v874, %v1064
      %v1066 = vpop.f32.mrf.mxu0
      %v1067 = vadd.f32 %v876, %v1066
      %1068 = vmatprep.mubr.f32.mxu0 0.0
      %1069 = vmatmul.mubr.f32.gmra.mxu0 %v524
      %v1070 = vpop.f32.mrf.mxu0
      %v1071 = vadd.f32 %v880, %v1070
      %v1072 = vpop.f32.mrf.mxu0
      %v1073 = vadd.f32 %v882, %v1072
      %1074 = vmatprep.mubr.f32.mxu0 0.0
      %1075 = vmatmul.mubr.f32.gmra.mxu0 %v527
      %v1076 = vpop.f32.mrf.mxu0
      %v1077 = vadd.f32 %v886, %v1076
      %v1078 = vpop.f32.mrf.mxu0
      %v1079 = vadd.f32 %v888, %v1078
      %1080 = vmatprep.mubr.f32.mxu0 0.0
      %1081 = vmatmul.mubr.f32.gmra.mxu0 %v530
      %v1082 = vpop.f32.mrf.mxu0
      %v1083 = vadd.f32 %v892, %v1082
      %v1084 = vpop.f32.mrf.mxu0
      %v1085 = vadd.f32 %v894, %v1084
      %1086 = vmatprep.mubr.f32.mxu0 0.0
      %1087 = vmatmul.mubr.f32.gmra.mxu0 %v533
      %v1088 = vpop.f32.mrf.mxu0
      %v1089 = vadd.f32 %v898, %v1088
      %v1090 = vpop.f32.mrf.mxu0
      %v1091 = vadd.f32 %v900, %v1090
      %1092 = vmatprep.mubr.f32.mxu0 0.0
      %1093 = vmatmul.mubr.f32.gmra.mxu0 %v536
      %v1094 = vpop.f32.mrf.mxu0
      %v1095 = vadd.f32 %v904, %v1094
      %v1096 = vpop.f32.mrf.mxu0
      %v1097 = vadd.f32 %v906, %v1096
      %1098 = vmatprep.mubr.f32.mxu0 0.0
      %1099 = vmatmul.mubr.f32.gmra.mxu0 %v539
      %v1100 = vpop.f32.mrf.mxu0
      %v1101 = vadd.f32 %v910, %v1100
      %v1102 = vpop.f32.mrf.mxu0
      %v1103 = vadd.f32 %v912, %v1102
      %1104 = vmatprep.mubr.f32.mxu0 0.0
      %1105 = vmatmul.mubr.f32.gmra.mxu0 %v542
      %v1106 = vpop.f32.mrf.mxu0
      %v1107 = vadd.f32 %v916, %v1106
      %v1108 = vpop.f32.mrf.mxu0
      %v1109 = vadd.f32 %v918, %v1108
      %1110 = vmatprep.mubr.f32.mxu0 0.0
      %1111 = vmatmul.mubr.f32.gmra.mxu0 %v545
      %v1112 = vpop.f32.mrf.mxu0
      %v1113 = vadd.f32 %v922, %v1112
      %v1114 = vpop.f32.mrf.mxu0
      %v1115 = vadd.f32 %v924, %v1114
      %1116 = vmatprep.mubr.f32.mxu0 0.0
      %1117 = vmatmul.mubr.f32.gmra.mxu0 %v548
      %v1118 = vpop.f32.mrf.mxu0
      %v1119 = vadd.f32 %v928, %v1118
      %v1120 = vpop.f32.mrf.mxu0
      %v1121 = vadd.f32 %v930, %v1120
      %1122 = vdwg.mxu0
      %vm1123 = vcmp.gt.f32.partialorder %v999, 0.0
      %vm1124 = vcmp.gt.f32.partialorder %v1001, 0.0
      %vm1125 = vcmp.gt.f32.partialorder %v1005, 0.0
      %vm1126 = vcmp.gt.f32.partialorder %v1007, 0.0
      %vm1127 = vcmp.gt.f32.partialorder %v1011, 0.0
      %vm1128 = vcmp.gt.f32.partialorder %v1013, 0.0
      %vm1129 = vcmp.gt.f32.partialorder %v1017, 0.0
      %vm1130 = vcmp.gt.f32.partialorder %v1019, 0.0
      %vm1131 = vcmp.gt.f32.partialorder %v1023, 0.0
      %vm1132 = vcmp.gt.f32.partialorder %v1025, 0.0
      %vm1133 = vcmp.gt.f32.partialorder %v1029, 0.0
      %vm1134 = vcmp.gt.f32.partialorder %v1031, 0.0
      %vm1135 = vcmp.gt.f32.partialorder %v1035, 0.0
      %vm1136 = vcmp.gt.f32.partialorder %v1037, 0.0
      %vm1137 = vcmp.gt.f32.partialorder %v1041, 0.0
      %vm1138 = vcmp.gt.f32.partialorder %v1043, 0.0
      %vm1139 = vcmp.gt.f32.partialorder %v1047, 0.0
      %vm1140 = vcmp.gt.f32.partialorder %v1049, 0.0
      %vm1141 = vcmp.gt.f32.partialorder %v1053, 0.0
      %vm1142 = vcmp.gt.f32.partialorder %v1055, 0.0
      %vm1143 = vcmp.gt.f32.partialorder %v1059, 0.0
      %vm1144 = vcmp.gt.f32.partialorder %v1061, 0.0
      %vm1145 = vcmp.gt.f32.partialorder %v1065, 0.0
      %vm1146 = vcmp.gt.f32.partialorder %v1067, 0.0
      %vm1147 = vcmp.gt.f32.partialorder %v1071, 0.0
      %vm1148 = vcmp.gt.f32.partialorder %v1073, 0.0
      %vm1149 = vcmp.gt.f32.partialorder %v1077, 0.0
      %vm1150 = vcmp.gt.f32.partialorder %v1079, 0.0
      %vm1151 = vcmp.gt.f32.partialorder %v1083, 0.0
      %vm1152 = vcmp.gt.f32.partialorder %v1085, 0.0
      %vm1153 = vcmp.gt.f32.partialorder %v1089, 0.0
      %vm1154 = vcmp.gt.f32.partialorder %v1091, 0.0
      %vm1155 = vcmp.gt.f32.partialorder %v1095, 0.0
      %vm1156 = vcmp.gt.f32.partialorder %v1097, 0.0
      %vm1157 = vcmp.gt.f32.partialorder %v1101, 0.0
      %vm1158 = vcmp.gt.f32.partialorder %v1103, 0.0
      %vm1159 = vcmp.gt.f32.partialorder %v1107, 0.0
      %vm1160 = vcmp.gt.f32.partialorder %v1109, 0.0
      %vm1161 = vcmp.gt.f32.partialorder %v1113, 0.0
      %vm1162 = vcmp.gt.f32.partialorder %v1115, 0.0
      %vm1163 = vcmp.gt.f32.partialorder %v1119, 0.0
      %vm1164 = vcmp.gt.f32.partialorder %v1121, 0.0
      %v1165 = vmul.f32 %v999, 0.02200345
      %v1166 = vmul.f32 %v1001, 0.02200345
      %v1167 = vmul.f32 %v1005, 0.02200345
      %v1168 = vmul.f32 %v1007, 0.02200345
      %v1169 = vmul.f32 %v1011, 0.02200345
      %v1170 = vmul.f32 %v1013, 0.02200345
      %v1171 = vmul.f32 %v1017, 0.02200345
      %v1172 = vmul.f32 %v1019, 0.02200345
      %v1173 = vmul.f32 %v1023, 0.02200345
      %v1174 = vmul.f32 %v1025, 0.02200345
      %v1175 = vmul.f32 %v1029, 0.02200345
      %v1176 = vmul.f32 %v1031, 0.02200345
      %v1177 = vmul.f32 %v1035, 0.02200345
      %v1178 = vmul.f32 %v1037, 0.02200345
      %v1179 = vmul.f32 %v1041, 0.02200345
      %v1180 = vmul.f32 %v1043, 0.02200345
      %v1181 = vmul.f32 %v1047, 0.02200345
      %v1182 = vmul.f32 %v1049, 0.02200345
      %v1183 = vmul.f32 %v1053, 0.02200345
      %v1184 = vmul.f32 %v1055, 0.02200345
      %v1185 = vmul.f32 %v1059, 0.02200345
      %v1186 = vmul.f32 %v1061, 0.02200345
      %v1187 = vmul.f32 %v1065, 0.02200345
      %v1188 = vmul.f32 %v1067, 0.02200345
      %v1189 = vmul.f32 %v1071, 0.02200345
      %v1190 = vmul.f32 %v1073, 0.02200345
      %v1191 = vmul.f32 %v1077, 0.02200345
      %v1192 = vmul.f32 %v1079, 0.02200345
      %v1193 = vmul.f32 %v1083, 0.02200345
      %v1194 = vmul.f32 %v1085, 0.02200345
      %v1195 = vmul.f32 %v1089, 0.02200345
      %v1196 = vmul.f32 %v1091, 0.02200345
      %v1197 = vmul.f32 %v1095, 0.02200345
      %v1198 = vmul.f32 %v1097, 0.02200345
      %v1199 = vmul.f32 %v1101, 0.02200345
      %v1200 = vmul.f32 %v1103, 0.02200345
      %v1201 = vmul.f32 %v1107, 0.02200345
      %v1202 = vmul.f32 %v1109, 0.02200345
      %v1203 = vmul.f32 %v1113, 0.02200345
      %v1204 = vmul.f32 %v1115, 0.02200345
      %v1205 = vmul.f32 %v1119, 0.02200345
      %v1206 = vmul.f32 %v1121, 0.02200345
      %v1207 = vsel %vm1123, %v999, %v1165
      %v1208 = vsel %vm1124, %v1001, %v1166
      %v1209 = vsel %vm1125, %v1005, %v1167
      %v1210 = vsel %vm1126, %v1007, %v1168
      %v1211 = vsel %vm1127, %v1011, %v1169
      %v1212 = vsel %vm1128, %v1013, %v1170
      %v1213 = vsel %vm1129, %v1017, %v1171
      %v1214 = vsel %vm1130, %v1019, %v1172
      %v1215 = vsel %vm1131, %v1023, %v1173
      %v1216 = vsel %vm1132, %v1025, %v1174
      %v1217 = vsel %vm1133, %v1029, %v1175
      %v1218 = vsel %vm1134, %v1031, %v1176
      %v1219 = vsel %vm1135, %v1035, %v1177
      %v1220 = vsel %vm1136, %v1037, %v1178
      %v1221 = vsel %vm1137, %v1041, %v1179
      %v1222 = vsel %vm1138, %v1043, %v1180
      %v1223 = vsel %vm1139, %v1047, %v1181
      %v1224 = vsel %vm1140, %v1049, %v1182
      %v1225 = vsel %vm1141, %v1053, %v1183
      %v1226 = vsel %vm1142, %v1055, %v1184
      %v1227 = vsel %vm1143, %v1059, %v1185
      %v1228 = vsel %vm1144, %v1061, %v1186
      %v1229 = vsel %vm1145, %v1065, %v1187
      %v1230 = vsel %vm1146, %v1067, %v1188
      %v1231 = vsel %vm1147, %v1071, %v1189
      %v1232 = vsel %vm1148, %v1073, %v1190
      %v1233 = vsel %vm1149, %v1077, %v1191
      %v1234 = vsel %vm1150, %v1079, %v1192
      %v1235 = vsel %vm1151, %v1083, %v1193
      %v1236 = vsel %vm1152, %v1085, %v1194
      %v1237 = vsel %vm1153, %v1089, %v1195
      %v1238 = vsel %vm1154, %v1091, %v1196
      %v1239 = vsel %vm1155, %v1095, %v1197
      %v1240 = vsel %vm1156, %v1097, %v1198
      %v1241 = vsel %vm1157, %v1101, %v1199
      %v1242 = vsel %vm1158, %v1103, %v1200
      %v1243 = vsel %vm1159, %v1107, %v1201
      %v1244 = vsel %vm1160, %v1109, %v1202
      %v1245 = vsel %vm1161, %v1113, %v1203
      %v1246 = vsel %vm1162, %v1115, %v1204
      %v1247 = vsel %vm1163, %v1119, %v1205
      %v1248 = vsel %vm1164, %v1121, %v1206
      %v1249 = vlaneseq
      %v1250 = vshrl.u32 %v1249, 7
      %v1251 = vadd.s32 %v1250, 8
      %v1252 = vadd.s32 %v1250, 16
      %v1253 = vadd.s32 %v1250, 24
      %v1254 = vadd.s32 %v1250, 32
      %v1255 = vadd.s32 %v1250, 40
      %v1256 = vadd.s32 %v1250, 48
      %v1257 = vadd.s32 %v1250, 56
      %v1258 = vadd.s32 %v1250, 64
      %v1259 = vadd.s32 %v1250, 72
      %v1260 = vadd.s32 %v1250, 80
      %v1261 = vadd.s32 %v1250, 88
      %v1262 = vadd.s32 %v1250, 96
      %v1263 = vadd.s32 %v1250, 104
      %v1264 = vadd.s32 %v1250, 112
      %v1265 = vadd.s32 %v1250, 120
      %v1266 = vadd.s32 %v1250, 128
      %v1267 = vadd.s32 %v1250, 136
      %v1268 = vadd.s32 %v1250, 144
      %v1269 = vadd.s32 %v1250, 152
      %v1270 = vadd.s32 %v1250, 160
      %vm1271 = vcmp.lt.s32.totalorder %v1250, 0
      %v1272 = vsub.s32 0, %v1250
      %v1273 = vsel %vm1271, %v1272, %v1250
      %v1274 = vmul.u32.u64.compose %v1273, 2863311531
      %v1275 = vextract.low.u32 %v1274
      %v1276 = vextract.high.u32 %v1274
      %v1277 = vshrl.u32 %v1276, 4
      %v1278 = vmul.u32 %v1277, 24
      %v1279 = vsub.s32 %v1273, %v1278
      %v1280 = vsub.s32 0, %v1279
      %v1281 = vsel %vm1271, %v1280, %v1279
      %vm1282 = vcmp.lt.s32.totalorder %v1251, 0
      %v1283 = vsub.s32 0, %v1251
      %v1284 = vsel %vm1282, %v1283, %v1251
      %v1285 = vmul.u32.u64.compose %v1284, 2863311531
      %v1286 = vextract.low.u32 %v1285
      %v1287 = vextract.high.u32 %v1285
      %v1288 = vshrl.u32 %v1287, 4
      %v1289 = vmul.u32 %v1288, 24
      %v1290 = vsub.s32 %v1284, %v1289
      %v1291 = vsub.s32 0, %v1290
      %v1292 = vsel %vm1282, %v1291, %v1290
      %vm1293 = vcmp.lt.s32.totalorder %v1252, 0
      %v1294 = vsub.s32 0, %v1252
      %v1295 = vsel %vm1293, %v1294, %v1252
      %v1296 = vmul.u32.u64.compose %v1295, 2863311531
      %v1297 = vextract.low.u32 %v1296
      %v1298 = vextract.high.u32 %v1296
      %v1299 = vshrl.u32 %v1298, 4
      %v1300 = vmul.u32 %v1299, 24
      %v1301 = vsub.s32 %v1295, %v1300
      %v1302 = vsub.s32 0, %v1301
      %v1303 = vsel %vm1293, %v1302, %v1301
      %vm1304 = vcmp.lt.s32.totalorder %v1253, 0
      %v1305 = vsub.s32 0, %v1253
      %v1306 = vsel %vm1304, %v1305, %v1253
      %v1307 = vmul.u32.u64.compose %v1306, 2863311531
      %v1308 = vextract.low.u32 %v1307
      %v1309 = vextract.high.u32 %v1307
      %v1310 = vshrl.u32 %v1309, 4
      %v1311 = vmul.u32 %v1310, 24
      %v1312 = vsub.s32 %v1306, %v1311
      %v1313 = vsub.s32 0, %v1312
      %v1314 = vsel %vm1304, %v1313, %v1312
      %vm1315 = vcmp.lt.s32.totalorder %v1254, 0
      %v1316 = vsub.s32 0, %v1254
      %v1317 = vsel %vm1315, %v1316, %v1254
      %v1318 = vmul.u32.u64.compose %v1317, 2863311531
      %v1319 = vextract.low.u32 %v1318
      %v1320 = vextract.high.u32 %v1318
      %v1321 = vshrl.u32 %v1320, 4
      %v1322 = vmul.u32 %v1321, 24
      %v1323 = vsub.s32 %v1317, %v1322
      %v1324 = vsub.s32 0, %v1323
      %v1325 = vsel %vm1315, %v1324, %v1323
      %vm1326 = vcmp.lt.s32.totalorder %v1255, 0
      %v1327 = vsub.s32 0, %v1255
      %v1328 = vsel %vm1326, %v1327, %v1255
      %v1329 = vmul.u32.u64.compose %v1328, 2863311531
      %v1330 = vextract.low.u32 %v1329
      %v1331 = vextract.high.u32 %v1329
      %v1332 = vshrl.u32 %v1331, 4
      %v1333 = vmul.u32 %v1332, 24
      %v1334 = vsub.s32 %v1328, %v1333
      %v1335 = vsub.s32 0, %v1334
      %v1336 = vsel %vm1326, %v1335, %v1334
      %vm1337 = vcmp.lt.s32.totalorder %v1256, 0
      %v1338 = vsub.s32 0, %v1256
      %v1339 = vsel %vm1337, %v1338, %v1256
      %v1340 = vmul.u32.u64.compose %v1339, 2863311531
      %v1341 = vextract.low.u32 %v1340
      %v1342 = vextract.high.u32 %v1340
      %v1343 = vshrl.u32 %v1342, 4
      %v1344 = vmul.u32 %v1343, 24
      %v1345 = vsub.s32 %v1339, %v1344
      %v1346 = vsub.s32 0, %v1345
      %v1347 = vsel %vm1337, %v1346, %v1345
      %vm1348 = vcmp.lt.s32.totalorder %v1257, 0
      %v1349 = vsub.s32 0, %v1257
      %v1350 = vsel %vm1348, %v1349, %v1257
      %v1351 = vmul.u32.u64.compose %v1350, 2863311531
      %v1352 = vextract.low.u32 %v1351
      %v1353 = vextract.high.u32 %v1351
      %v1354 = vshrl.u32 %v1353, 4
      %v1355 = vmul.u32 %v1354, 24
      %v1356 = vsub.s32 %v1350, %v1355
      %v1357 = vsub.s32 0, %v1356
      %v1358 = vsel %vm1348, %v1357, %v1356
      %vm1359 = vcmp.lt.s32.totalorder %v1258, 0
      %v1360 = vsub.s32 0, %v1258
      %v1361 = vsel %vm1359, %v1360, %v1258
      %v1362 = vmul.u32.u64.compose %v1361, 2863311531
      %v1363 = vextract.low.u32 %v1362
      %v1364 = vextract.high.u32 %v1362
      %v1365 = vshrl.u32 %v1364, 4
      %v1366 = vmul.u32 %v1365, 24
      %v1367 = vsub.s32 %v1361, %v1366
      %v1368 = vsub.s32 0, %v1367
      %v1369 = vsel %vm1359, %v1368, %v1367
      %vm1370 = vcmp.lt.s32.totalorder %v1259, 0
      %v1371 = vsub.s32 0, %v1259
      %v1372 = vsel %vm1370, %v1371, %v1259
      %v1373 = vmul.u32.u64.compose %v1372, 2863311531
      %v1374 = vextract.low.u32 %v1373
      %v1375 = vextract.high.u32 %v1373
      %v1376 = vshrl.u32 %v1375, 4
      %v1377 = vmul.u32 %v1376, 24
      %v1378 = vsub.s32 %v1372, %v1377
      %v1379 = vsub.s32 0, %v1378
      %v1380 = vsel %vm1370, %v1379, %v1378
      %vm1381 = vcmp.lt.s32.totalorder %v1260, 0
      %v1382 = vsub.s32 0, %v1260
      %v1383 = vsel %vm1381, %v1382, %v1260
      %v1384 = vmul.u32.u64.compose %v1383, 2863311531
      %v1385 = vextract.low.u32 %v1384
      %v1386 = vextract.high.u32 %v1384
      %v1387 = vshrl.u32 %v1386, 4
      %v1388 = vmul.u32 %v1387, 24
      %v1389 = vsub.s32 %v1383, %v1388
      %v1390 = vsub.s32 0, %v1389
      %v1391 = vsel %vm1381, %v1390, %v1389
      %vm1392 = vcmp.lt.s32.totalorder %v1261, 0
      %v1393 = vsub.s32 0, %v1261
      %v1394 = vsel %vm1392, %v1393, %v1261
      %v1395 = vmul.u32.u64.compose %v1394, 2863311531
      %v1396 = vextract.low.u32 %v1395
      %v1397 = vextract.high.u32 %v1395
      %v1398 = vshrl.u32 %v1397, 4
      %v1399 = vmul.u32 %v1398, 24
      %v1400 = vsub.s32 %v1394, %v1399
      %v1401 = vsub.s32 0, %v1400
      %v1402 = vsel %vm1392, %v1401, %v1400
      %vm1403 = vcmp.lt.s32.totalorder %v1262, 0
      %v1404 = vsub.s32 0, %v1262
      %v1405 = vsel %vm1403, %v1404, %v1262
      %v1406 = vmul.u32.u64.compose %v1405, 2863311531
      %v1407 = vextract.low.u32 %v1406
      %v1408 = vextract.high.u32 %v1406
      %v1409 = vshrl.u32 %v1408, 4
      %v1410 = vmul.u32 %v1409, 24
      %v1411 = vsub.s32 %v1405, %v1410
      %v1412 = vsub.s32 0, %v1411
      %v1413 = vsel %vm1403, %v1412, %v1411
      %vm1414 = vcmp.lt.s32.totalorder %v1263, 0
      %v1415 = vsub.s32 0, %v1263
      %v1416 = vsel %vm1414, %v1415, %v1263
      %v1417 = vmul.u32.u64.compose %v1416, 2863311531
      %v1418 = vextract.low.u32 %v1417
      %v1419 = vextract.high.u32 %v1417
      %v1420 = vshrl.u32 %v1419, 4
      %v1421 = vmul.u32 %v1420, 24
      %v1422 = vsub.s32 %v1416, %v1421
      %v1423 = vsub.s32 0, %v1422
      %v1424 = vsel %vm1414, %v1423, %v1422
      %vm1425 = vcmp.lt.s32.totalorder %v1264, 0
      %v1426 = vsub.s32 0, %v1264
      %v1427 = vsel %vm1425, %v1426, %v1264
      %v1428 = vmul.u32.u64.compose %v1427, 2863311531
      %v1429 = vextract.low.u32 %v1428
      %v1430 = vextract.high.u32 %v1428
      %v1431 = vshrl.u32 %v1430, 4
      %v1432 = vmul.u32 %v1431, 24
      %v1433 = vsub.s32 %v1427, %v1432
      %v1434 = vsub.s32 0, %v1433
      %v1435 = vsel %vm1425, %v1434, %v1433
      %vm1436 = vcmp.lt.s32.totalorder %v1265, 0
      %v1437 = vsub.s32 0, %v1265
      %v1438 = vsel %vm1436, %v1437, %v1265
      %v1439 = vmul.u32.u64.compose %v1438, 2863311531
      %v1440 = vextract.low.u32 %v1439
      %v1441 = vextract.high.u32 %v1439
      %v1442 = vshrl.u32 %v1441, 4
      %v1443 = vmul.u32 %v1442, 24
      %v1444 = vsub.s32 %v1438, %v1443
      %v1445 = vsub.s32 0, %v1444
      %v1446 = vsel %vm1436, %v1445, %v1444
      %vm1447 = vcmp.lt.s32.totalorder %v1266, 0
      %v1448 = vsub.s32 0, %v1266
      %v1449 = vsel %vm1447, %v1448, %v1266
      %v1450 = vmul.u32.u64.compose %v1449, 2863311531
      %v1451 = vextract.low.u32 %v1450
      %v1452 = vextract.high.u32 %v1450
      %v1453 = vshrl.u32 %v1452, 4
      %v1454 = vmul.u32 %v1453, 24
      %v1455 = vsub.s32 %v1449, %v1454
      %v1456 = vsub.s32 0, %v1455
      %v1457 = vsel %vm1447, %v1456, %v1455
      %vm1458 = vcmp.lt.s32.totalorder %v1267, 0
      %v1459 = vsub.s32 0, %v1267
      %v1460 = vsel %vm1458, %v1459, %v1267
      %v1461 = vmul.u32.u64.compose %v1460, 2863311531
      %v1462 = vextract.low.u32 %v1461
      %v1463 = vextract.high.u32 %v1461
      %v1464 = vshrl.u32 %v1463, 4
      %v1465 = vmul.u32 %v1464, 24
      %v1466 = vsub.s32 %v1460, %v1465
      %v1467 = vsub.s32 0, %v1466
      %v1468 = vsel %vm1458, %v1467, %v1466
      %vm1469 = vcmp.lt.s32.totalorder %v1268, 0
      %v1470 = vsub.s32 0, %v1268
      %v1471 = vsel %vm1469, %v1470, %v1268
      %v1472 = vmul.u32.u64.compose %v1471, 2863311531
      %v1473 = vextract.low.u32 %v1472
      %v1474 = vextract.high.u32 %v1472
      %v1475 = vshrl.u32 %v1474, 4
      %v1476 = vmul.u32 %v1475, 24
      %v1477 = vsub.s32 %v1471, %v1476
      %v1478 = vsub.s32 0, %v1477
      %v1479 = vsel %vm1469, %v1478, %v1477
      %vm1480 = vcmp.lt.s32.totalorder %v1269, 0
      %v1481 = vsub.s32 0, %v1269
      %v1482 = vsel %vm1480, %v1481, %v1269
      %v1483 = vmul.u32.u64.compose %v1482, 2863311531
      %v1484 = vextract.low.u32 %v1483
      %v1485 = vextract.high.u32 %v1483
      %v1486 = vshrl.u32 %v1485, 4
      %v1487 = vmul.u32 %v1486, 24
      %v1488 = vsub.s32 %v1482, %v1487
      %v1489 = vsub.s32 0, %v1488
      %v1490 = vsel %vm1480, %v1489, %v1488
      %vm1491 = vcmp.lt.s32.totalorder %v1270, 0
      %v1492 = vsub.s32 0, %v1270
      %v1493 = vsel %vm1491, %v1492, %v1270
      %v1494 = vmul.u32.u64.compose %v1493, 2863311531
      %v1495 = vextract.low.u32 %v1494
      %v1496 = vextract.high.u32 %v1494
      %v1497 = vshrl.u32 %v1496, 4
      %v1498 = vmul.u32 %v1497, 24
      %v1499 = vsub.s32 %v1493, %v1498
      %v1500 = vsub.s32 0, %v1499
      %v1501 = vsel %vm1491, %v1500, %v1499
      %vm1502 = vcmp.ne.s32.totalorder %v1281, 0
      %vm1503 = vcmp.ne.s32.totalorder %v1292, 0
      %vm1504 = vcmp.ne.s32.totalorder %v1303, 0
      %vm1505 = vcmp.ne.s32.totalorder %v1314, 0
      %vm1506 = vcmp.ne.s32.totalorder %v1325, 0
      %vm1507 = vcmp.ne.s32.totalorder %v1336, 0
      %vm1508 = vcmp.ne.s32.totalorder %v1347, 0
      %vm1509 = vcmp.ne.s32.totalorder %v1358, 0
      %vm1510 = vcmp.ne.s32.totalorder %v1369, 0
      %vm1511 = vcmp.ne.s32.totalorder %v1380, 0
      %vm1512 = vcmp.ne.s32.totalorder %v1391, 0
      %vm1513 = vcmp.ne.s32.totalorder %v1402, 0
      %vm1514 = vcmp.ne.s32.totalorder %v1413, 0
      %vm1515 = vcmp.ne.s32.totalorder %v1424, 0
      %vm1516 = vcmp.ne.s32.totalorder %v1435, 0
      %vm1517 = vcmp.ne.s32.totalorder %v1446, 0
      %vm1518 = vcmp.ne.s32.totalorder %v1457, 0
      %vm1519 = vcmp.ne.s32.totalorder %v1468, 0
      %vm1520 = vcmp.ne.s32.totalorder %v1479, 0
      %vm1521 = vcmp.ne.s32.totalorder %v1490, 0
      %vm1522 = vcmp.ne.s32.totalorder %v1501, 0
      %vm1523 = vcmp.lt.s32.totalorder %v1281, 0
      %vm1524 = vcmp.lt.s32.totalorder %v1292, 0
      %vm1525 = vcmp.lt.s32.totalorder %v1303, 0
      %vm1526 = vcmp.lt.s32.totalorder %v1314, 0
      %vm1527 = vcmp.lt.s32.totalorder %v1325, 0
      %vm1528 = vcmp.lt.s32.totalorder %v1336, 0
      %vm1529 = vcmp.lt.s32.totalorder %v1347, 0
      %vm1530 = vcmp.lt.s32.totalorder %v1358, 0
      %vm1531 = vcmp.lt.s32.totalorder %v1369, 0
      %vm1532 = vcmp.lt.s32.totalorder %v1380, 0
      %vm1533 = vcmp.lt.s32.totalorder %v1391, 0
      %vm1534 = vcmp.lt.s32.totalorder %v1402, 0
      %vm1535 = vcmp.lt.s32.totalorder %v1413, 0
      %vm1536 = vcmp.lt.s32.totalorder %v1424, 0
      %vm1537 = vcmp.lt.s32.totalorder %v1435, 0
      %vm1538 = vcmp.lt.s32.totalorder %v1446, 0
      %vm1539 = vcmp.lt.s32.totalorder %v1457, 0
      %vm1540 = vcmp.lt.s32.totalorder %v1468, 0
      %vm1541 = vcmp.lt.s32.totalorder %v1479, 0
      %vm1542 = vcmp.lt.s32.totalorder %v1490, 0
      %vm1543 = vcmp.lt.s32.totalorder %v1501, 0
      %vm1544 = vmand %vm1523, %vm1502
      %vm1545 = vmand %vm1524, %vm1503
      %vm1546 = vmand %vm1525, %vm1504
      %vm1547 = vmand %vm1526, %vm1505
      %vm1548 = vmand %vm1527, %vm1506
      %vm1549 = vmand %vm1528, %vm1507
      %vm1550 = vmand %vm1529, %vm1508
      %vm1551 = vmand %vm1530, %vm1509
      %vm1552 = vmand %vm1531, %vm1510
      %vm1553 = vmand %vm1532, %vm1511
      %vm1554 = vmand %vm1533, %vm1512
      %vm1555 = vmand %vm1534, %vm1513
      %vm1556 = vmand %vm1535, %vm1514
      %vm1557 = vmand %vm1536, %vm1515
      %vm1558 = vmand %vm1537, %vm1516
      %vm1559 = vmand %vm1538, %vm1517
      %vm1560 = vmand %vm1539, %vm1518
      %vm1561 = vmand %vm1540, %vm1519
      %vm1562 = vmand %vm1541, %vm1520
      %vm1563 = vmand %vm1542, %vm1521
      %vm1564 = vmand %vm1543, %vm1522
      %v1565 = vadd.s32 %v1281, 24
      %v1566 = vadd.s32 %v1292, 24
      %v1567 = vadd.s32 %v1303, 24
      %v1568 = vadd.s32 %v1314, 24
      %v1569 = vadd.s32 %v1325, 24
      %v1570 = vadd.s32 %v1336, 24
      %v1571 = vadd.s32 %v1347, 24
      %v1572 = vadd.s32 %v1358, 24
      %v1573 = vadd.s32 %v1369, 24
      %v1574 = vadd.s32 %v1380, 24
      %v1575 = vadd.s32 %v1391, 24
      %v1576 = vadd.s32 %v1402, 24
      %v1577 = vadd.s32 %v1413, 24
      %v1578 = vadd.s32 %v1424, 24
      %v1579 = vadd.s32 %v1435, 24
      %v1580 = vadd.s32 %v1446, 24
      %v1581 = vadd.s32 %v1457, 24
      %v1582 = vadd.s32 %v1468, 24
      %v1583 = vadd.s32 %v1479, 24
      %v1584 = vadd.s32 %v1490, 24
      %v1585 = vadd.s32 %v1501, 24
      %v1586 = vsel %vm1544, %v1565, %v1281
      %v1587 = vsel %vm1545, %v1566, %v1292
      %v1588 = vsel %vm1546, %v1567, %v1303
      %v1589 = vsel %vm1547, %v1568, %v1314
      %v1590 = vsel %vm1548, %v1569, %v1325
      %v1591 = vsel %vm1549, %v1570, %v1336
      %v1592 = vsel %vm1550, %v1571, %v1347
      %v1593 = vsel %vm1551, %v1572, %v1358
      %v1594 = vsel %vm1552, %v1573, %v1369
      %v1595 = vsel %vm1553, %v1574, %v1380
      %v1596 = vsel %vm1554, %v1575, %v1391
      %v1597 = vsel %vm1555, %v1576, %v1402
      %v1598 = vsel %vm1556, %v1577, %v1413
      %v1599 = vsel %vm1557, %v1578, %v1424
      %v1600 = vsel %vm1558, %v1579, %v1435
      %v1601 = vsel %vm1559, %v1580, %v1446
      %v1602 = vsel %vm1560, %v1581, %v1457
      %v1603 = vsel %vm1561, %v1582, %v1468
      %v1604 = vsel %vm1562, %v1583, %v1479
      %v1605 = vsel %vm1563, %v1584, %v1490
      %v1606 = vsel %vm1564, %v1585, %v1501
      %vm1607 = vcmp.ge.s32.totalorder %v1586, 1
      %vm1608 = vcmp.ge.s32.totalorder %v1587, 1
      %vm1609 = vcmp.ge.s32.totalorder %v1588, 1
      %vm1610 = vcmp.ge.s32.totalorder %v1589, 1
      %vm1611 = vcmp.ge.s32.totalorder %v1590, 1
      %vm1612 = vcmp.ge.s32.totalorder %v1591, 1
      %vm1613 = vcmp.ge.s32.totalorder %v1592, 1
      %vm1614 = vcmp.ge.s32.totalorder %v1593, 1
      %vm1615 = vcmp.ge.s32.totalorder %v1594, 1
      %vm1616 = vcmp.ge.s32.totalorder %v1595, 1
      %vm1617 = vcmp.ge.s32.totalorder %v1596, 1
      %vm1618 = vcmp.ge.s32.totalorder %v1597, 1
      %vm1619 = vcmp.ge.s32.totalorder %v1598, 1
      %vm1620 = vcmp.ge.s32.totalorder %v1599, 1
      %vm1621 = vcmp.ge.s32.totalorder %v1600, 1
      %vm1622 = vcmp.ge.s32.totalorder %v1601, 1
      %vm1623 = vcmp.ge.s32.totalorder %v1602, 1
      %vm1624 = vcmp.ge.s32.totalorder %v1603, 1
      %vm1625 = vcmp.ge.s32.totalorder %v1604, 1
      %vm1626 = vcmp.ge.s32.totalorder %v1605, 1
      %vm1627 = vcmp.ge.s32.totalorder %v1606, 1
      %vm1628 = vcmp.lt.s32.totalorder %v1586, 18
      %vm1629 = vcmp.lt.s32.totalorder %v1587, 18
      %vm1630 = vcmp.lt.s32.totalorder %v1588, 18
      %vm1631 = vcmp.lt.s32.totalorder %v1589, 18
      %vm1632 = vcmp.lt.s32.totalorder %v1590, 18
      %vm1633 = vcmp.lt.s32.totalorder %v1591, 18
      %vm1634 = vcmp.lt.s32.totalorder %v1592, 18
      %vm1635 = vcmp.lt.s32.totalorder %v1593, 18
      %vm1636 = vcmp.lt.s32.totalorder %v1594, 18
      %vm1637 = vcmp.lt.s32.totalorder %v1595, 18
      %vm1638 = vcmp.lt.s32.totalorder %v1596, 18
      %vm1639 = vcmp.lt.s32.totalorder %v1597, 18
      %vm1640 = vcmp.lt.s32.totalorder %v1598, 18
      %vm1641 = vcmp.lt.s32.totalorder %v1599, 18
      %vm1642 = vcmp.lt.s32.totalorder %v1600, 18
      %vm1643 = vcmp.lt.s32.totalorder %v1601, 18
      %vm1644 = vcmp.lt.s32.totalorder %v1602, 18
      %vm1645 = vcmp.lt.s32.totalorder %v1603, 18
      %vm1646 = vcmp.lt.s32.totalorder %v1604, 18
      %vm1647 = vcmp.lt.s32.totalorder %v1605, 18
      %vm1648 = vcmp.lt.s32.totalorder %v1606, 18
      %vm1649 = vmand %vm1607, %vm1628
      %vm1650 = vmand %vm1608, %vm1629
      %vm1651 = vmand %vm1609, %vm1630
      %vm1652 = vmand %vm1610, %vm1631
      %vm1653 = vmand %vm1611, %vm1632
      %vm1654 = vmand %vm1612, %vm1633
      %vm1655 = vmand %vm1613, %vm1634
      %vm1656 = vmand %vm1614, %vm1635
      %vm1657 = vmand %vm1615, %vm1636
      %vm1658 = vmand %vm1616, %vm1637
      %vm1659 = vmand %vm1617, %vm1638
      %vm1660 = vmand %vm1618, %vm1639
      %vm1661 = vmand %vm1619, %vm1640
      %vm1662 = vmand %vm1620, %vm1641
      %vm1663 = vmand %vm1621, %vm1642
      %vm1664 = vmand %vm1622, %vm1643
      %vm1665 = vmand %vm1623, %vm1644
      %vm1666 = vmand %vm1624, %vm1645
      %vm1667 = vmand %vm1625, %vm1646
      %vm1668 = vmand %vm1626, %vm1647
      %vm1669 = vmand %vm1627, %vm1648
      %v1670 = vsel %vm1649, 1, 0
      %v1671 = vsel %vm1650, 1, 0
      %v1672 = vsel %vm1651, 1, 0
      %v1673 = vsel %vm1652, 1, 0
      %v1674 = vsel %vm1653, 1, 0
      %v1675 = vsel %vm1654, 1, 0
      %v1676 = vsel %vm1655, 1, 0
      %v1677 = vsel %vm1656, 1, 0
      %v1678 = vsel %vm1657, 1, 0
      %v1679 = vsel %vm1658, 1, 0
      %v1680 = vsel %vm1659, 1, 0
      %v1681 = vsel %vm1660, 1, 0
      %v1682 = vsel %vm1661, 1, 0
      %v1683 = vsel %vm1662, 1, 0
      %v1684 = vsel %vm1663, 1, 0
      %v1685 = vsel %vm1664, 1, 0
      %v1686 = vsel %vm1665, 1, 0
      %v1687 = vsel %vm1666, 1, 0
      %v1688 = vsel %vm1667, 1, 0
      %v1689 = vsel %vm1668, 1, 0
      %v1690 = vsel %vm1669, 1, 0
      %vm1691 = vcmp.eq.s32.totalorder %v1670, 1
      %vm1692 = vcmp.eq.s32.totalorder %v1671, 1
      %vm1693 = vcmp.eq.s32.totalorder %v1672, 1
      %vm1694 = vcmp.eq.s32.totalorder %v1673, 1
      %vm1695 = vcmp.eq.s32.totalorder %v1674, 1
      %vm1696 = vcmp.eq.s32.totalorder %v1675, 1
      %vm1697 = vcmp.eq.s32.totalorder %v1676, 1
      %vm1698 = vcmp.eq.s32.totalorder %v1677, 1
      %vm1699 = vcmp.eq.s32.totalorder %v1678, 1
      %vm1700 = vcmp.eq.s32.totalorder %v1679, 1
      %vm1701 = vcmp.eq.s32.totalorder %v1680, 1
      %vm1702 = vcmp.eq.s32.totalorder %v1681, 1
      %vm1703 = vcmp.eq.s32.totalorder %v1682, 1
      %vm1704 = vcmp.eq.s32.totalorder %v1683, 1
      %vm1705 = vcmp.eq.s32.totalorder %v1684, 1
      %vm1706 = vcmp.eq.s32.totalorder %v1685, 1
      %vm1707 = vcmp.eq.s32.totalorder %v1686, 1
      %vm1708 = vcmp.eq.s32.totalorder %v1687, 1
      %vm1709 = vcmp.eq.s32.totalorder %v1688, 1
      %vm1710 = vcmp.eq.s32.totalorder %v1689, 1
      %vm1711 = vcmp.eq.s32.totalorder %v1690, 1
      %v1712 = vsel %vm1691, %v1207, 0.0
      %v1713 = vsel %vm1691, %v1208, 0.0
      %v1714 = vsel %vm1692, %v1209, 0.0
      %v1715 = vsel %vm1692, %v1210, 0.0
      %v1716 = vsel %vm1693, %v1211, 0.0
      %v1717 = vsel %vm1693, %v1212, 0.0
      %v1718 = vsel %vm1694, %v1213, 0.0
      %v1719 = vsel %vm1694, %v1214, 0.0
      %v1720 = vsel %vm1695, %v1215, 0.0
      %v1721 = vsel %vm1695, %v1216, 0.0
      %v1722 = vsel %vm1696, %v1217, 0.0
      %v1723 = vsel %vm1696, %v1218, 0.0
      %v1724 = vsel %vm1697, %v1219, 0.0
      %v1725 = vsel %vm1697, %v1220, 0.0
      %v1726 = vsel %vm1698, %v1221, 0.0
      %v1727 = vsel %vm1698, %v1222, 0.0
      %v1728 = vsel %vm1699, %v1223, 0.0
      %v1729 = vsel %vm1699, %v1224, 0.0
      %v1730 = vsel %vm1700, %v1225, 0.0
      %v1731 = vsel %vm1700, %v1226, 0.0
      %v1732 = vsel %vm1701, %v1227, 0.0
      %v1733 = vsel %vm1701, %v1228, 0.0
      %v1734 = vsel %vm1702, %v1229, 0.0
      %v1735 = vsel %vm1702, %v1230, 0.0
      %v1736 = vsel %vm1703, %v1231, 0.0
      %v1737 = vsel %vm1703, %v1232, 0.0
      %v1738 = vsel %vm1704, %v1233, 0.0
      %v1739 = vsel %vm1704, %v1234, 0.0
      %v1740 = vsel %vm1705, %v1235, 0.0
      %v1741 = vsel %vm1705, %v1236, 0.0
      %v1742 = vsel %vm1706, %v1237, 0.0
      %v1743 = vsel %vm1706, %v1238, 0.0
      %v1744 = vsel %vm1707, %v1239, 0.0
      %v1745 = vsel %vm1707, %v1240, 0.0
      %v1746 = vsel %vm1708, %v1241, 0.0
      %v1747 = vsel %vm1708, %v1242, 0.0
      %v1748 = vsel %vm1709, %v1243, 0.0
      %v1749 = vsel %vm1709, %v1244, 0.0
      %v1750 = vsel %vm1710, %v1245, 0.0
      %v1751 = vsel %vm1710, %v1246, 0.0
      %v1752 = vsel %vm1711, %v1247, 0.0
      %v1753 = vsel %vm1711, %v1248, 0.0
      %1754 = vst [vmem:[#allocation2] sm:$0xff] 0.0
      %vm1755 = vcmask 261120
      %1756 = vst.msk [vmem:[#allocation2 + $0x8] sm:$0xff] %vm1755, 0.0
      %1757 = vst [vmem:[#allocation2 + $0x10] sm:$0xff] 0.0
      %1758 = vst.msk [vmem:[#allocation2 + $0x18] sm:$0xff] %vm1755, 0.0
      %1759 = vst [vmem:[#allocation2 + $0x20] sm:$0xff] 0.0
      %1760 = vst.msk [vmem:[#allocation2 + $0x28] sm:$0xff] %vm1755, 0.0
      %1761 = vst [vmem:[#allocation2 + $0x30] sm:$0xff] 0.0
      %1762 = vst.msk [vmem:[#allocation2 + $0x38] sm:$0xff] %vm1755, 0.0
      %1763 = vst [vmem:[#allocation2 + $0x40] sm:$0xff] 0.0
      %1764 = vst.msk [vmem:[#allocation2 + $0x48] sm:$0xff] %vm1755, 0.0
      %1765 = vst [vmem:[#allocation2 + $0x50] sm:$0xff] 0.0
      %1766 = vst.msk [vmem:[#allocation2 + $0x58] sm:$0xff] %vm1755, 0.0
      %1767 = vst [vmem:[#allocation2 + $0x60] sm:$0xff] 0.0
      %1768 = vst.msk [vmem:[#allocation2 + $0x68] sm:$0xff] %vm1755, 0.0
      %1769 = vst [vmem:[#allocation2 + $0x70] sm:$0xff] 0.0
      %1770 = vst.msk [vmem:[#allocation2 + $0x78] sm:$0xff] %vm1755, 0.0
      %1771 = vst [vmem:[#allocation2 + $0x80] sm:$0xff] 0.0
      %1772 = vst.msk [vmem:[#allocation2 + $0x88] sm:$0xff] %vm1755, 0.0
      %1773 = vst [vmem:[#allocation2 + $0x90] sm:$0xff] 0.0
      %1774 = vst.msk [vmem:[#allocation2 + $0x98] sm:$0xff] %vm1755, 0.0
      %1775 = vst [vmem:[#allocation2 + $0xa0] sm:$0xff] 0.0
      %1776 = vst.msk [vmem:[#allocation2 + $0xa8] sm:$0xff] %vm1755, 0.0
      %1777 = vst [vmem:[#allocation2 + $0xb0] sm:$0xff] 0.0
      %1778 = vst.msk [vmem:[#allocation2 + $0xb8] sm:$0xff] %vm1755, 0.0
      %1779 = vst [vmem:[#allocation2 + $0xc0] sm:$0xff] 0.0
      %1780 = vst.msk [vmem:[#allocation2 + $0xc8] sm:$0xff] %vm1755, 0.0
      %1781 = vst [vmem:[#allocation2 + $0xd0] sm:$0xff] 0.0
      %1782 = vst.msk [vmem:[#allocation2 + $0xd8] sm:$0xff] %vm1755, 0.0
      %1783 = vst [vmem:[#allocation2 + $0xe0] sm:$0xff] 0.0
      %1784 = vst.msk [vmem:[#allocation2 + $0xe8] sm:$0xff] %vm1755, 0.0
      %1785 = vst [vmem:[#allocation2 + $0xf0] sm:$0xff] 0.0
      %1786 = vst.msk [vmem:[#allocation2 + $0xf8] sm:$0xff] %vm1755, 0.0
      %1787 = vst [vmem:[#allocation2 + $0x100] sm:$0xff] 0.0
      %1788 = vst.msk [vmem:[#allocation2 + $0x108] sm:$0xff] %vm1755, 0.0
      %1789 = vst [vmem:[#allocation2 + $0x110] sm:$0xff] 0.0
      %1790 = vst.msk [vmem:[#allocation2 + $0x118] sm:$0xff] %vm1755, 0.0
      %1791 = vst [vmem:[#allocation2 + $0x120] sm:$0xff] 0.0
      %1792 = vst.msk [vmem:[#allocation2 + $0x128] sm:$0xff] %vm1755, 0.0
      %1793 = vst [vmem:[#allocation2 + $0x130] sm:$0xff] 0.0
      %1794 = vst.msk [vmem:[#allocation2 + $0x138] sm:$0xff] %vm1755, 0.0
      %1795 = vst [vmem:[#allocation2 + $0x140] sm:$0xff] 0.0
      %1796 = vst.msk [vmem:[#allocation2 + $0x148] sm:$0xff] %vm1755, 0.0
      %1797 = vst [vmem:[#allocation2 + $0x150] sm:$0xff] 0.0
      %1798 = vst.msk [vmem:[#allocation2 + $0x158] sm:$0xff] %vm1755, 0.0
      %1799 = vst [vmem:[#allocation2 + $0x160] sm:$0xff] 0.0
      %1800 = vst.msk [vmem:[#allocation2 + $0x168] sm:$0xff] %vm1755, 0.0
      %1801 = vst [vmem:[#allocation2 + $0x170] sm:$0xff] 0.0
      %1802 = vst.msk [vmem:[#allocation2 + $0x178] sm:$0xff] %vm1755, 0.0
      %1803 = vst [vmem:[#allocation2 + $0x180] sm:$0xff] 0.0
      %1804 = vst.msk [vmem:[#allocation2 + $0x188] sm:$0xff] %vm1755, 0.0
      %1805 = vst [vmem:[#allocation2 + $0x190] sm:$0xff] 0.0
      %1806 = vst.msk [vmem:[#allocation2 + $0x198] sm:$0xff] %vm1755, 0.0
      %1807 = vst [vmem:[#allocation2 + $0x1a0] sm:$0xff] 0.0
      %1808 = vst.msk [vmem:[#allocation2 + $0x1a8] sm:$0xff] %vm1755, 0.0
      %1809 = vst [vmem:[#allocation2 + $0x1b0] sm:$0xff] 0.0
      %1810 = vst.msk [vmem:[#allocation2 + $0x1b8] sm:$0xff] %vm1755, 0.0
      %1811 = vst [vmem:[#allocation2 + $0x1c0] sm:$0xff] 0.0
      %1812 = vst.msk [vmem:[#allocation2 + $0x1c8] sm:$0xff] %vm1755, 0.0
      %1813 = vst [vmem:[#allocation2 + $0x1d0] sm:$0xff] 0.0
      %1814 = vst.msk [vmem:[#allocation2 + $0x1d8] sm:$0xff] %vm1755, 0.0
      %1815 = vst [vmem:[#allocation2 + $0x1e0] sm:$0xff] 0.0
      %1816 = vst.msk [vmem:[#allocation2 + $0x1e8] sm:$0xff] %vm1755, 0.0
      %1817 = vst [vmem:[#allocation2 + $0x1f0] sm:$0xff] 0.0
      %1818 = vst.msk [vmem:[#allocation2 + $0x1f8] sm:$0xff] %vm1755, 0.0
      %1819 = vst [vmem:[#allocation2 + $0x200] sm:$0xff] 0.0
      %1820 = vst.msk [vmem:[#allocation2 + $0x208] sm:$0xff] %vm1755, 0.0
      %1821 = vst [vmem:[#allocation2 + $0x210] sm:$0xff] 0.0
      %1822 = vst.msk [vmem:[#allocation2 + $0x218] sm:$0xff] %vm1755, 0.0
      %1823 = vst [vmem:[#allocation2 + $0x220] sm:$0xff] 0.0
      %1824 = vst.msk [vmem:[#allocation2 + $0x228] sm:$0xff] %vm1755, 0.0
      %1825 = vst [vmem:[#allocation2 + $0x230] sm:$0xff] 0.0
      %1826 = vst.msk [vmem:[#allocation2 + $0x238] sm:$0xff] %vm1755, 0.0
      %1827 = vst [vmem:[#allocation2] sm:$0xff] %v1712
      %1828 = vst.msk [vmem:[#allocation2 + $0x8] sm:$0xff] %vm1755, %v1713
      %1829 = vst [vmem:[#allocation2 + $0x10] sm:$0xff] %v1714
      %1830 = vst.msk [vmem:[#allocation2 + $0x18] sm:$0xff] %vm1755, %v1715
      %1831 = vst [vmem:[#allocation2 + $0x20] sm:$0xff] %v1716
      %1832 = vst.msk [vmem:[#allocation2 + $0x28] sm:$0xff] %vm1755, %v1717
      %1833 = vst [vmem:[#allocation2 + $0x40] sm:$0xff] %v1718
      %1834 = vst.msk [vmem:[#allocation2 + $0x48] sm:$0xff] %vm1755, %v1719
      %1835 = vst [vmem:[#allocation2 + $0x50] sm:$0xff] %v1720
      %1836 = vst.msk [vmem:[#allocation2 + $0x58] sm:$0xff] %vm1755, %v1721
      %1837 = vst [vmem:[#allocation2 + $0x60] sm:$0xff] %v1722
      %1838 = vst.msk [vmem:[#allocation2 + $0x68] sm:$0xff] %vm1755, %v1723
      %1839 = vst [vmem:[#allocation2 + $0x80] sm:$0xff] %v1724
      %1840 = vst.msk [vmem:[#allocation2 + $0x88] sm:$0xff] %vm1755, %v1725
      %1841 = vst [vmem:[#allocation2 + $0x90] sm:$0xff] %v1726
      %1842 = vst.msk [vmem:[#allocation2 + $0x98] sm:$0xff] %vm1755, %v1727
      %1843 = vst [vmem:[#allocation2 + $0xa0] sm:$0xff] %v1728
      %1844 = vst.msk [vmem:[#allocation2 + $0xa8] sm:$0xff] %vm1755, %v1729
      %1845 = vst [vmem:[#allocation2 + $0xc0] sm:$0xff] %v1730
      %1846 = vst.msk [vmem:[#allocation2 + $0xc8] sm:$0xff] %vm1755, %v1731
      %1847 = vst [vmem:[#allocation2 + $0xd0] sm:$0xff] %v1732
      %1848 = vst.msk [vmem:[#allocation2 + $0xd8] sm:$0xff] %vm1755, %v1733
      %1849 = vst [vmem:[#allocation2 + $0xe0] sm:$0xff] %v1734
      %1850 = vst.msk [vmem:[#allocation2 + $0xe8] sm:$0xff] %vm1755, %v1735
      %1851 = vst [vmem:[#allocation2 + $0x100] sm:$0xff] %v1736
      %1852 = vst.msk [vmem:[#allocation2 + $0x108] sm:$0xff] %vm1755, %v1737
      %1853 = vst [vmem:[#allocation2 + $0x110] sm:$0xff] %v1738
      %1854 = vst.msk [vmem:[#allocation2 + $0x118] sm:$0xff] %vm1755, %v1739
      %1855 = vst [vmem:[#allocation2 + $0x120] sm:$0xff] %v1740
      %1856 = vst.msk [vmem:[#allocation2 + $0x128] sm:$0xff] %vm1755, %v1741
      %1857 = vst [vmem:[#allocation2 + $0x140] sm:$0xff] %v1742
      %1858 = vst.msk [vmem:[#allocation2 + $0x148] sm:$0xff] %vm1755, %v1743
      %1859 = vst [vmem:[#allocation2 + $0x150] sm:$0xff] %v1744
      %1860 = vst.msk [vmem:[#allocation2 + $0x158] sm:$0xff] %vm1755, %v1745
      %1861 = vst [vmem:[#allocation2 + $0x160] sm:$0xff] %v1746
      %1862 = vst.msk [vmem:[#allocation2 + $0x168] sm:$0xff] %vm1755, %v1747
      %1863 = vst [vmem:[#allocation2 + $0x180] sm:$0xff] %v1748
      %1864 = vst.msk [vmem:[#allocation2 + $0x188] sm:$0xff] %vm1755, %v1749
      %1865 = vst [vmem:[#allocation2 + $0x190] sm:$0xff] %v1750
      %1866 = vst.msk [vmem:[#allocation2 + $0x198] sm:$0xff] %vm1755, %v1751
      %1867 = vst [vmem:[#allocation2 + $0x1a0] sm:$0xff] %v1752
      %1868 = vst.msk [vmem:[#allocation2 + $0x1a8] sm:$0xff] %vm1755, %v1753
      %s1869 = scalar_lea.vmem [#allocation2], 256
      %v1870 = vld [vmem:[%s1869] sm:$0xfc]
      %v1871 = vld [vmem:[%s1869 + $0x8] sm:$0xfc]
      %v1872 = vld [vmem:[%s1869 + $0x10] sm:$0xff]
      %v1873 = vld [vmem:[%s1869 + $0x18] sm:$0xff]
      %v1874 = vld [vmem:[%s1869 + $0x20] sm:$0xff]
      %v1875 = vld [vmem:[%s1869 + $0x28] sm:$0xff]
      %v1876 = vld [vmem:[%s1869 + $0x30] sm:$0x3]
      %v1877 = vld [vmem:[%s1869 + $0x38] sm:$0x3]
      %v1878 = vld [vmem:[%s1869 + $0x40] sm:$0xfc]
      %v1879 = vld [vmem:[%s1869 + $0x48] sm:$0xfc]
      %v1880 = vld [vmem:[%s1869 + $0x50] sm:$0xff]
      %v1881 = vld [vmem:[%s1869 + $0x58] sm:$0xff]
      %v1882 = vld [vmem:[%s1869 + $0x60] sm:$0xff]
      %v1883 = vld [vmem:[%s1869 + $0x68] sm:$0xff]
      %v1884 = vld [vmem:[%s1869 + $0x70] sm:$0x3]
      %v1885 = vld [vmem:[%s1869 + $0x78] sm:$0x3]
      %v1886 = vld [vmem:[%s1869 + $0x80] sm:$0xfc]
      %v1887 = vld [vmem:[%s1869 + $0x88] sm:$0xfc]
      %v1888 = vld [vmem:[%s1869 + $0x90] sm:$0xff]
      %v1889 = vld [vmem:[%s1869 + $0x98] sm:$0xff]
      %v1890 = vld [vmem:[%s1869 + $0xa0] sm:$0xff]
      %v1891 = vld [vmem:[%s1869 + $0xa8] sm:$0xff]
      %v1892 = vld [vmem:[%s1869 + $0xb0] sm:$0x3]
      %v1893 = vld [vmem:[%s1869 + $0xb8] sm:$0x3]
      %v1894 = vld [vmem:[%s1869 + $0xc0] sm:$0xfc]
      %v1895 = vld [vmem:[%s1869 + $0xc8] sm:$0xfc]
      %v1896 = vld [vmem:[%s1869 + $0xd0] sm:$0xff]
      %v1897 = vld [vmem:[%s1869 + $0xd8] sm:$0xff]
      %v1898 = vld [vmem:[%s1869 + $0xe0] sm:$0xff]
      %v1899 = vld [vmem:[%s1869 + $0xe8] sm:$0xff]
      %v1900 = vld [vmem:[%s1869 + $0xf0] sm:$0x3]
      %v1901 = vld [vmem:[%s1869 + $0xf8] sm:$0x3]
      %v1902 = vld [vmem:[%s1869 + $0x100] sm:$0xfc]
      %v1903 = vld [vmem:[%s1869 + $0x108] sm:$0xfc]
      %v1904 = vld [vmem:[%s1869 + $0x110] sm:$0xff]
      %v1905 = vld [vmem:[%s1869 + $0x118] sm:$0xff]
      %v1906 = vld [vmem:[%s1869 + $0x120] sm:$0xff]
      %v1907 = vld [vmem:[%s1869 + $0x128] sm:$0xff]
      %v1908 = vld [vmem:[%s1869 + $0x130] sm:$0x3]
      %v1909 = vld [vmem:[%s1869 + $0x138] sm:$0x3]
      %vm1950 = vcmask 1045504
      %v1951 = vrot.slane %v1870, 2
      %v1952 = vrot.slane %v1872, 2
      %v1953 = vsel %vm1950, %v1951, %v1952
      %v1954 = vrot.slane %v1871, 2
      %v1955 = vrot.slane %v1873, 2
      %v1956 = vsel %vm1950, %v1954, %v1955
      %v1957 = vrot.slane %v1874, 2
      %v1958 = vsel %vm1950, %v1952, %v1957
      %v1959 = vrot.slane %v1875, 2
      %v1960 = vsel %vm1950, %v1955, %v1959
      %v1961 = vrot.slane %v1876, 2
      %v1962 = vsel %vm1950, %v1957, %v1961
      %v1963 = vrot.slane %v1877, 2
      %v1964 = vsel %vm1950, %v1959, %v1963
      %v1965 = vrot.slane %v1878, 2
      %v1966 = vrot.slane %v1880, 2
      %v1967 = vsel %vm1950, %v1965, %v1966
      %v1968 = vrot.slane %v1879, 2
      %v1969 = vrot.slane %v1881, 2
      %v1970 = vsel %vm1950, %v1968, %v1969
      %v1971 = vrot.slane %v1882, 2
      %v1972 = vsel %vm1950, %v1966, %v1971
      %v1973 = vrot.slane %v1883, 2
      %v1974 = vsel %vm1950, %v1969, %v1973
      %v1975 = vrot.slane %v1884, 2
      %v1976 = vsel %vm1950, %v1971, %v1975
      %v1977 = vrot.slane %v1885, 2
      %v1978 = vsel %vm1950, %v1973, %v1977
      %v1979 = vrot.slane %v1886, 2
      %v1980 = vrot.slane %v1888, 2
      %v1981 = vsel %vm1950, %v1979, %v1980
      %v1982 = vrot.slane %v1887, 2
      %v1983 = vrot.slane %v1889, 2
      %v1984 = vsel %vm1950, %v1982, %v1983
      %v1985 = vrot.slane %v1890, 2
      %v1986 = vsel %vm1950, %v1980, %v1985
      %v1987 = vrot.slane %v1891, 2
      %v1988 = vsel %vm1950, %v1983, %v1987
      %v1989 = vrot.slane %v1892, 2
      %v1990 = vsel %vm1950, %v1985, %v1989
      %v1991 = vrot.slane %v1893, 2
      %v1992 = vsel %vm1950, %v1987, %v1991
      %v1993 = vrot.slane %v1894, 2
      %v1994 = vrot.slane %v1896, 2
      %v1995 = vsel %vm1950, %v1993, %v1994
      %v1996 = vrot.slane %v1895, 2
      %v1997 = vrot.slane %v1897, 2
      %v1998 = vsel %vm1950, %v1996, %v1997
      %v1999 = vrot.slane %v1898, 2
      %v2000 = vsel %vm1950, %v1994, %v1999
      %v2001 = vrot.slane %v1899, 2
      %v2002 = vsel %vm1950, %v1997, %v2001
      %v2003 = vrot.slane %v1900, 2
      %v2004 = vsel %vm1950, %v1999, %v2003
      %v2005 = vrot.slane %v1901, 2
      %v2006 = vsel %vm1950, %v2001, %v2005
      %v2007 = vrot.slane %v1902, 2
      %v2008 = vrot.slane %v1904, 2
      %v2009 = vsel %vm1950, %v2007, %v2008
      %v2010 = vrot.slane %v1903, 2
      %v2011 = vrot.slane %v1905, 2
      %v2012 = vsel %vm1950, %v2010, %v2011
      %v2013 = vrot.slane %v1906, 2
      %v2014 = vsel %vm1950, %v2008, %v2013
      %v2015 = vrot.slane %v1907, 2
      %v2016 = vsel %vm1950, %v2011, %v2015
      %v2017 = vrot.slane %v1908, 2
      %v2018 = vsel %vm1950, %v2013, %v2017
      %v2019 = vrot.slane %v1909, 2
      %v2020 = vsel %vm1950, %v2015, %v2019
      %v2036 = vld [vmem:[%s219] sm:$0xff]
      %v2037 = vld [vmem:[%s219 + $0x8] sm:$0xff]
      %v2038 = vld [vmem:[%s219 + $0x10] sm:$0xff]
      %v2039 = vld [vmem:[%s219 + $0x18] sm:$0xff]
      %v2040 = vld [vmem:[%s219 + $0x20] sm:$0xff]
      %v2041 = vld [vmem:[%s219 + $0x28] sm:$0xff]
      %v2042 = vld [vmem:[%s219 + $0x30] sm:$0xff]
      %v2043 = vld [vmem:[%s219 + $0x38] sm:$0xff]
      %v2044 = vld [vmem:[%s219 + $0x40] sm:$0xff]
      %v2045 = vld [vmem:[%s219 + $0x48] sm:$0xff]
      %v2046 = vld [vmem:[%s219 + $0x50] sm:$0xff]
      %v2047 = vld [vmem:[%s219 + $0x58] sm:$0xff]
      %v2048 = vld [vmem:[%s219 + $0x60] sm:$0xff]
      %v2049 = vld [vmem:[%s219 + $0x68] sm:$0xff]
      %v2050 = vld [vmem:[%s219 + $0x70] sm:$0xff]
      %v2051 = vld [vmem:[%s219 + $0x78] sm:$0xff]
      %v2052 = vld [vmem:[%s219 + $0x80] sm:$0xff]
      %v2053 = vld [vmem:[%s219 + $0x88] sm:$0xff]
      %v2054 = vld [vmem:[%s219 + $0x90] sm:$0xff]
      %v2055 = vld [vmem:[%s219 + $0x98] sm:$0xff]
      %v2056 = vld [vmem:[%s1869] sm:$0xfe]
      %v2057 = vld [vmem:[%s1869 + $0x8] sm:$0xfe]
      %v2058 = vld [vmem:[%s1869 + $0x30] sm:$0x1]
      %v2059 = vld [vmem:[%s1869 + $0x38] sm:$0x1]
      %v2060 = vld [vmem:[%s1869 + $0x40] sm:$0xfe]
      %v2061 = vld [vmem:[%s1869 + $0x48] sm:$0xfe]
      %v2062 = vld [vmem:[%s1869 + $0x70] sm:$0x1]
      %v2063 = vld [vmem:[%s1869 + $0x78] sm:$0x1]
      %v2064 = vld [vmem:[%s1869 + $0x80] sm:$0xfe]
      %v2065 = vld [vmem:[%s1869 + $0x88] sm:$0xfe]
      %v2066 = vld [vmem:[%s1869 + $0xb0] sm:$0x1]
      %v2067 = vld [vmem:[%s1869 + $0xb8] sm:$0x1]
      %v2068 = vld [vmem:[%s1869 + $0xc0] sm:$0xfe]
      %v2069 = vld [vmem:[%s1869 + $0xc8] sm:$0xfe]
      %v2070 = vld [vmem:[%s1869 + $0xf0] sm:$0x1]
      %v2071 = vld [vmem:[%s1869 + $0xf8] sm:$0x1]
      %v2072 = vld [vmem:[%s1869 + $0x100] sm:$0xfe]
      %v2073 = vld [vmem:[%s1869 + $0x108] sm:$0xfe]
      %v2074 = vld [vmem:[%s1869 + $0x130] sm:$0x1]
      %v2075 = vld [vmem:[%s1869 + $0x138] sm:$0x1]
      %vm2096 = vcmask 1046528
      %v2097 = vrot.slane %v2056, 1
      %v2098 = vrot.slane %v1872, 1
      %v2099 = vsel %vm2096, %v2097, %v2098
      %v2100 = vrot.slane %v2057, 1
      %v2101 = vrot.slane %v1873, 1
      %v2102 = vsel %vm2096, %v2100, %v2101
      %v2103 = vrot.slane %v1874, 1
      %v2104 = vsel %vm2096, %v2098, %v2103
      %v2105 = vrot.slane %v1875, 1
      %v2106 = vsel %vm2096, %v2101, %v2105
      %v2107 = vrot.slane %v2058, 1
      %v2108 = vsel %vm2096, %v2103, %v2107
      %v2109 = vrot.slane %v2059, 1
      %v2110 = vsel %vm2096, %v2105, %v2109
      %v2111 = vrot.slane %v2060, 1
      %v2112 = vrot.slane %v1880, 1
      %v2113 = vsel %vm2096, %v2111, %v2112
      %v2114 = vrot.slane %v2061, 1
      %v2115 = vrot.slane %v1881, 1
      %v2116 = vsel %vm2096, %v2114, %v2115
      %v2117 = vrot.slane %v1882, 1
      %v2118 = vsel %vm2096, %v2112, %v2117
      %v2119 = vrot.slane %v1883, 1
      %v2120 = vsel %vm2096, %v2115, %v2119
      %v2121 = vrot.slane %v2062, 1
      %v2122 = vsel %vm2096, %v2117, %v2121
      %v2123 = vrot.slane %v2063, 1
      %v2124 = vsel %vm2096, %v2119, %v2123
      %v2125 = vrot.slane %v2064, 1
      %v2126 = vrot.slane %v1888, 1
      %v2127 = vsel %vm2096, %v2125, %v2126
      %v2128 = vrot.slane %v2065, 1
      %v2129 = vrot.slane %v1889, 1
      %v2130 = vsel %vm2096, %v2128, %v2129
      %v2131 = vrot.slane %v1890, 1
      %v2132 = vsel %vm2096, %v2126, %v2131
      %v2133 = vrot.slane %v1891, 1
      %v2134 = vsel %vm2096, %v2129, %v2133
      %v2135 = vrot.slane %v2066, 1
      %v2136 = vsel %vm2096, %v2131, %v2135
      %v2137 = vrot.slane %v2067, 1
      %v2138 = vsel %vm2096, %v2133, %v2137
      %v2139 = vrot.slane %v2068, 1
      %v2140 = vrot.slane %v1896, 1
      %v2141 = vsel %vm2096, %v2139, %v2140
      %v2142 = vrot.slane %v2069, 1
      %v2143 = vrot.slane %v1897, 1
      %v2144 = vsel %vm2096, %v2142, %v2143
      %v2145 = vrot.slane %v1898, 1
      %v2146 = vsel %vm2096, %v2140, %v2145
      %v2147 = vrot.slane %v1899, 1
      %v2148 = vsel %vm2096, %v2143, %v2147
      %v2149 = vrot.slane %v2070, 1
      %v2150 = vsel %vm2096, %v2145, %v2149
      %v2151 = vrot.slane %v2071, 1
      %v2152 = vsel %vm2096, %v2147, %v2151
      %v2153 = vrot.slane %v2072, 1
      %v2154 = vrot.slane %v1904, 1
      %v2155 = vsel %vm2096, %v2153, %v2154
      %v2156 = vrot.slane %v2073, 1
      %v2157 = vrot.slane %v1905, 1
      %v2158 = vsel %vm2096, %v2156, %v2157
      %v2159 = vrot.slane %v1906, 1
      %v2160 = vsel %vm2096, %v2154, %v2159
      %v2161 = vrot.slane %v1907, 1
      %v2162 = vsel %vm2096, %v2157, %v2161
      %v2163 = vrot.slane %v2074, 1
      %v2164 = vsel %vm2096, %v2159, %v2163
      %v2165 = vrot.slane %v2075, 1
      %v2166 = vsel %vm2096, %v2161, %v2165
      %s2182 = scalar_lea.vmem %s219, 160
      %v2183 = vld [vmem:[%s2182] sm:$0xff]
      %v2184 = vld [vmem:[%s2182 + $0x8] sm:$0xff]
      %v2185 = vld [vmem:[%s2182 + $0x10] sm:$0xff]
      %v2186 = vld [vmem:[%s2182 + $0x18] sm:$0xff]
      %v2187 = vld [vmem:[%s2182 + $0x20] sm:$0xff]
      %v2188 = vld [vmem:[%s2182 + $0x28] sm:$0xff]
      %v2189 = vld [vmem:[%s2182 + $0x30] sm:$0xff]
      %v2190 = vld [vmem:[%s2182 + $0x38] sm:$0xff]
      %v2191 = vld [vmem:[%s2182 + $0x40] sm:$0xff]
      %v2192 = vld [vmem:[%s2182 + $0x48] sm:$0xff]
      %v2193 = vld [vmem:[%s2182 + $0x50] sm:$0xff]
      %v2194 = vld [vmem:[%s2182 + $0x58] sm:$0xff]
      %v2195 = vld [vmem:[%s2182 + $0x60] sm:$0xff]
      %v2196 = vld [vmem:[%s2182 + $0x68] sm:$0xff]
      %v2197 = vld [vmem:[%s2182 + $0x70] sm:$0xff]
      %v2198 = vld [vmem:[%s2182 + $0x78] sm:$0xff]
      %v2199 = vld [vmem:[%s2182 + $0x80] sm:$0xff]
      %v2200 = vld [vmem:[%s2182 + $0x88] sm:$0xff]
      %v2201 = vld [vmem:[%s2182 + $0x90] sm:$0xff]
      %v2202 = vld [vmem:[%s2182 + $0x98] sm:$0xff]
      %v2203 = vsel %vm1755, %v2102, 0
      %v2205 = vsel %vm1755, %v2106, 0
      %v2207 = vsel %vm1755, %v2110, 0
      %v2209 = vsel %vm1755, %v2116, 0
      %v2211 = vsel %vm1755, %v2120, 0
      %v2213 = vsel %vm1755, %v2124, 0
      %v2215 = vsel %vm1755, %v2130, 0
      %v2217 = vsel %vm1755, %v2134, 0
      %v2219 = vsel %vm1755, %v2138, 0
      %v2221 = vsel %vm1755, %v2144, 0
      %v2223 = vsel %vm1755, %v2148, 0
      %v2225 = vsel %vm1755, %v2152, 0
      %v2227 = vsel %vm1755, %v2158, 0
      %v2229 = vsel %vm1755, %v2162, 0
      %v2231 = vsel %vm1755, %v2166, 0
      %2233 = vmatprep.subr.mxu0 0.0
      %2234 = vmatpush1.msra.mxu0 %v2198
      %2235 = vmatprep.subr.mxu0 0.0
      %2236 = vmatpush1.msra.mxu0 %v2197
      %2237 = vmatprep.subr.mxu0 0.0
      %2238 = vmatpush1.msra.mxu0 %v2196
      %2239 = vmatprep.subr.mxu0 0.0
      %2240 = vmatpush1.msra.mxu0 %v2195
      %2241 = vmatprep.subr.mxu0 0.0
      %2242 = vmatpush1.msra.mxu0 %v2194
      %2243 = vmatprep.subr.mxu0 0.0
      %2244 = vmatpush1.msra.mxu0 %v2193
      %2245 = vmatprep.subr.mxu0 0.0
      %2246 = vmatpush1.msra.mxu0 %v2192
      %2247 = vmatprep.subr.mxu0 0.0
      %2248 = vmatpush1.msra.mxu0 %v2191
      %2249 = vmatprep.subr.mxu0 0.0
      %2250 = vmatpush1.msra.mxu0 %v2190
      %2251 = vmatprep.subr.mxu0 0.0
      %2252 = vmatpush1.msra.mxu0 %v2189
      %2253 = vmatprep.subr.mxu0 0.0
      %2254 = vmatpush1.msra.mxu0 %v2188
      %2255 = vmatprep.subr.mxu0 0.0
      %2256 = vmatpush1.msra.mxu0 %v2187
      %2257 = vmatprep.subr.mxu0 0.0
      %2258 = vmatpush1.msra.mxu0 %v2186
      %2259 = vmatprep.subr.mxu0 0.0
      %2260 = vmatpush1.msra.mxu0 %v2185
      %2261 = vmatprep.subr.mxu0 0.0
      %2262 = vmatpush1.msra.mxu0 %v2184
      %2263 = vmatprep.subr.mxu0 0.0
      %2264 = vmatpush1.msra.mxu0 %v2183
      %2265 = vmatprep.subr.mxu0 0.0
      %2266 = vmatpush2.msra.mxu0 0.0
      %2267 = vmatprep.subr.mxu0 0.0
      %2268 = vmatpush2.msra.mxu0 0.0
      %2269 = vmatprep.subr.mxu0 0.0
      %2270 = vmatpush2.msra.mxu0 0.0
      %2271 = vmatprep.subr.mxu0 0.0
      %2272 = vmatpush2.msra.mxu0 0.0
      %2273 = vmatprep.subr.mxu0 0.0
      %2274 = vmatpush2.msra.mxu0 0.0
      %2275 = vmatprep.subr.mxu0 0.0
      %2276 = vmatpush2.msra.mxu0 0.0
      %2277 = vmatprep.subr.mxu0 0.0
      %2278 = vmatpush2.msra.mxu0 0.0
      %2279 = vmatprep.subr.mxu0 0.0
      %2280 = vmatpush2.msra.mxu0 0.0
      %2281 = vmatprep.subr.mxu0 0.0
      %2282 = vmatpush2.msra.mxu0 0.0
      %2283 = vmatprep.subr.mxu0 0.0
      %2284 = vmatpush2.msra.mxu0 0.0
      %2285 = vmatprep.subr.mxu0 0.0
      %2286 = vmatpush2.msra.mxu0 0.0
      %2287 = vmatprep.subr.mxu0 0.0
      %2288 = vmatpush2.msra.mxu0 0.0
      %2289 = vmatprep.subr.mxu0 0.0
      %2290 = vmatpush2.msra.mxu0 %v2202
      %2291 = vmatprep.subr.mxu0 0.0
      %2292 = vmatpush2.msra.mxu0 %v2201
      %2293 = vmatprep.subr.mxu0 0.0
      %2294 = vmatpush2.msra.mxu0 %v2200
      %2295 = vmatprep.subr.mxu0 0.0
      %2296 = vmatpush2.msra.mxu0 %v2199
      %2297 = vmatprep.mubr.f32.mxu0 %v2203
      %2298 = vmatmul.mubr.f32.gmra.mxu0 %v2099
      %v2299 = vpop.f32.mrf.mxu0
      %v2300 = vadd.f32 0.0, %v2299
      %v2301 = vpop.f32.mrf.mxu0
      %2302 = vmatprep.mubr.f32.mxu0 %v2205
      %2303 = vmatmul.mubr.f32.gmra.mxu0 %v2104
      %v2304 = vpop.f32.mrf.mxu0
      %v2305 = vadd.f32 0.0, %v2304
      %v2306 = vpop.f32.mrf.mxu0
      %2307 = vmatprep.mubr.f32.mxu0 %v2207
      %2308 = vmatmul.mubr.f32.gmra.mxu0 %v2108
      %v2309 = vpop.f32.mrf.mxu0
      %v2310 = vadd.f32 0.0, %v2309
      %v2311 = vpop.f32.mrf.mxu0
      %2312 = vmatprep.mubr.f32.mxu0 %v2209
      %2313 = vmatmul.mubr.f32.gmra.mxu0 %v2113
      %v2314 = vpop.f32.mrf.mxu0
      %v2315 = vadd.f32 0.0, %v2314
      %v2316 = vpop.f32.mrf.mxu0
      %2317 = vmatprep.mubr.f32.mxu0 %v2211
      %2318 = vmatmul.mubr.f32.gmra.mxu0 %v2118
      %v2319 = vpop.f32.mrf.mxu0
      %v2320 = vadd.f32 0.0, %v2319
      %v2321 = vpop.f32.mrf.mxu0
      %2322 = vmatprep.mubr.f32.mxu0 %v2213
      %2323 = vmatmul.mubr.f32.gmra.mxu0 %v2122
      %v2324 = vpop.f32.mrf.mxu0
      %v2325 = vadd.f32 0.0, %v2324
      %v2326 = vpop.f32.mrf.mxu0
      %2327 = vmatprep.mubr.f32.mxu0 %v2215
      %2328 = vmatmul.mubr.f32.gmra.mxu0 %v2127
      %v2329 = vpop.f32.mrf.mxu0
      %v2330 = vadd.f32 0.0, %v2329
      %v2331 = vpop.f32.mrf.mxu0
      %2332 = vmatprep.mubr.f32.mxu0 %v2217
      %2333 = vmatmul.mubr.f32.gmra.mxu0 %v2132
      %v2334 = vpop.f32.mrf.mxu0
      %v2335 = vadd.f32 0.0, %v2334
      %v2336 = vpop.f32.mrf.mxu0
      %2337 = vmatprep.mubr.f32.mxu0 %v2219
      %2338 = vmatmul.mubr.f32.gmra.mxu0 %v2136
      %v2339 = vpop.f32.mrf.mxu0
      %v2340 = vadd.f32 0.0, %v2339
      %v2341 = vpop.f32.mrf.mxu0
      %2342 = vmatprep.mubr.f32.mxu0 %v2221
      %2343 = vmatmul.mubr.f32.gmra.mxu0 %v2141
      %v2344 = vpop.f32.mrf.mxu0
      %v2345 = vadd.f32 0.0, %v2344
      %v2346 = vpop.f32.mrf.mxu0
      %2347 = vmatprep.mubr.f32.mxu0 %v2223
      %2348 = vmatmul.mubr.f32.gmra.mxu0 %v2146
      %v2349 = vpop.f32.mrf.mxu0
      %v2350 = vadd.f32 0.0, %v2349
      %v2351 = vpop.f32.mrf.mxu0
      %2352 = vmatprep.mubr.f32.mxu0 %v2225
      %2353 = vmatmul.mubr.f32.gmra.mxu0 %v2150
      %v2354 = vpop.f32.mrf.mxu0
      %v2355 = vadd.f32 0.0, %v2354
      %v2356 = vpop.f32.mrf.mxu0
      %2357 = vmatprep.mubr.f32.mxu0 %v2227
      %2358 = vmatmul.mubr.f32.gmra.mxu0 %v2155
      %v2359 = vpop.f32.mrf.mxu0
      %v2360 = vadd.f32 0.0, %v2359
      %v2361 = vpop.f32.mrf.mxu0
      %2362 = vmatprep.mubr.f32.mxu0 %v2229
      %2363 = vmatmul.mubr.f32.gmra.mxu0 %v2160
      %v2364 = vpop.f32.mrf.mxu0
      %v2365 = vadd.f32 0.0, %v2364
      %v2366 = vpop.f32.mrf.mxu0
      %2367 = vmatprep.mubr.f32.mxu0 %v2231
      %2368 = vmatmul.mubr.f32.gmra.mxu0 %v2164
      %v2369 = vpop.f32.mrf.mxu0
      %v2370 = vadd.f32 0.0, %v2369
      %v2371 = vpop.f32.mrf.mxu0
      %2372 = vdwg.mxu0
      %v2373 = vsel %vm1755, %v1956, 0
      %v2375 = vsel %vm1755, %v1960, 0
      %v2377 = vsel %vm1755, %v1964, 0
      %v2379 = vsel %vm1755, %v1970, 0
      %v2381 = vsel %vm1755, %v1974, 0
      %v2383 = vsel %vm1755, %v1978, 0
      %v2385 = vsel %vm1755, %v1984, 0
      %v2387 = vsel %vm1755, %v1988, 0
      %v2389 = vsel %vm1755, %v1992, 0
      %v2391 = vsel %vm1755, %v1998, 0
      %v2393 = vsel %vm1755, %v2002, 0
      %v2395 = vsel %vm1755, %v2006, 0
      %v2397 = vsel %vm1755, %v2012, 0
      %v2399 = vsel %vm1755, %v2016, 0
      %v2401 = vsel %vm1755, %v2020, 0
      %2403 = vmatprep.subr.mxu0 0.0
      %2404 = vmatpush1.msra.mxu0 %v2051
      %2405 = vmatprep.subr.mxu0 0.0
      %2406 = vmatpush1.msra.mxu0 %v2050
      %2407 = vmatprep.subr.mxu0 0.0
      %2408 = vmatpush1.msra.mxu0 %v2049
      %2409 = vmatprep.subr.mxu0 0.0
      %2410 = vmatpush1.msra.mxu0 %v2048
      %2411 = vmatprep.subr.mxu0 0.0
      %2412 = vmatpush1.msra.mxu0 %v2047
      %2413 = vmatprep.subr.mxu0 0.0
      %2414 = vmatpush1.msra.mxu0 %v2046
      %2415 = vmatprep.subr.mxu0 0.0
      %2416 = vmatpush1.msra.mxu0 %v2045
      %2417 = vmatprep.subr.mxu0 0.0
      %2418 = vmatpush1.msra.mxu0 %v2044
      %2419 = vmatprep.subr.mxu0 0.0
      %2420 = vmatpush1.msra.mxu0 %v2043
      %2421 = vmatprep.subr.mxu0 0.0
      %2422 = vmatpush1.msra.mxu0 %v2042
      %2423 = vmatprep.subr.mxu0 0.0
      %2424 = vmatpush1.msra.mxu0 %v2041
      %2425 = vmatprep.subr.mxu0 0.0
      %2426 = vmatpush1.msra.mxu0 %v2040
      %2427 = vmatprep.subr.mxu0 0.0
      %2428 = vmatpush1.msra.mxu0 %v2039
      %2429 = vmatprep.subr.mxu0 0.0
      %2430 = vmatpush1.msra.mxu0 %v2038
      %2431 = vmatprep.subr.mxu0 0.0
      %2432 = vmatpush1.msra.mxu0 %v2037
      %2433 = vmatprep.subr.mxu0 0.0
      %2434 = vmatpush1.msra.mxu0 %v2036
      %2435 = vmatprep.subr.mxu0 0.0
      %2436 = vmatpush2.msra.mxu0 0.0
      %2437 = vmatprep.subr.mxu0 0.0
      %2438 = vmatpush2.msra.mxu0 0.0
      %2439 = vmatprep.subr.mxu0 0.0
      %2440 = vmatpush2.msra.mxu0 0.0
      %2441 = vmatprep.subr.mxu0 0.0
      %2442 = vmatpush2.msra.mxu0 0.0
      %2443 = vmatprep.subr.mxu0 0.0
      %2444 = vmatpush2.msra.mxu0 0.0
      %2445 = vmatprep.subr.mxu0 0.0
      %2446 = vmatpush2.msra.mxu0 0.0
      %2447 = vmatprep.subr.mxu0 0.0
      %2448 = vmatpush2.msra.mxu0 0.0
      %2449 = vmatprep.subr.mxu0 0.0
      %2450 = vmatpush2.msra.mxu0 0.0
      %2451 = vmatprep.subr.mxu0 0.0
      %2452 = vmatpush2.msra.mxu0 0.0
      %2453 = vmatprep.subr.mxu0 0.0
      %2454 = vmatpush2.msra.mxu0 0.0
      %2455 = vmatprep.subr.mxu0 0.0
      %2456 = vmatpush2.msra.mxu0 0.0
      %2457 = vmatprep.subr.mxu0 0.0
      %2458 = vmatpush2.msra.mxu0 0.0
      %2459 = vmatprep.subr.mxu0 0.0
      %2460 = vmatpush2.msra.mxu0 %v2055
      %2461 = vmatprep.subr.mxu0 0.0
      %2462 = vmatpush2.msra.mxu0 %v2054
      %2463 = vmatprep.subr.mxu0 0.0
      %2464 = vmatpush2.msra.mxu0 %v2053
      %2465 = vmatprep.subr.mxu0 0.0
      %2466 = vmatpush2.msra.mxu0 %v2052
      %2467 = vmatprep.mubr.f32.mxu0 %v2373
      %2468 = vmatmul.mubr.f32.gmra.mxu0 %v1953
      %v2469 = vpop.f32.mrf.mxu0
      %v2470 = vadd.f32 %v2300, %v2469
      %v2471 = vpop.f32.mrf.mxu0
      %2472 = vmatprep.mubr.f32.mxu0 %v2375
      %2473 = vmatmul.mubr.f32.gmra.mxu0 %v1958
      %v2474 = vpop.f32.mrf.mxu0
      %v2475 = vadd.f32 %v2305, %v2474
      %v2476 = vpop.f32.mrf.mxu0
      %2477 = vmatprep.mubr.f32.mxu0 %v2377
      %2478 = vmatmul.mubr.f32.gmra.mxu0 %v1962
      %v2479 = vpop.f32.mrf.mxu0
      %v2480 = vadd.f32 %v2310, %v2479
      %v2481 = vpop.f32.mrf.mxu0
      %2482 = vmatprep.mubr.f32.mxu0 %v2379
      %2483 = vmatmul.mubr.f32.gmra.mxu0 %v1967
      %v2484 = vpop.f32.mrf.mxu0
      %v2485 = vadd.f32 %v2315, %v2484
      %v2486 = vpop.f32.mrf.mxu0
      %2487 = vmatprep.mubr.f32.mxu0 %v2381
      %2488 = vmatmul.mubr.f32.gmra.mxu0 %v1972
      %v2489 = vpop.f32.mrf.mxu0
      %v2490 = vadd.f32 %v2320, %v2489
      %v2491 = vpop.f32.mrf.mxu0
      %2492 = vmatprep.mubr.f32.mxu0 %v2383
      %2493 = vmatmul.mubr.f32.gmra.mxu0 %v1976
      %v2494 = vpop.f32.mrf.mxu0
      %v2495 = vadd.f32 %v2325, %v2494
      %v2496 = vpop.f32.mrf.mxu0
      %2497 = vmatprep.mubr.f32.mxu0 %v2385
      %2498 = vmatmul.mubr.f32.gmra.mxu0 %v1981
      %v2499 = vpop.f32.mrf.mxu0
      %v2500 = vadd.f32 %v2330, %v2499
      %v2501 = vpop.f32.mrf.mxu0
      %2502 = vmatprep.mubr.f32.mxu0 %v2387
      %2503 = vmatmul.mubr.f32.gmra.mxu0 %v1986
      %v2504 = vpop.f32.mrf.mxu0
      %v2505 = vadd.f32 %v2335, %v2504
      %v2506 = vpop.f32.mrf.mxu0
      %2507 = vmatprep.mubr.f32.mxu0 %v2389
      %2508 = vmatmul.mubr.f32.gmra.mxu0 %v1990
      %v2509 = vpop.f32.mrf.mxu0
      %v2510 = vadd.f32 %v2340, %v2509
      %v2511 = vpop.f32.mrf.mxu0
      %2512 = vmatprep.mubr.f32.mxu0 %v2391
      %2513 = vmatmul.mubr.f32.gmra.mxu0 %v1995
      %v2514 = vpop.f32.mrf.mxu0
      %v2515 = vadd.f32 %v2345, %v2514
      %v2516 = vpop.f32.mrf.mxu0
      %2517 = vmatprep.mubr.f32.mxu0 %v2393
      %2518 = vmatmul.mubr.f32.gmra.mxu0 %v2000
      %v2519 = vpop.f32.mrf.mxu0
      %v2520 = vadd.f32 %v2350, %v2519
      %v2521 = vpop.f32.mrf.mxu0
      %2522 = vmatprep.mubr.f32.mxu0 %v2395
      %2523 = vmatmul.mubr.f32.gmra.mxu0 %v2004
      %v2524 = vpop.f32.mrf.mxu0
      %v2525 = vadd.f32 %v2355, %v2524
      %v2526 = vpop.f32.mrf.mxu0
      %2527 = vmatprep.mubr.f32.mxu0 %v2397
      %2528 = vmatmul.mubr.f32.gmra.mxu0 %v2009
      %v2529 = vpop.f32.mrf.mxu0
      %v2530 = vadd.f32 %v2360, %v2529
      %v2531 = vpop.f32.mrf.mxu0
      %2532 = vmatprep.mubr.f32.mxu0 %v2399
      %2533 = vmatmul.mubr.f32.gmra.mxu0 %v2014
      %v2534 = vpop.f32.mrf.mxu0
      %v2535 = vadd.f32 %v2365, %v2534
      %v2536 = vpop.f32.mrf.mxu0
      %2537 = vmatprep.mubr.f32.mxu0 %v2401
      %2538 = vmatmul.mubr.f32.gmra.mxu0 %v2018
      %v2539 = vpop.f32.mrf.mxu0
      %v2540 = vadd.f32 %v2370, %v2539
      %v2541 = vpop.f32.mrf.mxu0
      %2542 = vdwg.mxu0
      %v2543 = vld [vmem:[%s1869] sm:$0xff]
      %v2544 = vld [vmem:[%s1869 + $0x8] sm:$0xff]
      %v2545 = vld [vmem:[%s1869 + $0x10] sm:$0xff]
      %v2546 = vld [vmem:[%s1869 + $0x18] sm:$0xff]
      %v2547 = vld [vmem:[%s1869 + $0x20] sm:$0xff]
      %v2548 = vld [vmem:[%s1869 + $0x28] sm:$0xff]
      %v2549 = vld [vmem:[%s1869 + $0x40] sm:$0xff]
      %v2550 = vld [vmem:[%s1869 + $0x48] sm:$0xff]
      %v2551 = vld [vmem:[%s1869 + $0x50] sm:$0xff]
      %v2552 = vld [vmem:[%s1869 + $0x58] sm:$0xff]
      %v2553 = vld [vmem:[%s1869 + $0x60] sm:$0xff]
      %v2554 = vld [vmem:[%s1869 + $0x68] sm:$0xff]
      %v2555 = vld [vmem:[%s1869 + $0x80] sm:$0xff]
      %v2556 = vld [vmem:[%s1869 + $0x88] sm:$0xff]
      %v2557 = vld [vmem:[%s1869 + $0x90] sm:$0xff]
      %v2558 = vld [vmem:[%s1869 + $0x98] sm:$0xff]
      %v2559 = vld [vmem:[%s1869 + $0xa0] sm:$0xff]
      %v2560 = vld [vmem:[%s1869 + $0xa8] sm:$0xff]
      %v2561 = vld [vmem:[%s1869 + $0xc0] sm:$0xff]
      %v2562 = vld [vmem:[%s1869 + $0xc8] sm:$0xff]
      %v2563 = vld [vmem:[%s1869 + $0xd0] sm:$0xff]
      %v2564 = vld [vmem:[%s1869 + $0xd8] sm:$0xff]
      %v2565 = vld [vmem:[%s1869 + $0xe0] sm:$0xff]
      %v2566 = vld [vmem:[%s1869 + $0xe8] sm:$0xff]
      %v2567 = vld [vmem:[%s1869 + $0x100] sm:$0xff]
      %v2568 = vld [vmem:[%s1869 + $0x108] sm:$0xff]
      %v2569 = vld [vmem:[%s1869 + $0x110] sm:$0xff]
      %v2570 = vld [vmem:[%s1869 + $0x118] sm:$0xff]
      %v2571 = vld [vmem:[%s1869 + $0x120] sm:$0xff]
      %v2572 = vld [vmem:[%s1869 + $0x128] sm:$0xff]
      %s2573 = scalar_lea.vmem %s219, 320
      %v2574 = vld [vmem:[%s2573] sm:$0xff]
      %v2575 = vld [vmem:[%s2573 + $0x8] sm:$0xff]
      %v2576 = vld [vmem:[%s2573 + $0x10] sm:$0xff]
      %v2577 = vld [vmem:[%s2573 + $0x18] sm:$0xff]
      %v2578 = vld [vmem:[%s2573 + $0x20] sm:$0xff]
      %v2579 = vld [vmem:[%s2573 + $0x28] sm:$0xff]
      %v2580 = vld [vmem:[%s2573 + $0x30] sm:$0xff]
      %v2581 = vld [vmem:[%s2573 + $0x38] sm:$0xff]
      %v2582 = vld [vmem:[%s2573 + $0x40] sm:$0xff]
      %v2583 = vld [vmem:[%s2573 + $0x48] sm:$0xff]
      %v2584 = vld [vmem:[%s2573 + $0x50] sm:$0xff]
      %v2585 = vld [vmem:[%s2573 + $0x58] sm:$0xff]
      %v2586 = vld [vmem:[%s2573 + $0x60] sm:$0xff]
      %v2587 = vld [vmem:[%s2573 + $0x68] sm:$0xff]
      %v2588 = vld [vmem:[%s2573 + $0x70] sm:$0xff]
      %v2589 = vld [vmem:[%s2573 + $0x78] sm:$0xff]
      %v2590 = vld [vmem:[%s2573 + $0x80] sm:$0xff]
      %v2591 = vld [vmem:[%s2573 + $0x88] sm:$0xff]
      %v2592 = vld [vmem:[%s2573 + $0x90] sm:$0xff]
      %v2593 = vld [vmem:[%s2573 + $0x98] sm:$0xff]
      %v2595 = vsel %vm1755, %v2544, 0
      %v2598 = vsel %vm1755, %v2546, 0
      %v2601 = vsel %vm1755, %v2548, 0
      %v2604 = vsel %vm1755, %v2550, 0
      %v2607 = vsel %vm1755, %v2552, 0
      %v2610 = vsel %vm1755, %v2554, 0
      %v2613 = vsel %vm1755, %v2556, 0
      %v2616 = vsel %vm1755, %v2558, 0
      %v2619 = vsel %vm1755, %v2560, 0
      %v2622 = vsel %vm1755, %v2562, 0
      %v2625 = vsel %vm1755, %v2564, 0
      %v2628 = vsel %vm1755, %v2566, 0
      %v2631 = vsel %vm1755, %v2568, 0
      %v2634 = vsel %vm1755, %v2570, 0
      %v2637 = vsel %vm1755, %v2572, 0
      %2639 = vmatprep.subr.mxu0 0.0
      %2640 = vmatpush1.msra.mxu0 %v2589
      %2641 = vmatprep.subr.mxu0 0.0
      %2642 = vmatpush1.msra.mxu0 %v2588
      %2643 = vmatprep.subr.mxu0 0.0
      %2644 = vmatpush1.msra.mxu0 %v2587
      %2645 = vmatprep.subr.mxu0 0.0
      %2646 = vmatpush1.msra.mxu0 %v2586
      %2647 = vmatprep.subr.mxu0 0.0
      %2648 = vmatpush1.msra.mxu0 %v2585
      %2649 = vmatprep.subr.mxu0 0.0
      %2650 = vmatpush1.msra.mxu0 %v2584
      %2651 = vmatprep.subr.mxu0 0.0
      %2652 = vmatpush1.msra.mxu0 %v2583
      %2653 = vmatprep.subr.mxu0 0.0
      %2654 = vmatpush1.msra.mxu0 %v2582
      %2655 = vmatprep.subr.mxu0 0.0
      %2656 = vmatpush1.msra.mxu0 %v2581
      %2657 = vmatprep.subr.mxu0 0.0
      %2658 = vmatpush1.msra.mxu0 %v2580
      %2659 = vmatprep.subr.mxu0 0.0
      %2660 = vmatpush1.msra.mxu0 %v2579
      %2661 = vmatprep.subr.mxu0 0.0
      %2662 = vmatpush1.msra.mxu0 %v2578
      %2663 = vmatprep.subr.mxu0 0.0
      %2664 = vmatpush1.msra.mxu0 %v2577
      %2665 = vmatprep.subr.mxu0 0.0
      %2666 = vmatpush1.msra.mxu0 %v2576
      %2667 = vmatprep.subr.mxu0 0.0
      %2668 = vmatpush1.msra.mxu0 %v2575
      %2669 = vmatprep.subr.mxu0 0.0
      %2670 = vmatpush1.msra.mxu0 %v2574
      %2671 = vmatprep.subr.mxu0 0.0
      %2672 = vmatpush2.msra.mxu0 0.0
      %2673 = vmatprep.subr.mxu0 0.0
      %2674 = vmatpush2.msra.mxu0 0.0
      %2675 = vmatprep.subr.mxu0 0.0
      %2676 = vmatpush2.msra.mxu0 0.0
      %2677 = vmatprep.subr.mxu0 0.0
      %2678 = vmatpush2.msra.mxu0 0.0
      %2679 = vmatprep.subr.mxu0 0.0
      %2680 = vmatpush2.msra.mxu0 0.0
      %2681 = vmatprep.subr.mxu0 0.0
      %2682 = vmatpush2.msra.mxu0 0.0
      %2683 = vmatprep.subr.mxu0 0.0
      %2684 = vmatpush2.msra.mxu0 0.0
      %2685 = vmatprep.subr.mxu0 0.0
      %2686 = vmatpush2.msra.mxu0 0.0
      %2687 = vmatprep.subr.mxu0 0.0
      %2688 = vmatpush2.msra.mxu0 0.0
      %2689 = vmatprep.subr.mxu0 0.0
      %2690 = vmatpush2.msra.mxu0 0.0
      %2691 = vmatprep.subr.mxu0 0.0
      %2692 = vmatpush2.msra.mxu0 0.0
      %2693 = vmatprep.subr.mxu0 0.0
      %2694 = vmatpush2.msra.mxu0 0.0
      %2695 = vmatprep.subr.mxu0 0.0
      %2696 = vmatpush2.msra.mxu0 %v2593
      %2697 = vmatprep.subr.mxu0 0.0
      %2698 = vmatpush2.msra.mxu0 %v2592
      %2699 = vmatprep.subr.mxu0 0.0
      %2700 = vmatpush2.msra.mxu0 %v2591
      %2701 = vmatprep.subr.mxu0 0.0
      %2702 = vmatpush2.msra.mxu0 %v2590
      %2703 = vmatprep.mubr.f32.mxu0 %v2595
      %2704 = vmatmul.mubr.f32.gmra.mxu0 %v2543
      %v2705 = vpop.f32.mrf.mxu0
      %v2706 = vadd.f32 0.0, %v2705
      %v2707 = vpop.f32.mrf.mxu0
      %2708 = vmatprep.mubr.f32.mxu0 %v2598
      %2709 = vmatmul.mubr.f32.gmra.mxu0 %v2545
      %v2710 = vpop.f32.mrf.mxu0
      %v2711 = vadd.f32 0.0, %v2710
      %v2712 = vpop.f32.mrf.mxu0
      %2713 = vmatprep.mubr.f32.mxu0 %v2601
      %2714 = vmatmul.mubr.f32.gmra.mxu0 %v2547
      %v2715 = vpop.f32.mrf.mxu0
      %v2716 = vadd.f32 0.0, %v2715
      %v2717 = vpop.f32.mrf.mxu0
      %2718 = vmatprep.mubr.f32.mxu0 %v2604
      %2719 = vmatmul.mubr.f32.gmra.mxu0 %v2549
      %v2720 = vpop.f32.mrf.mxu0
      %v2721 = vadd.f32 0.0, %v2720
      %v2722 = vpop.f32.mrf.mxu0
      %2723 = vmatprep.mubr.f32.mxu0 %v2607
      %2724 = vmatmul.mubr.f32.gmra.mxu0 %v2551
      %v2725 = vpop.f32.mrf.mxu0
      %v2726 = vadd.f32 0.0, %v2725
      %v2727 = vpop.f32.mrf.mxu0
      %2728 = vmatprep.mubr.f32.mxu0 %v2610
      %2729 = vmatmul.mubr.f32.gmra.mxu0 %v2553
      %v2730 = vpop.f32.mrf.mxu0
      %v2731 = vadd.f32 0.0, %v2730
      %v2732 = vpop.f32.mrf.mxu0
      %2733 = vmatprep.mubr.f32.mxu0 %v2613
      %2734 = vmatmul.mubr.f32.gmra.mxu0 %v2555
      %v2735 = vpop.f32.mrf.mxu0
      %v2736 = vadd.f32 0.0, %v2735
      %v2737 = vpop.f32.mrf.mxu0
      %2738 = vmatprep.mubr.f32.mxu0 %v2616
      %2739 = vmatmul.mubr.f32.gmra.mxu0 %v2557
      %v2740 = vpop.f32.mrf.mxu0
      %v2741 = vadd.f32 0.0, %v2740
      %v2742 = vpop.f32.mrf.mxu0
      %2743 = vmatprep.mubr.f32.mxu0 %v2619
      %2744 = vmatmul.mubr.f32.gmra.mxu0 %v2559
      %v2745 = vpop.f32.mrf.mxu0
      %v2746 = vadd.f32 0.0, %v2745
      %v2747 = vpop.f32.mrf.mxu0
      %2748 = vmatprep.mubr.f32.mxu0 %v2622
      %2749 = vmatmul.mubr.f32.gmra.mxu0 %v2561
      %v2750 = vpop.f32.mrf.mxu0
      %v2751 = vadd.f32 0.0, %v2750
      %v2752 = vpop.f32.mrf.mxu0
      %2753 = vmatprep.mubr.f32.mxu0 %v2625
      %2754 = vmatmul.mubr.f32.gmra.mxu0 %v2563
      %v2755 = vpop.f32.mrf.mxu0
      %v2756 = vadd.f32 0.0, %v2755
      %v2757 = vpop.f32.mrf.mxu0
      %2758 = vmatprep.mubr.f32.mxu0 %v2628
      %2759 = vmatmul.mubr.f32.gmra.mxu0 %v2565
      %v2760 = vpop.f32.mrf.mxu0
      %v2761 = vadd.f32 0.0, %v2760
      %v2762 = vpop.f32.mrf.mxu0
      %2763 = vmatprep.mubr.f32.mxu0 %v2631
      %2764 = vmatmul.mubr.f32.gmra.mxu0 %v2567
      %v2765 = vpop.f32.mrf.mxu0
      %v2766 = vadd.f32 0.0, %v2765
      %v2767 = vpop.f32.mrf.mxu0
      %2768 = vmatprep.mubr.f32.mxu0 %v2634
      %2769 = vmatmul.mubr.f32.gmra.mxu0 %v2569
      %v2770 = vpop.f32.mrf.mxu0
      %v2771 = vadd.f32 0.0, %v2770
      %v2772 = vpop.f32.mrf.mxu0
      %2773 = vmatprep.mubr.f32.mxu0 %v2637
      %2774 = vmatmul.mubr.f32.gmra.mxu0 %v2571
      %v2775 = vpop.f32.mrf.mxu0
      %v2776 = vadd.f32 0.0, %v2775
      %v2777 = vpop.f32.mrf.mxu0
      %2778 = vdwg.mxu0
      %v2779 = vadd.f32 %v2470, %v2706
      %v2780 = vadd.f32 %v2475, %v2711
      %v2781 = vadd.f32 %v2480, %v2716
      %v2782 = vadd.f32 %v2485, %v2721
      %v2783 = vadd.f32 %v2490, %v2726
      %v2784 = vadd.f32 %v2495, %v2731
      %v2785 = vadd.f32 %v2500, %v2736
      %v2786 = vadd.f32 %v2505, %v2741
      %v2787 = vadd.f32 %v2510, %v2746
      %v2788 = vadd.f32 %v2515, %v2751
      %v2789 = vadd.f32 %v2520, %v2756
      %v2790 = vadd.f32 %v2525, %v2761
      %v2791 = vadd.f32 %v2530, %v2766
      %v2792 = vadd.f32 %v2535, %v2771
      %v2793 = vadd.f32 %v2540, %v2776
      %s2794 = scalar_lea.vmem [#allocation2], 192
      %v2795 = vld [vmem:[%s2794] sm:$0xfc]
      %v2796 = vld [vmem:[%s2794 + $0x8] sm:$0xfc]
      %v2797 = vld [vmem:[%s2794 + $0x10] sm:$0xff]
      %v2798 = vld [vmem:[%s2794 + $0x18] sm:$0xff]
      %v2799 = vld [vmem:[%s2794 + $0x20] sm:$0xff]
      %v2800 = vld [vmem:[%s2794 + $0x28] sm:$0xff]
      %v2801 = vld [vmem:[%s2794 + $0x30] sm:$0x3]
      %v2802 = vld [vmem:[%s2794 + $0x38] sm:$0x3]
      %v2803 = vld [vmem:[%s2794 + $0x40] sm:$0xfc]
      %v2804 = vld [vmem:[%s2794 + $0x48] sm:$0xfc]
      %v2805 = vld [vmem:[%s2794 + $0x50] sm:$0xff]
      %v2806 = vld [vmem:[%s2794 + $0x58] sm:$0xff]
      %v2807 = vld [vmem:[%s2794 + $0x60] sm:$0xff]
      %v2808 = vld [vmem:[%s2794 + $0x68] sm:$0xff]
      %v2809 = vld [vmem:[%s2794 + $0x70] sm:$0x3]
      %v2810 = vld [vmem:[%s2794 + $0x78] sm:$0x3]
      %v2811 = vld [vmem:[%s2794 + $0x80] sm:$0xfc]
      %v2812 = vld [vmem:[%s2794 + $0x88] sm:$0xfc]
      %v2813 = vld [vmem:[%s2794 + $0x90] sm:$0xff]
      %v2814 = vld [vmem:[%s2794 + $0x98] sm:$0xff]
      %v2815 = vld [vmem:[%s2794 + $0xa0] sm:$0xff]
      %v2816 = vld [vmem:[%s2794 + $0xa8] sm:$0xff]
      %v2817 = vld [vmem:[%s2794 + $0xb0] sm:$0x3]
      %v2818 = vld [vmem:[%s2794 + $0xb8] sm:$0x3]
      %v2819 = vld [vmem:[%s2794 + $0xc0] sm:$0xfc]
      %v2820 = vld [vmem:[%s2794 + $0xc8] sm:$0xfc]
      %v2821 = vld [vmem:[%s2794 + $0xd0] sm:$0xff]
      %v2822 = vld [vmem:[%s2794 + $0xd8] sm:$0xff]
      %v2823 = vld [vmem:[%s2794 + $0xe0] sm:$0xff]
      %v2824 = vld [vmem:[%s2794 + $0xe8] sm:$0xff]
      %v2825 = vld [vmem:[%s2794 + $0xf0] sm:$0x3]
      %v2826 = vld [vmem:[%s2794 + $0xf8] sm:$0x3]
      %v2827 = vld [vmem:[%s2794 + $0x100] sm:$0xfc]
      %v2828 = vld [vmem:[%s2794 + $0x108] sm:$0xfc]
      %v2829 = vld [vmem:[%s2794 + $0x110] sm:$0xff]
      %v2830 = vld [vmem:[%s2794 + $0x118] sm:$0xff]
      %v2831 = vld [vmem:[%s2794 + $0x120] sm:$0xff]
      %v2832 = vld [vmem:[%s2794 + $0x128] sm:$0xff]
      %v2833 = vld [vmem:[%s2794 + $0x130] sm:$0x3]
      %v2834 = vld [vmem:[%s2794 + $0x138] sm:$0x3]
      %v2875 = vrot.slane %v2795, 2
      %v2876 = vrot.slane %v2797, 2
      %v2877 = vsel %vm1950, %v2875, %v2876
      %v2878 = vrot.slane %v2796, 2
      %v2879 = vrot.slane %v2798, 2
      %v2880 = vsel %vm1950, %v2878, %v2879
      %v2881 = vrot.slane %v2799, 2
      %v2882 = vsel %vm1950, %v2876, %v2881
      %v2883 = vrot.slane %v2800, 2
      %v2884 = vsel %vm1950, %v2879, %v2883
      %v2885 = vrot.slane %v2801, 2
      %v2886 = vsel %vm1950, %v2881, %v2885
      %v2887 = vrot.slane %v2802, 2
      %v2888 = vsel %vm1950, %v2883, %v2887
      %v2889 = vrot.slane %v2803, 2
      %v2890 = vrot.slane %v2805, 2
      %v2891 = vsel %vm1950, %v2889, %v2890
      %v2892 = vrot.slane %v2804, 2
      %v2893 = vrot.slane %v2806, 2
      %v2894 = vsel %vm1950, %v2892, %v2893
      %v2895 = vrot.slane %v2807, 2
      %v2896 = vsel %vm1950, %v2890, %v2895
      %v2897 = vrot.slane %v2808, 2
      %v2898 = vsel %vm1950, %v2893, %v2897
      %v2899 = vrot.slane %v2809, 2
      %v2900 = vsel %vm1950, %v2895, %v2899
      %v2901 = vrot.slane %v2810, 2
      %v2902 = vsel %vm1950, %v2897, %v2901
      %v2903 = vrot.slane %v2811, 2
      %v2904 = vrot.slane %v2813, 2
      %v2905 = vsel %vm1950, %v2903, %v2904
      %v2906 = vrot.slane %v2812, 2
      %v2907 = vrot.slane %v2814, 2
      %v2908 = vsel %vm1950, %v2906, %v2907
      %v2909 = vrot.slane %v2815, 2
      %v2910 = vsel %vm1950, %v2904, %v2909
      %v2911 = vrot.slane %v2816, 2
      %v2912 = vsel %vm1950, %v2907, %v2911
      %v2913 = vrot.slane %v2817, 2
      %v2914 = vsel %vm1950, %v2909, %v2913
      %v2915 = vrot.slane %v2818, 2
      %v2916 = vsel %vm1950, %v2911, %v2915
      %v2917 = vrot.slane %v2819, 2
      %v2918 = vrot.slane %v2821, 2
      %v2919 = vsel %vm1950, %v2917, %v2918
      %v2920 = vrot.slane %v2820, 2
      %v2921 = vrot.slane %v2822, 2
      %v2922 = vsel %vm1950, %v2920, %v2921
      %v2923 = vrot.slane %v2823, 2
      %v2924 = vsel %vm1950, %v2918, %v2923
      %v2925 = vrot.slane %v2824, 2
      %v2926 = vsel %vm1950, %v2921, %v2925
      %v2927 = vrot.slane %v2825, 2
      %v2928 = vsel %vm1950, %v2923, %v2927
      %v2929 = vrot.slane %v2826, 2
      %v2930 = vsel %vm1950, %v2925, %v2929
      %v2931 = vrot.slane %v2827, 2
      %v2932 = vrot.slane %v2829, 2
      %v2933 = vsel %vm1950, %v2931, %v2932
      %v2934 = vrot.slane %v2828, 2
      %v2935 = vrot.slane %v2830, 2
      %v2936 = vsel %vm1950, %v2934, %v2935
      %v2937 = vrot.slane %v2831, 2
      %v2938 = vsel %vm1950, %v2932, %v2937
      %v2939 = vrot.slane %v2832, 2
      %v2940 = vsel %vm1950, %v2935, %v2939
      %v2941 = vrot.slane %v2833, 2
      %v2942 = vsel %vm1950, %v2937, %v2941
      %v2943 = vrot.slane %v2834, 2
      %v2944 = vsel %vm1950, %v2939, %v2943
      %s2960 = scalar_lea.vmem %s219, 480
      %v2961 = vld [vmem:[%s2960] sm:$0xff]
      %v2962 = vld [vmem:[%s2960 + $0x8] sm:$0xff]
      %v2963 = vld [vmem:[%s2960 + $0x10] sm:$0xff]
      %v2964 = vld [vmem:[%s2960 + $0x18] sm:$0xff]
      %v2965 = vld [vmem:[%s2960 + $0x20] sm:$0xff]
      %v2966 = vld [vmem:[%s2960 + $0x28] sm:$0xff]
      %v2967 = vld [vmem:[%s2960 + $0x30] sm:$0xff]
      %v2968 = vld [vmem:[%s2960 + $0x38] sm:$0xff]
      %v2969 = vld [vmem:[%s2960 + $0x40] sm:$0xff]
      %v2970 = vld [vmem:[%s2960 + $0x48] sm:$0xff]
      %v2971 = vld [vmem:[%s2960 + $0x50] sm:$0xff]
      %v2972 = vld [vmem:[%s2960 + $0x58] sm:$0xff]
      %v2973 = vld [vmem:[%s2960 + $0x60] sm:$0xff]
      %v2974 = vld [vmem:[%s2960 + $0x68] sm:$0xff]
      %v2975 = vld [vmem:[%s2960 + $0x70] sm:$0xff]
      %v2976 = vld [vmem:[%s2960 + $0x78] sm:$0xff]
      %v2977 = vld [vmem:[%s2960 + $0x80] sm:$0xff]
      %v2978 = vld [vmem:[%s2960 + $0x88] sm:$0xff]
      %v2979 = vld [vmem:[%s2960 + $0x90] sm:$0xff]
      %v2980 = vld [vmem:[%s2960 + $0x98] sm:$0xff]
      %v2981 = vsel %vm1755, %v2880, 0
      %v2983 = vsel %vm1755, %v2884, 0
      %v2985 = vsel %vm1755, %v2888, 0
      %v2987 = vsel %vm1755, %v2894, 0
      %v2989 = vsel %vm1755, %v2898, 0
      %v2991 = vsel %vm1755, %v2902, 0
      %v2993 = vsel %vm1755, %v2908, 0
      %v2995 = vsel %vm1755, %v2912, 0
      %v2997 = vsel %vm1755, %v2916, 0
      %v2999 = vsel %vm1755, %v2922, 0
      %v3001 = vsel %vm1755, %v2926, 0
      %v3003 = vsel %vm1755, %v2930, 0
      %v3005 = vsel %vm1755, %v2936, 0
      %v3007 = vsel %vm1755, %v2940, 0
      %v3009 = vsel %vm1755, %v2944, 0
      %3011 = vmatprep.subr.mxu0 0.0
      %3012 = vmatpush1.msra.mxu0 %v2976
      %3013 = vmatprep.subr.mxu0 0.0
      %3014 = vmatpush1.msra.mxu0 %v2975
      %3015 = vmatprep.subr.mxu0 0.0
      %3016 = vmatpush1.msra.mxu0 %v2974
      %3017 = vmatprep.subr.mxu0 0.0
      %3018 = vmatpush1.msra.mxu0 %v2973
      %3019 = vmatprep.subr.mxu0 0.0
      %3020 = vmatpush1.msra.mxu0 %v2972
      %3021 = vmatprep.subr.mxu0 0.0
      %3022 = vmatpush1.msra.mxu0 %v2971
      %3023 = vmatprep.subr.mxu0 0.0
      %3024 = vmatpush1.msra.mxu0 %v2970
      %3025 = vmatprep.subr.mxu0 0.0
      %3026 = vmatpush1.msra.mxu0 %v2969
      %3027 = vmatprep.subr.mxu0 0.0
      %3028 = vmatpush1.msra.mxu0 %v2968
      %3029 = vmatprep.subr.mxu0 0.0
      %3030 = vmatpush1.msra.mxu0 %v2967
      %3031 = vmatprep.subr.mxu0 0.0
      %3032 = vmatpush1.msra.mxu0 %v2966
      %3033 = vmatprep.subr.mxu0 0.0
      %3034 = vmatpush1.msra.mxu0 %v2965
      %3035 = vmatprep.subr.mxu0 0.0
      %3036 = vmatpush1.msra.mxu0 %v2964
      %3037 = vmatprep.subr.mxu0 0.0
      %3038 = vmatpush1.msra.mxu0 %v2963
      %3039 = vmatprep.subr.mxu0 0.0
      %3040 = vmatpush1.msra.mxu0 %v2962
      %3041 = vmatprep.subr.mxu0 0.0
      %3042 = vmatpush1.msra.mxu0 %v2961
      %3043 = vmatprep.subr.mxu0 0.0
      %3044 = vmatpush2.msra.mxu0 0.0
      %3045 = vmatprep.subr.mxu0 0.0
      %3046 = vmatpush2.msra.mxu0 0.0
      %3047 = vmatprep.subr.mxu0 0.0
      %3048 = vmatpush2.msra.mxu0 0.0
      %3049 = vmatprep.subr.mxu0 0.0
      %3050 = vmatpush2.msra.mxu0 0.0
      %3051 = vmatprep.subr.mxu0 0.0
      %3052 = vmatpush2.msra.mxu0 0.0
      %3053 = vmatprep.subr.mxu0 0.0
      %3054 = vmatpush2.msra.mxu0 0.0
      %3055 = vmatprep.subr.mxu0 0.0
      %3056 = vmatpush2.msra.mxu0 0.0
      %3057 = vmatprep.subr.mxu0 0.0
      %3058 = vmatpush2.msra.mxu0 0.0
      %3059 = vmatprep.subr.mxu0 0.0
      %3060 = vmatpush2.msra.mxu0 0.0
      %3061 = vmatprep.subr.mxu0 0.0
      %3062 = vmatpush2.msra.mxu0 0.0
      %3063 = vmatprep.subr.mxu0 0.0
      %3064 = vmatpush2.msra.mxu0 0.0
      %3065 = vmatprep.subr.mxu0 0.0
      %3066 = vmatpush2.msra.mxu0 0.0
      %3067 = vmatprep.subr.mxu0 0.0
      %3068 = vmatpush2.msra.mxu0 %v2980
      %3069 = vmatprep.subr.mxu0 0.0
      %3070 = vmatpush2.msra.mxu0 %v2979
      %3071 = vmatprep.subr.mxu0 0.0
      %3072 = vmatpush2.msra.mxu0 %v2978
      %3073 = vmatprep.subr.mxu0 0.0
      %3074 = vmatpush2.msra.mxu0 %v2977
      %3075 = vmatprep.mubr.f32.mxu0 %v2981
      %3076 = vmatmul.mubr.f32.gmra.mxu0 %v2877
      %v3077 = vpop.f32.mrf.mxu0
      %v3078 = vadd.f32 0.0, %v3077
      %v3079 = vpop.f32.mrf.mxu0
      %3080 = vmatprep.mubr.f32.mxu0 %v2983
      %3081 = vmatmul.mubr.f32.gmra.mxu0 %v2882
      %v3082 = vpop.f32.mrf.mxu0
      %v3083 = vadd.f32 0.0, %v3082
      %v3084 = vpop.f32.mrf.mxu0
      %3085 = vmatprep.mubr.f32.mxu0 %v2985
      %3086 = vmatmul.mubr.f32.gmra.mxu0 %v2886
      %v3087 = vpop.f32.mrf.mxu0
      %v3088 = vadd.f32 0.0, %v3087
      %v3089 = vpop.f32.mrf.mxu0
      %3090 = vmatprep.mubr.f32.mxu0 %v2987
      %3091 = vmatmul.mubr.f32.gmra.mxu0 %v2891
      %v3092 = vpop.f32.mrf.mxu0
      %v3093 = vadd.f32 0.0, %v3092
      %v3094 = vpop.f32.mrf.mxu0
      %3095 = vmatprep.mubr.f32.mxu0 %v2989
      %3096 = vmatmul.mubr.f32.gmra.mxu0 %v2896
      %v3097 = vpop.f32.mrf.mxu0
      %v3098 = vadd.f32 0.0, %v3097
      %v3099 = vpop.f32.mrf.mxu0
      %3100 = vmatprep.mubr.f32.mxu0 %v2991
      %3101 = vmatmul.mubr.f32.gmra.mxu0 %v2900
      %v3102 = vpop.f32.mrf.mxu0
      %v3103 = vadd.f32 0.0, %v3102
      %v3104 = vpop.f32.mrf.mxu0
      %3105 = vmatprep.mubr.f32.mxu0 %v2993
      %3106 = vmatmul.mubr.f32.gmra.mxu0 %v2905
      %v3107 = vpop.f32.mrf.mxu0
      %v3108 = vadd.f32 0.0, %v3107
      %v3109 = vpop.f32.mrf.mxu0
      %3110 = vmatprep.mubr.f32.mxu0 %v2995
      %3111 = vmatmul.mubr.f32.gmra.mxu0 %v2910
      %v3112 = vpop.f32.mrf.mxu0
      %v3113 = vadd.f32 0.0, %v3112
      %v3114 = vpop.f32.mrf.mxu0
      %3115 = vmatprep.mubr.f32.mxu0 %v2997
      %3116 = vmatmul.mubr.f32.gmra.mxu0 %v2914
      %v3117 = vpop.f32.mrf.mxu0
      %v3118 = vadd.f32 0.0, %v3117
      %v3119 = vpop.f32.mrf.mxu0
      %3120 = vmatprep.mubr.f32.mxu0 %v2999
      %3121 = vmatmul.mubr.f32.gmra.mxu0 %v2919
      %v3122 = vpop.f32.mrf.mxu0
      %v3123 = vadd.f32 0.0, %v3122
      %v3124 = vpop.f32.mrf.mxu0
      %3125 = vmatprep.mubr.f32.mxu0 %v3001
      %3126 = vmatmul.mubr.f32.gmra.mxu0 %v2924
      %v3127 = vpop.f32.mrf.mxu0
      %v3128 = vadd.f32 0.0, %v3127
      %v3129 = vpop.f32.mrf.mxu0
      %3130 = vmatprep.mubr.f32.mxu0 %v3003
      %3131 = vmatmul.mubr.f32.gmra.mxu0 %v2928
      %v3132 = vpop.f32.mrf.mxu0
      %v3133 = vadd.f32 0.0, %v3132
      %v3134 = vpop.f32.mrf.mxu0
      %3135 = vmatprep.mubr.f32.mxu0 %v3005
      %3136 = vmatmul.mubr.f32.gmra.mxu0 %v2933
      %v3137 = vpop.f32.mrf.mxu0
      %v3138 = vadd.f32 0.0, %v3137
      %v3139 = vpop.f32.mrf.mxu0
      %3140 = vmatprep.mubr.f32.mxu0 %v3007
      %3141 = vmatmul.mubr.f32.gmra.mxu0 %v2938
      %v3142 = vpop.f32.mrf.mxu0
      %v3143 = vadd.f32 0.0, %v3142
      %v3144 = vpop.f32.mrf.mxu0
      %3145 = vmatprep.mubr.f32.mxu0 %v3009
      %3146 = vmatmul.mubr.f32.gmra.mxu0 %v2942
      %v3147 = vpop.f32.mrf.mxu0
      %v3148 = vadd.f32 0.0, %v3147
      %v3149 = vpop.f32.mrf.mxu0
      %3150 = vdwg.mxu0
      %v3151 = vadd.f32 %v2779, %v3078
      %v3152 = vadd.f32 %v2780, %v3083
      %v3153 = vadd.f32 %v2781, %v3088
      %v3154 = vadd.f32 %v2782, %v3093
      %v3155 = vadd.f32 %v2783, %v3098
      %v3156 = vadd.f32 %v2784, %v3103
      %v3157 = vadd.f32 %v2785, %v3108
      %v3158 = vadd.f32 %v2786, %v3113
      %v3159 = vadd.f32 %v2787, %v3118
      %v3160 = vadd.f32 %v2788, %v3123
      %v3161 = vadd.f32 %v2789, %v3128
      %v3162 = vadd.f32 %v2790, %v3133
      %v3163 = vadd.f32 %v2791, %v3138
      %v3164 = vadd.f32 %v2792, %v3143
      %v3165 = vadd.f32 %v2793, %v3148
      %v3166 = vld [vmem:[%s2794] sm:$0xfe]
      %v3167 = vld [vmem:[%s2794 + $0x8] sm:$0xfe]
      %v3168 = vld [vmem:[%s2794 + $0x30] sm:$0x1]
      %v3169 = vld [vmem:[%s2794 + $0x38] sm:$0x1]
      %v3170 = vld [vmem:[%s2794 + $0x40] sm:$0xfe]
      %v3171 = vld [vmem:[%s2794 + $0x48] sm:$0xfe]
      %v3172 = vld [vmem:[%s2794 + $0x70] sm:$0x1]
      %v3173 = vld [vmem:[%s2794 + $0x78] sm:$0x1]
      %v3174 = vld [vmem:[%s2794 + $0x80] sm:$0xfe]
      %v3175 = vld [vmem:[%s2794 + $0x88] sm:$0xfe]
      %v3176 = vld [vmem:[%s2794 + $0xb0] sm:$0x1]
      %v3177 = vld [vmem:[%s2794 + $0xb8] sm:$0x1]
      %v3178 = vld [vmem:[%s2794 + $0xc0] sm:$0xfe]
      %v3179 = vld [vmem:[%s2794 + $0xc8] sm:$0xfe]
      %v3180 = vld [vmem:[%s2794 + $0xf0] sm:$0x1]
      %v3181 = vld [vmem:[%s2794 + $0xf8] sm:$0x1]
      %v3182 = vld [vmem:[%s2794 + $0x100] sm:$0xfe]
      %v3183 = vld [vmem:[%s2794 + $0x108] sm:$0xfe]
      %v3184 = vld [vmem:[%s2794 + $0x130] sm:$0x1]
      %v3185 = vld [vmem:[%s2794 + $0x138] sm:$0x1]
      %v3206 = vrot.slane %v3166, 1
      %v3207 = vrot.slane %v2797, 1
      %v3208 = vsel %vm2096, %v3206, %v3207
      %v3209 = vrot.slane %v3167, 1
      %v3210 = vrot.slane %v2798, 1
      %v3211 = vsel %vm2096, %v3209, %v3210
      %v3212 = vrot.slane %v2799, 1
      %v3213 = vsel %vm2096, %v3207, %v3212
      %v3214 = vrot.slane %v2800, 1
      %v3215 = vsel %vm2096, %v3210, %v3214
      %v3216 = vrot.slane %v3168, 1
      %v3217 = vsel %vm2096, %v3212, %v3216
      %v3218 = vrot.slane %v3169, 1
      %v3219 = vsel %vm2096, %v3214, %v3218
      %v3220 = vrot.slane %v3170, 1
      %v3221 = vrot.slane %v2805, 1
      %v3222 = vsel %vm2096, %v3220, %v3221
      %v3223 = vrot.slane %v3171, 1
      %v3224 = vrot.slane %v2806, 1
      %v3225 = vsel %vm2096, %v3223, %v3224
      %v3226 = vrot.slane %v2807, 1
      %v3227 = vsel %vm2096, %v3221, %v3226
      %v3228 = vrot.slane %v2808, 1
      %v3229 = vsel %vm2096, %v3224, %v3228
      %v3230 = vrot.slane %v3172, 1
      %v3231 = vsel %vm2096, %v3226, %v3230
      %v3232 = vrot.slane %v3173, 1
      %v3233 = vsel %vm2096, %v3228, %v3232
      %v3234 = vrot.slane %v3174, 1
      %v3235 = vrot.slane %v2813, 1
      %v3236 = vsel %vm2096, %v3234, %v3235
      %v3237 = vrot.slane %v3175, 1
      %v3238 = vrot.slane %v2814, 1
      %v3239 = vsel %vm2096, %v3237, %v3238
      %v3240 = vrot.slane %v2815, 1
      %v3241 = vsel %vm2096, %v3235, %v3240
      %v3242 = vrot.slane %v2816, 1
      %v3243 = vsel %vm2096, %v3238, %v3242
      %v3244 = vrot.slane %v3176, 1
      %v3245 = vsel %vm2096, %v3240, %v3244
      %v3246 = vrot.slane %v3177, 1
      %v3247 = vsel %vm2096, %v3242, %v3246
      %v3248 = vrot.slane %v3178, 1
      %v3249 = vrot.slane %v2821, 1
      %v3250 = vsel %vm2096, %v3248, %v3249
      %v3251 = vrot.slane %v3179, 1
      %v3252 = vrot.slane %v2822, 1
      %v3253 = vsel %vm2096, %v3251, %v3252
      %v3254 = vrot.slane %v2823, 1
      %v3255 = vsel %vm2096, %v3249, %v3254
      %v3256 = vrot.slane %v2824, 1
      %v3257 = vsel %vm2096, %v3252, %v3256
      %v3258 = vrot.slane %v3180, 1
      %v3259 = vsel %vm2096, %v3254, %v3258
      %v3260 = vrot.slane %v3181, 1
      %v3261 = vsel %vm2096, %v3256, %v3260
      %v3262 = vrot.slane %v3182, 1
      %v3263 = vrot.slane %v2829, 1
      %v3264 = vsel %vm2096, %v3262, %v3263
      %v3265 = vrot.slane %v3183, 1
      %v3266 = vrot.slane %v2830, 1
      %v3267 = vsel %vm2096, %v3265, %v3266
      %v3268 = vrot.slane %v2831, 1
      %v3269 = vsel %vm2096, %v3263, %v3268
      %v3270 = vrot.slane %v2832, 1
      %v3271 = vsel %vm2096, %v3266, %v3270
      %v3272 = vrot.slane %v3184, 1
      %v3273 = vsel %vm2096, %v3268, %v3272
      %v3274 = vrot.slane %v3185, 1
      %v3275 = vsel %vm2096, %v3270, %v3274
      %s3291 = scalar_lea.vmem %s219, 640
      %v3292 = vld [vmem:[%s3291] sm:$0xff]
      %v3293 = vld [vmem:[%s3291 + $0x8] sm:$0xff]
      %v3294 = vld [vmem:[%s3291 + $0x10] sm:$0xff]
      %v3295 = vld [vmem:[%s3291 + $0x18] sm:$0xff]
      %v3296 = vld [vmem:[%s3291 + $0x20] sm:$0xff]
      %v3297 = vld [vmem:[%s3291 + $0x28] sm:$0xff]
      %v3298 = vld [vmem:[%s3291 + $0x30] sm:$0xff]
      %v3299 = vld [vmem:[%s3291 + $0x38] sm:$0xff]
      %v3300 = vld [vmem:[%s3291 + $0x40] sm:$0xff]
      %v3301 = vld [vmem:[%s3291 + $0x48] sm:$0xff]
      %v3302 = vld [vmem:[%s3291 + $0x50] sm:$0xff]
      %v3303 = vld [vmem:[%s3291 + $0x58] sm:$0xff]
      %v3304 = vld [vmem:[%s3291 + $0x60] sm:$0xff]
      %v3305 = vld [vmem:[%s3291 + $0x68] sm:$0xff]
      %v3306 = vld [vmem:[%s3291 + $0x70] sm:$0xff]
      %v3307 = vld [vmem:[%s3291 + $0x78] sm:$0xff]
      %v3308 = vld [vmem:[%s3291 + $0x80] sm:$0xff]
      %v3309 = vld [vmem:[%s3291 + $0x88] sm:$0xff]
      %v3310 = vld [vmem:[%s3291 + $0x90] sm:$0xff]
      %v3311 = vld [vmem:[%s3291 + $0x98] sm:$0xff]
      %v3312 = vsel %vm1755, %v3211, 0
      %v3314 = vsel %vm1755, %v3215, 0
      %v3316 = vsel %vm1755, %v3219, 0
      %v3318 = vsel %vm1755, %v3225, 0
      %v3320 = vsel %vm1755, %v3229, 0
      %v3322 = vsel %vm1755, %v3233, 0
      %v3324 = vsel %vm1755, %v3239, 0
      %v3326 = vsel %vm1755, %v3243, 0
      %v3328 = vsel %vm1755, %v3247, 0
      %v3330 = vsel %vm1755, %v3253, 0
      %v3332 = vsel %vm1755, %v3257, 0
      %v3334 = vsel %vm1755, %v3261, 0
      %v3336 = vsel %vm1755, %v3267, 0
      %v3338 = vsel %vm1755, %v3271, 0
      %v3340 = vsel %vm1755, %v3275, 0
      %3342 = vmatprep.subr.mxu0 0.0
      %3343 = vmatpush1.msra.mxu0 %v3307
      %3344 = vmatprep.subr.mxu0 0.0
      %3345 = vmatpush1.msra.mxu0 %v3306
      %3346 = vmatprep.subr.mxu0 0.0
      %3347 = vmatpush1.msra.mxu0 %v3305
      %3348 = vmatprep.subr.mxu0 0.0
      %3349 = vmatpush1.msra.mxu0 %v3304
      %3350 = vmatprep.subr.mxu0 0.0
      %3351 = vmatpush1.msra.mxu0 %v3303
      %3352 = vmatprep.subr.mxu0 0.0
      %3353 = vmatpush1.msra.mxu0 %v3302
      %3354 = vmatprep.subr.mxu0 0.0
      %3355 = vmatpush1.msra.mxu0 %v3301
      %3356 = vmatprep.subr.mxu0 0.0
      %3357 = vmatpush1.msra.mxu0 %v3300
      %3358 = vmatprep.subr.mxu0 0.0
      %3359 = vmatpush1.msra.mxu0 %v3299
      %3360 = vmatprep.subr.mxu0 0.0
      %3361 = vmatpush1.msra.mxu0 %v3298
      %3362 = vmatprep.subr.mxu0 0.0
      %3363 = vmatpush1.msra.mxu0 %v3297
      %3364 = vmatprep.subr.mxu0 0.0
      %3365 = vmatpush1.msra.mxu0 %v3296
      %3366 = vmatprep.subr.mxu0 0.0
      %3367 = vmatpush1.msra.mxu0 %v3295
      %3368 = vmatprep.subr.mxu0 0.0
      %3369 = vmatpush1.msra.mxu0 %v3294
      %3370 = vmatprep.subr.mxu0 0.0
      %3371 = vmatpush1.msra.mxu0 %v3293
      %3372 = vmatprep.subr.mxu0 0.0
      %3373 = vmatpush1.msra.mxu0 %v3292
      %3374 = vmatprep.subr.mxu0 0.0
      %3375 = vmatpush2.msra.mxu0 0.0
      %3376 = vmatprep.subr.mxu0 0.0
      %3377 = vmatpush2.msra.mxu0 0.0
      %3378 = vmatprep.subr.mxu0 0.0
      %3379 = vmatpush2.msra.mxu0 0.0
      %3380 = vmatprep.subr.mxu0 0.0
      %3381 = vmatpush2.msra.mxu0 0.0
      %3382 = vmatprep.subr.mxu0 0.0
      %3383 = vmatpush2.msra.mxu0 0.0
      %3384 = vmatprep.subr.mxu0 0.0
      %3385 = vmatpush2.msra.mxu0 0.0
      %3386 = vmatprep.subr.mxu0 0.0
      %3387 = vmatpush2.msra.mxu0 0.0
      %3388 = vmatprep.subr.mxu0 0.0
      %3389 = vmatpush2.msra.mxu0 0.0
      %3390 = vmatprep.subr.mxu0 0.0
      %3391 = vmatpush2.msra.mxu0 0.0
      %3392 = vmatprep.subr.mxu0 0.0
      %3393 = vmatpush2.msra.mxu0 0.0
      %3394 = vmatprep.subr.mxu0 0.0
      %3395 = vmatpush2.msra.mxu0 0.0
      %3396 = vmatprep.subr.mxu0 0.0
      %3397 = vmatpush2.msra.mxu0 0.0
      %3398 = vmatprep.subr.mxu0 0.0
      %3399 = vmatpush2.msra.mxu0 %v3311
      %3400 = vmatprep.subr.mxu0 0.0
      %3401 = vmatpush2.msra.mxu0 %v3310
      %3402 = vmatprep.subr.mxu0 0.0
      %3403 = vmatpush2.msra.mxu0 %v3309
      %3404 = vmatprep.subr.mxu0 0.0
      %3405 = vmatpush2.msra.mxu0 %v3308
      %3406 = vmatprep.mubr.f32.mxu0 %v3312
      %3407 = vmatmul.mubr.f32.gmra.mxu0 %v3208
      %v3408 = vpop.f32.mrf.mxu0
      %v3409 = vadd.f32 0.0, %v3408
      %v3410 = vpop.f32.mrf.mxu0
      %3411 = vmatprep.mubr.f32.mxu0 %v3314
      %3412 = vmatmul.mubr.f32.gmra.mxu0 %v3213
      %v3413 = vpop.f32.mrf.mxu0
      %v3414 = vadd.f32 0.0, %v3413
      %v3415 = vpop.f32.mrf.mxu0
      %3416 = vmatprep.mubr.f32.mxu0 %v3316
      %3417 = vmatmul.mubr.f32.gmra.mxu0 %v3217
      %v3418 = vpop.f32.mrf.mxu0
      %v3419 = vadd.f32 0.0, %v3418
      %v3420 = vpop.f32.mrf.mxu0
      %3421 = vmatprep.mubr.f32.mxu0 %v3318
      %3422 = vmatmul.mubr.f32.gmra.mxu0 %v3222
      %v3423 = vpop.f32.mrf.mxu0
      %v3424 = vadd.f32 0.0, %v3423
      %v3425 = vpop.f32.mrf.mxu0
      %3426 = vmatprep.mubr.f32.mxu0 %v3320
      %3427 = vmatmul.mubr.f32.gmra.mxu0 %v3227
      %v3428 = vpop.f32.mrf.mxu0
      %v3429 = vadd.f32 0.0, %v3428
      %v3430 = vpop.f32.mrf.mxu0
      %3431 = vmatprep.mubr.f32.mxu0 %v3322
      %3432 = vmatmul.mubr.f32.gmra.mxu0 %v3231
      %v3433 = vpop.f32.mrf.mxu0
      %v3434 = vadd.f32 0.0, %v3433
      %v3435 = vpop.f32.mrf.mxu0
      %3436 = vmatprep.mubr.f32.mxu0 %v3324
      %3437 = vmatmul.mubr.f32.gmra.mxu0 %v3236
      %v3438 = vpop.f32.mrf.mxu0
      %v3439 = vadd.f32 0.0, %v3438
      %v3440 = vpop.f32.mrf.mxu0
      %3441 = vmatprep.mubr.f32.mxu0 %v3326
      %3442 = vmatmul.mubr.f32.gmra.mxu0 %v3241
      %v3443 = vpop.f32.mrf.mxu0
      %v3444 = vadd.f32 0.0, %v3443
      %v3445 = vpop.f32.mrf.mxu0
      %3446 = vmatprep.mubr.f32.mxu0 %v3328
      %3447 = vmatmul.mubr.f32.gmra.mxu0 %v3245
      %v3448 = vpop.f32.mrf.mxu0
      %v3449 = vadd.f32 0.0, %v3448
      %v3450 = vpop.f32.mrf.mxu0
      %3451 = vmatprep.mubr.f32.mxu0 %v3330
      %3452 = vmatmul.mubr.f32.gmra.mxu0 %v3250
      %v3453 = vpop.f32.mrf.mxu0
      %v3454 = vadd.f32 0.0, %v3453
      %v3455 = vpop.f32.mrf.mxu0
      %3456 = vmatprep.mubr.f32.mxu0 %v3332
      %3457 = vmatmul.mubr.f32.gmra.mxu0 %v3255
      %v3458 = vpop.f32.mrf.mxu0
      %v3459 = vadd.f32 0.0, %v3458
      %v3460 = vpop.f32.mrf.mxu0
      %3461 = vmatprep.mubr.f32.mxu0 %v3334
      %3462 = vmatmul.mubr.f32.gmra.mxu0 %v3259
      %v3463 = vpop.f32.mrf.mxu0
      %v3464 = vadd.f32 0.0, %v3463
      %v3465 = vpop.f32.mrf.mxu0
      %3466 = vmatprep.mubr.f32.mxu0 %v3336
      %3467 = vmatmul.mubr.f32.gmra.mxu0 %v3264
      %v3468 = vpop.f32.mrf.mxu0
      %v3469 = vadd.f32 0.0, %v3468
      %v3470 = vpop.f32.mrf.mxu0
      %3471 = vmatprep.mubr.f32.mxu0 %v3338
      %3472 = vmatmul.mubr.f32.gmra.mxu0 %v3269
      %v3473 = vpop.f32.mrf.mxu0
      %v3474 = vadd.f32 0.0, %v3473
      %v3475 = vpop.f32.mrf.mxu0
      %3476 = vmatprep.mubr.f32.mxu0 %v3340
      %3477 = vmatmul.mubr.f32.gmra.mxu0 %v3273
      %v3478 = vpop.f32.mrf.mxu0
      %v3479 = vadd.f32 0.0, %v3478
      %v3480 = vpop.f32.mrf.mxu0
      %3481 = vdwg.mxu0
      %v3482 = vadd.f32 %v3151, %v3409
      %v3483 = vadd.f32 %v3152, %v3414
      %v3484 = vadd.f32 %v3153, %v3419
      %v3485 = vadd.f32 %v3154, %v3424
      %v3486 = vadd.f32 %v3155, %v3429
      %v3487 = vadd.f32 %v3156, %v3434
      %v3488 = vadd.f32 %v3157, %v3439
      %v3489 = vadd.f32 %v3158, %v3444
      %v3490 = vadd.f32 %v3159, %v3449
      %v3491 = vadd.f32 %v3160, %v3454
      %v3492 = vadd.f32 %v3161, %v3459
      %v3493 = vadd.f32 %v3162, %v3464
      %v3494 = vadd.f32 %v3163, %v3469
      %v3495 = vadd.f32 %v3164, %v3474
      %v3496 = vadd.f32 %v3165, %v3479
      %v3497 = vld [vmem:[%s2794] sm:$0xff]
      %v3498 = vld [vmem:[%s2794 + $0x8] sm:$0xff]
      %v3499 = vld [vmem:[%s2794 + $0x10] sm:$0xff]
      %v3500 = vld [vmem:[%s2794 + $0x18] sm:$0xff]
      %v3501 = vld [vmem:[%s2794 + $0x20] sm:$0xff]
      %v3502 = vld [vmem:[%s2794 + $0x28] sm:$0xff]
      %v3503 = vld [vmem:[%s2794 + $0x40] sm:$0xff]
      %v3504 = vld [vmem:[%s2794 + $0x48] sm:$0xff]
      %v3505 = vld [vmem:[%s2794 + $0x50] sm:$0xff]
      %v3506 = vld [vmem:[%s2794 + $0x58] sm:$0xff]
      %v3507 = vld [vmem:[%s2794 + $0x60] sm:$0xff]
      %v3508 = vld [vmem:[%s2794 + $0x68] sm:$0xff]
      %v3509 = vld [vmem:[%s2794 + $0x80] sm:$0xff]
      %v3510 = vld [vmem:[%s2794 + $0x88] sm:$0xff]
      %v3511 = vld [vmem:[%s2794 + $0x90] sm:$0xff]
      %v3512 = vld [vmem:[%s2794 + $0x98] sm:$0xff]
      %v3513 = vld [vmem:[%s2794 + $0xa0] sm:$0xff]
      %v3514 = vld [vmem:[%s2794 + $0xa8] sm:$0xff]
      %v3515 = vld [vmem:[%s2794 + $0xc0] sm:$0xff]
      %v3516 = vld [vmem:[%s2794 + $0xc8] sm:$0xff]
      %v3517 = vld [vmem:[%s2794 + $0xd0] sm:$0xff]
      %v3518 = vld [vmem:[%s2794 + $0xd8] sm:$0xff]
      %v3519 = vld [vmem:[%s2794 + $0xe0] sm:$0xff]
      %v3520 = vld [vmem:[%s2794 + $0xe8] sm:$0xff]
      %v3521 = vld [vmem:[%s2794 + $0x100] sm:$0xff]
      %v3522 = vld [vmem:[%s2794 + $0x108] sm:$0xff]
      %v3523 = vld [vmem:[%s2794 + $0x110] sm:$0xff]
      %v3524 = vld [vmem:[%s2794 + $0x118] sm:$0xff]
      %v3525 = vld [vmem:[%s2794 + $0x120] sm:$0xff]
      %v3526 = vld [vmem:[%s2794 + $0x128] sm:$0xff]
      %s3527 = scalar_lea.vmem %s219, 800
      %v3528 = vld [vmem:[%s3527] sm:$0xff]
      %v3529 = vld [vmem:[%s3527 + $0x8] sm:$0xff]
      %v3530 = vld [vmem:[%s3527 + $0x10] sm:$0xff]
      %v3531 = vld [vmem:[%s3527 + $0x18] sm:$0xff]
      %v3532 = vld [vmem:[%s3527 + $0x20] sm:$0xff]
      %v3533 = vld [vmem:[%s3527 + $0x28] sm:$0xff]
      %v3534 = vld [vmem:[%s3527 + $0x30] sm:$0xff]
      %v3535 = vld [vmem:[%s3527 + $0x38] sm:$0xff]
      %v3536 = vld [vmem:[%s3527 + $0x40] sm:$0xff]
      %v3537 = vld [vmem:[%s3527 + $0x48] sm:$0xff]
      %v3538 = vld [vmem:[%s3527 + $0x50] sm:$0xff]
      %v3539 = vld [vmem:[%s3527 + $0x58] sm:$0xff]
      %v3540 = vld [vmem:[%s3527 + $0x60] sm:$0xff]
      %v3541 = vld [vmem:[%s3527 + $0x68] sm:$0xff]
      %v3542 = vld [vmem:[%s3527 + $0x70] sm:$0xff]
      %v3543 = vld [vmem:[%s3527 + $0x78] sm:$0xff]
      %v3544 = vld [vmem:[%s3527 + $0x80] sm:$0xff]
      %v3545 = vld [vmem:[%s3527 + $0x88] sm:$0xff]
      %v3546 = vld [vmem:[%s3527 + $0x90] sm:$0xff]
      %v3547 = vld [vmem:[%s3527 + $0x98] sm:$0xff]
      %v3549 = vsel %vm1755, %v3498, 0
      %v3552 = vsel %vm1755, %v3500, 0
      %v3555 = vsel %vm1755, %v3502, 0
      %v3558 = vsel %vm1755, %v3504, 0
      %v3561 = vsel %vm1755, %v3506, 0
      %v3564 = vsel %vm1755, %v3508, 0
      %v3567 = vsel %vm1755, %v3510, 0
      %v3570 = vsel %vm1755, %v3512, 0
      %v3573 = vsel %vm1755, %v3514, 0
      %v3576 = vsel %vm1755, %v3516, 0
      %v3579 = vsel %vm1755, %v3518, 0
      %v3582 = vsel %vm1755, %v3520, 0
      %v3585 = vsel %vm1755, %v3522, 0
      %v3588 = vsel %vm1755, %v3524, 0
      %v3591 = vsel %vm1755, %v3526, 0
      %3593 = vmatprep.subr.mxu0 0.0
      %3594 = vmatpush1.msra.mxu0 %v3543
      %3595 = vmatprep.subr.mxu0 0.0
      %3596 = vmatpush1.msra.mxu0 %v3542
      %3597 = vmatprep.subr.mxu0 0.0
      %3598 = vmatpush1.msra.mxu0 %v3541
      %3599 = vmatprep.subr.mxu0 0.0
      %3600 = vmatpush1.msra.mxu0 %v3540
      %3601 = vmatprep.subr.mxu0 0.0
      %3602 = vmatpush1.msra.mxu0 %v3539
      %3603 = vmatprep.subr.mxu0 0.0
      %3604 = vmatpush1.msra.mxu0 %v3538
      %3605 = vmatprep.subr.mxu0 0.0
      %3606 = vmatpush1.msra.mxu0 %v3537
      %3607 = vmatprep.subr.mxu0 0.0
      %3608 = vmatpush1.msra.mxu0 %v3536
      %3609 = vmatprep.subr.mxu0 0.0
      %3610 = vmatpush1.msra.mxu0 %v3535
      %3611 = vmatprep.subr.mxu0 0.0
      %3612 = vmatpush1.msra.mxu0 %v3534
      %3613 = vmatprep.subr.mxu0 0.0
      %3614 = vmatpush1.msra.mxu0 %v3533
      %3615 = vmatprep.subr.mxu0 0.0
      %3616 = vmatpush1.msra.mxu0 %v3532
      %3617 = vmatprep.subr.mxu0 0.0
      %3618 = vmatpush1.msra.mxu0 %v3531
      %3619 = vmatprep.subr.mxu0 0.0
      %3620 = vmatpush1.msra.mxu0 %v3530
      %3621 = vmatprep.subr.mxu0 0.0
      %3622 = vmatpush1.msra.mxu0 %v3529
      %3623 = vmatprep.subr.mxu0 0.0
      %3624 = vmatpush1.msra.mxu0 %v3528
      %3625 = vmatprep.subr.mxu0 0.0
      %3626 = vmatpush2.msra.mxu0 0.0
      %3627 = vmatprep.subr.mxu0 0.0
      %3628 = vmatpush2.msra.mxu0 0.0
      %3629 = vmatprep.subr.mxu0 0.0
      %3630 = vmatpush2.msra.mxu0 0.0
      %3631 = vmatprep.subr.mxu0 0.0
      %3632 = vmatpush2.msra.mxu0 0.0
      %3633 = vmatprep.subr.mxu0 0.0
      %3634 = vmatpush2.msra.mxu0 0.0
      %3635 = vmatprep.subr.mxu0 0.0
      %3636 = vmatpush2.msra.mxu0 0.0
      %3637 = vmatprep.subr.mxu0 0.0
      %3638 = vmatpush2.msra.mxu0 0.0
      %3639 = vmatprep.subr.mxu0 0.0
      %3640 = vmatpush2.msra.mxu0 0.0
      %3641 = vmatprep.subr.mxu0 0.0
      %3642 = vmatpush2.msra.mxu0 0.0
      %3643 = vmatprep.subr.mxu0 0.0
      %3644 = vmatpush2.msra.mxu0 0.0
      %3645 = vmatprep.subr.mxu0 0.0
      %3646 = vmatpush2.msra.mxu0 0.0
      %3647 = vmatprep.subr.mxu0 0.0
      %3648 = vmatpush2.msra.mxu0 0.0
      %3649 = vmatprep.subr.mxu0 0.0
      %3650 = vmatpush2.msra.mxu0 %v3547
      %3651 = vmatprep.subr.mxu0 0.0
      %3652 = vmatpush2.msra.mxu0 %v3546
      %3653 = vmatprep.subr.mxu0 0.0
      %3654 = vmatpush2.msra.mxu0 %v3545
      %3655 = vmatprep.subr.mxu0 0.0
      %3656 = vmatpush2.msra.mxu0 %v3544
      %3657 = vmatprep.mubr.f32.mxu0 %v3549
      %3658 = vmatmul.mubr.f32.gmra.mxu0 %v3497
      %v3659 = vpop.f32.mrf.mxu0
      %v3660 = vadd.f32 0.0, %v3659
      %v3661 = vpop.f32.mrf.mxu0
      %3662 = vmatprep.mubr.f32.mxu0 %v3552
      %3663 = vmatmul.mubr.f32.gmra.mxu0 %v3499
      %v3664 = vpop.f32.mrf.mxu0
      %v3665 = vadd.f32 0.0, %v3664
      %v3666 = vpop.f32.mrf.mxu0
      %3667 = vmatprep.mubr.f32.mxu0 %v3555
      %3668 = vmatmul.mubr.f32.gmra.mxu0 %v3501
      %v3669 = vpop.f32.mrf.mxu0
      %v3670 = vadd.f32 0.0, %v3669
      %v3671 = vpop.f32.mrf.mxu0
      %3672 = vmatprep.mubr.f32.mxu0 %v3558
      %3673 = vmatmul.mubr.f32.gmra.mxu0 %v3503
      %v3674 = vpop.f32.mrf.mxu0
      %v3675 = vadd.f32 0.0, %v3674
      %v3676 = vpop.f32.mrf.mxu0
      %3677 = vmatprep.mubr.f32.mxu0 %v3561
      %3678 = vmatmul.mubr.f32.gmra.mxu0 %v3505
      %v3679 = vpop.f32.mrf.mxu0
      %v3680 = vadd.f32 0.0, %v3679
      %v3681 = vpop.f32.mrf.mxu0
      %3682 = vmatprep.mubr.f32.mxu0 %v3564
      %3683 = vmatmul.mubr.f32.gmra.mxu0 %v3507
      %v3684 = vpop.f32.mrf.mxu0
      %v3685 = vadd.f32 0.0, %v3684
      %v3686 = vpop.f32.mrf.mxu0
      %3687 = vmatprep.mubr.f32.mxu0 %v3567
      %3688 = vmatmul.mubr.f32.gmra.mxu0 %v3509
      %v3689 = vpop.f32.mrf.mxu0
      %v3690 = vadd.f32 0.0, %v3689
      %v3691 = vpop.f32.mrf.mxu0
      %3692 = vmatprep.mubr.f32.mxu0 %v3570
      %3693 = vmatmul.mubr.f32.gmra.mxu0 %v3511
      %v3694 = vpop.f32.mrf.mxu0
      %v3695 = vadd.f32 0.0, %v3694
      %v3696 = vpop.f32.mrf.mxu0
      %3697 = vmatprep.mubr.f32.mxu0 %v3573
      %3698 = vmatmul.mubr.f32.gmra.mxu0 %v3513
      %v3699 = vpop.f32.mrf.mxu0
      %v3700 = vadd.f32 0.0, %v3699
      %v3701 = vpop.f32.mrf.mxu0
      %3702 = vmatprep.mubr.f32.mxu0 %v3576
      %3703 = vmatmul.mubr.f32.gmra.mxu0 %v3515
      %v3704 = vpop.f32.mrf.mxu0
      %v3705 = vadd.f32 0.0, %v3704
      %v3706 = vpop.f32.mrf.mxu0
      %3707 = vmatprep.mubr.f32.mxu0 %v3579
      %3708 = vmatmul.mubr.f32.gmra.mxu0 %v3517
      %v3709 = vpop.f32.mrf.mxu0
      %v3710 = vadd.f32 0.0, %v3709
      %v3711 = vpop.f32.mrf.mxu0
      %3712 = vmatprep.mubr.f32.mxu0 %v3582
      %3713 = vmatmul.mubr.f32.gmra.mxu0 %v3519
      %v3714 = vpop.f32.mrf.mxu0
      %v3715 = vadd.f32 0.0, %v3714
      %v3716 = vpop.f32.mrf.mxu0
      %3717 = vmatprep.mubr.f32.mxu0 %v3585
      %3718 = vmatmul.mubr.f32.gmra.mxu0 %v3521
      %v3719 = vpop.f32.mrf.mxu0
      %v3720 = vadd.f32 0.0, %v3719
      %v3721 = vpop.f32.mrf.mxu0
      %3722 = vmatprep.mubr.f32.mxu0 %v3588
      %3723 = vmatmul.mubr.f32.gmra.mxu0 %v3523
      %v3724 = vpop.f32.mrf.mxu0
      %v3725 = vadd.f32 0.0, %v3724
      %v3726 = vpop.f32.mrf.mxu0
      %3727 = vmatprep.mubr.f32.mxu0 %v3591
      %3728 = vmatmul.mubr.f32.gmra.mxu0 %v3525
      %v3729 = vpop.f32.mrf.mxu0
      %v3730 = vadd.f32 0.0, %v3729
      %v3731 = vpop.f32.mrf.mxu0
      %3732 = vdwg.mxu0
      %v3733 = vadd.f32 %v3482, %v3660
      %v3734 = vadd.f32 %v3483, %v3665
      %v3735 = vadd.f32 %v3484, %v3670
      %v3736 = vadd.f32 %v3485, %v3675
      %v3737 = vadd.f32 %v3486, %v3680
      %v3738 = vadd.f32 %v3487, %v3685
      %v3739 = vadd.f32 %v3488, %v3690
      %v3740 = vadd.f32 %v3489, %v3695
      %v3741 = vadd.f32 %v3490, %v3700
      %v3742 = vadd.f32 %v3491, %v3705
      %v3743 = vadd.f32 %v3492, %v3710
      %v3744 = vadd.f32 %v3493, %v3715
      %v3745 = vadd.f32 %v3494, %v3720
      %v3746 = vadd.f32 %v3495, %v3725
      %v3747 = vadd.f32 %v3496, %v3730
      %s3748 = scalar_lea.vmem [#allocation2], 128
      %v3749 = vld [vmem:[%s3748] sm:$0xfc]
      %v3750 = vld [vmem:[%s3748 + $0x8] sm:$0xfc]
      %v3751 = vld [vmem:[%s3748 + $0x10] sm:$0xff]
      %v3752 = vld [vmem:[%s3748 + $0x18] sm:$0xff]
      %v3753 = vld [vmem:[%s3748 + $0x20] sm:$0xff]
      %v3754 = vld [vmem:[%s3748 + $0x28] sm:$0xff]
      %v3755 = vld [vmem:[%s3748 + $0x30] sm:$0x3]
      %v3756 = vld [vmem:[%s3748 + $0x38] sm:$0x3]
      %v3757 = vld [vmem:[%s3748 + $0x40] sm:$0xfc]
      %v3758 = vld [vmem:[%s3748 + $0x48] sm:$0xfc]
      %v3759 = vld [vmem:[%s3748 + $0x50] sm:$0xff]
      %v3760 = vld [vmem:[%s3748 + $0x58] sm:$0xff]
      %v3761 = vld [vmem:[%s3748 + $0x60] sm:$0xff]
      %v3762 = vld [vmem:[%s3748 + $0x68] sm:$0xff]
      %v3763 = vld [vmem:[%s3748 + $0x70] sm:$0x3]
      %v3764 = vld [vmem:[%s3748 + $0x78] sm:$0x3]
      %v3765 = vld [vmem:[%s3748 + $0x80] sm:$0xfc]
      %v3766 = vld [vmem:[%s3748 + $0x88] sm:$0xfc]
      %v3767 = vld [vmem:[%s3748 + $0x90] sm:$0xff]
      %v3768 = vld [vmem:[%s3748 + $0x98] sm:$0xff]
      %v3769 = vld [vmem:[%s3748 + $0xa0] sm:$0xff]
      %v3770 = vld [vmem:[%s3748 + $0xa8] sm:$0xff]
      %v3771 = vld [vmem:[%s3748 + $0xb0] sm:$0x3]
      %v3772 = vld [vmem:[%s3748 + $0xb8] sm:$0x3]
      %v3773 = vld [vmem:[%s3748 + $0xc0] sm:$0xfc]
      %v3774 = vld [vmem:[%s3748 + $0xc8] sm:$0xfc]
      %v3775 = vld [vmem:[%s3748 + $0xd0] sm:$0xff]
      %v3776 = vld [vmem:[%s3748 + $0xd8] sm:$0xff]
      %v3777 = vld [vmem:[%s3748 + $0xe0] sm:$0xff]
      %v3778 = vld [vmem:[%s3748 + $0xe8] sm:$0xff]
      %v3779 = vld [vmem:[%s3748 + $0xf0] sm:$0x3]
      %v3780 = vld [vmem:[%s3748 + $0xf8] sm:$0x3]
      %v3781 = vld [vmem:[%s3748 + $0x100] sm:$0xfc]
      %v3782 = vld [vmem:[%s3748 + $0x108] sm:$0xfc]
      %v3783 = vld [vmem:[%s3748 + $0x110] sm:$0xff]
      %v3784 = vld [vmem:[%s3748 + $0x118] sm:$0xff]
      %v3785 = vld [vmem:[%s3748 + $0x120] sm:$0xff]
      %v3786 = vld [vmem:[%s3748 + $0x128] sm:$0xff]
      %v3787 = vld [vmem:[%s3748 + $0x130] sm:$0x3]
      %v3788 = vld [vmem:[%s3748 + $0x138] sm:$0x3]
      %v3829 = vrot.slane %v3749, 2
      %v3830 = vrot.slane %v3751, 2
      %v3831 = vsel %vm1950, %v3829, %v3830
      %v3832 = vrot.slane %v3750, 2
      %v3833 = vrot.slane %v3752, 2
      %v3834 = vsel %vm1950, %v3832, %v3833
      %v3835 = vrot.slane %v3753, 2
      %v3836 = vsel %vm1950, %v3830, %v3835
      %v3837 = vrot.slane %v3754, 2
      %v3838 = vsel %vm1950, %v3833, %v3837
      %v3839 = vrot.slane %v3755, 2
      %v3840 = vsel %vm1950, %v3835, %v3839
      %v3841 = vrot.slane %v3756, 2
      %v3842 = vsel %vm1950, %v3837, %v3841
      %v3843 = vrot.slane %v3757, 2
      %v3844 = vrot.slane %v3759, 2
      %v3845 = vsel %vm1950, %v3843, %v3844
      %v3846 = vrot.slane %v3758, 2
      %v3847 = vrot.slane %v3760, 2
      %v3848 = vsel %vm1950, %v3846, %v3847
      %v3849 = vrot.slane %v3761, 2
      %v3850 = vsel %vm1950, %v3844, %v3849
      %v3851 = vrot.slane %v3762, 2
      %v3852 = vsel %vm1950, %v3847, %v3851
      %v3853 = vrot.slane %v3763, 2
      %v3854 = vsel %vm1950, %v3849, %v3853
      %v3855 = vrot.slane %v3764, 2
      %v3856 = vsel %vm1950, %v3851, %v3855
      %v3857 = vrot.slane %v3765, 2
      %v3858 = vrot.slane %v3767, 2
      %v3859 = vsel %vm1950, %v3857, %v3858
      %v3860 = vrot.slane %v3766, 2
      %v3861 = vrot.slane %v3768, 2
      %v3862 = vsel %vm1950, %v3860, %v3861
      %v3863 = vrot.slane %v3769, 2
      %v3864 = vsel %vm1950, %v3858, %v3863
      %v3865 = vrot.slane %v3770, 2
      %v3866 = vsel %vm1950, %v3861, %v3865
      %v3867 = vrot.slane %v3771, 2
      %v3868 = vsel %vm1950, %v3863, %v3867
      %v3869 = vrot.slane %v3772, 2
      %v3870 = vsel %vm1950, %v3865, %v3869
      %v3871 = vrot.slane %v3773, 2
      %v3872 = vrot.slane %v3775, 2
      %v3873 = vsel %vm1950, %v3871, %v3872
      %v3874 = vrot.slane %v3774, 2
      %v3875 = vrot.slane %v3776, 2
      %v3876 = vsel %vm1950, %v3874, %v3875
      %v3877 = vrot.slane %v3777, 2
      %v3878 = vsel %vm1950, %v3872, %v3877
      %v3879 = vrot.slane %v3778, 2
      %v3880 = vsel %vm1950, %v3875, %v3879
      %v3881 = vrot.slane %v3779, 2
      %v3882 = vsel %vm1950, %v3877, %v3881
      %v3883 = vrot.slane %v3780, 2
      %v3884 = vsel %vm1950, %v3879, %v3883
      %v3885 = vrot.slane %v3781, 2
      %v3886 = vrot.slane %v3783, 2
      %v3887 = vsel %vm1950, %v3885, %v3886
      %v3888 = vrot.slane %v3782, 2
      %v3889 = vrot.slane %v3784, 2
      %v3890 = vsel %vm1950, %v3888, %v3889
      %v3891 = vrot.slane %v3785, 2
      %v3892 = vsel %vm1950, %v3886, %v3891
      %v3893 = vrot.slane %v3786, 2
      %v3894 = vsel %vm1950, %v3889, %v3893
      %v3895 = vrot.slane %v3787, 2
      %v3896 = vsel %vm1950, %v3891, %v3895
      %v3897 = vrot.slane %v3788, 2
      %v3898 = vsel %vm1950, %v3893, %v3897
      %s3914 = scalar_lea.vmem %s219, 960
      %v3915 = vld [vmem:[%s3914] sm:$0xff]
      %v3916 = vld [vmem:[%s3914 + $0x8] sm:$0xff]
      %v3917 = vld [vmem:[%s3914 + $0x10] sm:$0xff]
      %v3918 = vld [vmem:[%s3914 + $0x18] sm:$0xff]
      %v3919 = vld [vmem:[%s3914 + $0x20] sm:$0xff]
      %v3920 = vld [vmem:[%s3914 + $0x28] sm:$0xff]
      %v3921 = vld [vmem:[%s3914 + $0x30] sm:$0xff]
      %v3922 = vld [vmem:[%s3914 + $0x38] sm:$0xff]
      %v3923 = vld [vmem:[%s3914 + $0x40] sm:$0xff]
      %v3924 = vld [vmem:[%s3914 + $0x48] sm:$0xff]
      %v3925 = vld [vmem:[%s3914 + $0x50] sm:$0xff]
      %v3926 = vld [vmem:[%s3914 + $0x58] sm:$0xff]
      %v3927 = vld [vmem:[%s3914 + $0x60] sm:$0xff]
      %v3928 = vld [vmem:[%s3914 + $0x68] sm:$0xff]
      %v3929 = vld [vmem:[%s3914 + $0x70] sm:$0xff]
      %v3930 = vld [vmem:[%s3914 + $0x78] sm:$0xff]
      %v3931 = vld [vmem:[%s3914 + $0x80] sm:$0xff]
      %v3932 = vld [vmem:[%s3914 + $0x88] sm:$0xff]
      %v3933 = vld [vmem:[%s3914 + $0x90] sm:$0xff]
      %v3934 = vld [vmem:[%s3914 + $0x98] sm:$0xff]
      %v3935 = vsel %vm1755, %v3834, 0
      %v3937 = vsel %vm1755, %v3838, 0
      %v3939 = vsel %vm1755, %v3842, 0
      %v3941 = vsel %vm1755, %v3848, 0
      %v3943 = vsel %vm1755, %v3852, 0
      %v3945 = vsel %vm1755, %v3856, 0
      %v3947 = vsel %vm1755, %v3862, 0
      %v3949 = vsel %vm1755, %v3866, 0
      %v3951 = vsel %vm1755, %v3870, 0
      %v3953 = vsel %vm1755, %v3876, 0
      %v3955 = vsel %vm1755, %v3880, 0
      %v3957 = vsel %vm1755, %v3884, 0
      %v3959 = vsel %vm1755, %v3890, 0
      %v3961 = vsel %vm1755, %v3894, 0
      %v3963 = vsel %vm1755, %v3898, 0
      %3965 = vmatprep.subr.mxu0 0.0
      %3966 = vmatpush1.msra.mxu0 %v3930
      %3967 = vmatprep.subr.mxu0 0.0
      %3968 = vmatpush1.msra.mxu0 %v3929
      %3969 = vmatprep.subr.mxu0 0.0
      %3970 = vmatpush1.msra.mxu0 %v3928
      %3971 = vmatprep.subr.mxu0 0.0
      %3972 = vmatpush1.msra.mxu0 %v3927
      %3973 = vmatprep.subr.mxu0 0.0
      %3974 = vmatpush1.msra.mxu0 %v3926
      %3975 = vmatprep.subr.mxu0 0.0
      %3976 = vmatpush1.msra.mxu0 %v3925
      %3977 = vmatprep.subr.mxu0 0.0
      %3978 = vmatpush1.msra.mxu0 %v3924
      %3979 = vmatprep.subr.mxu0 0.0
      %3980 = vmatpush1.msra.mxu0 %v3923
      %3981 = vmatprep.subr.mxu0 0.0
      %3982 = vmatpush1.msra.mxu0 %v3922
      %3983 = vmatprep.subr.mxu0 0.0
      %3984 = vmatpush1.msra.mxu0 %v3921
      %3985 = vmatprep.subr.mxu0 0.0
      %3986 = vmatpush1.msra.mxu0 %v3920
      %3987 = vmatprep.subr.mxu0 0.0
      %3988 = vmatpush1.msra.mxu0 %v3919
      %3989 = vmatprep.subr.mxu0 0.0
      %3990 = vmatpush1.msra.mxu0 %v3918
      %3991 = vmatprep.subr.mxu0 0.0
      %3992 = vmatpush1.msra.mxu0 %v3917
      %3993 = vmatprep.subr.mxu0 0.0
      %3994 = vmatpush1.msra.mxu0 %v3916
      %3995 = vmatprep.subr.mxu0 0.0
      %3996 = vmatpush1.msra.mxu0 %v3915
      %3997 = vmatprep.subr.mxu0 0.0
      %3998 = vmatpush2.msra.mxu0 0.0
      %3999 = vmatprep.subr.mxu0 0.0
      %4000 = vmatpush2.msra.mxu0 0.0
      %4001 = vmatprep.subr.mxu0 0.0
      %4002 = vmatpush2.msra.mxu0 0.0
      %4003 = vmatprep.subr.mxu0 0.0
      %4004 = vmatpush2.msra.mxu0 0.0
      %4005 = vmatprep.subr.mxu0 0.0
      %4006 = vmatpush2.msra.mxu0 0.0
      %4007 = vmatprep.subr.mxu0 0.0
      %4008 = vmatpush2.msra.mxu0 0.0
      %4009 = vmatprep.subr.mxu0 0.0
      %4010 = vmatpush2.msra.mxu0 0.0
      %4011 = vmatprep.subr.mxu0 0.0
      %4012 = vmatpush2.msra.mxu0 0.0
      %4013 = vmatprep.subr.mxu0 0.0
      %4014 = vmatpush2.msra.mxu0 0.0
      %4015 = vmatprep.subr.mxu0 0.0
      %4016 = vmatpush2.msra.mxu0 0.0
      %4017 = vmatprep.subr.mxu0 0.0
      %4018 = vmatpush2.msra.mxu0 0.0
      %4019 = vmatprep.subr.mxu0 0.0
      %4020 = vmatpush2.msra.mxu0 0.0
      %4021 = vmatprep.subr.mxu0 0.0
      %4022 = vmatpush2.msra.mxu0 %v3934
      %4023 = vmatprep.subr.mxu0 0.0
      %4024 = vmatpush2.msra.mxu0 %v3933
      %4025 = vmatprep.subr.mxu0 0.0
      %4026 = vmatpush2.msra.mxu0 %v3932
      %4027 = vmatprep.subr.mxu0 0.0
      %4028 = vmatpush2.msra.mxu0 %v3931
      %4029 = vmatprep.mubr.f32.mxu0 %v3935
      %4030 = vmatmul.mubr.f32.gmra.mxu0 %v3831
      %v4031 = vpop.f32.mrf.mxu0
      %v4032 = vadd.f32 0.0, %v4031
      %v4033 = vpop.f32.mrf.mxu0
      %4034 = vmatprep.mubr.f32.mxu0 %v3937
      %4035 = vmatmul.mubr.f32.gmra.mxu0 %v3836
      %v4036 = vpop.f32.mrf.mxu0
      %v4037 = vadd.f32 0.0, %v4036
      %v4038 = vpop.f32.mrf.mxu0
      %4039 = vmatprep.mubr.f32.mxu0 %v3939
      %4040 = vmatmul.mubr.f32.gmra.mxu0 %v3840
      %v4041 = vpop.f32.mrf.mxu0
      %v4042 = vadd.f32 0.0, %v4041
      %v4043 = vpop.f32.mrf.mxu0
      %4044 = vmatprep.mubr.f32.mxu0 %v3941
      %4045 = vmatmul.mubr.f32.gmra.mxu0 %v3845
      %v4046 = vpop.f32.mrf.mxu0
      %v4047 = vadd.f32 0.0, %v4046
      %v4048 = vpop.f32.mrf.mxu0
      %4049 = vmatprep.mubr.f32.mxu0 %v3943
      %4050 = vmatmul.mubr.f32.gmra.mxu0 %v3850
      %v4051 = vpop.f32.mrf.mxu0
      %v4052 = vadd.f32 0.0, %v4051
      %v4053 = vpop.f32.mrf.mxu0
      %4054 = vmatprep.mubr.f32.mxu0 %v3945
      %4055 = vmatmul.mubr.f32.gmra.mxu0 %v3854
      %v4056 = vpop.f32.mrf.mxu0
      %v4057 = vadd.f32 0.0, %v4056
      %v4058 = vpop.f32.mrf.mxu0
      %4059 = vmatprep.mubr.f32.mxu0 %v3947
      %4060 = vmatmul.mubr.f32.gmra.mxu0 %v3859
      %v4061 = vpop.f32.mrf.mxu0
      %v4062 = vadd.f32 0.0, %v4061
      %v4063 = vpop.f32.mrf.mxu0
      %4064 = vmatprep.mubr.f32.mxu0 %v3949
      %4065 = vmatmul.mubr.f32.gmra.mxu0 %v3864
      %v4066 = vpop.f32.mrf.mxu0
      %v4067 = vadd.f32 0.0, %v4066
      %v4068 = vpop.f32.mrf.mxu0
      %4069 = vmatprep.mubr.f32.mxu0 %v3951
      %4070 = vmatmul.mubr.f32.gmra.mxu0 %v3868
      %v4071 = vpop.f32.mrf.mxu0
      %v4072 = vadd.f32 0.0, %v4071
      %v4073 = vpop.f32.mrf.mxu0
      %4074 = vmatprep.mubr.f32.mxu0 %v3953
      %4075 = vmatmul.mubr.f32.gmra.mxu0 %v3873
      %v4076 = vpop.f32.mrf.mxu0
      %v4077 = vadd.f32 0.0, %v4076
      %v4078 = vpop.f32.mrf.mxu0
      %4079 = vmatprep.mubr.f32.mxu0 %v3955
      %4080 = vmatmul.mubr.f32.gmra.mxu0 %v3878
      %v4081 = vpop.f32.mrf.mxu0
      %v4082 = vadd.f32 0.0, %v4081
      %v4083 = vpop.f32.mrf.mxu0
      %4084 = vmatprep.mubr.f32.mxu0 %v3957
      %4085 = vmatmul.mubr.f32.gmra.mxu0 %v3882
      %v4086 = vpop.f32.mrf.mxu0
      %v4087 = vadd.f32 0.0, %v4086
      %v4088 = vpop.f32.mrf.mxu0
      %4089 = vmatprep.mubr.f32.mxu0 %v3959
      %4090 = vmatmul.mubr.f32.gmra.mxu0 %v3887
      %v4091 = vpop.f32.mrf.mxu0
      %v4092 = vadd.f32 0.0, %v4091
      %v4093 = vpop.f32.mrf.mxu0
      %4094 = vmatprep.mubr.f32.mxu0 %v3961
      %4095 = vmatmul.mubr.f32.gmra.mxu0 %v3892
      %v4096 = vpop.f32.mrf.mxu0
      %v4097 = vadd.f32 0.0, %v4096
      %v4098 = vpop.f32.mrf.mxu0
      %4099 = vmatprep.mubr.f32.mxu0 %v3963
      %4100 = vmatmul.mubr.f32.gmra.mxu0 %v3896
      %v4101 = vpop.f32.mrf.mxu0
      %v4102 = vadd.f32 0.0, %v4101
      %v4103 = vpop.f32.mrf.mxu0
      %4104 = vdwg.mxu0
      %v4105 = vadd.f32 %v3733, %v4032
      %v4106 = vadd.f32 %v3734, %v4037
      %v4107 = vadd.f32 %v3735, %v4042
      %v4108 = vadd.f32 %v3736, %v4047
      %v4109 = vadd.f32 %v3737, %v4052
      %v4110 = vadd.f32 %v3738, %v4057
      %v4111 = vadd.f32 %v3739, %v4062
      %v4112 = vadd.f32 %v3740, %v4067
      %v4113 = vadd.f32 %v3741, %v4072
      %v4114 = vadd.f32 %v3742, %v4077
      %v4115 = vadd.f32 %v3743, %v4082
      %v4116 = vadd.f32 %v3744, %v4087
      %v4117 = vadd.f32 %v3745, %v4092
      %v4118 = vadd.f32 %v3746, %v4097
      %v4119 = vadd.f32 %v3747, %v4102
      %v4120 = vld [vmem:[%s3748] sm:$0xfe]
      %v4121 = vld [vmem:[%s3748 + $0x8] sm:$0xfe]
      %v4122 = vld [vmem:[%s3748 + $0x30] sm:$0x1]
      %v4123 = vld [vmem:[%s3748 + $0x38] sm:$0x1]
      %v4124 = vld [vmem:[%s3748 + $0x40] sm:$0xfe]
      %v4125 = vld [vmem:[%s3748 + $0x48] sm:$0xfe]
      %v4126 = vld [vmem:[%s3748 + $0x70] sm:$0x1]
      %v4127 = vld [vmem:[%s3748 + $0x78] sm:$0x1]
      %v4128 = vld [vmem:[%s3748 + $0x80] sm:$0xfe]
      %v4129 = vld [vmem:[%s3748 + $0x88] sm:$0xfe]
      %v4130 = vld [vmem:[%s3748 + $0xb0] sm:$0x1]
      %v4131 = vld [vmem:[%s3748 + $0xb8] sm:$0x1]
      %v4132 = vld [vmem:[%s3748 + $0xc0] sm:$0xfe]
      %v4133 = vld [vmem:[%s3748 + $0xc8] sm:$0xfe]
      %v4134 = vld [vmem:[%s3748 + $0xf0] sm:$0x1]
      %v4135 = vld [vmem:[%s3748 + $0xf8] sm:$0x1]
      %v4136 = vld [vmem:[%s3748 + $0x100] sm:$0xfe]
      %v4137 = vld [vmem:[%s3748 + $0x108] sm:$0xfe]
      %v4138 = vld [vmem:[%s3748 + $0x130] sm:$0x1]
      %v4139 = vld [vmem:[%s3748 + $0x138] sm:$0x1]
      %v4160 = vrot.slane %v4120, 1
      %v4161 = vrot.slane %v3751, 1
      %v4162 = vsel %vm2096, %v4160, %v4161
      %v4163 = vrot.slane %v4121, 1
      %v4164 = vrot.slane %v3752, 1
      %v4165 = vsel %vm2096, %v4163, %v4164
      %v4166 = vrot.slane %v3753, 1
      %v4167 = vsel %vm2096, %v4161, %v4166
      %v4168 = vrot.slane %v3754, 1
      %v4169 = vsel %vm2096, %v4164, %v4168
      %v4170 = vrot.slane %v4122, 1
      %v4171 = vsel %vm2096, %v4166, %v4170
      %v4172 = vrot.slane %v4123, 1
      %v4173 = vsel %vm2096, %v4168, %v4172
      %v4174 = vrot.slane %v4124, 1
      %v4175 = vrot.slane %v3759, 1
      %v4176 = vsel %vm2096, %v4174, %v4175
      %v4177 = vrot.slane %v4125, 1
      %v4178 = vrot.slane %v3760, 1
      %v4179 = vsel %vm2096, %v4177, %v4178
      %v4180 = vrot.slane %v3761, 1
      %v4181 = vsel %vm2096, %v4175, %v4180
      %v4182 = vrot.slane %v3762, 1
      %v4183 = vsel %vm2096, %v4178, %v4182
      %v4184 = vrot.slane %v4126, 1
      %v4185 = vsel %vm2096, %v4180, %v4184
      %v4186 = vrot.slane %v4127, 1
      %v4187 = vsel %vm2096, %v4182, %v4186
      %v4188 = vrot.slane %v4128, 1
      %v4189 = vrot.slane %v3767, 1
      %v4190 = vsel %vm2096, %v4188, %v4189
      %v4191 = vrot.slane %v4129, 1
      %v4192 = vrot.slane %v3768, 1
      %v4193 = vsel %vm2096, %v4191, %v4192
      %v4194 = vrot.slane %v3769, 1
      %v4195 = vsel %vm2096, %v4189, %v4194
      %v4196 = vrot.slane %v3770, 1
      %v4197 = vsel %vm2096, %v4192, %v4196
      %v4198 = vrot.slane %v4130, 1
      %v4199 = vsel %vm2096, %v4194, %v4198
      %v4200 = vrot.slane %v4131, 1
      %v4201 = vsel %vm2096, %v4196, %v4200
      %v4202 = vrot.slane %v4132, 1
      %v4203 = vrot.slane %v3775, 1
      %v4204 = vsel %vm2096, %v4202, %v4203
      %v4205 = vrot.slane %v4133, 1
      %v4206 = vrot.slane %v3776, 1
      %v4207 = vsel %vm2096, %v4205, %v4206
      %v4208 = vrot.slane %v3777, 1
      %v4209 = vsel %vm2096, %v4203, %v4208
      %v4210 = vrot.slane %v3778, 1
      %v4211 = vsel %vm2096, %v4206, %v4210
      %v4212 = vrot.slane %v4134, 1
      %v4213 = vsel %vm2096, %v4208, %v4212
      %v4214 = vrot.slane %v4135, 1
      %v4215 = vsel %vm2096, %v4210, %v4214
      %v4216 = vrot.slane %v4136, 1
      %v4217 = vrot.slane %v3783, 1
      %v4218 = vsel %vm2096, %v4216, %v4217
      %v4219 = vrot.slane %v4137, 1
      %v4220 = vrot.slane %v3784, 1
      %v4221 = vsel %vm2096, %v4219, %v4220
      %v4222 = vrot.slane %v3785, 1
      %v4223 = vsel %vm2096, %v4217, %v4222
      %v4224 = vrot.slane %v3786, 1
      %v4225 = vsel %vm2096, %v4220, %v4224
      %v4226 = vrot.slane %v4138, 1
      %v4227 = vsel %vm2096, %v4222, %v4226
      %v4228 = vrot.slane %v4139, 1
      %v4229 = vsel %vm2096, %v4224, %v4228
      %s4245 = scalar_lea.vmem %s219, 1120
      %v4246 = vld [vmem:[%s4245] sm:$0xff]
      %v4247 = vld [vmem:[%s4245 + $0x8] sm:$0xff]
      %v4248 = vld [vmem:[%s4245 + $0x10] sm:$0xff]
      %v4249 = vld [vmem:[%s4245 + $0x18] sm:$0xff]
      %v4250 = vld [vmem:[%s4245 + $0x20] sm:$0xff]
      %v4251 = vld [vmem:[%s4245 + $0x28] sm:$0xff]
      %v4252 = vld [vmem:[%s4245 + $0x30] sm:$0xff]
      %v4253 = vld [vmem:[%s4245 + $0x38] sm:$0xff]
      %v4254 = vld [vmem:[%s4245 + $0x40] sm:$0xff]
      %v4255 = vld [vmem:[%s4245 + $0x48] sm:$0xff]
      %v4256 = vld [vmem:[%s4245 + $0x50] sm:$0xff]
      %v4257 = vld [vmem:[%s4245 + $0x58] sm:$0xff]
      %v4258 = vld [vmem:[%s4245 + $0x60] sm:$0xff]
      %v4259 = vld [vmem:[%s4245 + $0x68] sm:$0xff]
      %v4260 = vld [vmem:[%s4245 + $0x70] sm:$0xff]
      %v4261 = vld [vmem:[%s4245 + $0x78] sm:$0xff]
      %v4262 = vld [vmem:[%s4245 + $0x80] sm:$0xff]
      %v4263 = vld [vmem:[%s4245 + $0x88] sm:$0xff]
      %v4264 = vld [vmem:[%s4245 + $0x90] sm:$0xff]
      %v4265 = vld [vmem:[%s4245 + $0x98] sm:$0xff]
      %v4266 = vsel %vm1755, %v4165, 0
      %v4268 = vsel %vm1755, %v4169, 0
      %v4270 = vsel %vm1755, %v4173, 0
      %v4272 = vsel %vm1755, %v4179, 0
      %v4274 = vsel %vm1755, %v4183, 0
      %v4276 = vsel %vm1755, %v4187, 0
      %v4278 = vsel %vm1755, %v4193, 0
      %v4280 = vsel %vm1755, %v4197, 0
      %v4282 = vsel %vm1755, %v4201, 0
      %v4284 = vsel %vm1755, %v4207, 0
      %v4286 = vsel %vm1755, %v4211, 0
      %v4288 = vsel %vm1755, %v4215, 0
      %v4290 = vsel %vm1755, %v4221, 0
      %v4292 = vsel %vm1755, %v4225, 0
      %v4294 = vsel %vm1755, %v4229, 0
      %4296 = vmatprep.subr.mxu0 0.0
      %4297 = vmatpush1.msra.mxu0 %v4261
      %4298 = vmatprep.subr.mxu0 0.0
      %4299 = vmatpush1.msra.mxu0 %v4260
      %4300 = vmatprep.subr.mxu0 0.0
      %4301 = vmatpush1.msra.mxu0 %v4259
      %4302 = vmatprep.subr.mxu0 0.0
      %4303 = vmatpush1.msra.mxu0 %v4258
      %4304 = vmatprep.subr.mxu0 0.0
      %4305 = vmatpush1.msra.mxu0 %v4257
      %4306 = vmatprep.subr.mxu0 0.0
      %4307 = vmatpush1.msra.mxu0 %v4256
      %4308 = vmatprep.subr.mxu0 0.0
      %4309 = vmatpush1.msra.mxu0 %v4255
      %4310 = vmatprep.subr.mxu0 0.0
      %4311 = vmatpush1.msra.mxu0 %v4254
      %4312 = vmatprep.subr.mxu0 0.0
      %4313 = vmatpush1.msra.mxu0 %v4253
      %4314 = vmatprep.subr.mxu0 0.0
      %4315 = vmatpush1.msra.mxu0 %v4252
      %4316 = vmatprep.subr.mxu0 0.0
      %4317 = vmatpush1.msra.mxu0 %v4251
      %4318 = vmatprep.subr.mxu0 0.0
      %4319 = vmatpush1.msra.mxu0 %v4250
      %4320 = vmatprep.subr.mxu0 0.0
      %4321 = vmatpush1.msra.mxu0 %v4249
      %4322 = vmatprep.subr.mxu0 0.0
      %4323 = vmatpush1.msra.mxu0 %v4248
      %4324 = vmatprep.subr.mxu0 0.0
      %4325 = vmatpush1.msra.mxu0 %v4247
      %4326 = vmatprep.subr.mxu0 0.0
      %4327 = vmatpush1.msra.mxu0 %v4246
      %4328 = vmatprep.subr.mxu0 0.0
      %4329 = vmatpush2.msra.mxu0 0.0
      %4330 = vmatprep.subr.mxu0 0.0
      %4331 = vmatpush2.msra.mxu0 0.0
      %4332 = vmatprep.subr.mxu0 0.0
      %4333 = vmatpush2.msra.mxu0 0.0
      %4334 = vmatprep.subr.mxu0 0.0
      %4335 = vmatpush2.msra.mxu0 0.0
      %4336 = vmatprep.subr.mxu0 0.0
      %4337 = vmatpush2.msra.mxu0 0.0
      %4338 = vmatprep.subr.mxu0 0.0
      %4339 = vmatpush2.msra.mxu0 0.0
      %4340 = vmatprep.subr.mxu0 0.0
      %4341 = vmatpush2.msra.mxu0 0.0
      %4342 = vmatprep.subr.mxu0 0.0
      %4343 = vmatpush2.msra.mxu0 0.0
      %4344 = vmatprep.subr.mxu0 0.0
      %4345 = vmatpush2.msra.mxu0 0.0
      %4346 = vmatprep.subr.mxu0 0.0
      %4347 = vmatpush2.msra.mxu0 0.0
      %4348 = vmatprep.subr.mxu0 0.0
      %4349 = vmatpush2.msra.mxu0 0.0
      %4350 = vmatprep.subr.mxu0 0.0
      %4351 = vmatpush2.msra.mxu0 0.0
      %4352 = vmatprep.subr.mxu0 0.0
      %4353 = vmatpush2.msra.mxu0 %v4265
      %4354 = vmatprep.subr.mxu0 0.0
      %4355 = vmatpush2.msra.mxu0 %v4264
      %4356 = vmatprep.subr.mxu0 0.0
      %4357 = vmatpush2.msra.mxu0 %v4263
      %4358 = vmatprep.subr.mxu0 0.0
      %4359 = vmatpush2.msra.mxu0 %v4262
      %4360 = vmatprep.mubr.f32.mxu0 %v4266
      %4361 = vmatmul.mubr.f32.gmra.mxu0 %v4162
      %v4362 = vpop.f32.mrf.mxu0
      %v4363 = vadd.f32 0.0, %v4362
      %v4364 = vpop.f32.mrf.mxu0
      %4365 = vmatprep.mubr.f32.mxu0 %v4268
      %4366 = vmatmul.mubr.f32.gmra.mxu0 %v4167
      %v4367 = vpop.f32.mrf.mxu0
      %v4368 = vadd.f32 0.0, %v4367
      %v4369 = vpop.f32.mrf.mxu0
      %4370 = vmatprep.mubr.f32.mxu0 %v4270
      %4371 = vmatmul.mubr.f32.gmra.mxu0 %v4171
      %v4372 = vpop.f32.mrf.mxu0
      %v4373 = vadd.f32 0.0, %v4372
      %v4374 = vpop.f32.mrf.mxu0
      %4375 = vmatprep.mubr.f32.mxu0 %v4272
      %4376 = vmatmul.mubr.f32.gmra.mxu0 %v4176
      %v4377 = vpop.f32.mrf.mxu0
      %v4378 = vadd.f32 0.0, %v4377
      %v4379 = vpop.f32.mrf.mxu0
      %4380 = vmatprep.mubr.f32.mxu0 %v4274
      %4381 = vmatmul.mubr.f32.gmra.mxu0 %v4181
      %v4382 = vpop.f32.mrf.mxu0
      %v4383 = vadd.f32 0.0, %v4382
      %v4384 = vpop.f32.mrf.mxu0
      %4385 = vmatprep.mubr.f32.mxu0 %v4276
      %4386 = vmatmul.mubr.f32.gmra.mxu0 %v4185
      %v4387 = vpop.f32.mrf.mxu0
      %v4388 = vadd.f32 0.0, %v4387
      %v4389 = vpop.f32.mrf.mxu0
      %4390 = vmatprep.mubr.f32.mxu0 %v4278
      %4391 = vmatmul.mubr.f32.gmra.mxu0 %v4190
      %v4392 = vpop.f32.mrf.mxu0
      %v4393 = vadd.f32 0.0, %v4392
      %v4394 = vpop.f32.mrf.mxu0
      %4395 = vmatprep.mubr.f32.mxu0 %v4280
      %4396 = vmatmul.mubr.f32.gmra.mxu0 %v4195
      %v4397 = vpop.f32.mrf.mxu0
      %v4398 = vadd.f32 0.0, %v4397
      %v4399 = vpop.f32.mrf.mxu0
      %4400 = vmatprep.mubr.f32.mxu0 %v4282
      %4401 = vmatmul.mubr.f32.gmra.mxu0 %v4199
      %v4402 = vpop.f32.mrf.mxu0
      %v4403 = vadd.f32 0.0, %v4402
      %v4404 = vpop.f32.mrf.mxu0
      %4405 = vmatprep.mubr.f32.mxu0 %v4284
      %4406 = vmatmul.mubr.f32.gmra.mxu0 %v4204
      %v4407 = vpop.f32.mrf.mxu0
      %v4408 = vadd.f32 0.0, %v4407
      %v4409 = vpop.f32.mrf.mxu0
      %4410 = vmatprep.mubr.f32.mxu0 %v4286
      %4411 = vmatmul.mubr.f32.gmra.mxu0 %v4209
      %v4412 = vpop.f32.mrf.mxu0
      %v4413 = vadd.f32 0.0, %v4412
      %v4414 = vpop.f32.mrf.mxu0
      %4415 = vmatprep.mubr.f32.mxu0 %v4288
      %4416 = vmatmul.mubr.f32.gmra.mxu0 %v4213
      %v4417 = vpop.f32.mrf.mxu0
      %v4418 = vadd.f32 0.0, %v4417
      %v4419 = vpop.f32.mrf.mxu0
      %4420 = vmatprep.mubr.f32.mxu0 %v4290
      %4421 = vmatmul.mubr.f32.gmra.mxu0 %v4218
      %v4422 = vpop.f32.mrf.mxu0
      %v4423 = vadd.f32 0.0, %v4422
      %v4424 = vpop.f32.mrf.mxu0
      %4425 = vmatprep.mubr.f32.mxu0 %v4292
      %4426 = vmatmul.mubr.f32.gmra.mxu0 %v4223
      %v4427 = vpop.f32.mrf.mxu0
      %v4428 = vadd.f32 0.0, %v4427
      %v4429 = vpop.f32.mrf.mxu0
      %4430 = vmatprep.mubr.f32.mxu0 %v4294
      %4431 = vmatmul.mubr.f32.gmra.mxu0 %v4227
      %v4432 = vpop.f32.mrf.mxu0
      %v4433 = vadd.f32 0.0, %v4432
      %v4434 = vpop.f32.mrf.mxu0
      %4435 = vdwg.mxu0
      %v4436 = vadd.f32 %v4105, %v4363
      %v4437 = vadd.f32 %v4106, %v4368
      %v4438 = vadd.f32 %v4107, %v4373
      %v4439 = vadd.f32 %v4108, %v4378
      %v4440 = vadd.f32 %v4109, %v4383
      %v4441 = vadd.f32 %v4110, %v4388
      %v4442 = vadd.f32 %v4111, %v4393
      %v4443 = vadd.f32 %v4112, %v4398
      %v4444 = vadd.f32 %v4113, %v4403
      %v4445 = vadd.f32 %v4114, %v4408
      %v4446 = vadd.f32 %v4115, %v4413
      %v4447 = vadd.f32 %v4116, %v4418
      %v4448 = vadd.f32 %v4117, %v4423
      %v4449 = vadd.f32 %v4118, %v4428
      %v4450 = vadd.f32 %v4119, %v4433
      %v4451 = vld [vmem:[%s3748] sm:$0xff]
      %v4452 = vld [vmem:[%s3748 + $0x8] sm:$0xff]
      %v4453 = vld [vmem:[%s3748 + $0x10] sm:$0xff]
      %v4454 = vld [vmem:[%s3748 + $0x18] sm:$0xff]
      %v4455 = vld [vmem:[%s3748 + $0x20] sm:$0xff]
      %v4456 = vld [vmem:[%s3748 + $0x28] sm:$0xff]
      %v4457 = vld [vmem:[%s3748 + $0x40] sm:$0xff]
      %v4458 = vld [vmem:[%s3748 + $0x48] sm:$0xff]
      %v4459 = vld [vmem:[%s3748 + $0x50] sm:$0xff]
      %v4460 = vld [vmem:[%s3748 + $0x58] sm:$0xff]
      %v4461 = vld [vmem:[%s3748 + $0x60] sm:$0xff]
      %v4462 = vld [vmem:[%s3748 + $0x68] sm:$0xff]
      %v4463 = vld [vmem:[%s3748 + $0x80] sm:$0xff]
      %v4464 = vld [vmem:[%s3748 + $0x88] sm:$0xff]
      %v4465 = vld [vmem:[%s3748 + $0x90] sm:$0xff]
      %v4466 = vld [vmem:[%s3748 + $0x98] sm:$0xff]
      %v4467 = vld [vmem:[%s3748 + $0xa0] sm:$0xff]
      %v4468 = vld [vmem:[%s3748 + $0xa8] sm:$0xff]
      %v4469 = vld [vmem:[%s3748 + $0xc0] sm:$0xff]
      %v4470 = vld [vmem:[%s3748 + $0xc8] sm:$0xff]
      %v4471 = vld [vmem:[%s3748 + $0xd0] sm:$0xff]
      %v4472 = vld [vmem:[%s3748 + $0xd8] sm:$0xff]
      %v4473 = vld [vmem:[%s3748 + $0xe0] sm:$0xff]
      %v4474 = vld [vmem:[%s3748 + $0xe8] sm:$0xff]
      %v4475 = vld [vmem:[%s3748 + $0x100] sm:$0xff]
      %v4476 = vld [vmem:[%s3748 + $0x108] sm:$0xff]
      %v4477 = vld [vmem:[%s3748 + $0x110] sm:$0xff]
      %v4478 = vld [vmem:[%s3748 + $0x118] sm:$0xff]
      %v4479 = vld [vmem:[%s3748 + $0x120] sm:$0xff]
      %v4480 = vld [vmem:[%s3748 + $0x128] sm:$0xff]
      %s4481 = scalar_lea.vmem %s219, 1280
      %v4482 = vld [vmem:[%s4481] sm:$0xff]
      %v4483 = vld [vmem:[%s4481 + $0x8] sm:$0xff]
      %v4484 = vld [vmem:[%s4481 + $0x10] sm:$0xff]
      %v4485 = vld [vmem:[%s4481 + $0x18] sm:$0xff]
      %v4486 = vld [vmem:[%s4481 + $0x20] sm:$0xff]
      %v4487 = vld [vmem:[%s4481 + $0x28] sm:$0xff]
      %v4488 = vld [vmem:[%s4481 + $0x30] sm:$0xff]
      %v4489 = vld [vmem:[%s4481 + $0x38] sm:$0xff]
      %v4490 = vld [vmem:[%s4481 + $0x40] sm:$0xff]
      %v4491 = vld [vmem:[%s4481 + $0x48] sm:$0xff]
      %v4492 = vld [vmem:[%s4481 + $0x50] sm:$0xff]
      %v4493 = vld [vmem:[%s4481 + $0x58] sm:$0xff]
      %v4494 = vld [vmem:[%s4481 + $0x60] sm:$0xff]
      %v4495 = vld [vmem:[%s4481 + $0x68] sm:$0xff]
      %v4496 = vld [vmem:[%s4481 + $0x70] sm:$0xff]
      %v4497 = vld [vmem:[%s4481 + $0x78] sm:$0xff]
      %v4498 = vld [vmem:[%s4481 + $0x80] sm:$0xff]
      %v4499 = vld [vmem:[%s4481 + $0x88] sm:$0xff]
      %v4500 = vld [vmem:[%s4481 + $0x90] sm:$0xff]
      %v4501 = vld [vmem:[%s4481 + $0x98] sm:$0xff]
      %v4503 = vsel %vm1755, %v4452, 0
      %v4506 = vsel %vm1755, %v4454, 0
      %v4509 = vsel %vm1755, %v4456, 0
      %v4512 = vsel %vm1755, %v4458, 0
      %v4515 = vsel %vm1755, %v4460, 0
      %v4518 = vsel %vm1755, %v4462, 0
      %v4521 = vsel %vm1755, %v4464, 0
      %v4524 = vsel %vm1755, %v4466, 0
      %v4527 = vsel %vm1755, %v4468, 0
      %v4530 = vsel %vm1755, %v4470, 0
      %v4533 = vsel %vm1755, %v4472, 0
      %v4536 = vsel %vm1755, %v4474, 0
      %v4539 = vsel %vm1755, %v4476, 0
      %v4542 = vsel %vm1755, %v4478, 0
      %v4545 = vsel %vm1755, %v4480, 0
      %4547 = vmatprep.subr.mxu0 0.0
      %4548 = vmatpush1.msra.mxu0 %v4497
      %4549 = vmatprep.subr.mxu0 0.0
      %4550 = vmatpush1.msra.mxu0 %v4496
      %4551 = vmatprep.subr.mxu0 0.0
      %4552 = vmatpush1.msra.mxu0 %v4495
      %4553 = vmatprep.subr.mxu0 0.0
      %4554 = vmatpush1.msra.mxu0 %v4494
      %4555 = vmatprep.subr.mxu0 0.0
      %4556 = vmatpush1.msra.mxu0 %v4493
      %4557 = vmatprep.subr.mxu0 0.0
      %4558 = vmatpush1.msra.mxu0 %v4492
      %4559 = vmatprep.subr.mxu0 0.0
      %4560 = vmatpush1.msra.mxu0 %v4491
      %4561 = vmatprep.subr.mxu0 0.0
      %4562 = vmatpush1.msra.mxu0 %v4490
      %4563 = vmatprep.subr.mxu0 0.0
      %4564 = vmatpush1.msra.mxu0 %v4489
      %4565 = vmatprep.subr.mxu0 0.0
      %4566 = vmatpush1.msra.mxu0 %v4488
      %4567 = vmatprep.subr.mxu0 0.0
      %4568 = vmatpush1.msra.mxu0 %v4487
      %4569 = vmatprep.subr.mxu0 0.0
      %4570 = vmatpush1.msra.mxu0 %v4486
      %4571 = vmatprep.subr.mxu0 0.0
      %4572 = vmatpush1.msra.mxu0 %v4485
      %4573 = vmatprep.subr.mxu0 0.0
      %4574 = vmatpush1.msra.mxu0 %v4484
      %4575 = vmatprep.subr.mxu0 0.0
      %4576 = vmatpush1.msra.mxu0 %v4483
      %4577 = vmatprep.subr.mxu0 0.0
      %4578 = vmatpush1.msra.mxu0 %v4482
      %4579 = vmatprep.subr.mxu0 0.0
      %4580 = vmatpush2.msra.mxu0 0.0
      %4581 = vmatprep.subr.mxu0 0.0
      %4582 = vmatpush2.msra.mxu0 0.0
      %4583 = vmatprep.subr.mxu0 0.0
      %4584 = vmatpush2.msra.mxu0 0.0
      %4585 = vmatprep.subr.mxu0 0.0
      %4586 = vmatpush2.msra.mxu0 0.0
      %4587 = vmatprep.subr.mxu0 0.0
      %4588 = vmatpush2.msra.mxu0 0.0
      %4589 = vmatprep.subr.mxu0 0.0
      %4590 = vmatpush2.msra.mxu0 0.0
      %4591 = vmatprep.subr.mxu0 0.0
      %4592 = vmatpush2.msra.mxu0 0.0
      %4593 = vmatprep.subr.mxu0 0.0
      %4594 = vmatpush2.msra.mxu0 0.0
      %4595 = vmatprep.subr.mxu0 0.0
      %4596 = vmatpush2.msra.mxu0 0.0
      %4597 = vmatprep.subr.mxu0 0.0
      %4598 = vmatpush2.msra.mxu0 0.0
      %4599 = vmatprep.subr.mxu0 0.0
      %4600 = vmatpush2.msra.mxu0 0.0
      %4601 = vmatprep.subr.mxu0 0.0
      %4602 = vmatpush2.msra.mxu0 0.0
      %4603 = vmatprep.subr.mxu0 0.0
      %4604 = vmatpush2.msra.mxu0 %v4501
      %4605 = vmatprep.subr.mxu0 0.0
      %4606 = vmatpush2.msra.mxu0 %v4500
      %4607 = vmatprep.subr.mxu0 0.0
      %4608 = vmatpush2.msra.mxu0 %v4499
      %4609 = vmatprep.subr.mxu0 0.0
      %4610 = vmatpush2.msra.mxu0 %v4498
      %4611 = vmatprep.mubr.f32.mxu0 %v4503
      %4612 = vmatmul.mubr.f32.gmra.mxu0 %v4451
      %v4613 = vpop.f32.mrf.mxu0
      %v4614 = vadd.f32 0.0, %v4613
      %v4615 = vpop.f32.mrf.mxu0
      %4616 = vmatprep.mubr.f32.mxu0 %v4506
      %4617 = vmatmul.mubr.f32.gmra.mxu0 %v4453
      %v4618 = vpop.f32.mrf.mxu0
      %v4619 = vadd.f32 0.0, %v4618
      %v4620 = vpop.f32.mrf.mxu0
      %4621 = vmatprep.mubr.f32.mxu0 %v4509
      %4622 = vmatmul.mubr.f32.gmra.mxu0 %v4455
      %v4623 = vpop.f32.mrf.mxu0
      %v4624 = vadd.f32 0.0, %v4623
      %v4625 = vpop.f32.mrf.mxu0
      %4626 = vmatprep.mubr.f32.mxu0 %v4512
      %4627 = vmatmul.mubr.f32.gmra.mxu0 %v4457
      %v4628 = vpop.f32.mrf.mxu0
      %v4629 = vadd.f32 0.0, %v4628
      %v4630 = vpop.f32.mrf.mxu0
      %4631 = vmatprep.mubr.f32.mxu0 %v4515
      %4632 = vmatmul.mubr.f32.gmra.mxu0 %v4459
      %v4633 = vpop.f32.mrf.mxu0
      %v4634 = vadd.f32 0.0, %v4633
      %v4635 = vpop.f32.mrf.mxu0
      %4636 = vmatprep.mubr.f32.mxu0 %v4518
      %4637 = vmatmul.mubr.f32.gmra.mxu0 %v4461
      %v4638 = vpop.f32.mrf.mxu0
      %v4639 = vadd.f32 0.0, %v4638
      %v4640 = vpop.f32.mrf.mxu0
      %4641 = vmatprep.mubr.f32.mxu0 %v4521
      %4642 = vmatmul.mubr.f32.gmra.mxu0 %v4463
      %v4643 = vpop.f32.mrf.mxu0
      %v4644 = vadd.f32 0.0, %v4643
      %v4645 = vpop.f32.mrf.mxu0
      %4646 = vmatprep.mubr.f32.mxu0 %v4524
      %4647 = vmatmul.mubr.f32.gmra.mxu0 %v4465
      %v4648 = vpop.f32.mrf.mxu0
      %v4649 = vadd.f32 0.0, %v4648
      %v4650 = vpop.f32.mrf.mxu0
      %4651 = vmatprep.mubr.f32.mxu0 %v4527
      %4652 = vmatmul.mubr.f32.gmra.mxu0 %v4467
      %v4653 = vpop.f32.mrf.mxu0
      %v4654 = vadd.f32 0.0, %v4653
      %v4655 = vpop.f32.mrf.mxu0
      %4656 = vmatprep.mubr.f32.mxu0 %v4530
      %4657 = vmatmul.mubr.f32.gmra.mxu0 %v4469
      %v4658 = vpop.f32.mrf.mxu0
      %v4659 = vadd.f32 0.0, %v4658
      %v4660 = vpop.f32.mrf.mxu0
      %4661 = vmatprep.mubr.f32.mxu0 %v4533
      %4662 = vmatmul.mubr.f32.gmra.mxu0 %v4471
      %v4663 = vpop.f32.mrf.mxu0
      %v4664 = vadd.f32 0.0, %v4663
      %v4665 = vpop.f32.mrf.mxu0
      %4666 = vmatprep.mubr.f32.mxu0 %v4536
      %4667 = vmatmul.mubr.f32.gmra.mxu0 %v4473
      %v4668 = vpop.f32.mrf.mxu0
      %v4669 = vadd.f32 0.0, %v4668
      %v4670 = vpop.f32.mrf.mxu0
      %4671 = vmatprep.mubr.f32.mxu0 %v4539
      %4672 = vmatmul.mubr.f32.gmra.mxu0 %v4475
      %v4673 = vpop.f32.mrf.mxu0
      %v4674 = vadd.f32 0.0, %v4673
      %v4675 = vpop.f32.mrf.mxu0
      %4676 = vmatprep.mubr.f32.mxu0 %v4542
      %4677 = vmatmul.mubr.f32.gmra.mxu0 %v4477
      %v4678 = vpop.f32.mrf.mxu0
      %v4679 = vadd.f32 0.0, %v4678
      %v4680 = vpop.f32.mrf.mxu0
      %4681 = vmatprep.mubr.f32.mxu0 %v4545
      %4682 = vmatmul.mubr.f32.gmra.mxu0 %v4479
      %v4683 = vpop.f32.mrf.mxu0
      %v4684 = vadd.f32 0.0, %v4683
      %v4685 = vpop.f32.mrf.mxu0
      %4686 = vdwg.mxu0
      %v4687 = vadd.f32 %v4436, %v4614
      %v4688 = vadd.f32 %v4437, %v4619
      %v4689 = vadd.f32 %v4438, %v4624
      %v4690 = vadd.f32 %v4439, %v4629
      %v4691 = vadd.f32 %v4440, %v4634
      %v4692 = vadd.f32 %v4441, %v4639
      %v4693 = vadd.f32 %v4442, %v4644
      %v4694 = vadd.f32 %v4443, %v4649
      %v4695 = vadd.f32 %v4444, %v4654
      %v4696 = vadd.f32 %v4445, %v4659
      %v4697 = vadd.f32 %v4446, %v4664
      %v4698 = vadd.f32 %v4447, %v4669
      %v4699 = vadd.f32 %v4448, %v4674
      %v4700 = vadd.f32 %v4449, %v4679
      %v4701 = vadd.f32 %v4450, %v4684
      %s4702 = scalar_lea.vmem [#allocation2], 64
      %v4703 = vld [vmem:[%s4702] sm:$0xfc]
      %v4704 = vld [vmem:[%s4702 + $0x8] sm:$0xfc]
      %v4705 = vld [vmem:[%s4702 + $0x10] sm:$0xff]
      %v4706 = vld [vmem:[%s4702 + $0x18] sm:$0xff]
      %v4707 = vld [vmem:[%s4702 + $0x20] sm:$0xff]
      %v4708 = vld [vmem:[%s4702 + $0x28] sm:$0xff]
      %v4709 = vld [vmem:[%s4702 + $0x30] sm:$0x3]
      %v4710 = vld [vmem:[%s4702 + $0x38] sm:$0x3]
      %v4711 = vld [vmem:[%s4702 + $0x40] sm:$0xfc]
      %v4712 = vld [vmem:[%s4702 + $0x48] sm:$0xfc]
      %v4713 = vld [vmem:[%s4702 + $0x50] sm:$0xff]
      %v4714 = vld [vmem:[%s4702 + $0x58] sm:$0xff]
      %v4715 = vld [vmem:[%s4702 + $0x60] sm:$0xff]
      %v4716 = vld [vmem:[%s4702 + $0x68] sm:$0xff]
      %v4717 = vld [vmem:[%s4702 + $0x70] sm:$0x3]
      %v4718 = vld [vmem:[%s4702 + $0x78] sm:$0x3]
      %v4719 = vld [vmem:[%s4702 + $0x80] sm:$0xfc]
      %v4720 = vld [vmem:[%s4702 + $0x88] sm:$0xfc]
      %v4721 = vld [vmem:[%s4702 + $0x90] sm:$0xff]
      %v4722 = vld [vmem:[%s4702 + $0x98] sm:$0xff]
      %v4723 = vld [vmem:[%s4702 + $0xa0] sm:$0xff]
      %v4724 = vld [vmem:[%s4702 + $0xa8] sm:$0xff]
      %v4725 = vld [vmem:[%s4702 + $0xb0] sm:$0x3]
      %v4726 = vld [vmem:[%s4702 + $0xb8] sm:$0x3]
      %v4727 = vld [vmem:[%s4702 + $0xc0] sm:$0xfc]
      %v4728 = vld [vmem:[%s4702 + $0xc8] sm:$0xfc]
      %v4729 = vld [vmem:[%s4702 + $0xd0] sm:$0xff]
      %v4730 = vld [vmem:[%s4702 + $0xd8] sm:$0xff]
      %v4731 = vld [vmem:[%s4702 + $0xe0] sm:$0xff]
      %v4732 = vld [vmem:[%s4702 + $0xe8] sm:$0xff]
      %v4733 = vld [vmem:[%s4702 + $0xf0] sm:$0x3]
      %v4734 = vld [vmem:[%s4702 + $0xf8] sm:$0x3]
      %v4735 = vld [vmem:[%s4702 + $0x100] sm:$0xfc]
      %v4736 = vld [vmem:[%s4702 + $0x108] sm:$0xfc]
      %v4737 = vld [vmem:[%s4702 + $0x110] sm:$0xff]
      %v4738 = vld [vmem:[%s4702 + $0x118] sm:$0xff]
      %v4739 = vld [vmem:[%s4702 + $0x120] sm:$0xff]
      %v4740 = vld [vmem:[%s4702 + $0x128] sm:$0xff]
      %v4741 = vld [vmem:[%s4702 + $0x130] sm:$0x3]
      %v4742 = vld [vmem:[%s4702 + $0x138] sm:$0x3]
      %v4783 = vrot.slane %v4703, 2
      %v4784 = vrot.slane %v4705, 2
      %v4785 = vsel %vm1950, %v4783, %v4784
      %v4786 = vrot.slane %v4704, 2
      %v4787 = vrot.slane %v4706, 2
      %v4788 = vsel %vm1950, %v4786, %v4787
      %v4789 = vrot.slane %v4707, 2
      %v4790 = vsel %vm1950, %v4784, %v4789
      %v4791 = vrot.slane %v4708, 2
      %v4792 = vsel %vm1950, %v4787, %v4791
      %v4793 = vrot.slane %v4709, 2
      %v4794 = vsel %vm1950, %v4789, %v4793
      %v4795 = vrot.slane %v4710, 2
      %v4796 = vsel %vm1950, %v4791, %v4795
      %v4797 = vrot.slane %v4711, 2
      %v4798 = vrot.slane %v4713, 2
      %v4799 = vsel %vm1950, %v4797, %v4798
      %v4800 = vrot.slane %v4712, 2
      %v4801 = vrot.slane %v4714, 2
      %v4802 = vsel %vm1950, %v4800, %v4801
      %v4803 = vrot.slane %v4715, 2
      %v4804 = vsel %vm1950, %v4798, %v4803
      %v4805 = vrot.slane %v4716, 2
      %v4806 = vsel %vm1950, %v4801, %v4805
      %v4807 = vrot.slane %v4717, 2
      %v4808 = vsel %vm1950, %v4803, %v4807
      %v4809 = vrot.slane %v4718, 2
      %v4810 = vsel %vm1950, %v4805, %v4809
      %v4811 = vrot.slane %v4719, 2
      %v4812 = vrot.slane %v4721, 2
      %v4813 = vsel %vm1950, %v4811, %v4812
      %v4814 = vrot.slane %v4720, 2
      %v4815 = vrot.slane %v4722, 2
      %v4816 = vsel %vm1950, %v4814, %v4815
      %v4817 = vrot.slane %v4723, 2
      %v4818 = vsel %vm1950, %v4812, %v4817
      %v4819 = vrot.slane %v4724, 2
      %v4820 = vsel %vm1950, %v4815, %v4819
      %v4821 = vrot.slane %v4725, 2
      %v4822 = vsel %vm1950, %v4817, %v4821
      %v4823 = vrot.slane %v4726, 2
      %v4824 = vsel %vm1950, %v4819, %v4823
      %v4825 = vrot.slane %v4727, 2
      %v4826 = vrot.slane %v4729, 2
      %v4827 = vsel %vm1950, %v4825, %v4826
      %v4828 = vrot.slane %v4728, 2
      %v4829 = vrot.slane %v4730, 2
      %v4830 = vsel %vm1950, %v4828, %v4829
      %v4831 = vrot.slane %v4731, 2
      %v4832 = vsel %vm1950, %v4826, %v4831
      %v4833 = vrot.slane %v4732, 2
      %v4834 = vsel %vm1950, %v4829, %v4833
      %v4835 = vrot.slane %v4733, 2
      %v4836 = vsel %vm1950, %v4831, %v4835
      %v4837 = vrot.slane %v4734, 2
      %v4838 = vsel %vm1950, %v4833, %v4837
      %v4839 = vrot.slane %v4735, 2
      %v4840 = vrot.slane %v4737, 2
      %v4841 = vsel %vm1950, %v4839, %v4840
      %v4842 = vrot.slane %v4736, 2
      %v4843 = vrot.slane %v4738, 2
      %v4844 = vsel %vm1950, %v4842, %v4843
      %v4845 = vrot.slane %v4739, 2
      %v4846 = vsel %vm1950, %v4840, %v4845
      %v4847 = vrot.slane %v4740, 2
      %v4848 = vsel %vm1950, %v4843, %v4847
      %v4849 = vrot.slane %v4741, 2
      %v4850 = vsel %vm1950, %v4845, %v4849
      %v4851 = vrot.slane %v4742, 2
      %v4852 = vsel %vm1950, %v4847, %v4851
      %s4868 = scalar_lea.vmem %s219, 1440
      %v4869 = vld [vmem:[%s4868] sm:$0xff]
      %v4870 = vld [vmem:[%s4868 + $0x8] sm:$0xff]
      %v4871 = vld [vmem:[%s4868 + $0x10] sm:$0xff]
      %v4872 = vld [vmem:[%s4868 + $0x18] sm:$0xff]
      %v4873 = vld [vmem:[%s4868 + $0x20] sm:$0xff]
      %v4874 = vld [vmem:[%s4868 + $0x28] sm:$0xff]
      %v4875 = vld [vmem:[%s4868 + $0x30] sm:$0xff]
      %v4876 = vld [vmem:[%s4868 + $0x38] sm:$0xff]
      %v4877 = vld [vmem:[%s4868 + $0x40] sm:$0xff]
      %v4878 = vld [vmem:[%s4868 + $0x48] sm:$0xff]
      %v4879 = vld [vmem:[%s4868 + $0x50] sm:$0xff]
      %v4880 = vld [vmem:[%s4868 + $0x58] sm:$0xff]
      %v4881 = vld [vmem:[%s4868 + $0x60] sm:$0xff]
      %v4882 = vld [vmem:[%s4868 + $0x68] sm:$0xff]
      %v4883 = vld [vmem:[%s4868 + $0x70] sm:$0xff]
      %v4884 = vld [vmem:[%s4868 + $0x78] sm:$0xff]
      %v4885 = vld [vmem:[%s4868 + $0x80] sm:$0xff]
      %v4886 = vld [vmem:[%s4868 + $0x88] sm:$0xff]
      %v4887 = vld [vmem:[%s4868 + $0x90] sm:$0xff]
      %v4888 = vld [vmem:[%s4868 + $0x98] sm:$0xff]
      %v4889 = vsel %vm1755, %v4788, 0
      %v4891 = vsel %vm1755, %v4792, 0
      %v4893 = vsel %vm1755, %v4796, 0
      %v4895 = vsel %vm1755, %v4802, 0
      %v4897 = vsel %vm1755, %v4806, 0
      %v4899 = vsel %vm1755, %v4810, 0
      %v4901 = vsel %vm1755, %v4816, 0
      %v4903 = vsel %vm1755, %v4820, 0
      %v4905 = vsel %vm1755, %v4824, 0
      %v4907 = vsel %vm1755, %v4830, 0
      %v4909 = vsel %vm1755, %v4834, 0
      %v4911 = vsel %vm1755, %v4838, 0
      %v4913 = vsel %vm1755, %v4844, 0
      %v4915 = vsel %vm1755, %v4848, 0
      %v4917 = vsel %vm1755, %v4852, 0
      %4919 = vmatprep.subr.mxu0 0.0
      %4920 = vmatpush1.msra.mxu0 %v4884
      %4921 = vmatprep.subr.mxu0 0.0
      %4922 = vmatpush1.msra.mxu0 %v4883
      %4923 = vmatprep.subr.mxu0 0.0
      %4924 = vmatpush1.msra.mxu0 %v4882
      %4925 = vmatprep.subr.mxu0 0.0
      %4926 = vmatpush1.msra.mxu0 %v4881
      %4927 = vmatprep.subr.mxu0 0.0
      %4928 = vmatpush1.msra.mxu0 %v4880
      %4929 = vmatprep.subr.mxu0 0.0
      %4930 = vmatpush1.msra.mxu0 %v4879
      %4931 = vmatprep.subr.mxu0 0.0
      %4932 = vmatpush1.msra.mxu0 %v4878
      %4933 = vmatprep.subr.mxu0 0.0
      %4934 = vmatpush1.msra.mxu0 %v4877
      %4935 = vmatprep.subr.mxu0 0.0
      %4936 = vmatpush1.msra.mxu0 %v4876
      %4937 = vmatprep.subr.mxu0 0.0
      %4938 = vmatpush1.msra.mxu0 %v4875
      %4939 = vmatprep.subr.mxu0 0.0
      %4940 = vmatpush1.msra.mxu0 %v4874
      %4941 = vmatprep.subr.mxu0 0.0
      %4942 = vmatpush1.msra.mxu0 %v4873
      %4943 = vmatprep.subr.mxu0 0.0
      %4944 = vmatpush1.msra.mxu0 %v4872
      %4945 = vmatprep.subr.mxu0 0.0
      %4946 = vmatpush1.msra.mxu0 %v4871
      %4947 = vmatprep.subr.mxu0 0.0
      %4948 = vmatpush1.msra.mxu0 %v4870
      %4949 = vmatprep.subr.mxu0 0.0
      %4950 = vmatpush1.msra.mxu0 %v4869
      %4951 = vmatprep.subr.mxu0 0.0
      %4952 = vmatpush2.msra.mxu0 0.0
      %4953 = vmatprep.subr.mxu0 0.0
      %4954 = vmatpush2.msra.mxu0 0.0
      %4955 = vmatprep.subr.mxu0 0.0
      %4956 = vmatpush2.msra.mxu0 0.0
      %4957 = vmatprep.subr.mxu0 0.0
      %4958 = vmatpush2.msra.mxu0 0.0
      %4959 = vmatprep.subr.mxu0 0.0
      %4960 = vmatpush2.msra.mxu0 0.0
      %4961 = vmatprep.subr.mxu0 0.0
      %4962 = vmatpush2.msra.mxu0 0.0
      %4963 = vmatprep.subr.mxu0 0.0
      %4964 = vmatpush2.msra.mxu0 0.0
      %4965 = vmatprep.subr.mxu0 0.0
      %4966 = vmatpush2.msra.mxu0 0.0
      %4967 = vmatprep.subr.mxu0 0.0
      %4968 = vmatpush2.msra.mxu0 0.0
      %4969 = vmatprep.subr.mxu0 0.0
      %4970 = vmatpush2.msra.mxu0 0.0
      %4971 = vmatprep.subr.mxu0 0.0
      %4972 = vmatpush2.msra.mxu0 0.0
      %4973 = vmatprep.subr.mxu0 0.0
      %4974 = vmatpush2.msra.mxu0 0.0
      %4975 = vmatprep.subr.mxu0 0.0
      %4976 = vmatpush2.msra.mxu0 %v4888
      %4977 = vmatprep.subr.mxu0 0.0
      %4978 = vmatpush2.msra.mxu0 %v4887
      %4979 = vmatprep.subr.mxu0 0.0
      %4980 = vmatpush2.msra.mxu0 %v4886
      %4981 = vmatprep.subr.mxu0 0.0
      %4982 = vmatpush2.msra.mxu0 %v4885
      %4983 = vmatprep.mubr.f32.mxu0 %v4889
      %4984 = vmatmul.mubr.f32.gmra.mxu0 %v4785
      %v4985 = vpop.f32.mrf.mxu0
      %v4986 = vadd.f32 0.0, %v4985
      %v4987 = vpop.f32.mrf.mxu0
      %4988 = vmatprep.mubr.f32.mxu0 %v4891
      %4989 = vmatmul.mubr.f32.gmra.mxu0 %v4790
      %v4990 = vpop.f32.mrf.mxu0
      %v4991 = vadd.f32 0.0, %v4990
      %v4992 = vpop.f32.mrf.mxu0
      %4993 = vmatprep.mubr.f32.mxu0 %v4893
      %4994 = vmatmul.mubr.f32.gmra.mxu0 %v4794
      %v4995 = vpop.f32.mrf.mxu0
      %v4996 = vadd.f32 0.0, %v4995
      %v4997 = vpop.f32.mrf.mxu0
      %4998 = vmatprep.mubr.f32.mxu0 %v4895
      %4999 = vmatmul.mubr.f32.gmra.mxu0 %v4799
      %v5000 = vpop.f32.mrf.mxu0
      %v5001 = vadd.f32 0.0, %v5000
      %v5002 = vpop.f32.mrf.mxu0
      %5003 = vmatprep.mubr.f32.mxu0 %v4897
      %5004 = vmatmul.mubr.f32.gmra.mxu0 %v4804
      %v5005 = vpop.f32.mrf.mxu0
      %v5006 = vadd.f32 0.0, %v5005
      %v5007 = vpop.f32.mrf.mxu0
      %5008 = vmatprep.mubr.f32.mxu0 %v4899
      %5009 = vmatmul.mubr.f32.gmra.mxu0 %v4808
      %v5010 = vpop.f32.mrf.mxu0
      %v5011 = vadd.f32 0.0, %v5010
      %v5012 = vpop.f32.mrf.mxu0
      %5013 = vmatprep.mubr.f32.mxu0 %v4901
      %5014 = vmatmul.mubr.f32.gmra.mxu0 %v4813
      %v5015 = vpop.f32.mrf.mxu0
      %v5016 = vadd.f32 0.0, %v5015
      %v5017 = vpop.f32.mrf.mxu0
      %5018 = vmatprep.mubr.f32.mxu0 %v4903
      %5019 = vmatmul.mubr.f32.gmra.mxu0 %v4818
      %v5020 = vpop.f32.mrf.mxu0
      %v5021 = vadd.f32 0.0, %v5020
      %v5022 = vpop.f32.mrf.mxu0
      %5023 = vmatprep.mubr.f32.mxu0 %v4905
      %5024 = vmatmul.mubr.f32.gmra.mxu0 %v4822
      %v5025 = vpop.f32.mrf.mxu0
      %v5026 = vadd.f32 0.0, %v5025
      %v5027 = vpop.f32.mrf.mxu0
      %5028 = vmatprep.mubr.f32.mxu0 %v4907
      %5029 = vmatmul.mubr.f32.gmra.mxu0 %v4827
      %v5030 = vpop.f32.mrf.mxu0
      %v5031 = vadd.f32 0.0, %v5030
      %v5032 = vpop.f32.mrf.mxu0
      %5033 = vmatprep.mubr.f32.mxu0 %v4909
      %5034 = vmatmul.mubr.f32.gmra.mxu0 %v4832
      %v5035 = vpop.f32.mrf.mxu0
      %v5036 = vadd.f32 0.0, %v5035
      %v5037 = vpop.f32.mrf.mxu0
      %5038 = vmatprep.mubr.f32.mxu0 %v4911
      %5039 = vmatmul.mubr.f32.gmra.mxu0 %v4836
      %v5040 = vpop.f32.mrf.mxu0
      %v5041 = vadd.f32 0.0, %v5040
      %v5042 = vpop.f32.mrf.mxu0
      %5043 = vmatprep.mubr.f32.mxu0 %v4913
      %5044 = vmatmul.mubr.f32.gmra.mxu0 %v4841
      %v5045 = vpop.f32.mrf.mxu0
      %v5046 = vadd.f32 0.0, %v5045
      %v5047 = vpop.f32.mrf.mxu0
      %5048 = vmatprep.mubr.f32.mxu0 %v4915
      %5049 = vmatmul.mubr.f32.gmra.mxu0 %v4846
      %v5050 = vpop.f32.mrf.mxu0
      %v5051 = vadd.f32 0.0, %v5050
      %v5052 = vpop.f32.mrf.mxu0
      %5053 = vmatprep.mubr.f32.mxu0 %v4917
      %5054 = vmatmul.mubr.f32.gmra.mxu0 %v4850
      %v5055 = vpop.f32.mrf.mxu0
      %v5056 = vadd.f32 0.0, %v5055
      %v5057 = vpop.f32.mrf.mxu0
      %5058 = vdwg.mxu0
      %v5059 = vadd.f32 %v4687, %v4986
      %v5060 = vadd.f32 %v4688, %v4991
      %v5061 = vadd.f32 %v4689, %v4996
      %v5062 = vadd.f32 %v4690, %v5001
      %v5063 = vadd.f32 %v4691, %v5006
      %v5064 = vadd.f32 %v4692, %v5011
      %v5065 = vadd.f32 %v4693, %v5016
      %v5066 = vadd.f32 %v4694, %v5021
      %v5067 = vadd.f32 %v4695, %v5026
      %v5068 = vadd.f32 %v4696, %v5031
      %v5069 = vadd.f32 %v4697, %v5036
      %v5070 = vadd.f32 %v4698, %v5041
      %v5071 = vadd.f32 %v4699, %v5046
      %v5072 = vadd.f32 %v4700, %v5051
      %v5073 = vadd.f32 %v4701, %v5056
      %v5074 = vld [vmem:[%s4702] sm:$0xfe]
      %v5075 = vld [vmem:[%s4702 + $0x8] sm:$0xfe]
      %v5076 = vld [vmem:[%s4702 + $0x30] sm:$0x1]
      %v5077 = vld [vmem:[%s4702 + $0x38] sm:$0x1]
      %v5078 = vld [vmem:[%s4702 + $0x40] sm:$0xfe]
      %v5079 = vld [vmem:[%s4702 + $0x48] sm:$0xfe]
      %v5080 = vld [vmem:[%s4702 + $0x70] sm:$0x1]
      %v5081 = vld [vmem:[%s4702 + $0x78] sm:$0x1]
      %v5082 = vld [vmem:[%s4702 + $0x80] sm:$0xfe]
      %v5083 = vld [vmem:[%s4702 + $0x88] sm:$0xfe]
      %v5084 = vld [vmem:[%s4702 + $0xb0] sm:$0x1]
      %v5085 = vld [vmem:[%s4702 + $0xb8] sm:$0x1]
      %v5086 = vld [vmem:[%s4702 + $0xc0] sm:$0xfe]
      %v5087 = vld [vmem:[%s4702 + $0xc8] sm:$0xfe]
      %v5088 = vld [vmem:[%s4702 + $0xf0] sm:$0x1]
      %v5089 = vld [vmem:[%s4702 + $0xf8] sm:$0x1]
      %v5090 = vld [vmem:[%s4702 + $0x100] sm:$0xfe]
      %v5091 = vld [vmem:[%s4702 + $0x108] sm:$0xfe]
      %v5092 = vld [vmem:[%s4702 + $0x130] sm:$0x1]
      %v5093 = vld [vmem:[%s4702 + $0x138] sm:$0x1]
      %v5114 = vrot.slane %v5074, 1
      %v5115 = vrot.slane %v4705, 1
      %v5116 = vsel %vm2096, %v5114, %v5115
      %v5117 = vrot.slane %v5075, 1
      %v5118 = vrot.slane %v4706, 1
      %v5119 = vsel %vm2096, %v5117, %v5118
      %v5120 = vrot.slane %v4707, 1
      %v5121 = vsel %vm2096, %v5115, %v5120
      %v5122 = vrot.slane %v4708, 1
      %v5123 = vsel %vm2096, %v5118, %v5122
      %v5124 = vrot.slane %v5076, 1
      %v5125 = vsel %vm2096, %v5120, %v5124
      %v5126 = vrot.slane %v5077, 1
      %v5127 = vsel %vm2096, %v5122, %v5126
      %v5128 = vrot.slane %v5078, 1
      %v5129 = vrot.slane %v4713, 1
      %v5130 = vsel %vm2096, %v5128, %v5129
      %v5131 = vrot.slane %v5079, 1
      %v5132 = vrot.slane %v4714, 1
      %v5133 = vsel %vm2096, %v5131, %v5132
      %v5134 = vrot.slane %v4715, 1
      %v5135 = vsel %vm2096, %v5129, %v5134
      %v5136 = vrot.slane %v4716, 1
      %v5137 = vsel %vm2096, %v5132, %v5136
      %v5138 = vrot.slane %v5080, 1
      %v5139 = vsel %vm2096, %v5134, %v5138
      %v5140 = vrot.slane %v5081, 1
      %v5141 = vsel %vm2096, %v5136, %v5140
      %v5142 = vrot.slane %v5082, 1
      %v5143 = vrot.slane %v4721, 1
      %v5144 = vsel %vm2096, %v5142, %v5143
      %v5145 = vrot.slane %v5083, 1
      %v5146 = vrot.slane %v4722, 1
      %v5147 = vsel %vm2096, %v5145, %v5146
      %v5148 = vrot.slane %v4723, 1
      %v5149 = vsel %vm2096, %v5143, %v5148
      %v5150 = vrot.slane %v4724, 1
      %v5151 = vsel %vm2096, %v5146, %v5150
      %v5152 = vrot.slane %v5084, 1
      %v5153 = vsel %vm2096, %v5148, %v5152
      %v5154 = vrot.slane %v5085, 1
      %v5155 = vsel %vm2096, %v5150, %v5154
      %v5156 = vrot.slane %v5086, 1
      %v5157 = vrot.slane %v4729, 1
      %v5158 = vsel %vm2096, %v5156, %v5157
      %v5159 = vrot.slane %v5087, 1
      %v5160 = vrot.slane %v4730, 1
      %v5161 = vsel %vm2096, %v5159, %v5160
      %v5162 = vrot.slane %v4731, 1
      %v5163 = vsel %vm2096, %v5157, %v5162
      %v5164 = vrot.slane %v4732, 1
      %v5165 = vsel %vm2096, %v5160, %v5164
      %v5166 = vrot.slane %v5088, 1
      %v5167 = vsel %vm2096, %v5162, %v5166
      %v5168 = vrot.slane %v5089, 1
      %v5169 = vsel %vm2096, %v5164, %v5168
      %v5170 = vrot.slane %v5090, 1
      %v5171 = vrot.slane %v4737, 1
      %v5172 = vsel %vm2096, %v5170, %v5171
      %v5173 = vrot.slane %v5091, 1
      %v5174 = vrot.slane %v4738, 1
      %v5175 = vsel %vm2096, %v5173, %v5174
      %v5176 = vrot.slane %v4739, 1
      %v5177 = vsel %vm2096, %v5171, %v5176
      %v5178 = vrot.slane %v4740, 1
      %v5179 = vsel %vm2096, %v5174, %v5178
      %v5180 = vrot.slane %v5092, 1
      %v5181 = vsel %vm2096, %v5176, %v5180
      %v5182 = vrot.slane %v5093, 1
      %v5183 = vsel %vm2096, %v5178, %v5182
      %s5199 = scalar_lea.vmem %s219, 1600
      %v5200 = vld [vmem:[%s5199] sm:$0xff]
      %v5201 = vld [vmem:[%s5199 + $0x8] sm:$0xff]
      %v5202 = vld [vmem:[%s5199 + $0x10] sm:$0xff]
      %v5203 = vld [vmem:[%s5199 + $0x18] sm:$0xff]
      %v5204 = vld [vmem:[%s5199 + $0x20] sm:$0xff]
      %v5205 = vld [vmem:[%s5199 + $0x28] sm:$0xff]
      %v5206 = vld [vmem:[%s5199 + $0x30] sm:$0xff]
      %v5207 = vld [vmem:[%s5199 + $0x38] sm:$0xff]
      %v5208 = vld [vmem:[%s5199 + $0x40] sm:$0xff]
      %v5209 = vld [vmem:[%s5199 + $0x48] sm:$0xff]
      %v5210 = vld [vmem:[%s5199 + $0x50] sm:$0xff]
      %v5211 = vld [vmem:[%s5199 + $0x58] sm:$0xff]
      %v5212 = vld [vmem:[%s5199 + $0x60] sm:$0xff]
      %v5213 = vld [vmem:[%s5199 + $0x68] sm:$0xff]
      %v5214 = vld [vmem:[%s5199 + $0x70] sm:$0xff]
      %v5215 = vld [vmem:[%s5199 + $0x78] sm:$0xff]
      %v5216 = vld [vmem:[%s5199 + $0x80] sm:$0xff]
      %v5217 = vld [vmem:[%s5199 + $0x88] sm:$0xff]
      %v5218 = vld [vmem:[%s5199 + $0x90] sm:$0xff]
      %v5219 = vld [vmem:[%s5199 + $0x98] sm:$0xff]
      %v5220 = vsel %vm1755, %v5119, 0
      %v5222 = vsel %vm1755, %v5123, 0
      %v5224 = vsel %vm1755, %v5127, 0
      %v5226 = vsel %vm1755, %v5133, 0
      %v5228 = vsel %vm1755, %v5137, 0
      %v5230 = vsel %vm1755, %v5141, 0
      %v5232 = vsel %vm1755, %v5147, 0
      %v5234 = vsel %vm1755, %v5151, 0
      %v5236 = vsel %vm1755, %v5155, 0
      %v5238 = vsel %vm1755, %v5161, 0
      %v5240 = vsel %vm1755, %v5165, 0
      %v5242 = vsel %vm1755, %v5169, 0
      %v5244 = vsel %vm1755, %v5175, 0
      %v5246 = vsel %vm1755, %v5179, 0
      %v5248 = vsel %vm1755, %v5183, 0
      %5250 = vmatprep.subr.mxu0 0.0
      %5251 = vmatpush1.msra.mxu0 %v5215
      %5252 = vmatprep.subr.mxu0 0.0
      %5253 = vmatpush1.msra.mxu0 %v5214
      %5254 = vmatprep.subr.mxu0 0.0
      %5255 = vmatpush1.msra.mxu0 %v5213
      %5256 = vmatprep.subr.mxu0 0.0
      %5257 = vmatpush1.msra.mxu0 %v5212
      %5258 = vmatprep.subr.mxu0 0.0
      %5259 = vmatpush1.msra.mxu0 %v5211
      %5260 = vmatprep.subr.mxu0 0.0
      %5261 = vmatpush1.msra.mxu0 %v5210
      %5262 = vmatprep.subr.mxu0 0.0
      %5263 = vmatpush1.msra.mxu0 %v5209
      %5264 = vmatprep.subr.mxu0 0.0
      %5265 = vmatpush1.msra.mxu0 %v5208
      %5266 = vmatprep.subr.mxu0 0.0
      %5267 = vmatpush1.msra.mxu0 %v5207
      %5268 = vmatprep.subr.mxu0 0.0
      %5269 = vmatpush1.msra.mxu0 %v5206
      %5270 = vmatprep.subr.mxu0 0.0
      %5271 = vmatpush1.msra.mxu0 %v5205
      %5272 = vmatprep.subr.mxu0 0.0
      %5273 = vmatpush1.msra.mxu0 %v5204
      %5274 = vmatprep.subr.mxu0 0.0
      %5275 = vmatpush1.msra.mxu0 %v5203
      %5276 = vmatprep.subr.mxu0 0.0
      %5277 = vmatpush1.msra.mxu0 %v5202
      %5278 = vmatprep.subr.mxu0 0.0
      %5279 = vmatpush1.msra.mxu0 %v5201
      %5280 = vmatprep.subr.mxu0 0.0
      %5281 = vmatpush1.msra.mxu0 %v5200
      %5282 = vmatprep.subr.mxu0 0.0
      %5283 = vmatpush2.msra.mxu0 0.0
      %5284 = vmatprep.subr.mxu0 0.0
      %5285 = vmatpush2.msra.mxu0 0.0
      %5286 = vmatprep.subr.mxu0 0.0
      %5287 = vmatpush2.msra.mxu0 0.0
      %5288 = vmatprep.subr.mxu0 0.0
      %5289 = vmatpush2.msra.mxu0 0.0
      %5290 = vmatprep.subr.mxu0 0.0
      %5291 = vmatpush2.msra.mxu0 0.0
      %5292 = vmatprep.subr.mxu0 0.0
      %5293 = vmatpush2.msra.mxu0 0.0
      %5294 = vmatprep.subr.mxu0 0.0
      %5295 = vmatpush2.msra.mxu0 0.0
      %5296 = vmatprep.subr.mxu0 0.0
      %5297 = vmatpush2.msra.mxu0 0.0
      %5298 = vmatprep.subr.mxu0 0.0
      %5299 = vmatpush2.msra.mxu0 0.0
      %5300 = vmatprep.subr.mxu0 0.0
      %5301 = vmatpush2.msra.mxu0 0.0
      %5302 = vmatprep.subr.mxu0 0.0
      %5303 = vmatpush2.msra.mxu0 0.0
      %5304 = vmatprep.subr.mxu0 0.0
      %5305 = vmatpush2.msra.mxu0 0.0
      %5306 = vmatprep.subr.mxu0 0.0
      %5307 = vmatpush2.msra.mxu0 %v5219
      %5308 = vmatprep.subr.mxu0 0.0
      %5309 = vmatpush2.msra.mxu0 %v5218
      %5310 = vmatprep.subr.mxu0 0.0
      %5311 = vmatpush2.msra.mxu0 %v5217
      %5312 = vmatprep.subr.mxu0 0.0
      %5313 = vmatpush2.msra.mxu0 %v5216
      %5314 = vmatprep.mubr.f32.mxu0 %v5220
      %5315 = vmatmul.mubr.f32.gmra.mxu0 %v5116
      %v5316 = vpop.f32.mrf.mxu0
      %v5317 = vadd.f32 0.0, %v5316
      %v5318 = vpop.f32.mrf.mxu0
      %5319 = vmatprep.mubr.f32.mxu0 %v5222
      %5320 = vmatmul.mubr.f32.gmra.mxu0 %v5121
      %v5321 = vpop.f32.mrf.mxu0
      %v5322 = vadd.f32 0.0, %v5321
      %v5323 = vpop.f32.mrf.mxu0
      %5324 = vmatprep.mubr.f32.mxu0 %v5224
      %5325 = vmatmul.mubr.f32.gmra.mxu0 %v5125
      %v5326 = vpop.f32.mrf.mxu0
      %v5327 = vadd.f32 0.0, %v5326
      %v5328 = vpop.f32.mrf.mxu0
      %5329 = vmatprep.mubr.f32.mxu0 %v5226
      %5330 = vmatmul.mubr.f32.gmra.mxu0 %v5130
      %v5331 = vpop.f32.mrf.mxu0
      %v5332 = vadd.f32 0.0, %v5331
      %v5333 = vpop.f32.mrf.mxu0
      %5334 = vmatprep.mubr.f32.mxu0 %v5228
      %5335 = vmatmul.mubr.f32.gmra.mxu0 %v5135
      %v5336 = vpop.f32.mrf.mxu0
      %v5337 = vadd.f32 0.0, %v5336
      %v5338 = vpop.f32.mrf.mxu0
      %5339 = vmatprep.mubr.f32.mxu0 %v5230
      %5340 = vmatmul.mubr.f32.gmra.mxu0 %v5139
      %v5341 = vpop.f32.mrf.mxu0
      %v5342 = vadd.f32 0.0, %v5341
      %v5343 = vpop.f32.mrf.mxu0
      %5344 = vmatprep.mubr.f32.mxu0 %v5232
      %5345 = vmatmul.mubr.f32.gmra.mxu0 %v5144
      %v5346 = vpop.f32.mrf.mxu0
      %v5347 = vadd.f32 0.0, %v5346
      %v5348 = vpop.f32.mrf.mxu0
      %5349 = vmatprep.mubr.f32.mxu0 %v5234
      %5350 = vmatmul.mubr.f32.gmra.mxu0 %v5149
      %v5351 = vpop.f32.mrf.mxu0
      %v5352 = vadd.f32 0.0, %v5351
      %v5353 = vpop.f32.mrf.mxu0
      %5354 = vmatprep.mubr.f32.mxu0 %v5236
      %5355 = vmatmul.mubr.f32.gmra.mxu0 %v5153
      %v5356 = vpop.f32.mrf.mxu0
      %v5357 = vadd.f32 0.0, %v5356
      %v5358 = vpop.f32.mrf.mxu0
      %5359 = vmatprep.mubr.f32.mxu0 %v5238
      %5360 = vmatmul.mubr.f32.gmra.mxu0 %v5158
      %v5361 = vpop.f32.mrf.mxu0
      %v5362 = vadd.f32 0.0, %v5361
      %v5363 = vpop.f32.mrf.mxu0
      %5364 = vmatprep.mubr.f32.mxu0 %v5240
      %5365 = vmatmul.mubr.f32.gmra.mxu0 %v5163
      %v5366 = vpop.f32.mrf.mxu0
      %v5367 = vadd.f32 0.0, %v5366
      %v5368 = vpop.f32.mrf.mxu0
      %5369 = vmatprep.mubr.f32.mxu0 %v5242
      %5370 = vmatmul.mubr.f32.gmra.mxu0 %v5167
      %v5371 = vpop.f32.mrf.mxu0
      %v5372 = vadd.f32 0.0, %v5371
      %v5373 = vpop.f32.mrf.mxu0
      %5374 = vmatprep.mubr.f32.mxu0 %v5244
      %5375 = vmatmul.mubr.f32.gmra.mxu0 %v5172
      %v5376 = vpop.f32.mrf.mxu0
      %v5377 = vadd.f32 0.0, %v5376
      %v5378 = vpop.f32.mrf.mxu0
      %5379 = vmatprep.mubr.f32.mxu0 %v5246
      %5380 = vmatmul.mubr.f32.gmra.mxu0 %v5177
      %v5381 = vpop.f32.mrf.mxu0
      %v5382 = vadd.f32 0.0, %v5381
      %v5383 = vpop.f32.mrf.mxu0
      %5384 = vmatprep.mubr.f32.mxu0 %v5248
      %5385 = vmatmul.mubr.f32.gmra.mxu0 %v5181
      %v5386 = vpop.f32.mrf.mxu0
      %v5387 = vadd.f32 0.0, %v5386
      %v5388 = vpop.f32.mrf.mxu0
      %5389 = vdwg.mxu0
      %v5390 = vadd.f32 %v5059, %v5317
      %v5391 = vadd.f32 %v5060, %v5322
      %v5392 = vadd.f32 %v5061, %v5327
      %v5393 = vadd.f32 %v5062, %v5332
      %v5394 = vadd.f32 %v5063, %v5337
      %v5395 = vadd.f32 %v5064, %v5342
      %v5396 = vadd.f32 %v5065, %v5347
      %v5397 = vadd.f32 %v5066, %v5352
      %v5398 = vadd.f32 %v5067, %v5357
      %v5399 = vadd.f32 %v5068, %v5362
      %v5400 = vadd.f32 %v5069, %v5367
      %v5401 = vadd.f32 %v5070, %v5372
      %v5402 = vadd.f32 %v5071, %v5377
      %v5403 = vadd.f32 %v5072, %v5382
      %v5404 = vadd.f32 %v5073, %v5387
      %v5405 = vld [vmem:[%s4702] sm:$0xff]
      %v5406 = vld [vmem:[%s4702 + $0x8] sm:$0xff]
      %v5407 = vld [vmem:[%s4702 + $0x10] sm:$0xff]
      %v5408 = vld [vmem:[%s4702 + $0x18] sm:$0xff]
      %v5409 = vld [vmem:[%s4702 + $0x20] sm:$0xff]
      %v5410 = vld [vmem:[%s4702 + $0x28] sm:$0xff]
      %v5411 = vld [vmem:[%s4702 + $0x40] sm:$0xff]
      %v5412 = vld [vmem:[%s4702 + $0x48] sm:$0xff]
      %v5413 = vld [vmem:[%s4702 + $0x50] sm:$0xff]
      %v5414 = vld [vmem:[%s4702 + $0x58] sm:$0xff]
      %v5415 = vld [vmem:[%s4702 + $0x60] sm:$0xff]
      %v5416 = vld [vmem:[%s4702 + $0x68] sm:$0xff]
      %v5417 = vld [vmem:[%s4702 + $0x80] sm:$0xff]
      %v5418 = vld [vmem:[%s4702 + $0x88] sm:$0xff]
      %v5419 = vld [vmem:[%s4702 + $0x90] sm:$0xff]
      %v5420 = vld [vmem:[%s4702 + $0x98] sm:$0xff]
      %v5421 = vld [vmem:[%s4702 + $0xa0] sm:$0xff]
      %v5422 = vld [vmem:[%s4702 + $0xa8] sm:$0xff]
      %v5423 = vld [vmem:[%s4702 + $0xc0] sm:$0xff]
      %v5424 = vld [vmem:[%s4702 + $0xc8] sm:$0xff]
      %v5425 = vld [vmem:[%s4702 + $0xd0] sm:$0xff]
      %v5426 = vld [vmem:[%s4702 + $0xd8] sm:$0xff]
      %v5427 = vld [vmem:[%s4702 + $0xe0] sm:$0xff]
      %v5428 = vld [vmem:[%s4702 + $0xe8] sm:$0xff]
      %v5429 = vld [vmem:[%s4702 + $0x100] sm:$0xff]
      %v5430 = vld [vmem:[%s4702 + $0x108] sm:$0xff]
      %v5431 = vld [vmem:[%s4702 + $0x110] sm:$0xff]
      %v5432 = vld [vmem:[%s4702 + $0x118] sm:$0xff]
      %v5433 = vld [vmem:[%s4702 + $0x120] sm:$0xff]
      %v5434 = vld [vmem:[%s4702 + $0x128] sm:$0xff]
      %s5435 = scalar_lea.vmem %s219, 1760
      %v5436 = vld [vmem:[%s5435] sm:$0xff]
      %v5437 = vld [vmem:[%s5435 + $0x8] sm:$0xff]
      %v5438 = vld [vmem:[%s5435 + $0x10] sm:$0xff]
      %v5439 = vld [vmem:[%s5435 + $0x18] sm:$0xff]
      %v5440 = vld [vmem:[%s5435 + $0x20] sm:$0xff]
      %v5441 = vld [vmem:[%s5435 + $0x28] sm:$0xff]
      %v5442 = vld [vmem:[%s5435 + $0x30] sm:$0xff]
      %v5443 = vld [vmem:[%s5435 + $0x38] sm:$0xff]
      %v5444 = vld [vmem:[%s5435 + $0x40] sm:$0xff]
      %v5445 = vld [vmem:[%s5435 + $0x48] sm:$0xff]
      %v5446 = vld [vmem:[%s5435 + $0x50] sm:$0xff]
      %v5447 = vld [vmem:[%s5435 + $0x58] sm:$0xff]
      %v5448 = vld [vmem:[%s5435 + $0x60] sm:$0xff]
      %v5449 = vld [vmem:[%s5435 + $0x68] sm:$0xff]
      %v5450 = vld [vmem:[%s5435 + $0x70] sm:$0xff]
      %v5451 = vld [vmem:[%s5435 + $0x78] sm:$0xff]
      %v5452 = vld [vmem:[%s5435 + $0x80] sm:$0xff]
      %v5453 = vld [vmem:[%s5435 + $0x88] sm:$0xff]
      %v5454 = vld [vmem:[%s5435 + $0x90] sm:$0xff]
      %v5455 = vld [vmem:[%s5435 + $0x98] sm:$0xff]
      %v5457 = vsel %vm1755, %v5406, 0
      %v5460 = vsel %vm1755, %v5408, 0
      %v5463 = vsel %vm1755, %v5410, 0
      %v5466 = vsel %vm1755, %v5412, 0
      %v5469 = vsel %vm1755, %v5414, 0
      %v5472 = vsel %vm1755, %v5416, 0
      %v5475 = vsel %vm1755, %v5418, 0
      %v5478 = vsel %vm1755, %v5420, 0
      %v5481 = vsel %vm1755, %v5422, 0
      %v5484 = vsel %vm1755, %v5424, 0
      %v5487 = vsel %vm1755, %v5426, 0
      %v5490 = vsel %vm1755, %v5428, 0
      %v5493 = vsel %vm1755, %v5430, 0
      %v5496 = vsel %vm1755, %v5432, 0
      %v5499 = vsel %vm1755, %v5434, 0
      %5501 = vmatprep.subr.mxu0 0.0
      %5502 = vmatpush1.msra.mxu0 %v5451
      %5503 = vmatprep.subr.mxu0 0.0
      %5504 = vmatpush1.msra.mxu0 %v5450
      %5505 = vmatprep.subr.mxu0 0.0
      %5506 = vmatpush1.msra.mxu0 %v5449
      %5507 = vmatprep.subr.mxu0 0.0
      %5508 = vmatpush1.msra.mxu0 %v5448
      %5509 = vmatprep.subr.mxu0 0.0
      %5510 = vmatpush1.msra.mxu0 %v5447
      %5511 = vmatprep.subr.mxu0 0.0
      %5512 = vmatpush1.msra.mxu0 %v5446
      %5513 = vmatprep.subr.mxu0 0.0
      %5514 = vmatpush1.msra.mxu0 %v5445
      %5515 = vmatprep.subr.mxu0 0.0
      %5516 = vmatpush1.msra.mxu0 %v5444
      %5517 = vmatprep.subr.mxu0 0.0
      %5518 = vmatpush1.msra.mxu0 %v5443
      %5519 = vmatprep.subr.mxu0 0.0
      %5520 = vmatpush1.msra.mxu0 %v5442
      %5521 = vmatprep.subr.mxu0 0.0
      %5522 = vmatpush1.msra.mxu0 %v5441
      %5523 = vmatprep.subr.mxu0 0.0
      %5524 = vmatpush1.msra.mxu0 %v5440
      %5525 = vmatprep.subr.mxu0 0.0
      %5526 = vmatpush1.msra.mxu0 %v5439
      %5527 = vmatprep.subr.mxu0 0.0
      %5528 = vmatpush1.msra.mxu0 %v5438
      %5529 = vmatprep.subr.mxu0 0.0
      %5530 = vmatpush1.msra.mxu0 %v5437
      %5531 = vmatprep.subr.mxu0 0.0
      %5532 = vmatpush1.msra.mxu0 %v5436
      %5533 = vmatprep.subr.mxu0 0.0
      %5534 = vmatpush2.msra.mxu0 0.0
      %5535 = vmatprep.subr.mxu0 0.0
      %5536 = vmatpush2.msra.mxu0 0.0
      %5537 = vmatprep.subr.mxu0 0.0
      %5538 = vmatpush2.msra.mxu0 0.0
      %5539 = vmatprep.subr.mxu0 0.0
      %5540 = vmatpush2.msra.mxu0 0.0
      %5541 = vmatprep.subr.mxu0 0.0
      %5542 = vmatpush2.msra.mxu0 0.0
      %5543 = vmatprep.subr.mxu0 0.0
      %5544 = vmatpush2.msra.mxu0 0.0
      %5545 = vmatprep.subr.mxu0 0.0
      %5546 = vmatpush2.msra.mxu0 0.0
      %5547 = vmatprep.subr.mxu0 0.0
      %5548 = vmatpush2.msra.mxu0 0.0
      %5549 = vmatprep.subr.mxu0 0.0
      %5550 = vmatpush2.msra.mxu0 0.0
      %5551 = vmatprep.subr.mxu0 0.0
      %5552 = vmatpush2.msra.mxu0 0.0
      %5553 = vmatprep.subr.mxu0 0.0
      %5554 = vmatpush2.msra.mxu0 0.0
      %5555 = vmatprep.subr.mxu0 0.0
      %5556 = vmatpush2.msra.mxu0 0.0
      %5557 = vmatprep.subr.mxu0 0.0
      %5558 = vmatpush2.msra.mxu0 %v5455
      %5559 = vmatprep.subr.mxu0 0.0
      %5560 = vmatpush2.msra.mxu0 %v5454
      %5561 = vmatprep.subr.mxu0 0.0
      %5562 = vmatpush2.msra.mxu0 %v5453
      %5563 = vmatprep.subr.mxu0 0.0
      %5564 = vmatpush2.msra.mxu0 %v5452
      %5565 = vmatprep.mubr.f32.mxu0 %v5457
      %5566 = vmatmul.mubr.f32.gmra.mxu0 %v5405
      %v5567 = vpop.f32.mrf.mxu0
      %v5568 = vadd.f32 0.0, %v5567
      %v5569 = vpop.f32.mrf.mxu0
      %5570 = vmatprep.mubr.f32.mxu0 %v5460
      %5571 = vmatmul.mubr.f32.gmra.mxu0 %v5407
      %v5572 = vpop.f32.mrf.mxu0
      %v5573 = vadd.f32 0.0, %v5572
      %v5574 = vpop.f32.mrf.mxu0
      %5575 = vmatprep.mubr.f32.mxu0 %v5463
      %5576 = vmatmul.mubr.f32.gmra.mxu0 %v5409
      %v5577 = vpop.f32.mrf.mxu0
      %v5578 = vadd.f32 0.0, %v5577
      %v5579 = vpop.f32.mrf.mxu0
      %5580 = vmatprep.mubr.f32.mxu0 %v5466
      %5581 = vmatmul.mubr.f32.gmra.mxu0 %v5411
      %v5582 = vpop.f32.mrf.mxu0
      %v5583 = vadd.f32 0.0, %v5582
      %v5584 = vpop.f32.mrf.mxu0
      %5585 = vmatprep.mubr.f32.mxu0 %v5469
      %5586 = vmatmul.mubr.f32.gmra.mxu0 %v5413
      %v5587 = vpop.f32.mrf.mxu0
      %v5588 = vadd.f32 0.0, %v5587
      %v5589 = vpop.f32.mrf.mxu0
      %5590 = vmatprep.mubr.f32.mxu0 %v5472
      %5591 = vmatmul.mubr.f32.gmra.mxu0 %v5415
      %v5592 = vpop.f32.mrf.mxu0
      %v5593 = vadd.f32 0.0, %v5592
      %v5594 = vpop.f32.mrf.mxu0
      %5595 = vmatprep.mubr.f32.mxu0 %v5475
      %5596 = vmatmul.mubr.f32.gmra.mxu0 %v5417
      %v5597 = vpop.f32.mrf.mxu0
      %v5598 = vadd.f32 0.0, %v5597
      %v5599 = vpop.f32.mrf.mxu0
      %5600 = vmatprep.mubr.f32.mxu0 %v5478
      %5601 = vmatmul.mubr.f32.gmra.mxu0 %v5419
      %v5602 = vpop.f32.mrf.mxu0
      %v5603 = vadd.f32 0.0, %v5602
      %v5604 = vpop.f32.mrf.mxu0
      %5605 = vmatprep.mubr.f32.mxu0 %v5481
      %5606 = vmatmul.mubr.f32.gmra.mxu0 %v5421
      %v5607 = vpop.f32.mrf.mxu0
      %v5608 = vadd.f32 0.0, %v5607
      %v5609 = vpop.f32.mrf.mxu0
      %5610 = vmatprep.mubr.f32.mxu0 %v5484
      %5611 = vmatmul.mubr.f32.gmra.mxu0 %v5423
      %v5612 = vpop.f32.mrf.mxu0
      %v5613 = vadd.f32 0.0, %v5612
      %v5614 = vpop.f32.mrf.mxu0
      %5615 = vmatprep.mubr.f32.mxu0 %v5487
      %5616 = vmatmul.mubr.f32.gmra.mxu0 %v5425
      %v5617 = vpop.f32.mrf.mxu0
      %v5618 = vadd.f32 0.0, %v5617
      %v5619 = vpop.f32.mrf.mxu0
      %5620 = vmatprep.mubr.f32.mxu0 %v5490
      %5621 = vmatmul.mubr.f32.gmra.mxu0 %v5427
      %v5622 = vpop.f32.mrf.mxu0
      %v5623 = vadd.f32 0.0, %v5622
      %v5624 = vpop.f32.mrf.mxu0
      %5625 = vmatprep.mubr.f32.mxu0 %v5493
      %5626 = vmatmul.mubr.f32.gmra.mxu0 %v5429
      %v5627 = vpop.f32.mrf.mxu0
      %v5628 = vadd.f32 0.0, %v5627
      %v5629 = vpop.f32.mrf.mxu0
      %5630 = vmatprep.mubr.f32.mxu0 %v5496
      %5631 = vmatmul.mubr.f32.gmra.mxu0 %v5431
      %v5632 = vpop.f32.mrf.mxu0
      %v5633 = vadd.f32 0.0, %v5632
      %v5634 = vpop.f32.mrf.mxu0
      %5635 = vmatprep.mubr.f32.mxu0 %v5499
      %5636 = vmatmul.mubr.f32.gmra.mxu0 %v5433
      %v5637 = vpop.f32.mrf.mxu0
      %v5638 = vadd.f32 0.0, %v5637
      %v5639 = vpop.f32.mrf.mxu0
      %5640 = vdwg.mxu0
      %v5641 = vadd.f32 %v5390, %v5568
      %v5642 = vadd.f32 %v5391, %v5573
      %v5643 = vadd.f32 %v5392, %v5578
      %v5644 = vadd.f32 %v5393, %v5583
      %v5645 = vadd.f32 %v5394, %v5588
      %v5646 = vadd.f32 %v5395, %v5593
      %v5647 = vadd.f32 %v5396, %v5598
      %v5648 = vadd.f32 %v5397, %v5603
      %v5649 = vadd.f32 %v5398, %v5608
      %v5650 = vadd.f32 %v5399, %v5613
      %v5651 = vadd.f32 %v5400, %v5618
      %v5652 = vadd.f32 %v5401, %v5623
      %v5653 = vadd.f32 %v5402, %v5628
      %v5654 = vadd.f32 %v5403, %v5633
      %v5655 = vadd.f32 %v5404, %v5638
      %v5656 = vld [vmem:[#allocation2] sm:$0xfc]
      %v5657 = vld [vmem:[#allocation2 + $0x8] sm:$0xfc]
      %v5658 = vld [vmem:[#allocation2 + $0x10] sm:$0xff]
      %v5659 = vld [vmem:[#allocation2 + $0x18] sm:$0xff]
      %v5660 = vld [vmem:[#allocation2 + $0x20] sm:$0xff]
      %v5661 = vld [vmem:[#allocation2 + $0x28] sm:$0xff]
      %v5662 = vld [vmem:[#allocation2 + $0x30] sm:$0x3]
      %v5663 = vld [vmem:[#allocation2 + $0x38] sm:$0x3]
      %v5664 = vld [vmem:[#allocation2 + $0x40] sm:$0xfc]
      %v5665 = vld [vmem:[#allocation2 + $0x48] sm:$0xfc]
      %v5666 = vld [vmem:[#allocation2 + $0x50] sm:$0xff]
      %v5667 = vld [vmem:[#allocation2 + $0x58] sm:$0xff]
      %v5668 = vld [vmem:[#allocation2 + $0x60] sm:$0xff]
      %v5669 = vld [vmem:[#allocation2 + $0x68] sm:$0xff]
      %v5670 = vld [vmem:[#allocation2 + $0x70] sm:$0x3]
      %v5671 = vld [vmem:[#allocation2 + $0x78] sm:$0x3]
      %v5672 = vld [vmem:[#allocation2 + $0x80] sm:$0xfc]
      %v5673 = vld [vmem:[#allocation2 + $0x88] sm:$0xfc]
      %v5674 = vld [vmem:[#allocation2 + $0x90] sm:$0xff]
      %v5675 = vld [vmem:[#allocation2 + $0x98] sm:$0xff]
      %v5676 = vld [vmem:[#allocation2 + $0xa0] sm:$0xff]
      %v5677 = vld [vmem:[#allocation2 + $0xa8] sm:$0xff]
      %v5678 = vld [vmem:[#allocation2 + $0xb0] sm:$0x3]
      %v5679 = vld [vmem:[#allocation2 + $0xb8] sm:$0x3]
      %v5680 = vld [vmem:[#allocation2 + $0xc0] sm:$0xfc]
      %v5681 = vld [vmem:[#allocation2 + $0xc8] sm:$0xfc]
      %v5682 = vld [vmem:[#allocation2 + $0xd0] sm:$0xff]
      %v5683 = vld [vmem:[#allocation2 + $0xd8] sm:$0xff]
      %v5684 = vld [vmem:[#allocation2 + $0xe0] sm:$0xff]
      %v5685 = vld [vmem:[#allocation2 + $0xe8] sm:$0xff]
      %v5686 = vld [vmem:[#allocation2 + $0xf0] sm:$0x3]
      %v5687 = vld [vmem:[#allocation2 + $0xf8] sm:$0x3]
      %v5688 = vld [vmem:[#allocation2 + $0x100] sm:$0xfc]
      %v5689 = vld [vmem:[#allocation2 + $0x108] sm:$0xfc]
      %v5690 = vld [vmem:[#allocation2 + $0x110] sm:$0xff]
      %v5691 = vld [vmem:[#allocation2 + $0x118] sm:$0xff]
      %v5692 = vld [vmem:[#allocation2 + $0x120] sm:$0xff]
      %v5693 = vld [vmem:[#allocation2 + $0x128] sm:$0xff]
      %v5694 = vld [vmem:[#allocation2 + $0x130] sm:$0x3]
      %v5695 = vld [vmem:[#allocation2 + $0x138] sm:$0x3]
      %v5736 = vrot.slane %v5656, 2
      %v5737 = vrot.slane %v5658, 2
      %v5738 = vsel %vm1950, %v5736, %v5737
      %v5739 = vrot.slane %v5657, 2
      %v5740 = vrot.slane %v5659, 2
      %v5741 = vsel %vm1950, %v5739, %v5740
      %v5742 = vrot.slane %v5660, 2
      %v5743 = vsel %vm1950, %v5737, %v5742
      %v5744 = vrot.slane %v5661, 2
      %v5745 = vsel %vm1950, %v5740, %v5744
      %v5746 = vrot.slane %v5662, 2
      %v5747 = vsel %vm1950, %v5742, %v5746
      %v5748 = vrot.slane %v5663, 2
      %v5749 = vsel %vm1950, %v5744, %v5748
      %v5750 = vrot.slane %v5664, 2
      %v5751 = vrot.slane %v5666, 2
      %v5752 = vsel %vm1950, %v5750, %v5751
      %v5753 = vrot.slane %v5665, 2
      %v5754 = vrot.slane %v5667, 2
      %v5755 = vsel %vm1950, %v5753, %v5754
      %v5756 = vrot.slane %v5668, 2
      %v5757 = vsel %vm1950, %v5751, %v5756
      %v5758 = vrot.slane %v5669, 2
      %v5759 = vsel %vm1950, %v5754, %v5758
      %v5760 = vrot.slane %v5670, 2
      %v5761 = vsel %vm1950, %v5756, %v5760
      %v5762 = vrot.slane %v5671, 2
      %v5763 = vsel %vm1950, %v5758, %v5762
      %v5764 = vrot.slane %v5672, 2
      %v5765 = vrot.slane %v5674, 2
      %v5766 = vsel %vm1950, %v5764, %v5765
      %v5767 = vrot.slane %v5673, 2
      %v5768 = vrot.slane %v5675, 2
      %v5769 = vsel %vm1950, %v5767, %v5768
      %v5770 = vrot.slane %v5676, 2
      %v5771 = vsel %vm1950, %v5765, %v5770
      %v5772 = vrot.slane %v5677, 2
      %v5773 = vsel %vm1950, %v5768, %v5772
      %v5774 = vrot.slane %v5678, 2
      %v5775 = vsel %vm1950, %v5770, %v5774
      %v5776 = vrot.slane %v5679, 2
      %v5777 = vsel %vm1950, %v5772, %v5776
      %v5778 = vrot.slane %v5680, 2
      %v5779 = vrot.slane %v5682, 2
      %v5780 = vsel %vm1950, %v5778, %v5779
      %v5781 = vrot.slane %v5681, 2
      %v5782 = vrot.slane %v5683, 2
      %v5783 = vsel %vm1950, %v5781, %v5782
      %v5784 = vrot.slane %v5684, 2
      %v5785 = vsel %vm1950, %v5779, %v5784
      %v5786 = vrot.slane %v5685, 2
      %v5787 = vsel %vm1950, %v5782, %v5786
      %v5788 = vrot.slane %v5686, 2
      %v5789 = vsel %vm1950, %v5784, %v5788
      %v5790 = vrot.slane %v5687, 2
      %v5791 = vsel %vm1950, %v5786, %v5790
      %v5792 = vrot.slane %v5688, 2
      %v5793 = vrot.slane %v5690, 2
      %v5794 = vsel %vm1950, %v5792, %v5793
      %v5795 = vrot.slane %v5689, 2
      %v5796 = vrot.slane %v5691, 2
      %v5797 = vsel %vm1950, %v5795, %v5796
      %v5798 = vrot.slane %v5692, 2
      %v5799 = vsel %vm1950, %v5793, %v5798
      %v5800 = vrot.slane %v5693, 2
      %v5801 = vsel %vm1950, %v5796, %v5800
      %v5802 = vrot.slane %v5694, 2
      %v5803 = vsel %vm1950, %v5798, %v5802
      %v5804 = vrot.slane %v5695, 2
      %v5805 = vsel %vm1950, %v5800, %v5804
      %s5821 = scalar_lea.vmem %s219, 1920
      %v5822 = vld [vmem:[%s5821] sm:$0xff]
      %v5823 = vld [vmem:[%s5821 + $0x8] sm:$0xff]
      %v5824 = vld [vmem:[%s5821 + $0x10] sm:$0xff]
      %v5825 = vld [vmem:[%s5821 + $0x18] sm:$0xff]
      %v5826 = vld [vmem:[%s5821 + $0x20] sm:$0xff]
      %v5827 = vld [vmem:[%s5821 + $0x28] sm:$0xff]
      %v5828 = vld [vmem:[%s5821 + $0x30] sm:$0xff]
      %v5829 = vld [vmem:[%s5821 + $0x38] sm:$0xff]
      %v5830 = vld [vmem:[%s5821 + $0x40] sm:$0xff]
      %v5831 = vld [vmem:[%s5821 + $0x48] sm:$0xff]
      %v5832 = vld [vmem:[%s5821 + $0x50] sm:$0xff]
      %v5833 = vld [vmem:[%s5821 + $0x58] sm:$0xff]
      %v5834 = vld [vmem:[%s5821 + $0x60] sm:$0xff]
      %v5835 = vld [vmem:[%s5821 + $0x68] sm:$0xff]
      %v5836 = vld [vmem:[%s5821 + $0x70] sm:$0xff]
      %v5837 = vld [vmem:[%s5821 + $0x78] sm:$0xff]
      %v5838 = vld [vmem:[%s5821 + $0x80] sm:$0xff]
      %v5839 = vld [vmem:[%s5821 + $0x88] sm:$0xff]
      %v5840 = vld [vmem:[%s5821 + $0x90] sm:$0xff]
      %v5841 = vld [vmem:[%s5821 + $0x98] sm:$0xff]
      %v5842 = vsel %vm1755, %v5741, 0
      %v5844 = vsel %vm1755, %v5745, 0
      %v5846 = vsel %vm1755, %v5749, 0
      %v5848 = vsel %vm1755, %v5755, 0
      %v5850 = vsel %vm1755, %v5759, 0
      %v5852 = vsel %vm1755, %v5763, 0
      %v5854 = vsel %vm1755, %v5769, 0
      %v5856 = vsel %vm1755, %v5773, 0
      %v5858 = vsel %vm1755, %v5777, 0
      %v5860 = vsel %vm1755, %v5783, 0
      %v5862 = vsel %vm1755, %v5787, 0
      %v5864 = vsel %vm1755, %v5791, 0
      %v5866 = vsel %vm1755, %v5797, 0
      %v5868 = vsel %vm1755, %v5801, 0
      %v5870 = vsel %vm1755, %v5805, 0
      %5872 = vmatprep.subr.mxu0 0.0
      %5873 = vmatpush1.msra.mxu0 %v5837
      %5874 = vmatprep.subr.mxu0 0.0
      %5875 = vmatpush1.msra.mxu0 %v5836
      %5876 = vmatprep.subr.mxu0 0.0
      %5877 = vmatpush1.msra.mxu0 %v5835
      %5878 = vmatprep.subr.mxu0 0.0
      %5879 = vmatpush1.msra.mxu0 %v5834
      %5880 = vmatprep.subr.mxu0 0.0
      %5881 = vmatpush1.msra.mxu0 %v5833
      %5882 = vmatprep.subr.mxu0 0.0
      %5883 = vmatpush1.msra.mxu0 %v5832
      %5884 = vmatprep.subr.mxu0 0.0
      %5885 = vmatpush1.msra.mxu0 %v5831
      %5886 = vmatprep.subr.mxu0 0.0
      %5887 = vmatpush1.msra.mxu0 %v5830
      %5888 = vmatprep.subr.mxu0 0.0
      %5889 = vmatpush1.msra.mxu0 %v5829
      %5890 = vmatprep.subr.mxu0 0.0
      %5891 = vmatpush1.msra.mxu0 %v5828
      %5892 = vmatprep.subr.mxu0 0.0
      %5893 = vmatpush1.msra.mxu0 %v5827
      %5894 = vmatprep.subr.mxu0 0.0
      %5895 = vmatpush1.msra.mxu0 %v5826
      %5896 = vmatprep.subr.mxu0 0.0
      %5897 = vmatpush1.msra.mxu0 %v5825
      %5898 = vmatprep.subr.mxu0 0.0
      %5899 = vmatpush1.msra.mxu0 %v5824
      %5900 = vmatprep.subr.mxu0 0.0
      %5901 = vmatpush1.msra.mxu0 %v5823
      %5902 = vmatprep.subr.mxu0 0.0
      %5903 = vmatpush1.msra.mxu0 %v5822
      %5904 = vmatprep.subr.mxu0 0.0
      %5905 = vmatpush2.msra.mxu0 0.0
      %5906 = vmatprep.subr.mxu0 0.0
      %5907 = vmatpush2.msra.mxu0 0.0
      %5908 = vmatprep.subr.mxu0 0.0
      %5909 = vmatpush2.msra.mxu0 0.0
      %5910 = vmatprep.subr.mxu0 0.0
      %5911 = vmatpush2.msra.mxu0 0.0
      %5912 = vmatprep.subr.mxu0 0.0
      %5913 = vmatpush2.msra.mxu0 0.0
      %5914 = vmatprep.subr.mxu0 0.0
      %5915 = vmatpush2.msra.mxu0 0.0
      %5916 = vmatprep.subr.mxu0 0.0
      %5917 = vmatpush2.msra.mxu0 0.0
      %5918 = vmatprep.subr.mxu0 0.0
      %5919 = vmatpush2.msra.mxu0 0.0
      %5920 = vmatprep.subr.mxu0 0.0
      %5921 = vmatpush2.msra.mxu0 0.0
      %5922 = vmatprep.subr.mxu0 0.0
      %5923 = vmatpush2.msra.mxu0 0.0
      %5924 = vmatprep.subr.mxu0 0.0
      %5925 = vmatpush2.msra.mxu0 0.0
      %5926 = vmatprep.subr.mxu0 0.0
      %5927 = vmatpush2.msra.mxu0 0.0
      %5928 = vmatprep.subr.mxu0 0.0
      %5929 = vmatpush2.msra.mxu0 %v5841
      %5930 = vmatprep.subr.mxu0 0.0
      %5931 = vmatpush2.msra.mxu0 %v5840
      %5932 = vmatprep.subr.mxu0 0.0
      %5933 = vmatpush2.msra.mxu0 %v5839
      %5934 = vmatprep.subr.mxu0 0.0
      %5935 = vmatpush2.msra.mxu0 %v5838
      %5936 = vmatprep.mubr.f32.mxu0 %v5842
      %5937 = vmatmul.mubr.f32.gmra.mxu0 %v5738
      %v5938 = vpop.f32.mrf.mxu0
      %v5939 = vadd.f32 0.0, %v5938
      %v5940 = vpop.f32.mrf.mxu0
      %5941 = vmatprep.mubr.f32.mxu0 %v5844
      %5942 = vmatmul.mubr.f32.gmra.mxu0 %v5743
      %v5943 = vpop.f32.mrf.mxu0
      %v5944 = vadd.f32 0.0, %v5943
      %v5945 = vpop.f32.mrf.mxu0
      %5946 = vmatprep.mubr.f32.mxu0 %v5846
      %5947 = vmatmul.mubr.f32.gmra.mxu0 %v5747
      %v5948 = vpop.f32.mrf.mxu0
      %v5949 = vadd.f32 0.0, %v5948
      %v5950 = vpop.f32.mrf.mxu0
      %5951 = vmatprep.mubr.f32.mxu0 %v5848
      %5952 = vmatmul.mubr.f32.gmra.mxu0 %v5752
      %v5953 = vpop.f32.mrf.mxu0
      %v5954 = vadd.f32 0.0, %v5953
      %v5955 = vpop.f32.mrf.mxu0
      %5956 = vmatprep.mubr.f32.mxu0 %v5850
      %5957 = vmatmul.mubr.f32.gmra.mxu0 %v5757
      %v5958 = vpop.f32.mrf.mxu0
      %v5959 = vadd.f32 0.0, %v5958
      %v5960 = vpop.f32.mrf.mxu0
      %5961 = vmatprep.mubr.f32.mxu0 %v5852
      %5962 = vmatmul.mubr.f32.gmra.mxu0 %v5761
      %v5963 = vpop.f32.mrf.mxu0
      %v5964 = vadd.f32 0.0, %v5963
      %v5965 = vpop.f32.mrf.mxu0
      %5966 = vmatprep.mubr.f32.mxu0 %v5854
      %5967 = vmatmul.mubr.f32.gmra.mxu0 %v5766
      %v5968 = vpop.f32.mrf.mxu0
      %v5969 = vadd.f32 0.0, %v5968
      %v5970 = vpop.f32.mrf.mxu0
      %5971 = vmatprep.mubr.f32.mxu0 %v5856
      %5972 = vmatmul.mubr.f32.gmra.mxu0 %v5771
      %v5973 = vpop.f32.mrf.mxu0
      %v5974 = vadd.f32 0.0, %v5973
      %v5975 = vpop.f32.mrf.mxu0
      %5976 = vmatprep.mubr.f32.mxu0 %v5858
      %5977 = vmatmul.mubr.f32.gmra.mxu0 %v5775
      %v5978 = vpop.f32.mrf.mxu0
      %v5979 = vadd.f32 0.0, %v5978
      %v5980 = vpop.f32.mrf.mxu0
      %5981 = vmatprep.mubr.f32.mxu0 %v5860
      %5982 = vmatmul.mubr.f32.gmra.mxu0 %v5780
      %v5983 = vpop.f32.mrf.mxu0
      %v5984 = vadd.f32 0.0, %v5983
      %v5985 = vpop.f32.mrf.mxu0
      %5986 = vmatprep.mubr.f32.mxu0 %v5862
      %5987 = vmatmul.mubr.f32.gmra.mxu0 %v5785
      %v5988 = vpop.f32.mrf.mxu0
      %v5989 = vadd.f32 0.0, %v5988
      %v5990 = vpop.f32.mrf.mxu0
      %5991 = vmatprep.mubr.f32.mxu0 %v5864
      %5992 = vmatmul.mubr.f32.gmra.mxu0 %v5789
      %v5993 = vpop.f32.mrf.mxu0
      %v5994 = vadd.f32 0.0, %v5993
      %v5995 = vpop.f32.mrf.mxu0
      %5996 = vmatprep.mubr.f32.mxu0 %v5866
      %5997 = vmatmul.mubr.f32.gmra.mxu0 %v5794
      %v5998 = vpop.f32.mrf.mxu0
      %v5999 = vadd.f32 0.0, %v5998
      %v6000 = vpop.f32.mrf.mxu0
      %6001 = vmatprep.mubr.f32.mxu0 %v5868
      %6002 = vmatmul.mubr.f32.gmra.mxu0 %v5799
      %v6003 = vpop.f32.mrf.mxu0
      %v6004 = vadd.f32 0.0, %v6003
      %v6005 = vpop.f32.mrf.mxu0
      %6006 = vmatprep.mubr.f32.mxu0 %v5870
      %6007 = vmatmul.mubr.f32.gmra.mxu0 %v5803
      %v6008 = vpop.f32.mrf.mxu0
      %v6009 = vadd.f32 0.0, %v6008
      %v6010 = vpop.f32.mrf.mxu0
      %6011 = vdwg.mxu0
      %v6012 = vadd.f32 %v5641, %v5939
      %v6013 = vadd.f32 %v5642, %v5944
      %v6014 = vadd.f32 %v5643, %v5949
      %v6015 = vadd.f32 %v5644, %v5954
      %v6016 = vadd.f32 %v5645, %v5959
      %v6017 = vadd.f32 %v5646, %v5964
      %v6018 = vadd.f32 %v5647, %v5969
      %v6019 = vadd.f32 %v5648, %v5974
      %v6020 = vadd.f32 %v5649, %v5979
      %v6021 = vadd.f32 %v5650, %v5984
      %v6022 = vadd.f32 %v5651, %v5989
      %v6023 = vadd.f32 %v5652, %v5994
      %v6024 = vadd.f32 %v5653, %v5999
      %v6025 = vadd.f32 %v5654, %v6004
      %v6026 = vadd.f32 %v5655, %v6009
      %v6027 = vld [vmem:[#allocation2] sm:$0xfe]
      %v6028 = vld [vmem:[#allocation2 + $0x8] sm:$0xfe]
      %v6029 = vld [vmem:[#allocation2 + $0x30] sm:$0x1]
      %v6030 = vld [vmem:[#allocation2 + $0x38] sm:$0x1]
      %v6031 = vld [vmem:[#allocation2 + $0x40] sm:$0xfe]
      %v6032 = vld [vmem:[#allocation2 + $0x48] sm:$0xfe]
      %v6033 = vld [vmem:[#allocation2 + $0x70] sm:$0x1]
      %v6034 = vld [vmem:[#allocation2 + $0x78] sm:$0x1]
      %v6035 = vld [vmem:[#allocation2 + $0x80] sm:$0xfe]
      %v6036 = vld [vmem:[#allocation2 + $0x88] sm:$0xfe]
      %v6037 = vld [vmem:[#allocation2 + $0xb0] sm:$0x1]
      %v6038 = vld [vmem:[#allocation2 + $0xb8] sm:$0x1]
      %v6039 = vld [vmem:[#allocation2 + $0xc0] sm:$0xfe]
      %v6040 = vld [vmem:[#allocation2 + $0xc8] sm:$0xfe]
      %v6041 = vld [vmem:[#allocation2 + $0xf0] sm:$0x1]
      %v6042 = vld [vmem:[#allocation2 + $0xf8] sm:$0x1]
      %v6043 = vld [vmem:[#allocation2 + $0x100] sm:$0xfe]
      %v6044 = vld [vmem:[#allocation2 + $0x108] sm:$0xfe]
      %v6045 = vld [vmem:[#allocation2 + $0x130] sm:$0x1]
      %v6046 = vld [vmem:[#allocation2 + $0x138] sm:$0x1]
      %v6067 = vrot.slane %v6027, 1
      %v6068 = vrot.slane %v5658, 1
      %v6069 = vsel %vm2096, %v6067, %v6068
      %v6070 = vrot.slane %v6028, 1
      %v6071 = vrot.slane %v5659, 1
      %v6072 = vsel %vm2096, %v6070, %v6071
      %v6073 = vrot.slane %v5660, 1
      %v6074 = vsel %vm2096, %v6068, %v6073
      %v6075 = vrot.slane %v5661, 1
      %v6076 = vsel %vm2096, %v6071, %v6075
      %v6077 = vrot.slane %v6029, 1
      %v6078 = vsel %vm2096, %v6073, %v6077
      %v6079 = vrot.slane %v6030, 1
      %v6080 = vsel %vm2096, %v6075, %v6079
      %v6081 = vrot.slane %v6031, 1
      %v6082 = vrot.slane %v5666, 1
      %v6083 = vsel %vm2096, %v6081, %v6082
      %v6084 = vrot.slane %v6032, 1
      %v6085 = vrot.slane %v5667, 1
      %v6086 = vsel %vm2096, %v6084, %v6085
      %v6087 = vrot.slane %v5668, 1
      %v6088 = vsel %vm2096, %v6082, %v6087
      %v6089 = vrot.slane %v5669, 1
      %v6090 = vsel %vm2096, %v6085, %v6089
      %v6091 = vrot.slane %v6033, 1
      %v6092 = vsel %vm2096, %v6087, %v6091
      %v6093 = vrot.slane %v6034, 1
      %v6094 = vsel %vm2096, %v6089, %v6093
      %v6095 = vrot.slane %v6035, 1
      %v6096 = vrot.slane %v5674, 1
      %v6097 = vsel %vm2096, %v6095, %v6096
      %v6098 = vrot.slane %v6036, 1
      %v6099 = vrot.slane %v5675, 1
      %v6100 = vsel %vm2096, %v6098, %v6099
      %v6101 = vrot.slane %v5676, 1
      %v6102 = vsel %vm2096, %v6096, %v6101
      %v6103 = vrot.slane %v5677, 1
      %v6104 = vsel %vm2096, %v6099, %v6103
      %v6105 = vrot.slane %v6037, 1
      %v6106 = vsel %vm2096, %v6101, %v6105
      %v6107 = vrot.slane %v6038, 1
      %v6108 = vsel %vm2096, %v6103, %v6107
      %v6109 = vrot.slane %v6039, 1
      %v6110 = vrot.slane %v5682, 1
      %v6111 = vsel %vm2096, %v6109, %v6110
      %v6112 = vrot.slane %v6040, 1
      %v6113 = vrot.slane %v5683, 1
      %v6114 = vsel %vm2096, %v6112, %v6113
      %v6115 = vrot.slane %v5684, 1
      %v6116 = vsel %vm2096, %v6110, %v6115
      %v6117 = vrot.slane %v5685, 1
      %v6118 = vsel %vm2096, %v6113, %v6117
      %v6119 = vrot.slane %v6041, 1
      %v6120 = vsel %vm2096, %v6115, %v6119
      %v6121 = vrot.slane %v6042, 1
      %v6122 = vsel %vm2096, %v6117, %v6121
      %v6123 = vrot.slane %v6043, 1
      %v6124 = vrot.slane %v5690, 1
      %v6125 = vsel %vm2096, %v6123, %v6124
      %v6126 = vrot.slane %v6044, 1
      %v6127 = vrot.slane %v5691, 1
      %v6128 = vsel %vm2096, %v6126, %v6127
      %v6129 = vrot.slane %v5692, 1
      %v6130 = vsel %vm2096, %v6124, %v6129
      %v6131 = vrot.slane %v5693, 1
      %v6132 = vsel %vm2096, %v6127, %v6131
      %v6133 = vrot.slane %v6045, 1
      %v6134 = vsel %vm2096, %v6129, %v6133
      %v6135 = vrot.slane %v6046, 1
      %v6136 = vsel %vm2096, %v6131, %v6135
      %s6152 = scalar_lea.vmem %s219, 2080
      %v6153 = vld [vmem:[%s6152] sm:$0xff]
      %v6154 = vld [vmem:[%s6152 + $0x8] sm:$0xff]
      %v6155 = vld [vmem:[%s6152 + $0x10] sm:$0xff]
      %v6156 = vld [vmem:[%s6152 + $0x18] sm:$0xff]
      %v6157 = vld [vmem:[%s6152 + $0x20] sm:$0xff]
      %v6158 = vld [vmem:[%s6152 + $0x28] sm:$0xff]
      %v6159 = vld [vmem:[%s6152 + $0x30] sm:$0xff]
      %v6160 = vld [vmem:[%s6152 + $0x38] sm:$0xff]
      %v6161 = vld [vmem:[%s6152 + $0x40] sm:$0xff]
      %v6162 = vld [vmem:[%s6152 + $0x48] sm:$0xff]
      %v6163 = vld [vmem:[%s6152 + $0x50] sm:$0xff]
      %v6164 = vld [vmem:[%s6152 + $0x58] sm:$0xff]
      %v6165 = vld [vmem:[%s6152 + $0x60] sm:$0xff]
      %v6166 = vld [vmem:[%s6152 + $0x68] sm:$0xff]
      %v6167 = vld [vmem:[%s6152 + $0x70] sm:$0xff]
      %v6168 = vld [vmem:[%s6152 + $0x78] sm:$0xff]
      %v6169 = vld [vmem:[%s6152 + $0x80] sm:$0xff]
      %v6170 = vld [vmem:[%s6152 + $0x88] sm:$0xff]
      %v6171 = vld [vmem:[%s6152 + $0x90] sm:$0xff]
      %v6172 = vld [vmem:[%s6152 + $0x98] sm:$0xff]
      %v6173 = vsel %vm1755, %v6072, 0
      %v6175 = vsel %vm1755, %v6076, 0
      %v6177 = vsel %vm1755, %v6080, 0
      %v6179 = vsel %vm1755, %v6086, 0
      %v6181 = vsel %vm1755, %v6090, 0
      %v6183 = vsel %vm1755, %v6094, 0
      %v6185 = vsel %vm1755, %v6100, 0
      %v6187 = vsel %vm1755, %v6104, 0
      %v6189 = vsel %vm1755, %v6108, 0
      %v6191 = vsel %vm1755, %v6114, 0
      %v6193 = vsel %vm1755, %v6118, 0
      %v6195 = vsel %vm1755, %v6122, 0
      %v6197 = vsel %vm1755, %v6128, 0
      %v6199 = vsel %vm1755, %v6132, 0
      %v6201 = vsel %vm1755, %v6136, 0
      %6203 = vmatprep.subr.mxu0 0.0
      %6204 = vmatpush1.msra.mxu0 %v6168
      %6205 = vmatprep.subr.mxu0 0.0
      %6206 = vmatpush1.msra.mxu0 %v6167
      %6207 = vmatprep.subr.mxu0 0.0
      %6208 = vmatpush1.msra.mxu0 %v6166
      %6209 = vmatprep.subr.mxu0 0.0
      %6210 = vmatpush1.msra.mxu0 %v6165
      %6211 = vmatprep.subr.mxu0 0.0
      %6212 = vmatpush1.msra.mxu0 %v6164
      %6213 = vmatprep.subr.mxu0 0.0
      %6214 = vmatpush1.msra.mxu0 %v6163
      %6215 = vmatprep.subr.mxu0 0.0
      %6216 = vmatpush1.msra.mxu0 %v6162
      %6217 = vmatprep.subr.mxu0 0.0
      %6218 = vmatpush1.msra.mxu0 %v6161
      %6219 = vmatprep.subr.mxu0 0.0
      %6220 = vmatpush1.msra.mxu0 %v6160
      %6221 = vmatprep.subr.mxu0 0.0
      %6222 = vmatpush1.msra.mxu0 %v6159
      %6223 = vmatprep.subr.mxu0 0.0
      %6224 = vmatpush1.msra.mxu0 %v6158
      %6225 = vmatprep.subr.mxu0 0.0
      %6226 = vmatpush1.msra.mxu0 %v6157
      %6227 = vmatprep.subr.mxu0 0.0
      %6228 = vmatpush1.msra.mxu0 %v6156
      %6229 = vmatprep.subr.mxu0 0.0
      %6230 = vmatpush1.msra.mxu0 %v6155
      %6231 = vmatprep.subr.mxu0 0.0
      %6232 = vmatpush1.msra.mxu0 %v6154
      %6233 = vmatprep.subr.mxu0 0.0
      %6234 = vmatpush1.msra.mxu0 %v6153
      %6235 = vmatprep.subr.mxu0 0.0
      %6236 = vmatpush2.msra.mxu0 0.0
      %6237 = vmatprep.subr.mxu0 0.0
      %6238 = vmatpush2.msra.mxu0 0.0
      %6239 = vmatprep.subr.mxu0 0.0
      %6240 = vmatpush2.msra.mxu0 0.0
      %6241 = vmatprep.subr.mxu0 0.0
      %6242 = vmatpush2.msra.mxu0 0.0
      %6243 = vmatprep.subr.mxu0 0.0
      %6244 = vmatpush2.msra.mxu0 0.0
      %6245 = vmatprep.subr.mxu0 0.0
      %6246 = vmatpush2.msra.mxu0 0.0
      %6247 = vmatprep.subr.mxu0 0.0
      %6248 = vmatpush2.msra.mxu0 0.0
      %6249 = vmatprep.subr.mxu0 0.0
      %6250 = vmatpush2.msra.mxu0 0.0
      %6251 = vmatprep.subr.mxu0 0.0
      %6252 = vmatpush2.msra.mxu0 0.0
      %6253 = vmatprep.subr.mxu0 0.0
      %6254 = vmatpush2.msra.mxu0 0.0
      %6255 = vmatprep.subr.mxu0 0.0
      %6256 = vmatpush2.msra.mxu0 0.0
      %6257 = vmatprep.subr.mxu0 0.0
      %6258 = vmatpush2.msra.mxu0 0.0
      %6259 = vmatprep.subr.mxu0 0.0
      %6260 = vmatpush2.msra.mxu0 %v6172
      %6261 = vmatprep.subr.mxu0 0.0
      %6262 = vmatpush2.msra.mxu0 %v6171
      %6263 = vmatprep.subr.mxu0 0.0
      %6264 = vmatpush2.msra.mxu0 %v6170
      %6265 = vmatprep.subr.mxu0 0.0
      %6266 = vmatpush2.msra.mxu0 %v6169
      %6267 = vmatprep.mubr.f32.mxu0 %v6173
      %6268 = vmatmul.mubr.f32.gmra.mxu0 %v6069
      %v6269 = vpop.f32.mrf.mxu0
      %v6270 = vadd.f32 0.0, %v6269
      %v6271 = vpop.f32.mrf.mxu0
      %6272 = vmatprep.mubr.f32.mxu0 %v6175
      %6273 = vmatmul.mubr.f32.gmra.mxu0 %v6074
      %v6274 = vpop.f32.mrf.mxu0
      %v6275 = vadd.f32 0.0, %v6274
      %v6276 = vpop.f32.mrf.mxu0
      %6277 = vmatprep.mubr.f32.mxu0 %v6177
      %6278 = vmatmul.mubr.f32.gmra.mxu0 %v6078
      %v6279 = vpop.f32.mrf.mxu0
      %v6280 = vadd.f32 0.0, %v6279
      %v6281 = vpop.f32.mrf.mxu0
      %6282 = vmatprep.mubr.f32.mxu0 %v6179
      %6283 = vmatmul.mubr.f32.gmra.mxu0 %v6083
      %v6284 = vpop.f32.mrf.mxu0
      %v6285 = vadd.f32 0.0, %v6284
      %v6286 = vpop.f32.mrf.mxu0
      %6287 = vmatprep.mubr.f32.mxu0 %v6181
      %6288 = vmatmul.mubr.f32.gmra.mxu0 %v6088
      %v6289 = vpop.f32.mrf.mxu0
      %v6290 = vadd.f32 0.0, %v6289
      %v6291 = vpop.f32.mrf.mxu0
      %6292 = vmatprep.mubr.f32.mxu0 %v6183
      %6293 = vmatmul.mubr.f32.gmra.mxu0 %v6092
      %v6294 = vpop.f32.mrf.mxu0
      %v6295 = vadd.f32 0.0, %v6294
      %v6296 = vpop.f32.mrf.mxu0
      %6297 = vmatprep.mubr.f32.mxu0 %v6185
      %6298 = vmatmul.mubr.f32.gmra.mxu0 %v6097
      %v6299 = vpop.f32.mrf.mxu0
      %v6300 = vadd.f32 0.0, %v6299
      %v6301 = vpop.f32.mrf.mxu0
      %6302 = vmatprep.mubr.f32.mxu0 %v6187
      %6303 = vmatmul.mubr.f32.gmra.mxu0 %v6102
      %v6304 = vpop.f32.mrf.mxu0
      %v6305 = vadd.f32 0.0, %v6304
      %v6306 = vpop.f32.mrf.mxu0
      %6307 = vmatprep.mubr.f32.mxu0 %v6189
      %6308 = vmatmul.mubr.f32.gmra.mxu0 %v6106
      %v6309 = vpop.f32.mrf.mxu0
      %v6310 = vadd.f32 0.0, %v6309
      %v6311 = vpop.f32.mrf.mxu0
      %6312 = vmatprep.mubr.f32.mxu0 %v6191
      %6313 = vmatmul.mubr.f32.gmra.mxu0 %v6111
      %v6314 = vpop.f32.mrf.mxu0
      %v6315 = vadd.f32 0.0, %v6314
      %v6316 = vpop.f32.mrf.mxu0
      %6317 = vmatprep.mubr.f32.mxu0 %v6193
      %6318 = vmatmul.mubr.f32.gmra.mxu0 %v6116
      %v6319 = vpop.f32.mrf.mxu0
      %v6320 = vadd.f32 0.0, %v6319
      %v6321 = vpop.f32.mrf.mxu0
      %6322 = vmatprep.mubr.f32.mxu0 %v6195
      %6323 = vmatmul.mubr.f32.gmra.mxu0 %v6120
      %v6324 = vpop.f32.mrf.mxu0
      %v6325 = vadd.f32 0.0, %v6324
      %v6326 = vpop.f32.mrf.mxu0
      %6327 = vmatprep.mubr.f32.mxu0 %v6197
      %6328 = vmatmul.mubr.f32.gmra.mxu0 %v6125
      %v6329 = vpop.f32.mrf.mxu0
      %v6330 = vadd.f32 0.0, %v6329
      %v6331 = vpop.f32.mrf.mxu0
      %6332 = vmatprep.mubr.f32.mxu0 %v6199
      %6333 = vmatmul.mubr.f32.gmra.mxu0 %v6130
      %v6334 = vpop.f32.mrf.mxu0
      %v6335 = vadd.f32 0.0, %v6334
      %v6336 = vpop.f32.mrf.mxu0
      %6337 = vmatprep.mubr.f32.mxu0 %v6201
      %6338 = vmatmul.mubr.f32.gmra.mxu0 %v6134
      %v6339 = vpop.f32.mrf.mxu0
      %v6340 = vadd.f32 0.0, %v6339
      %v6341 = vpop.f32.mrf.mxu0
      %6342 = vdwg.mxu0
      %v6343 = vadd.f32 %v6012, %v6270
      %v6344 = vadd.f32 %v6013, %v6275
      %v6345 = vadd.f32 %v6014, %v6280
      %v6346 = vadd.f32 %v6015, %v6285
      %v6347 = vadd.f32 %v6016, %v6290
      %v6348 = vadd.f32 %v6017, %v6295
      %v6349 = vadd.f32 %v6018, %v6300
      %v6350 = vadd.f32 %v6019, %v6305
      %v6351 = vadd.f32 %v6020, %v6310
      %v6352 = vadd.f32 %v6021, %v6315
      %v6353 = vadd.f32 %v6022, %v6320
      %v6354 = vadd.f32 %v6023, %v6325
      %v6355 = vadd.f32 %v6024, %v6330
      %v6356 = vadd.f32 %v6025, %v6335
      %v6357 = vadd.f32 %v6026, %v6340
      %v6358 = vld [vmem:[#allocation2] sm:$0xff]
      %v6359 = vld [vmem:[#allocation2 + $0x8] sm:$0xff]
      %v6360 = vld [vmem:[#allocation2 + $0x10] sm:$0xff]
      %v6361 = vld [vmem:[#allocation2 + $0x18] sm:$0xff]
      %v6362 = vld [vmem:[#allocation2 + $0x20] sm:$0xff]
      %v6363 = vld [vmem:[#allocation2 + $0x28] sm:$0xff]
      %v6364 = vld [vmem:[#allocation2 + $0x40] sm:$0xff]
      %v6365 = vld [vmem:[#allocation2 + $0x48] sm:$0xff]
      %v6366 = vld [vmem:[#allocation2 + $0x50] sm:$0xff]
      %v6367 = vld [vmem:[#allocation2 + $0x58] sm:$0xff]
      %v6368 = vld [vmem:[#allocation2 + $0x60] sm:$0xff]
      %v6369 = vld [vmem:[#allocation2 + $0x68] sm:$0xff]
      %v6370 = vld [vmem:[#allocation2 + $0x80] sm:$0xff]
      %v6371 = vld [vmem:[#allocation2 + $0x88] sm:$0xff]
      %v6372 = vld [vmem:[#allocation2 + $0x90] sm:$0xff]
      %v6373 = vld [vmem:[#allocation2 + $0x98] sm:$0xff]
      %v6374 = vld [vmem:[#allocation2 + $0xa0] sm:$0xff]
      %v6375 = vld [vmem:[#allocation2 + $0xa8] sm:$0xff]
      %v6376 = vld [vmem:[#allocation2 + $0xc0] sm:$0xff]
      %v6377 = vld [vmem:[#allocation2 + $0xc8] sm:$0xff]
      %v6378 = vld [vmem:[#allocation2 + $0xd0] sm:$0xff]
      %v6379 = vld [vmem:[#allocation2 + $0xd8] sm:$0xff]
      %v6380 = vld [vmem:[#allocation2 + $0xe0] sm:$0xff]
      %v6381 = vld [vmem:[#allocation2 + $0xe8] sm:$0xff]
      %v6382 = vld [vmem:[#allocation2 + $0x100] sm:$0xff]
      %v6383 = vld [vmem:[#allocation2 + $0x108] sm:$0xff]
      %v6384 = vld [vmem:[#allocation2 + $0x110] sm:$0xff]
      %v6385 = vld [vmem:[#allocation2 + $0x118] sm:$0xff]
      %v6386 = vld [vmem:[#allocation2 + $0x120] sm:$0xff]
      %v6387 = vld [vmem:[#allocation2 + $0x128] sm:$0xff]
      %s6388 = scalar_lea.vmem %s219, 2240
      %v6389 = vld [vmem:[%s6388] sm:$0xff]
      %v6390 = vld [vmem:[%s6388 + $0x8] sm:$0xff]
      %v6391 = vld [vmem:[%s6388 + $0x10] sm:$0xff]
      %v6392 = vld [vmem:[%s6388 + $0x18] sm:$0xff]
      %v6393 = vld [vmem:[%s6388 + $0x20] sm:$0xff]
      %v6394 = vld [vmem:[%s6388 + $0x28] sm:$0xff]
      %v6395 = vld [vmem:[%s6388 + $0x30] sm:$0xff]
      %v6396 = vld [vmem:[%s6388 + $0x38] sm:$0xff]
      %v6397 = vld [vmem:[%s6388 + $0x40] sm:$0xff]
      %v6398 = vld [vmem:[%s6388 + $0x48] sm:$0xff]
      %v6399 = vld [vmem:[%s6388 + $0x50] sm:$0xff]
      %v6400 = vld [vmem:[%s6388 + $0x58] sm:$0xff]
      %v6401 = vld [vmem:[%s6388 + $0x60] sm:$0xff]
      %v6402 = vld [vmem:[%s6388 + $0x68] sm:$0xff]
      %v6403 = vld [vmem:[%s6388 + $0x70] sm:$0xff]
      %v6404 = vld [vmem:[%s6388 + $0x78] sm:$0xff]
      %v6405 = vld [vmem:[%s6388 + $0x80] sm:$0xff]
      %v6406 = vld [vmem:[%s6388 + $0x88] sm:$0xff]
      %v6407 = vld [vmem:[%s6388 + $0x90] sm:$0xff]
      %v6408 = vld [vmem:[%s6388 + $0x98] sm:$0xff]
      %v6410 = vsel %vm1755, %v6359, 0
      %v6413 = vsel %vm1755, %v6361, 0
      %v6416 = vsel %vm1755, %v6363, 0
      %v6419 = vsel %vm1755, %v6365, 0
      %v6422 = vsel %vm1755, %v6367, 0
      %v6425 = vsel %vm1755, %v6369, 0
      %v6428 = vsel %vm1755, %v6371, 0
      %v6431 = vsel %vm1755, %v6373, 0
      %v6434 = vsel %vm1755, %v6375, 0
      %v6437 = vsel %vm1755, %v6377, 0
      %v6440 = vsel %vm1755, %v6379, 0
      %v6443 = vsel %vm1755, %v6381, 0
      %v6446 = vsel %vm1755, %v6383, 0
      %v6449 = vsel %vm1755, %v6385, 0
      %v6452 = vsel %vm1755, %v6387, 0
      %6454 = vmatprep.subr.mxu0 0.0
      %6455 = vmatpush1.msra.mxu0 %v6404
      %6456 = vmatprep.subr.mxu0 0.0
      %6457 = vmatpush1.msra.mxu0 %v6403
      %6458 = vmatprep.subr.mxu0 0.0
      %6459 = vmatpush1.msra.mxu0 %v6402
      %6460 = vmatprep.subr.mxu0 0.0
      %6461 = vmatpush1.msra.mxu0 %v6401
      %6462 = vmatprep.subr.mxu0 0.0
      %6463 = vmatpush1.msra.mxu0 %v6400
      %6464 = vmatprep.subr.mxu0 0.0
      %6465 = vmatpush1.msra.mxu0 %v6399
      %6466 = vmatprep.subr.mxu0 0.0
      %6467 = vmatpush1.msra.mxu0 %v6398
      %6468 = vmatprep.subr.mxu0 0.0
      %6469 = vmatpush1.msra.mxu0 %v6397
      %6470 = vmatprep.subr.mxu0 0.0
      %6471 = vmatpush1.msra.mxu0 %v6396
      %6472 = vmatprep.subr.mxu0 0.0
      %6473 = vmatpush1.msra.mxu0 %v6395
      %6474 = vmatprep.subr.mxu0 0.0
      %6475 = vmatpush1.msra.mxu0 %v6394
      %6476 = vmatprep.subr.mxu0 0.0
      %6477 = vmatpush1.msra.mxu0 %v6393
      %6478 = vmatprep.subr.mxu0 0.0
      %6479 = vmatpush1.msra.mxu0 %v6392
      %6480 = vmatprep.subr.mxu0 0.0
      %6481 = vmatpush1.msra.mxu0 %v6391
      %6482 = vmatprep.subr.mxu0 0.0
      %6483 = vmatpush1.msra.mxu0 %v6390
      %6484 = vmatprep.subr.mxu0 0.0
      %6485 = vmatpush1.msra.mxu0 %v6389
      %6486 = vmatprep.subr.mxu0 0.0
      %6487 = vmatpush2.msra.mxu0 0.0
      %6488 = vmatprep.subr.mxu0 0.0
      %6489 = vmatpush2.msra.mxu0 0.0
      %6490 = vmatprep.subr.mxu0 0.0
      %6491 = vmatpush2.msra.mxu0 0.0
      %6492 = vmatprep.subr.mxu0 0.0
      %6493 = vmatpush2.msra.mxu0 0.0
      %6494 = vmatprep.subr.mxu0 0.0
      %6495 = vmatpush2.msra.mxu0 0.0
      %6496 = vmatprep.subr.mxu0 0.0
      %6497 = vmatpush2.msra.mxu0 0.0
      %6498 = vmatprep.subr.mxu0 0.0
      %6499 = vmatpush2.msra.mxu0 0.0
      %6500 = vmatprep.subr.mxu0 0.0
      %6501 = vmatpush2.msra.mxu0 0.0
      %6502 = vmatprep.subr.mxu0 0.0
      %6503 = vmatpush2.msra.mxu0 0.0
      %6504 = vmatprep.subr.mxu0 0.0
      %6505 = vmatpush2.msra.mxu0 0.0
      %6506 = vmatprep.subr.mxu0 0.0
      %6507 = vmatpush2.msra.mxu0 0.0
      %6508 = vmatprep.subr.mxu0 0.0
      %6509 = vmatpush2.msra.mxu0 0.0
      %6510 = vmatprep.subr.mxu0 0.0
      %6511 = vmatpush2.msra.mxu0 %v6408
      %6512 = vmatprep.subr.mxu0 0.0
      %6513 = vmatpush2.msra.mxu0 %v6407
      %6514 = vmatprep.subr.mxu0 0.0
      %6515 = vmatpush2.msra.mxu0 %v6406
      %6516 = vmatprep.subr.mxu0 0.0
      %6517 = vmatpush2.msra.mxu0 %v6405
      %6518 = vmatprep.mubr.f32.mxu0 %v6410
      %6519 = vmatmul.mubr.f32.gmra.mxu0 %v6358
      %v6520 = vpop.f32.mrf.mxu0
      %v6521 = vadd.f32 0.0, %v6520
      %v6522 = vpop.f32.mrf.mxu0
      %6523 = vmatprep.mubr.f32.mxu0 %v6413
      %6524 = vmatmul.mubr.f32.gmra.mxu0 %v6360
      %v6525 = vpop.f32.mrf.mxu0
      %v6526 = vadd.f32 0.0, %v6525
      %v6527 = vpop.f32.mrf.mxu0
      %6528 = vmatprep.mubr.f32.mxu0 %v6416
      %6529 = vmatmul.mubr.f32.gmra.mxu0 %v6362
      %v6530 = vpop.f32.mrf.mxu0
      %v6531 = vadd.f32 0.0, %v6530
      %v6532 = vpop.f32.mrf.mxu0
      %6533 = vmatprep.mubr.f32.mxu0 %v6419
      %6534 = vmatmul.mubr.f32.gmra.mxu0 %v6364
      %v6535 = vpop.f32.mrf.mxu0
      %v6536 = vadd.f32 0.0, %v6535
      %v6537 = vpop.f32.mrf.mxu0
      %6538 = vmatprep.mubr.f32.mxu0 %v6422
      %6539 = vmatmul.mubr.f32.gmra.mxu0 %v6366
      %v6540 = vpop.f32.mrf.mxu0
      %v6541 = vadd.f32 0.0, %v6540
      %v6542 = vpop.f32.mrf.mxu0
      %6543 = vmatprep.mubr.f32.mxu0 %v6425
      %6544 = vmatmul.mubr.f32.gmra.mxu0 %v6368
      %v6545 = vpop.f32.mrf.mxu0
      %v6546 = vadd.f32 0.0, %v6545
      %v6547 = vpop.f32.mrf.mxu0
      %6548 = vmatprep.mubr.f32.mxu0 %v6428
      %6549 = vmatmul.mubr.f32.gmra.mxu0 %v6370
      %v6550 = vpop.f32.mrf.mxu0
      %v6551 = vadd.f32 0.0, %v6550
      %v6552 = vpop.f32.mrf.mxu0
      %6553 = vmatprep.mubr.f32.mxu0 %v6431
      %6554 = vmatmul.mubr.f32.gmra.mxu0 %v6372
      %v6555 = vpop.f32.mrf.mxu0
      %v6556 = vadd.f32 0.0, %v6555
      %v6557 = vpop.f32.mrf.mxu0
      %6558 = vmatprep.mubr.f32.mxu0 %v6434
      %6559 = vmatmul.mubr.f32.gmra.mxu0 %v6374
      %v6560 = vpop.f32.mrf.mxu0
      %v6561 = vadd.f32 0.0, %v6560
      %v6562 = vpop.f32.mrf.mxu0
      %6563 = vmatprep.mubr.f32.mxu0 %v6437
      %6564 = vmatmul.mubr.f32.gmra.mxu0 %v6376
      %v6565 = vpop.f32.mrf.mxu0
      %v6566 = vadd.f32 0.0, %v6565
      %v6567 = vpop.f32.mrf.mxu0
      %6568 = vmatprep.mubr.f32.mxu0 %v6440
      %6569 = vmatmul.mubr.f32.gmra.mxu0 %v6378
      %v6570 = vpop.f32.mrf.mxu0
      %v6571 = vadd.f32 0.0, %v6570
      %v6572 = vpop.f32.mrf.mxu0
      %6573 = vmatprep.mubr.f32.mxu0 %v6443
      %6574 = vmatmul.mubr.f32.gmra.mxu0 %v6380
      %v6575 = vpop.f32.mrf.mxu0
      %v6576 = vadd.f32 0.0, %v6575
      %v6577 = vpop.f32.mrf.mxu0
      %6578 = vmatprep.mubr.f32.mxu0 %v6446
      %6579 = vmatmul.mubr.f32.gmra.mxu0 %v6382
      %v6580 = vpop.f32.mrf.mxu0
      %v6581 = vadd.f32 0.0, %v6580
      %v6582 = vpop.f32.mrf.mxu0
      %6583 = vmatprep.mubr.f32.mxu0 %v6449
      %6584 = vmatmul.mubr.f32.gmra.mxu0 %v6384
      %v6585 = vpop.f32.mrf.mxu0
      %v6586 = vadd.f32 0.0, %v6585
      %v6587 = vpop.f32.mrf.mxu0
      %6588 = vmatprep.mubr.f32.mxu0 %v6452
      %6589 = vmatmul.mubr.f32.gmra.mxu0 %v6386
      %v6590 = vpop.f32.mrf.mxu0
      %v6591 = vadd.f32 0.0, %v6590
      %v6592 = vpop.f32.mrf.mxu0
      %6593 = vdwg.mxu0
      %v6594 = vadd.f32 %v6343, %v6521
      %v6595 = vadd.f32 %v6344, %v6526
      %v6596 = vadd.f32 %v6345, %v6531
      %v6597 = vadd.f32 %v6346, %v6536
      %v6598 = vadd.f32 %v6347, %v6541
      %v6599 = vadd.f32 %v6348, %v6546
      %v6600 = vadd.f32 %v6349, %v6551
      %v6601 = vadd.f32 %v6350, %v6556
      %v6602 = vadd.f32 %v6351, %v6561
      %v6603 = vadd.f32 %v6352, %v6566
      %v6604 = vadd.f32 %v6353, %v6571
      %v6605 = vadd.f32 %v6354, %v6576
      %v6606 = vadd.f32 %v6355, %v6581
      %v6607 = vadd.f32 %v6356, %v6586
      %v6608 = vadd.f32 %v6357, %v6591
      %v6609 = vld [vmem:[%s4] sm:$0x1]
      %v6611 = vlaneseq
      %v6612 = vshrl.u32 %v6611, 7
      %v6613 = vsub.s32 0, %v6612
      %v6614 = vrot.slane %v6609, %v6613
      %v6616 = vadd.f32 %v6594, %v6614
      %v6617 = vadd.f32 %v6595, %v6614
      %v6618 = vadd.f32 %v6596, %v6614
      %v6619 = vadd.f32 %v6597, %v6614
      %v6620 = vadd.f32 %v6598, %v6614
      %v6621 = vadd.f32 %v6599, %v6614
      %v6622 = vadd.f32 %v6600, %v6614
      %v6623 = vadd.f32 %v6601, %v6614
      %v6624 = vadd.f32 %v6602, %v6614
      %v6625 = vadd.f32 %v6603, %v6614
      %v6626 = vadd.f32 %v6604, %v6614
      %v6627 = vadd.f32 %v6605, %v6614
      %v6628 = vadd.f32 %v6606, %v6614
      %v6629 = vadd.f32 %v6607, %v6614
      %v6630 = vadd.f32 %v6608, %v6614
      %vm6631 = vcmp.gt.f32.partialorder %v6616, 0.0
      %vm6632 = vcmp.gt.f32.partialorder %v6617, 0.0
      %vm6633 = vcmp.gt.f32.partialorder %v6618, 0.0
      %vm6634 = vcmp.gt.f32.partialorder %v6619, 0.0
      %vm6635 = vcmp.gt.f32.partialorder %v6620, 0.0
      %vm6636 = vcmp.gt.f32.partialorder %v6621, 0.0
      %vm6637 = vcmp.gt.f32.partialorder %v6622, 0.0
      %vm6638 = vcmp.gt.f32.partialorder %v6623, 0.0
      %vm6639 = vcmp.gt.f32.partialorder %v6624, 0.0
      %vm6640 = vcmp.gt.f32.partialorder %v6625, 0.0
      %vm6641 = vcmp.gt.f32.partialorder %v6626, 0.0
      %vm6642 = vcmp.gt.f32.partialorder %v6627, 0.0
      %vm6643 = vcmp.gt.f32.partialorder %v6628, 0.0
      %vm6644 = vcmp.gt.f32.partialorder %v6629, 0.0
      %vm6645 = vcmp.gt.f32.partialorder %v6630, 0.0
      %v6646 = vmul.f32 %v6616, -1.1942047
      %v6647 = vmul.f32 %v6617, -1.1942047
      %v6648 = vmul.f32 %v6618, -1.1942047
      %v6649 = vmul.f32 %v6619, -1.1942047
      %v6650 = vmul.f32 %v6620, -1.1942047
      %v6651 = vmul.f32 %v6621, -1.1942047
      %v6652 = vmul.f32 %v6622, -1.1942047
      %v6653 = vmul.f32 %v6623, -1.1942047
      %v6654 = vmul.f32 %v6624, -1.1942047
      %v6655 = vmul.f32 %v6625, -1.1942047
      %v6656 = vmul.f32 %v6626, -1.1942047
      %v6657 = vmul.f32 %v6627, -1.1942047
      %v6658 = vmul.f32 %v6628, -1.1942047
      %v6659 = vmul.f32 %v6629, -1.1942047
      %v6660 = vmul.f32 %v6630, -1.1942047
      %v6661 = vsel %vm6631, %v6616, %v6646
      %v6662 = vsel %vm6632, %v6617, %v6647
      %v6663 = vsel %vm6633, %v6618, %v6648
      %v6664 = vsel %vm6634, %v6619, %v6649
      %v6665 = vsel %vm6635, %v6620, %v6650
      %v6666 = vsel %vm6636, %v6621, %v6651
      %v6667 = vsel %vm6637, %v6622, %v6652
      %v6668 = vsel %vm6638, %v6623, %v6653
      %v6669 = vsel %vm6639, %v6624, %v6654
      %v6670 = vsel %vm6640, %v6625, %v6655
      %v6671 = vsel %vm6641, %v6626, %v6656
      %v6672 = vsel %vm6642, %v6627, %v6657
      %v6673 = vsel %vm6643, %v6628, %v6658
      %v6674 = vsel %vm6644, %v6629, %v6659
      %v6675 = vsel %vm6645, %v6630, %v6660
      %vm6676 = vcmask 588800
      %6677 = vst.msk [vmem:[%s224] sm:$0xff] %vm6676, %v6661
      %6678 = vst.msk [vmem:[%s224 + $0x8] sm:$0xff] %vm6676, %v6662
      %6679 = vst.msk [vmem:[%s224 + $0x10] sm:$0xff] %vm6676, %v6663
      %6680 = vst.msk [vmem:[%s224 + $0x18] sm:$0xff] %vm6676, %v6664
      %6681 = vst.msk [vmem:[%s224 + $0x20] sm:$0xff] %vm6676, %v6665
      %6682 = vst.msk [vmem:[%s224 + $0x28] sm:$0xff] %vm6676, %v6666
      %6683 = vst.msk [vmem:[%s224 + $0x30] sm:$0xff] %vm6676, %v6667
      %6684 = vst.msk [vmem:[%s224 + $0x38] sm:$0xff] %vm6676, %v6668
      %6685 = vst.msk [vmem:[%s224 + $0x40] sm:$0xff] %vm6676, %v6669
      %6686 = vst.msk [vmem:[%s224 + $0x48] sm:$0xff] %vm6676, %v6670
      %6687 = vst.msk [vmem:[%s224 + $0x50] sm:$0xff] %vm6676, %v6671
      %6688 = vst.msk [vmem:[%s224 + $0x58] sm:$0xff] %vm6676, %v6672
      %6689 = vst.msk [vmem:[%s224 + $0x60] sm:$0xff] %vm6676, %v6673
      %6690 = vst.msk [vmem:[%s224 + $0x68] sm:$0xff] %vm6676, %v6674
      %6691 = vst.msk [vmem:[%s224 + $0x70] sm:$0xff] %vm6676, %v6675
      %p6692 = scmp.lt.s32.totalorder %s16, 1
      %s6693 = scalar_select %p6692, %s16, 1
      %s6694 = smul.addr %s6693, 15
      %s6695 = smul.addr %s6694, 8
      %s6696 = scalar_lea.vmem %s5, %s6695
      // Predicated region
      $region41: #{model_forward.1} parent=39 // pred_check
        %p6697 = pneg %p144
      $region42: #{model_forward.1} parent=39 // pred_check_branch
        %6699 = sbr.rel (%p6697) target = $region44
      $region43: #{model_forward.1} parent=39 // pred_region
        _
      $region44: #{model_forward.1} parent=39 // pred_fallthru
        _
    $region40: #{model_forward.1} parent=5 // pred_fallthru
      _
    %p6700 = scmp.le.s32.totalorder 2, %s11
    // Predicated region
    $region45: #{model_forward.1} parent=5 // pred_check
      %p6701 = pneg %p6700
    $region46: #{model_forward.1} parent=5 // pred_check_branch
      %6703 = sbr.rel (%p6701) target = $region48
    $region47: #{model_forward.1} parent=5 // pred_region
      %s6704 = ssub.s32 %s11, 2
      // Predicated region
      $region49: #{model_forward.1} parent=47 // pred_check
        %p6705 = pneg %p150
      $region50: #{model_forward.1} parent=47 // pred_check_branch
        %6707 = sbr.rel (%p6705) target = $region52
      $region51: #{model_forward.1} parent=47 // pred_region
        %p6708 = scmp.lt.s32.totalorder %s17, 1
        %s6709 = scalar_select %p6708, %s17, 1
        %s6710 = smul.addr %s6709, 15
        %s6711 = smul.addr %s6710, 8
        %s6712 = scalar_lea.vmem %s5, %s6711
      $region52: #{model_forward.1} parent=47 // pred_fallthru
        _
    $region48: #{model_forward.1} parent=5 // pred_fallthru
      _
  $region6: #{model_forward.1} parent=0 // loop_footer
    %s15 = sadd.s32 1, %s11
  $region7: #{model_forward.1} parent=0 // loop_footer_branch
    %10 = sbr.rel target = $region3
  $region8: #{model_forward.1} parent=0 // loop_exit
    _

</llo_original>
